<compile_context>
chip_gen: v7x
topology: tpu7x:2x2x1
jax: 0.10.0
libtpu: 0.0.40
codegen_flags: <defaults>
</compile_context>

<pallas_src>
import numpy as np
import jax
import jax.numpy as jnp
from jax.experimental import pallas as pl
from jax.experimental.pallas import tpu as pltpu


# ------------------------------ fused kernel -------------------------------

def _sudoku_kernel(cols_ref, sel_ref, w1_ref, b1_ref, w2_ref, b2_ref,
                   wf1_ref, bf1_ref, wf2_ref, bf2_ref, out_ref,
                   p1_ref, pooled_ref):
    f32 = jnp.float32

    # ---- conv1 (+ReLU) fused with maxpool1 -------------------------------
    # cols_ref block: (1, 576, 32); rows are 4 slabs of 144, one per 2x2
    # pooling offset, each slab in (pi, pj) raster order (pi,pj in 0..11).
    w1 = w1_ref[...]                       # (32, 128)  (25 real rows, 20 real cols)
    b1 = b1_ref[...]                       # (1, 128)

    def conv1_slab(k):
        c = cols_ref[0, k * 144:(k + 1) * 144, :]          # (144, 32)
        return jnp.maximum(jnp.dot(c, w1, preferred_element_type=f32) + b1, 0.0)

    p1 = conv1_slab(0)
    for k in range(1, 4):
        p1 = jnp.maximum(p1, conv1_slab(k))                # (144, 128) pooled

    # Stash pool1 output (row = 12*i + j, i,j in 0..11) in VMEM scratch; pad
    # rows 144..159 with zeros so shifted window reads below stay finite.
    p1_ref[0:144, :] = p1
    p1_ref[144:160, :] = jnp.zeros((16, 128), f32)

    # ---- conv2 (+ReLU) via 25 shifted-window channel matmuls -------------
    # Output row r2 = 12*i + j (i in 0..7, j in 0..11; only j <= 7 is valid).
    acc2 = jnp.zeros((96, 128), f32)
    for t in range(25):
        dy, dx = divmod(t, 5)
        s = dy * 12 + dx
        acc2 = acc2 + jnp.dot(p1_ref[s:s + 96, :], w2_ref[t],
                              preferred_element_type=f32)
    a2 = jnp.maximum(acc2 + b2_ref[...], 0.0)              # (96, 128)

    # ---- maxpool2: selection matmul (no strided slicing) -----------------
    # sel is (64, 96): rows 16*k .. 16*k+15 pick pooling offset k's 16 spatial
    # positions (q = 4*pi + pj) out of the 96 conv2 rows.
    g = jnp.dot(sel_ref[...], a2, preferred_element_type=f32)   # (64, 128)
    pooled = jnp.maximum(jnp.maximum(g[0:16, :], g[16:32, :]),
                         jnp.maximum(g[32:48, :], g[48:64, :]))  # (16, 128)
    pooled_ref[...] = pooled

    # ---- fc1 (+ReLU): sum of 16 (1,128)x(128,512) matmuls ----------------
    # wf1 is pre-permuted at init so feature (q, c) matches torch's CHW flatten.
    accf = jnp.zeros((1, 512), f32)
    for q in range(16):
        accf = accf + jnp.dot(pooled_ref[pl.ds(q, 1), :], wf1_ref[q],
                              preferred_element_type=f32)
    h = jnp.maximum(accf + bf1_ref[...], 0.0)              # (1, 512)

    # ---- fc2 + log_softmax over the 10 real logits -----------------------
    logits = jnp.dot(h, wf2_ref[...], preferred_element_type=f32) + bf2_ref[...]
    lane = jax.lax.broadcasted_iota(jnp.int32, (1, 128), 1)
    valid = lane < 10
    lm = jnp.where(valid, logits, -1e30)
    m = jnp.max(lm, axis=1, keepdims=True)
    e = jnp.where(valid, jnp.exp(lm - m), 0.0)
    lse = jnp.log(jnp.sum(e, axis=1, keepdims=True))
    res = jnp.where(valid, lm - m - lse, 0.0)              # (1, 128)

    out_ref[0, :, :] = jnp.broadcast_to(res, (8, 128))     # lane-dense store


# ------------------------------ host wrapper -------------------------------

def sudoku_net_forward(x_nchw, p):
    N = x_nchw.shape[0]
    img = x_nchw[:, 0]                                     # (N, 28, 28), C=1

    # conv1 im2col on the raw (tiny) input, rows ordered as 4 pooling slabs
    # of 144 (slab = 2*di + dj), within a slab row = 12*pi + pj, so that pool1
    # becomes a contiguous max of 4 slabs inside the kernel.
    pats = jnp.stack([img[:, dy:dy + 24, dx:dx + 24]
                      for dy in range(5) for dx in range(5)], axis=-1)  # (N,24,24,25)
    pats = pats.reshape(N, 12, 2, 12, 2, 25).transpose(0, 2, 4, 1, 3, 5)
    cols1 = jnp.pad(pats.reshape(N, 576, 25), ((0, 0), (0, 0), (0, 7)))  # (N,576,32)

    out = pl.pallas_call(
        _sudoku_kernel,
        grid=(N,),
        out_shape=jax.ShapeDtypeStruct((N, 8, 128), jnp.float32),
        in_specs=[
            pl.BlockSpec((1, 576, 32), lambda n: (n, 0, 0)),   # per-image im2col
            pl.BlockSpec((64, 96), lambda n: (0, 0)),          # pool2 selection
            pl.BlockSpec((32, 128), lambda n: (0, 0)),         # conv1 weight
            pl.BlockSpec((1, 128), lambda n: (0, 0)),          # conv1 bias
            pl.BlockSpec((25, 128, 128), lambda n: (0, 0, 0)), # conv2 weight
            pl.BlockSpec((1, 128), lambda n: (0, 0)),          # conv2 bias
            pl.BlockSpec((16, 128, 512), lambda n: (0, 0, 0)), # fc1 weight
            pl.BlockSpec((1, 512), lambda n: (0, 0)),          # fc1 bias
            pl.BlockSpec((512, 128), lambda n: (0, 0)),        # fc2 weight
            pl.BlockSpec((1, 128), lambda n: (0, 0)),          # fc2 bias
        ],
        out_specs=pl.BlockSpec((1, 8, 128), lambda n: (n, 0, 0)),
        scratch_shapes=[pltpu.VMEM((160, 128), jnp.float32),   # pool1 output (padded)
                        pltpu.VMEM((16, 128), jnp.float32)],   # pool2 output
        compiler_params=pltpu.CompilerParams(
            dimension_semantics=("parallel",),                 # v7x: 1 image per TC
            vmem_limit_bytes=48 * 1024 * 1024),
    )(cols1, p["sel"], p["w1p"], p["b1p"], p["w2p"], p["b2p"],
      p["wf1p"], p["bf1p"], p["wf2p"], p["bf2p"])

    return out[:, 0, :10]                                   # (N, 10)


# --------------------- deterministic parameter init ------------------------

def init_params(key):
    k = jax.random.split(key, 8)
    # torch-layout tensors (kept for the pure-JAX reference check)
    w1_t = jax.random.normal(k[0], (20, 1, 5, 5), jnp.float32) * 0.10
    b1 = jax.random.normal(k[1], (20,), jnp.float32) * 0.10
    w2_t = jax.random.normal(k[2], (50, 20, 5, 5), jnp.float32) * 0.05
    b2 = jax.random.normal(k[3], (50,), jnp.float32) * 0.05
    wf1_t = jax.random.normal(k[4], (500, 800), jnp.float32) * 0.03
    bf1 = jax.random.normal(k[5], (500,), jnp.float32) * 0.03
    wf2_t = jax.random.normal(k[6], (10, 500), jnp.float32) * 0.05
    bf2 = jax.random.normal(k[7], (10,), jnp.float32) * 0.05

    # conv1: (oc,1,5,5) -> (kh*kw, oc), zero-padded to (32, 128)
    w1p = jnp.zeros((32, 128), jnp.float32).at[:25, :20].set(
        jnp.transpose(w1_t, (2, 3, 1, 0)).reshape(25, 20))
    b1p = jnp.zeros((1, 128), jnp.float32).at[0, :20].set(b1)

    # conv2: (oc,ic,5,5) -> per-offset (ic, oc), zero-padded to (25, 128, 128)
    w2p = jnp.zeros((25, 128, 128), jnp.float32).at[:, :20, :50].set(
        jnp.transpose(w2_t, (2, 3, 1, 0)).reshape(25, 20, 50))
    b2p = jnp.zeros((1, 128), jnp.float32).at[0, :50].set(b2)

    # fc1: torch in-feature index = c*16 + q (q = 4*pi + pj).  Re-layout the
    # weight as (q, c, o) once here so the kernel needs no activation transpose.
    wf1p = jnp.zeros((16, 128, 512), jnp.float32).at[:, :50, :500].set(
        jnp.transpose(wf1_t.reshape(500, 50, 16), (2, 1, 0)))
    bf1p = jnp.zeros((1, 512), jnp.float32).at[0, :500].set(bf1)

    # fc2: (10, 500) -> (in, out), zero-padded to (512, 128)
    wf2p = jnp.zeros((512, 128), jnp.float32).at[:500, :10].set(wf2_t.T)
    bf2p = jnp.zeros((1, 128), jnp.float32).at[0, :10].set(bf2)

    # pool2 selection matrix: row 16*(2*di+dj) + 4*pi+pj picks conv2 row
    # 12*(2*pi+di) + (2*pj+dj).
    sel = np.zeros((64, 96), np.float32)
    for di in range(2):
        for dj in range(2):
            for pi in range(4):
                for pj in range(4):
                    sel[16 * (2 * di + dj) + 4 * pi + pj,
                        12 * (2 * pi + di) + (2 * pj + dj)] = 1.0

    return dict(
        w1p=w1p, b1p=b1p, w2p=w2p, b2p=b2p,
        wf1p=wf1p, bf1p=bf1p, wf2p=wf2p, bf2p=bf2p,
        sel=jnp.asarray(sel),
        # torch layouts (reference only)
        w1_t=w1_t, b1=b1, w2_t=w2_t, b2=b2,
        wf1_t=wf1_t, bf1=bf1, wf2_t=wf2_t, bf2=bf2,
    )


# -------------------------- pure-JAX reference ------------------------------

def reference_forward(x, p):
    hp = jax.lax.Precision.HIGHEST
    y = jax.lax.conv_general_dilated(
        x, p["w1_t"], (1, 1), "VALID",
        dimension_numbers=("NCHW", "OIHW", "NCHW"), precision=hp)
    y = jnp.maximum(y + p["b1"][None, :, None, None], 0.0)
    y = jax.lax.reduce_window(y, -jnp.inf, jax.lax.max,
                              (1, 1, 2, 2), (1, 1, 2, 2), "VALID")
    y = jax.lax.conv_general_dilated(
        y, p["w2_t"], (1, 1), "VALID",
        dimension_numbers=("NCHW", "OIHW", "NCHW"), precision=hp)
    y = jnp.maximum(y + p["b2"][None, :, None, None], 0.0)
    y = jax.lax.reduce_window(y, -jnp.inf, jax.lax.max,
                              (1, 1, 2, 2), (1, 1, 2, 2), "VALID")
    y = y.reshape(y.shape[0], -1)                          # (N, 800), CHW order
    y = jnp.maximum(jnp.dot(y, p["wf1_t"].T, precision=hp) + p["bf1"], 0.0)
    y = jnp.dot(y, p["wf2_t"].T, precision=hp) + p["bf2"]
    return jax.nn.log_softmax(y, axis=1)


# --------------------------------- main -------------------------------------

if __name__ == "__main__":
    key = jax.random.PRNGKey(0)
    kx, kp = jax.random.split(key)
    x = jax.random.normal(kx, (2, 1, 28, 28), jnp.float32)   # NCHW, batch=2
    params = init_params(kp)

    out = jax.jit(sudoku_net_forward)(x, params)
    out = jax.block_until_ready(out)
    assert out.shape == (2, 10) and out.dtype == jnp.float32

    ref = jax.block_until_ready(reference_forward(x, params))
    assert jnp.allclose(out, ref, atol=5e-3, rtol=5e-3), (
        f"max abs err {jnp.max(jnp.abs(out - ref))}")
    # log-softmax rows must exponentiate-sum to 1
    assert jnp.allclose(jnp.sum(jnp.exp(out), axis=1), 1.0, atol=1e-4)

    print("KERNEL_OK")
</pallas_src>

<mosaic_0001>
module attributes {stable_mosaic.version = 11 : i64} {
  func.func @_sudoku_kernel(%arg0: i32, %arg1: memref<1x576x32xf32, #tpu.memory_space<vmem>>, %arg2: memref<64x96xf32, #tpu.memory_space<vmem>>, %arg3: memref<32x128xf32, #tpu.memory_space<vmem>>, %arg4: memref<1x128xf32, #tpu.memory_space<vmem>>, %arg5: memref<25x128x128xf32, #tpu.memory_space<vmem>>, %arg6: memref<1x128xf32, #tpu.memory_space<vmem>>, %arg7: memref<16x128x512xf32, #tpu.memory_space<vmem>>, %arg8: memref<1x512xf32, #tpu.memory_space<vmem>>, %arg9: memref<512x128xf32, #tpu.memory_space<vmem>>, %arg10: memref<1x128xf32, #tpu.memory_space<vmem>>, %arg11: memref<1x8x128xf32, #tpu.memory_space<vmem>>, %arg12: memref<160x128xf32, #tpu.memory_space<vmem>>, %arg13: memref<16x128xf32, #tpu.memory_space<vmem>>) attributes {dimension_semantics = [#tpu.dimension_semantics<parallel>], iteration_bounds = array<i64: 2>, scalar_prefetch = 0 : i64, scratch_operands = 2 : i64, tpu.core_type = #tpu.core_type<tc>, window_params = [{transform_indices = @transform_0, window_bounds = array<i64: 1, 576, 32>}, {pipeline_mode = #tpu.pipeline_mode<synchronous>, transform_indices = @transform_1, window_bounds = array<i64: 64, 96>}, {pipeline_mode = #tpu.pipeline_mode<synchronous>, transform_indices = @transform_2, window_bounds = array<i64: 32, 128>}, {pipeline_mode = #tpu.pipeline_mode<synchronous>, transform_indices = @transform_3, window_bounds = array<i64: 1, 128>}, {pipeline_mode = #tpu.pipeline_mode<synchronous>, transform_indices = @transform_4, window_bounds = array<i64: 25, 128, 128>}, {pipeline_mode = #tpu.pipeline_mode<synchronous>, transform_indices = @transform_5, window_bounds = array<i64: 1, 128>}, {pipeline_mode = #tpu.pipeline_mode<synchronous>, transform_indices = @transform_6, window_bounds = array<i64: 16, 128, 512>}, {pipeline_mode = #tpu.pipeline_mode<synchronous>, transform_indices = @transform_7, window_bounds = array<i64: 1, 512>}, {pipeline_mode = #tpu.pipeline_mode<synchronous>, transform_indices = @transform_8, window_bounds = array<i64: 512, 128>}, {pipeline_mode = #tpu.pipeline_mode<synchronous>, transform_indices = @transform_9, window_bounds = array<i64: 1, 128>}, {transform_indices = @transform_10, window_bounds = array<i64: 1, 8, 128>}]} {
    %c0 = arith.constant 0 : index
    %c0_0 = arith.constant 0 : index
    %0 = vector.load %arg3[%c0, %c0_0] : memref<32x128xf32, #tpu.memory_space<vmem>>, vector<32x128xf32>
    %c0_1 = arith.constant 0 : index
    %c0_2 = arith.constant 0 : index
    %1 = vector.load %arg4[%c0_1, %c0_2] : memref<1x128xf32, #tpu.memory_space<vmem>>, vector<1x128xf32>
    %c0_3 = arith.constant 0 : index
    %c0_4 = arith.constant 0 : index
    %c0_5 = arith.constant 0 : index
    %2 = vector.load %arg1[%c0_3, %c0_4, %c0_5] : memref<1x576x32xf32, #tpu.memory_space<vmem>>, vector<1x144x32xf32>
    %3 = vector.shape_cast %2 : vector<1x144x32xf32> to vector<144x32xf32>
    %cst = arith.constant dense<0.000000e+00> : vector<144x128xf32>
    %4 = tpu.matmul %3, %0, %cst {dimension_numbers = #tpu.dot_dimension_numbers<[1], [0], [0], [1], [0, 0, 1, 1], [], []>} : vector<144x32xf32>, vector<32x128xf32>, vector<144x128xf32> -> vector<144x128xf32>
    %5 = vector.broadcast %1 : vector<1x128xf32> to vector<144x128xf32>
    %6 = arith.addf %4, %5 : vector<144x128xf32>
    %cst_6 = arith.constant 0.000000e+00 : f32
    %7 = vector.broadcast %cst_6 : f32 to vector<144x128xf32>
    %8 = arith.maximumf %6, %7 : vector<144x128xf32>
    %c0_7 = arith.constant 0 : index
    %c144 = arith.constant 144 : index
    %c0_8 = arith.constant 0 : index
    %9 = vector.load %arg1[%c0_7, %c144, %c0_8] : memref<1x576x32xf32, #tpu.memory_space<vmem>>, vector<1x144x32xf32>
    %10 = vector.shape_cast %9 : vector<1x144x32xf32> to vector<144x32xf32>
    %cst_9 = arith.constant dense<0.000000e+00> : vector<144x128xf32>
    %11 = tpu.matmul %10, %0, %cst_9 {dimension_numbers = #tpu.dot_dimension_numbers<[1], [0], [0], [1], [0, 0, 1, 1], [], []>} : vector<144x32xf32>, vector<32x128xf32>, vector<144x128xf32> -> vector<144x128xf32>
    %12 = vector.broadcast %1 : vector<1x128xf32> to vector<144x128xf32>
    %13 = arith.addf %11, %12 : vector<144x128xf32>
    %cst_10 = arith.constant 0.000000e+00 : f32
    %14 = vector.broadcast %cst_10 : f32 to vector<144x128xf32>
    %15 = arith.maximumf %13, %14 : vector<144x128xf32>
    %16 = arith.maximumf %8, %15 : vector<144x128xf32>
    %c0_11 = arith.constant 0 : index
    %c288 = arith.constant 288 : index
    %c0_12 = arith.constant 0 : index
    %17 = vector.load %arg1[%c0_11, %c288, %c0_12] : memref<1x576x32xf32, #tpu.memory_space<vmem>>, vector<1x144x32xf32>
    %18 = vector.shape_cast %17 : vector<1x144x32xf32> to vector<144x32xf32>
    %cst_13 = arith.constant dense<0.000000e+00> : vector<144x128xf32>
    %19 = tpu.matmul %18, %0, %cst_13 {dimension_numbers = #tpu.dot_dimension_numbers<[1], [0], [0], [1], [0, 0, 1, 1], [], []>} : vector<144x32xf32>, vector<32x128xf32>, vector<144x128xf32> -> vector<144x128xf32>
    %20 = vector.broadcast %1 : vector<1x128xf32> to vector<144x128xf32>
    %21 = arith.addf %19, %20 : vector<144x128xf32>
    %cst_14 = arith.constant 0.000000e+00 : f32
    %22 = vector.broadcast %cst_14 : f32 to vector<144x128xf32>
    %23 = arith.maximumf %21, %22 : vector<144x128xf32>
    %24 = arith.maximumf %16, %23 : vector<144x128xf32>
    %c0_15 = arith.constant 0 : index
    %c432 = arith.constant 432 : index
    %c0_16 = arith.constant 0 : index
    %25 = vector.load %arg1[%c0_15, %c432, %c0_16] : memref<1x576x32xf32, #tpu.memory_space<vmem>>, vector<1x144x32xf32>
    %26 = vector.shape_cast %25 : vector<1x144x32xf32> to vector<144x32xf32>
    %cst_17 = arith.constant dense<0.000000e+00> : vector<144x128xf32>
    %27 = tpu.matmul %26, %0, %cst_17 {dimension_numbers = #tpu.dot_dimension_numbers<[1], [0], [0], [1], [0, 0, 1, 1], [], []>} : vector<144x32xf32>, vector<32x128xf32>, vector<144x128xf32> -> vector<144x128xf32>
    %28 = vector.broadcast %1 : vector<1x128xf32> to vector<144x128xf32>
    %29 = arith.addf %27, %28 : vector<144x128xf32>
    %cst_18 = arith.constant 0.000000e+00 : f32
    %30 = vector.broadcast %cst_18 : f32 to vector<144x128xf32>
    %31 = arith.maximumf %29, %30 : vector<144x128xf32>
    %32 = arith.maximumf %24, %31 : vector<144x128xf32>
    %c0_19 = arith.constant 0 : index
    %c0_20 = arith.constant 0 : index
    %33 = vector.load %arg12[%c0_19, %c0_20] : memref<160x128xf32, #tpu.memory_space<vmem>>, vector<144x128xf32>
    tpu.vector_store %arg12[%c0_19, %c0_20], %32 {strides = array<i32>} : memref<160x128xf32, #tpu.memory_space<vmem>>, vector<144x128xf32>,
    %cst_21 = arith.constant 0.000000e+00 : f32
    %34 = vector.broadcast %cst_21 : f32 to vector<16x128xf32>
    %c144_22 = arith.constant 144 : index
    %c0_23 = arith.constant 0 : index
    %35 = vector.load %arg12[%c144_22, %c0_23] : memref<160x128xf32, #tpu.memory_space<vmem>>, vector<16x128xf32>
    tpu.vector_store %arg12[%c144_22, %c0_23], %34 {strides = array<i32>} : memref<160x128xf32, #tpu.memory_space<vmem>>, vector<16x128xf32>,
    %cst_24 = arith.constant 0.000000e+00 : f32
    %36 = vector.broadcast %cst_24 : f32 to vector<96x128xf32>
    %c0_25 = arith.constant 0 : index
    %c0_26 = arith.constant 0 : index
    %37 = vector.load %arg12[%c0_25, %c0_26] : memref<160x128xf32, #tpu.memory_space<vmem>>, vector<96x128xf32>
    %c0_27 = arith.constant 0 : index
    %c0_28 = arith.constant 0 : index
    %c0_29 = arith.constant 0 : index
    %38 = vector.load %arg5[%c0_27, %c0_28, %c0_29] : memref<25x128x128xf32, #tpu.memory_space<vmem>>, vector<1x128x128xf32>
    %39 = vector.shape_cast %38 : vector<1x128x128xf32> to vector<128x128xf32>
    %cst_30 = arith.constant dense<0.000000e+00> : vector<96x128xf32>
    %40 = tpu.matmul %37, %39, %cst_30 {dimension_numbers = #tpu.dot_dimension_numbers<[1], [0], [0], [1], [0, 0, 1, 1], [], []>} : vector<96x128xf32>, vector<128x128xf32>, vector<96x128xf32> -> vector<96x128xf32>
    %41 = arith.addf %36, %40 : vector<96x128xf32>
    %c1 = arith.constant 1 : index
    %c0_31 = arith.constant 0 : index
    %42 = vector.load %arg12[%c1, %c0_31] : memref<160x128xf32, #tpu.memory_space<vmem>>, vector<96x128xf32>
    %c1_32 = arith.constant 1 : index
    %c0_33 = arith.constant 0 : index
    %c0_34 = arith.constant 0 : index
    %43 = vector.load %arg5[%c1_32, %c0_33, %c0_34] : memref<25x128x128xf32, #tpu.memory_space<vmem>>, vector<1x128x128xf32>
    %44 = vector.shape_cast %43 : vector<1x128x128xf32> to vector<128x128xf32>
    %cst_35 = arith.constant dense<0.000000e+00> : vector<96x128xf32>
    %45 = tpu.matmul %42, %44, %cst_35 {dimension_numbers = #tpu.dot_dimension_numbers<[1], [0], [0], [1], [0, 0, 1, 1], [], []>} : vector<96x128xf32>, vector<128x128xf32>, vector<96x128xf32> -> vector<96x128xf32>
    %46 = arith.addf %41, %45 : vector<96x128xf32>
    %c2 = arith.constant 2 : index
    %c0_36 = arith.constant 0 : index
    %47 = vector.load %arg12[%c2, %c0_36] : memref<160x128xf32, #tpu.memory_space<vmem>>, vector<96x128xf32>
    %c2_37 = arith.constant 2 : index
    %c0_38 = arith.constant 0 : index
    %c0_39 = arith.constant 0 : index
    %48 = vector.load %arg5[%c2_37, %c0_38, %c0_39] : memref<25x128x128xf32, #tpu.memory_space<vmem>>, vector<1x128x128xf32>
    %49 = vector.shape_cast %48 : vector<1x128x128xf32> to vector<128x128xf32>
    %cst_40 = arith.constant dense<0.000000e+00> : vector<96x128xf32>
    %50 = tpu.matmul %47, %49, %cst_40 {dimension_numbers = #tpu.dot_dimension_numbers<[1], [0], [0], [1], [0, 0, 1, 1], [], []>} : vector<96x128xf32>, vector<128x128xf32>, vector<96x128xf32> -> vector<96x128xf32>
    %51 = arith.addf %46, %50 : vector<96x128xf32>
    %c3 = arith.constant 3 : index
    %c0_41 = arith.constant 0 : index
    %52 = vector.load %arg12[%c3, %c0_41] : memref<160x128xf32, #tpu.memory_space<vmem>>, vector<96x128xf32>
    %c3_42 = arith.constant 3 : index
    %c0_43 = arith.constant 0 : index
    %c0_44 = arith.constant 0 : index
    %53 = vector.load %arg5[%c3_42, %c0_43, %c0_44] : memref<25x128x128xf32, #tpu.memory_space<vmem>>, vector<1x128x128xf32>
    %54 = vector.shape_cast %53 : vector<1x128x128xf32> to vector<128x128xf32>
    %cst_45 = arith.constant dense<0.000000e+00> : vector<96x128xf32>
    %55 = tpu.matmul %52, %54, %cst_45 {dimension_numbers = #tpu.dot_dimension_numbers<[1], [0], [0], [1], [0, 0, 1, 1], [], []>} : vector<96x128xf32>, vector<128x128xf32>, vector<96x128xf32> -> vector<96x128xf32>
    %56 = arith.addf %51, %55 : vector<96x128xf32>
    %c4 = arith.constant 4 : index
    %c0_46 = arith.constant 0 : index
    %57 = vector.load %arg12[%c4, %c0_46] : memref<160x128xf32, #tpu.memory_space<vmem>>, vector<96x128xf32>
    %c4_47 = arith.constant 4 : index
    %c0_48 = arith.constant 0 : index
    %c0_49 = arith.constant 0 : index
    %58 = vector.load %arg5[%c4_47, %c0_48, %c0_49] : memref<25x128x128xf32, #tpu.memory_space<vmem>>, vector<1x128x128xf32>
    %59 = vector.shape_cast %58 : vector<1x128x128xf32> to vector<128x128xf32>
    %cst_50 = arith.constant dense<0.000000e+00> : vector<96x128xf32>
    %60 = tpu.matmul %57, %59, %cst_50 {dimension_numbers = #tpu.dot_dimension_numbers<[1], [0], [0], [1], [0, 0, 1, 1], [], []>} : vector<96x128xf32>, vector<128x128xf32>, vector<96x128xf32> -> vector<96x128xf32>
    %61 = arith.addf %56, %60 : vector<96x128xf32>
    %c12 = arith.constant 12 : index
    %c0_51 = arith.constant 0 : index
    %62 = vector.load %arg12[%c12, %c0_51] : memref<160x128xf32, #tpu.memory_space<vmem>>, vector<96x128xf32>
    %c5 = arith.constant 5 : index
    %c0_52 = arith.constant 0 : index
    %c0_53 = arith.constant 0 : index
    %63 = vector.load %arg5[%c5, %c0_52, %c0_53] : memref<25x128x128xf32, #tpu.memory_space<vmem>>, vector<1x128x128xf32>
    %64 = vector.shape_cast %63 : vector<1x128x128xf32> to vector<128x128xf32>
    %cst_54 = arith.constant dense<0.000000e+00> : vector<96x128xf32>
    %65 = tpu.matmul %62, %64, %cst_54 {dimension_numbers = #tpu.dot_dimension_numbers<[1], [0], [0], [1], [0, 0, 1, 1], [], []>} : vector<96x128xf32>, vector<128x128xf32>, vector<96x128xf32> -> vector<96x128xf32>
    %66 = arith.addf %61, %65 : vector<96x128xf32>
    %c13 = arith.constant 13 : index
    %c0_55 = arith.constant 0 : index
    %67 = vector.load %arg12[%c13, %c0_55] : memref<160x128xf32, #tpu.memory_space<vmem>>, vector<96x128xf32>
    %c6 = arith.constant 6 : index
    %c0_56 = arith.constant 0 : index
    %c0_57 = arith.constant 0 : index
    %68 = vector.load %arg5[%c6, %c0_56, %c0_57] : memref<25x128x128xf32, #tpu.memory_space<vmem>>, vector<1x128x128xf32>
    %69 = vector.shape_cast %68 : vector<1x128x128xf32> to vector<128x128xf32>
    %cst_58 = arith.constant dense<0.000000e+00> : vector<96x128xf32>
    %70 = tpu.matmul %67, %69, %cst_58 {dimension_numbers = #tpu.dot_dimension_numbers<[1], [0], [0], [1], [0, 0, 1, 1], [], []>} : vector<96x128xf32>, vector<128x128xf32>, vector<96x128xf32> -> vector<96x128xf32>
    %71 = arith.addf %66, %70 : vector<96x128xf32>
    %c14 = arith.constant 14 : index
    %c0_59 = arith.constant 0 : index
    %72 = vector.load %arg12[%c14, %c0_59] : memref<160x128xf32, #tpu.memory_space<vmem>>, vector<96x128xf32>
    %c7 = arith.constant 7 : index
    %c0_60 = arith.constant 0 : index
    %c0_61 = arith.constant 0 : index
    %73 = vector.load %arg5[%c7, %c0_60, %c0_61] : memref<25x128x128xf32, #tpu.memory_space<vmem>>, vector<1x128x128xf32>
    %74 = vector.shape_cast %73 : vector<1x128x128xf32> to vector<128x128xf32>
    %cst_62 = arith.constant dense<0.000000e+00> : vector<96x128xf32>
    %75 = tpu.matmul %72, %74, %cst_62 {dimension_numbers = #tpu.dot_dimension_numbers<[1], [0], [0], [1], [0, 0, 1, 1], [], []>} : vector<96x128xf32>, vector<128x128xf32>, vector<96x128xf32> -> vector<96x128xf32>
    %76 = arith.addf %71, %75 : vector<96x128xf32>
    %c15 = arith.constant 15 : index
    %c0_63 = arith.constant 0 : index
    %77 = vector.load %arg12[%c15, %c0_63] : memref<160x128xf32, #tpu.memory_space<vmem>>, vector<96x128xf32>
    %c8 = arith.constant 8 : index
    %c0_64 = arith.constant 0 : index
    %c0_65 = arith.constant 0 : index
    %78 = vector.load %arg5[%c8, %c0_64, %c0_65] : memref<25x128x128xf32, #tpu.memory_space<vmem>>, vector<1x128x128xf32>
    %79 = vector.shape_cast %78 : vector<1x128x128xf32> to vector<128x128xf32>
    %cst_66 = arith.constant dense<0.000000e+00> : vector<96x128xf32>
    %80 = tpu.matmul %77, %79, %cst_66 {dimension_numbers = #tpu.dot_dimension_numbers<[1], [0], [0], [1], [0, 0, 1, 1], [], []>} : vector<96x128xf32>, vector<128x128xf32>, vector<96x128xf32> -> vector<96x128xf32>
    %81 = arith.addf %76, %80 : vector<96x128xf32>
    %c16 = arith.constant 16 : index
    %c0_67 = arith.constant 0 : index
    %82 = vector.load %arg12[%c16, %c0_67] : memref<160x128xf32, #tpu.memory_space<vmem>>, vector<96x128xf32>
    %c9 = arith.constant 9 : index
    %c0_68 = arith.constant 0 : index
    %c0_69 = arith.constant 0 : index
    %83 = vector.load %arg5[%c9, %c0_68, %c0_69] : memref<25x128x128xf32, #tpu.memory_space<vmem>>, vector<1x128x128xf32>
    %84 = vector.shape_cast %83 : vector<1x128x128xf32> to vector<128x128xf32>
    %cst_70 = arith.constant dense<0.000000e+00> : vector<96x128xf32>
    %85 = tpu.matmul %82, %84, %cst_70 {dimension_numbers = #tpu.dot_dimension_numbers<[1], [0], [0], [1], [0, 0, 1, 1], [], []>} : vector<96x128xf32>, vector<128x128xf32>, vector<96x128xf32> -> vector<96x128xf32>
    %86 = arith.addf %81, %85 : vector<96x128xf32>
    %c24 = arith.constant 24 : index
    %c0_71 = arith.constant 0 : index
    %87 = vector.load %arg12[%c24, %c0_71] : memref<160x128xf32, #tpu.memory_space<vmem>>, vector<96x128xf32>
    %c10 = arith.constant 10 : index
    %c0_72 = arith.constant 0 : index
    %c0_73 = arith.constant 0 : index
    %88 = vector.load %arg5[%c10, %c0_72, %c0_73] : memref<25x128x128xf32, #tpu.memory_space<vmem>>, vector<1x128x128xf32>
    %89 = vector.shape_cast %88 : vector<1x128x128xf32> to vector<128x128xf32>
    %cst_74 = arith.constant dense<0.000000e+00> : vector<96x128xf32>
    %90 = tpu.matmul %87, %89, %cst_74 {dimension_numbers = #tpu.dot_dimension_numbers<[1], [0], [0], [1], [0, 0, 1, 1], [], []>} : vector<96x128xf32>, vector<128x128xf32>, vector<96x128xf32> -> vector<96x128xf32>
    %91 = arith.addf %86, %90 : vector<96x128xf32>
    %c25 = arith.constant 25 : index
    %c0_75 = arith.constant 0 : index
    %92 = vector.load %arg12[%c25, %c0_75] : memref<160x128xf32, #tpu.memory_space<vmem>>, vector<96x128xf32>
    %c11 = arith.constant 11 : index
    %c0_76 = arith.constant 0 : index
    %c0_77 = arith.constant 0 : index
    %93 = vector.load %arg5[%c11, %c0_76, %c0_77] : memref<25x128x128xf32, #tpu.memory_space<vmem>>, vector<1x128x128xf32>
    %94 = vector.shape_cast %93 : vector<1x128x128xf32> to vector<128x128xf32>
    %cst_78 = arith.constant dense<0.000000e+00> : vector<96x128xf32>
    %95 = tpu.matmul %92, %94, %cst_78 {dimension_numbers = #tpu.dot_dimension_numbers<[1], [0], [0], [1], [0, 0, 1, 1], [], []>} : vector<96x128xf32>, vector<128x128xf32>, vector<96x128xf32> -> vector<96x128xf32>
    %96 = arith.addf %91, %95 : vector<96x128xf32>
    %c26 = arith.constant 26 : index
    %c0_79 = arith.constant 0 : index
    %97 = vector.load %arg12[%c26, %c0_79] : memref<160x128xf32, #tpu.memory_space<vmem>>, vector<96x128xf32>
    %c12_80 = arith.constant 12 : index
    %c0_81 = arith.constant 0 : index
    %c0_82 = arith.constant 0 : index
    %98 = vector.load %arg5[%c12_80, %c0_81, %c0_82] : memref<25x128x128xf32, #tpu.memory_space<vmem>>, vector<1x128x128xf32>
    %99 = vector.shape_cast %98 : vector<1x128x128xf32> to vector<128x128xf32>
    %cst_83 = arith.constant dense<0.000000e+00> : vector<96x128xf32>
    %100 = tpu.matmul %97, %99, %cst_83 {dimension_numbers = #tpu.dot_dimension_numbers<[1], [0], [0], [1], [0, 0, 1, 1], [], []>} : vector<96x128xf32>, vector<128x128xf32>, vector<96x128xf32> -> vector<96x128xf32>
    %101 = arith.addf %96, %100 : vector<96x128xf32>
    %c27 = arith.constant 27 : index
    %c0_84 = arith.constant 0 : index
    %102 = vector.load %arg12[%c27, %c0_84] : memref<160x128xf32, #tpu.memory_space<vmem>>, vector<96x128xf32>
    %c13_85 = arith.constant 13 : index
    %c0_86 = arith.constant 0 : index
    %c0_87 = arith.constant 0 : index
    %103 = vector.load %arg5[%c13_85, %c0_86, %c0_87] : memref<25x128x128xf32, #tpu.memory_space<vmem>>, vector<1x128x128xf32>
    %104 = vector.shape_cast %103 : vector<1x128x128xf32> to vector<128x128xf32>
    %cst_88 = arith.constant dense<0.000000e+00> : vector<96x128xf32>
    %105 = tpu.matmul %102, %104, %cst_88 {dimension_numbers = #tpu.dot_dimension_numbers<[1], [0], [0], [1], [0, 0, 1, 1], [], []>} : vector<96x128xf32>, vector<128x128xf32>, vector<96x128xf32> -> vector<96x128xf32>
    %106 = arith.addf %101, %105 : vector<96x128xf32>
    %c28 = arith.constant 28 : index
    %c0_89 = arith.constant 0 : index
    %107 = vector.load %arg12[%c28, %c0_89] : memref<160x128xf32, #tpu.memory_space<vmem>>, vector<96x128xf32>
    %c14_90 = arith.constant 14 : index
    %c0_91 = arith.constant 0 : index
    %c0_92 = arith.constant 0 : index
    %108 = vector.load %arg5[%c14_90, %c0_91, %c0_92] : memref<25x128x128xf32, #tpu.memory_space<vmem>>, vector<1x128x128xf32>
    %109 = vector.shape_cast %108 : vector<1x128x128xf32> to vector<128x128xf32>
    %cst_93 = arith.constant dense<0.000000e+00> : vector<96x128xf32>
    %110 = tpu.matmul %107, %109, %cst_93 {dimension_numbers = #tpu.dot_dimension_numbers<[1], [0], [0], [1], [0, 0, 1, 1], [], []>} : vector<96x128xf32>, vector<128x128xf32>, vector<96x128xf32> -> vector<96x128xf32>
    %111 = arith.addf %106, %110 : vector<96x128xf32>
    %c36 = arith.constant 36 : index
    %c0_94 = arith.constant 0 : index
    %112 = vector.load %arg12[%c36, %c0_94] : memref<160x128xf32, #tpu.memory_space<vmem>>, vector<96x128xf32>
    %c15_95 = arith.constant 15 : index
    %c0_96 = arith.constant 0 : index
    %c0_97 = arith.constant 0 : index
    %113 = vector.load %arg5[%c15_95, %c0_96, %c0_97] : memref<25x128x128xf32, #tpu.memory_space<vmem>>, vector<1x128x128xf32>
    %114 = vector.shape_cast %113 : vector<1x128x128xf32> to vector<128x128xf32>
    %cst_98 = arith.constant dense<0.000000e+00> : vector<96x128xf32>
    %115 = tpu.matmul %112, %114, %cst_98 {dimension_numbers = #tpu.dot_dimension_numbers<[1], [0], [0], [1], [0, 0, 1, 1], [], []>} : vector<96x128xf32>, vector<128x128xf32>, vector<96x128xf32> -> vector<96x128xf32>
    %116 = arith.addf %111, %115 : vector<96x128xf32>
    %c37 = arith.constant 37 : index
    %c0_99 = arith.constant 0 : index
    %117 = vector.load %arg12[%c37, %c0_99] : memref<160x128xf32, #tpu.memory_space<vmem>>, vector<96x128xf32>
    %c16_100 = arith.constant 16 : index
    %c0_101 = arith.constant 0 : index
    %c0_102 = arith.constant 0 : index
    %118 = vector.load %arg5[%c16_100, %c0_101, %c0_102] : memref<25x128x128xf32, #tpu.memory_space<vmem>>, vector<1x128x128xf32>
    %119 = vector.shape_cast %118 : vector<1x128x128xf32> to vector<128x128xf32>
    %cst_103 = arith.constant dense<0.000000e+00> : vector<96x128xf32>
    %120 = tpu.matmul %117, %119, %cst_103 {dimension_numbers = #tpu.dot_dimension_numbers<[1], [0], [0], [1], [0, 0, 1, 1], [], []>} : vector<96x128xf32>, vector<128x128xf32>, vector<96x128xf32> -> vector<96x128xf32>
    %121 = arith.addf %116, %120 : vector<96x128xf32>
    %c38 = arith.constant 38 : index
    %c0_104 = arith.constant 0 : index
    %122 = vector.load %arg12[%c38, %c0_104] : memref<160x128xf32, #tpu.memory_space<vmem>>, vector<96x128xf32>
    %c17 = arith.constant 17 : index
    %c0_105 = arith.constant 0 : index
    %c0_106 = arith.constant 0 : index
    %123 = vector.load %arg5[%c17, %c0_105, %c0_106] : memref<25x128x128xf32, #tpu.memory_space<vmem>>, vector<1x128x128xf32>
    %124 = vector.shape_cast %123 : vector<1x128x128xf32> to vector<128x128xf32>
    %cst_107 = arith.constant dense<0.000000e+00> : vector<96x128xf32>
    %125 = tpu.matmul %122, %124, %cst_107 {dimension_numbers = #tpu.dot_dimension_numbers<[1], [0], [0], [1], [0, 0, 1, 1], [], []>} : vector<96x128xf32>, vector<128x128xf32>, vector<96x128xf32> -> vector<96x128xf32>
    %126 = arith.addf %121, %125 : vector<96x128xf32>
    %c39 = arith.constant 39 : index
    %c0_108 = arith.constant 0 : index
    %127 = vector.load %arg12[%c39, %c0_108] : memref<160x128xf32, #tpu.memory_space<vmem>>, vector<96x128xf32>
    %c18 = arith.constant 18 : index
    %c0_109 = arith.constant 0 : index
    %c0_110 = arith.constant 0 : index
    %128 = vector.load %arg5[%c18, %c0_109, %c0_110] : memref<25x128x128xf32, #tpu.memory_space<vmem>>, vector<1x128x128xf32>
    %129 = vector.shape_cast %128 : vector<1x128x128xf32> to vector<128x128xf32>
    %cst_111 = arith.constant dense<0.000000e+00> : vector<96x128xf32>
    %130 = tpu.matmul %127, %129, %cst_111 {dimension_numbers = #tpu.dot_dimension_numbers<[1], [0], [0], [1], [0, 0, 1, 1], [], []>} : vector<96x128xf32>, vector<128x128xf32>, vector<96x128xf32> -> vector<96x128xf32>
    %131 = arith.addf %126, %130 : vector<96x128xf32>
    %c40 = arith.constant 40 : index
    %c0_112 = arith.constant 0 : index
    %132 = vector.load %arg12[%c40, %c0_112] : memref<160x128xf32, #tpu.memory_space<vmem>>, vector<96x128xf32>
    %c19 = arith.constant 19 : index
    %c0_113 = arith.constant 0 : index
    %c0_114 = arith.constant 0 : index
    %133 = vector.load %arg5[%c19, %c0_113, %c0_114] : memref<25x128x128xf32, #tpu.memory_space<vmem>>, vector<1x128x128xf32>
    %134 = vector.shape_cast %133 : vector<1x128x128xf32> to vector<128x128xf32>
    %cst_115 = arith.constant dense<0.000000e+00> : vector<96x128xf32>
    %135 = tpu.matmul %132, %134, %cst_115 {dimension_numbers = #tpu.dot_dimension_numbers<[1], [0], [0], [1], [0, 0, 1, 1], [], []>} : vector<96x128xf32>, vector<128x128xf32>, vector<96x128xf32> -> vector<96x128xf32>
    %136 = arith.addf %131, %135 : vector<96x128xf32>
    %c48 = arith.constant 48 : index
    %c0_116 = arith.constant 0 : index
    %137 = vector.load %arg12[%c48, %c0_116] : memref<160x128xf32, #tpu.memory_space<vmem>>, vector<96x128xf32>
    %c20 = arith.constant 20 : index
    %c0_117 = arith.constant 0 : index
    %c0_118 = arith.constant 0 : index
    %138 = vector.load %arg5[%c20, %c0_117, %c0_118] : memref<25x128x128xf32, #tpu.memory_space<vmem>>, vector<1x128x128xf32>
    %139 = vector.shape_cast %138 : vector<1x128x128xf32> to vector<128x128xf32>
    %cst_119 = arith.constant dense<0.000000e+00> : vector<96x128xf32>
    %140 = tpu.matmul %137, %139, %cst_119 {dimension_numbers = #tpu.dot_dimension_numbers<[1], [0], [0], [1], [0, 0, 1, 1], [], []>} : vector<96x128xf32>, vector<128x128xf32>, vector<96x128xf32> -> vector<96x128xf32>
    %141 = arith.addf %136, %140 : vector<96x128xf32>
    %c49 = arith.constant 49 : index
    %c0_120 = arith.constant 0 : index
    %142 = vector.load %arg12[%c49, %c0_120] : memref<160x128xf32, #tpu.memory_space<vmem>>, vector<96x128xf32>
    %c21 = arith.constant 21 : index
    %c0_121 = arith.constant 0 : index
    %c0_122 = arith.constant 0 : index
    %143 = vector.load %arg5[%c21, %c0_121, %c0_122] : memref<25x128x128xf32, #tpu.memory_space<vmem>>, vector<1x128x128xf32>
    %144 = vector.shape_cast %143 : vector<1x128x128xf32> to vector<128x128xf32>
    %cst_123 = arith.constant dense<0.000000e+00> : vector<96x128xf32>
    %145 = tpu.matmul %142, %144, %cst_123 {dimension_numbers = #tpu.dot_dimension_numbers<[1], [0], [0], [1], [0, 0, 1, 1], [], []>} : vector<96x128xf32>, vector<128x128xf32>, vector<96x128xf32> -> vector<96x128xf32>
    %146 = arith.addf %141, %145 : vector<96x128xf32>
    %c50 = arith.constant 50 : index
    %c0_124 = arith.constant 0 : index
    %147 = vector.load %arg12[%c50, %c0_124] : memref<160x128xf32, #tpu.memory_space<vmem>>, vector<96x128xf32>
    %c22 = arith.constant 22 : index
    %c0_125 = arith.constant 0 : index
    %c0_126 = arith.constant 0 : index
    %148 = vector.load %arg5[%c22, %c0_125, %c0_126] : memref<25x128x128xf32, #tpu.memory_space<vmem>>, vector<1x128x128xf32>
    %149 = vector.shape_cast %148 : vector<1x128x128xf32> to vector<128x128xf32>
    %cst_127 = arith.constant dense<0.000000e+00> : vector<96x128xf32>
    %150 = tpu.matmul %147, %149, %cst_127 {dimension_numbers = #tpu.dot_dimension_numbers<[1], [0], [0], [1], [0, 0, 1, 1], [], []>} : vector<96x128xf32>, vector<128x128xf32>, vector<96x128xf32> -> vector<96x128xf32>
    %151 = arith.addf %146, %150 : vector<96x128xf32>
    %c51 = arith.constant 51 : index
    %c0_128 = arith.constant 0 : index
    %152 = vector.load %arg12[%c51, %c0_128] : memref<160x128xf32, #tpu.memory_space<vmem>>, vector<96x128xf32>
    %c23 = arith.constant 23 : index
    %c0_129 = arith.constant 0 : index
    %c0_130 = arith.constant 0 : index
    %153 = vector.load %arg5[%c23, %c0_129, %c0_130] : memref<25x128x128xf32, #tpu.memory_space<vmem>>, vector<1x128x128xf32>
    %154 = vector.shape_cast %153 : vector<1x128x128xf32> to vector<128x128xf32>
    %cst_131 = arith.constant dense<0.000000e+00> : vector<96x128xf32>
    %155 = tpu.matmul %152, %154, %cst_131 {dimension_numbers = #tpu.dot_dimension_numbers<[1], [0], [0], [1], [0, 0, 1, 1], [], []>} : vector<96x128xf32>, vector<128x128xf32>, vector<96x128xf32> -> vector<96x128xf32>
    %156 = arith.addf %151, %155 : vector<96x128xf32>
    %c52 = arith.constant 52 : index
    %c0_132 = arith.constant 0 : index
    %157 = vector.load %arg12[%c52, %c0_132] : memref<160x128xf32, #tpu.memory_space<vmem>>, vector<96x128xf32>
    %c24_133 = arith.constant 24 : index
    %c0_134 = arith.constant 0 : index
    %c0_135 = arith.constant 0 : index
    %158 = vector.load %arg5[%c24_133, %c0_134, %c0_135] : memref<25x128x128xf32, #tpu.memory_space<vmem>>, vector<1x128x128xf32>
    %159 = vector.shape_cast %158 : vector<1x128x128xf32> to vector<128x128xf32>
    %cst_136 = arith.constant dense<0.000000e+00> : vector<96x128xf32>
    %160 = tpu.matmul %157, %159, %cst_136 {dimension_numbers = #tpu.dot_dimension_numbers<[1], [0], [0], [1], [0, 0, 1, 1], [], []>} : vector<96x128xf32>, vector<128x128xf32>, vector<96x128xf32> -> vector<96x128xf32>
    %161 = arith.addf %156, %160 : vector<96x128xf32>
    %c0_137 = arith.constant 0 : index
    %c0_138 = arith.constant 0 : index
    %162 = vector.load %arg6[%c0_137, %c0_138] : memref<1x128xf32, #tpu.memory_space<vmem>>, vector<1x128xf32>
    %163 = vector.broadcast %162 : vector<1x128xf32> to vector<96x128xf32>
    %164 = arith.addf %161, %163 : vector<96x128xf32>
    %cst_139 = arith.constant 0.000000e+00 : f32
    %165 = vector.broadcast %cst_139 : f32 to vector<96x128xf32>
    %166 = arith.maximumf %164, %165 : vector<96x128xf32>
    %c0_140 = arith.constant 0 : index
    %c0_141 = arith.constant 0 : index
    %167 = vector.load %arg2[%c0_140, %c0_141] : memref<64x96xf32, #tpu.memory_space<vmem>>, vector<64x96xf32>
    %cst_142 = arith.constant dense<0.000000e+00> : vector<64x128xf32>
    %168 = tpu.matmul %167, %166, %cst_142 {dimension_numbers = #tpu.dot_dimension_numbers<[1], [0], [0], [1], [0, 0, 1, 1], [], []>} : vector<64x96xf32>, vector<96x128xf32>, vector<64x128xf32> -> vector<64x128xf32>
    %169 = vector.extract_strided_slice %168 {offsets = [0, 0], sizes = [16, 128], strides = [1, 1]} : vector<64x128xf32> to vector<16x128xf32>
    %170 = vector.extract_strided_slice %168 {offsets = [16, 0], sizes = [16, 128], strides = [1, 1]} : vector<64x128xf32> to vector<16x128xf32>
    %171 = arith.maximumf %169, %170 : vector<16x128xf32>
    %172 = vector.extract_strided_slice %168 {offsets = [32, 0], sizes = [16, 128], strides = [1, 1]} : vector<64x128xf32> to vector<16x128xf32>
    %173 = vector.extract_strided_slice %168 {offsets = [48, 0], sizes = [16, 128], strides = [1, 1]} : vector<64x128xf32> to vector<16x128xf32>
    %174 = arith.maximumf %172, %173 : vector<16x128xf32>
    %175 = arith.maximumf %171, %174 : vector<16x128xf32>
    %c0_143 = arith.constant 0 : index
    %c0_144 = arith.constant 0 : index
    %176 = vector.load %arg13[%c0_143, %c0_144] : memref<16x128xf32, #tpu.memory_space<vmem>>, vector<16x128xf32>
    tpu.vector_store %arg13[%c0_143, %c0_144], %175 {strides = array<i32>} : memref<16x128xf32, #tpu.memory_space<vmem>>, vector<16x128xf32>,
    %cst_145 = arith.constant 0.000000e+00 : f32
    %177 = vector.broadcast %cst_145 : f32 to vector<1x512xf32>
    %c0_146 = arith.constant 0 : index
    %c0_147 = arith.constant 0 : index
    %178 = vector.load %arg13[%c0_146, %c0_147] : memref<16x128xf32, #tpu.memory_space<vmem>>, vector<1x128xf32>
    %c0_148 = arith.constant 0 : index
    %c0_149 = arith.constant 0 : index
    %c0_150 = arith.constant 0 : index
    %179 = vector.load %arg7[%c0_148, %c0_149, %c0_150] : memref<16x128x512xf32, #tpu.memory_space<vmem>>, vector<1x128x512xf32>
    %180 = vector.shape_cast %179 : vector<1x128x512xf32> to vector<128x512xf32>
    %cst_151 = arith.constant dense<0.000000e+00> : vector<1x512xf32>
    %181 = tpu.matmul %178, %180, %cst_151 {dimension_numbers = #tpu.dot_dimension_numbers<[1], [0], [0], [1], [0, 0, 1, 1], [], []>} : vector<1x128xf32>, vector<128x512xf32>, vector<1x512xf32> -> vector<1x512xf32>
    %182 = arith.addf %177, %181 : vector<1x512xf32>
    %c1_152 = arith.constant 1 : index
    %c0_153 = arith.constant 0 : index
    %183 = vector.load %arg13[%c1_152, %c0_153] : memref<16x128xf32, #tpu.memory_space<vmem>>, vector<1x128xf32>
    %c1_154 = arith.constant 1 : index
    %c0_155 = arith.constant 0 : index
    %c0_156 = arith.constant 0 : index
    %184 = vector.load %arg7[%c1_154, %c0_155, %c0_156] : memref<16x128x512xf32, #tpu.memory_space<vmem>>, vector<1x128x512xf32>
    %185 = vector.shape_cast %184 : vector<1x128x512xf32> to vector<128x512xf32>
    %cst_157 = arith.constant dense<0.000000e+00> : vector<1x512xf32>
    %186 = tpu.matmul %183, %185, %cst_157 {dimension_numbers = #tpu.dot_dimension_numbers<[1], [0], [0], [1], [0, 0, 1, 1], [], []>} : vector<1x128xf32>, vector<128x512xf32>, vector<1x512xf32> -> vector<1x512xf32>
    %187 = arith.addf %182, %186 : vector<1x512xf32>
    %c2_158 = arith.constant 2 : index
    %c0_159 = arith.constant 0 : index
    %188 = vector.load %arg13[%c2_158, %c0_159] : memref<16x128xf32, #tpu.memory_space<vmem>>, vector<1x128xf32>
    %c2_160 = arith.constant 2 : index
    %c0_161 = arith.constant 0 : index
    %c0_162 = arith.constant 0 : index
    %189 = vector.load %arg7[%c2_160, %c0_161, %c0_162] : memref<16x128x512xf32, #tpu.memory_space<vmem>>, vector<1x128x512xf32>
    %190 = vector.shape_cast %189 : vector<1x128x512xf32> to vector<128x512xf32>
    %cst_163 = arith.constant dense<0.000000e+00> : vector<1x512xf32>
    %191 = tpu.matmul %188, %190, %cst_163 {dimension_numbers = #tpu.dot_dimension_numbers<[1], [0], [0], [1], [0, 0, 1, 1], [], []>} : vector<1x128xf32>, vector<128x512xf32>, vector<1x512xf32> -> vector<1x512xf32>
    %192 = arith.addf %187, %191 : vector<1x512xf32>
    %c3_164 = arith.constant 3 : index
    %c0_165 = arith.constant 0 : index
    %193 = vector.load %arg13[%c3_164, %c0_165] : memref<16x128xf32, #tpu.memory_space<vmem>>, vector<1x128xf32>
    %c3_166 = arith.constant 3 : index
    %c0_167 = arith.constant 0 : index
    %c0_168 = arith.constant 0 : index
    %194 = vector.load %arg7[%c3_166, %c0_167, %c0_168] : memref<16x128x512xf32, #tpu.memory_space<vmem>>, vector<1x128x512xf32>
    %195 = vector.shape_cast %194 : vector<1x128x512xf32> to vector<128x512xf32>
    %cst_169 = arith.constant dense<0.000000e+00> : vector<1x512xf32>
    %196 = tpu.matmul %193, %195, %cst_169 {dimension_numbers = #tpu.dot_dimension_numbers<[1], [0], [0], [1], [0, 0, 1, 1], [], []>} : vector<1x128xf32>, vector<128x512xf32>, vector<1x512xf32> -> vector<1x512xf32>
    %197 = arith.addf %192, %196 : vector<1x512xf32>
    %c4_170 = arith.constant 4 : index
    %c0_171 = arith.constant 0 : index
    %198 = vector.load %arg13[%c4_170, %c0_171] : memref<16x128xf32, #tpu.memory_space<vmem>>, vector<1x128xf32>
    %c4_172 = arith.constant 4 : index
    %c0_173 = arith.constant 0 : index
    %c0_174 = arith.constant 0 : index
    %199 = vector.load %arg7[%c4_172, %c0_173, %c0_174] : memref<16x128x512xf32, #tpu.memory_space<vmem>>, vector<1x128x512xf32>
    %200 = vector.shape_cast %199 : vector<1x128x512xf32> to vector<128x512xf32>
    %cst_175 = arith.constant dense<0.000000e+00> : vector<1x512xf32>
    %201 = tpu.matmul %198, %200, %cst_175 {dimension_numbers = #tpu.dot_dimension_numbers<[1], [0], [0], [1], [0, 0, 1, 1], [], []>} : vector<1x128xf32>, vector<128x512xf32>, vector<1x512xf32> -> vector<1x512xf32>
    %202 = arith.addf %197, %201 : vector<1x512xf32>
    %c5_176 = arith.constant 5 : index
    %c0_177 = arith.constant 0 : index
    %203 = vector.load %arg13[%c5_176, %c0_177] : memref<16x128xf32, #tpu.memory_space<vmem>>, vector<1x128xf32>
    %c5_178 = arith.constant 5 : index
    %c0_179 = arith.constant 0 : index
    %c0_180 = arith.constant 0 : index
    %204 = vector.load %arg7[%c5_178, %c0_179, %c0_180] : memref<16x128x512xf32, #tpu.memory_space<vmem>>, vector<1x128x512xf32>
    %205 = vector.shape_cast %204 : vector<1x128x512xf32> to vector<128x512xf32>
    %cst_181 = arith.constant dense<0.000000e+00> : vector<1x512xf32>
    %206 = tpu.matmul %203, %205, %cst_181 {dimension_numbers = #tpu.dot_dimension_numbers<[1], [0], [0], [1], [0, 0, 1, 1], [], []>} : vector<1x128xf32>, vector<128x512xf32>, vector<1x512xf32> -> vector<1x512xf32>
    %207 = arith.addf %202, %206 : vector<1x512xf32>
    %c6_182 = arith.constant 6 : index
    %c0_183 = arith.constant 0 : index
    %208 = vector.load %arg13[%c6_182, %c0_183] : memref<16x128xf32, #tpu.memory_space<vmem>>, vector<1x128xf32>
    %c6_184 = arith.constant 6 : index
    %c0_185 = arith.constant 0 : index
    %c0_186 = arith.constant 0 : index
    %209 = vector.load %arg7[%c6_184, %c0_185, %c0_186] : memref<16x128x512xf32, #tpu.memory_space<vmem>>, vector<1x128x512xf32>
    %210 = vector.shape_cast %209 : vector<1x128x512xf32> to vector<128x512xf32>
    %cst_187 = arith.constant dense<0.000000e+00> : vector<1x512xf32>
    %211 = tpu.matmul %208, %210, %cst_187 {dimension_numbers = #tpu.dot_dimension_numbers<[1], [0], [0], [1], [0, 0, 1, 1], [], []>} : vector<1x128xf32>, vector<128x512xf32>, vector<1x512xf32> -> vector<1x512xf32>
    %212 = arith.addf %207, %211 : vector<1x512xf32>
    %c7_188 = arith.constant 7 : index
    %c0_189 = arith.constant 0 : index
    %213 = vector.load %arg13[%c7_188, %c0_189] : memref<16x128xf32, #tpu.memory_space<vmem>>, vector<1x128xf32>
    %c7_190 = arith.constant 7 : index
    %c0_191 = arith.constant 0 : index
    %c0_192 = arith.constant 0 : index
    %214 = vector.load %arg7[%c7_190, %c0_191, %c0_192] : memref<16x128x512xf32, #tpu.memory_space<vmem>>, vector<1x128x512xf32>
    %215 = vector.shape_cast %214 : vector<1x128x512xf32> to vector<128x512xf32>
    %cst_193 = arith.constant dense<0.000000e+00> : vector<1x512xf32>
    %216 = tpu.matmul %213, %215, %cst_193 {dimension_numbers = #tpu.dot_dimension_numbers<[1], [0], [0], [1], [0, 0, 1, 1], [], []>} : vector<1x128xf32>, vector<128x512xf32>, vector<1x512xf32> -> vector<1x512xf32>
    %217 = arith.addf %212, %216 : vector<1x512xf32>
    %c8_194 = arith.constant 8 : index
    %c0_195 = arith.constant 0 : index
    %218 = vector.load %arg13[%c8_194, %c0_195] : memref<16x128xf32, #tpu.memory_space<vmem>>, vector<1x128xf32>
    %c8_196 = arith.constant 8 : index
    %c0_197 = arith.constant 0 : index
    %c0_198 = arith.constant 0 : index
    %219 = vector.load %arg7[%c8_196, %c0_197, %c0_198] : memref<16x128x512xf32, #tpu.memory_space<vmem>>, vector<1x128x512xf32>
    %220 = vector.shape_cast %219 : vector<1x128x512xf32> to vector<128x512xf32>
    %cst_199 = arith.constant dense<0.000000e+00> : vector<1x512xf32>
    %221 = tpu.matmul %218, %220, %cst_199 {dimension_numbers = #tpu.dot_dimension_numbers<[1], [0], [0], [1], [0, 0, 1, 1], [], []>} : vector<1x128xf32>, vector<128x512xf32>, vector<1x512xf32> -> vector<1x512xf32>
    %222 = arith.addf %217, %221 : vector<1x512xf32>
    %c9_200 = arith.constant 9 : index
    %c0_201 = arith.constant 0 : index
    %223 = vector.load %arg13[%c9_200, %c0_201] : memref<16x128xf32, #tpu.memory_space<vmem>>, vector<1x128xf32>
    %c9_202 = arith.constant 9 : index
    %c0_203 = arith.constant 0 : index
    %c0_204 = arith.constant 0 : index
    %224 = vector.load %arg7[%c9_202, %c0_203, %c0_204] : memref<16x128x512xf32, #tpu.memory_space<vmem>>, vector<1x128x512xf32>
    %225 = vector.shape_cast %224 : vector<1x128x512xf32> to vector<128x512xf32>
    %cst_205 = arith.constant dense<0.000000e+00> : vector<1x512xf32>
    %226 = tpu.matmul %223, %225, %cst_205 {dimension_numbers = #tpu.dot_dimension_numbers<[1], [0], [0], [1], [0, 0, 1, 1], [], []>} : vector<1x128xf32>, vector<128x512xf32>, vector<1x512xf32> -> vector<1x512xf32>
    %227 = arith.addf %222, %226 : vector<1x512xf32>
    %c10_206 = arith.constant 10 : index
    %c0_207 = arith.constant 0 : index
    %228 = vector.load %arg13[%c10_206, %c0_207] : memref<16x128xf32, #tpu.memory_space<vmem>>, vector<1x128xf32>
    %c10_208 = arith.constant 10 : index
    %c0_209 = arith.constant 0 : index
    %c0_210 = arith.constant 0 : index
    %229 = vector.load %arg7[%c10_208, %c0_209, %c0_210] : memref<16x128x512xf32, #tpu.memory_space<vmem>>, vector<1x128x512xf32>
    %230 = vector.shape_cast %229 : vector<1x128x512xf32> to vector<128x512xf32>
    %cst_211 = arith.constant dense<0.000000e+00> : vector<1x512xf32>
    %231 = tpu.matmul %228, %230, %cst_211 {dimension_numbers = #tpu.dot_dimension_numbers<[1], [0], [0], [1], [0, 0, 1, 1], [], []>} : vector<1x128xf32>, vector<128x512xf32>, vector<1x512xf32> -> vector<1x512xf32>
    %232 = arith.addf %227, %231 : vector<1x512xf32>
    %c11_212 = arith.constant 11 : index
    %c0_213 = arith.constant 0 : index
    %233 = vector.load %arg13[%c11_212, %c0_213] : memref<16x128xf32, #tpu.memory_space<vmem>>, vector<1x128xf32>
    %c11_214 = arith.constant 11 : index
    %c0_215 = arith.constant 0 : index
    %c0_216 = arith.constant 0 : index
    %234 = vector.load %arg7[%c11_214, %c0_215, %c0_216] : memref<16x128x512xf32, #tpu.memory_space<vmem>>, vector<1x128x512xf32>
    %235 = vector.shape_cast %234 : vector<1x128x512xf32> to vector<128x512xf32>
    %cst_217 = arith.constant dense<0.000000e+00> : vector<1x512xf32>
    %236 = tpu.matmul %233, %235, %cst_217 {dimension_numbers = #tpu.dot_dimension_numbers<[1], [0], [0], [1], [0, 0, 1, 1], [], []>} : vector<1x128xf32>, vector<128x512xf32>, vector<1x512xf32> -> vector<1x512xf32>
    %237 = arith.addf %232, %236 : vector<1x512xf32>
    %c12_218 = arith.constant 12 : index
    %c0_219 = arith.constant 0 : index
    %238 = vector.load %arg13[%c12_218, %c0_219] : memref<16x128xf32, #tpu.memory_space<vmem>>, vector<1x128xf32>
    %c12_220 = arith.constant 12 : index
    %c0_221 = arith.constant 0 : index
    %c0_222 = arith.constant 0 : index
    %239 = vector.load %arg7[%c12_220, %c0_221, %c0_222] : memref<16x128x512xf32, #tpu.memory_space<vmem>>, vector<1x128x512xf32>
    %240 = vector.shape_cast %239 : vector<1x128x512xf32> to vector<128x512xf32>
    %cst_223 = arith.constant dense<0.000000e+00> : vector<1x512xf32>
    %241 = tpu.matmul %238, %240, %cst_223 {dimension_numbers = #tpu.dot_dimension_numbers<[1], [0], [0], [1], [0, 0, 1, 1], [], []>} : vector<1x128xf32>, vector<128x512xf32>, vector<1x512xf32> -> vector<1x512xf32>
    %242 = arith.addf %237, %241 : vector<1x512xf32>
    %c13_224 = arith.constant 13 : index
    %c0_225 = arith.constant 0 : index
    %243 = vector.load %arg13[%c13_224, %c0_225] : memref<16x128xf32, #tpu.memory_space<vmem>>, vector<1x128xf32>
    %c13_226 = arith.constant 13 : index
    %c0_227 = arith.constant 0 : index
    %c0_228 = arith.constant 0 : index
    %244 = vector.load %arg7[%c13_226, %c0_227, %c0_228] : memref<16x128x512xf32, #tpu.memory_space<vmem>>, vector<1x128x512xf32>
    %245 = vector.shape_cast %244 : vector<1x128x512xf32> to vector<128x512xf32>
    %cst_229 = arith.constant dense<0.000000e+00> : vector<1x512xf32>
    %246 = tpu.matmul %243, %245, %cst_229 {dimension_numbers = #tpu.dot_dimension_numbers<[1], [0], [0], [1], [0, 0, 1, 1], [], []>} : vector<1x128xf32>, vector<128x512xf32>, vector<1x512xf32> -> vector<1x512xf32>
    %247 = arith.addf %242, %246 : vector<1x512xf32>
    %c14_230 = arith.constant 14 : index
    %c0_231 = arith.constant 0 : index
    %248 = vector.load %arg13[%c14_230, %c0_231] : memref<16x128xf32, #tpu.memory_space<vmem>>, vector<1x128xf32>
    %c14_232 = arith.constant 14 : index
    %c0_233 = arith.constant 0 : index
    %c0_234 = arith.constant 0 : index
    %249 = vector.load %arg7[%c14_232, %c0_233, %c0_234] : memref<16x128x512xf32, #tpu.memory_space<vmem>>, vector<1x128x512xf32>
    %250 = vector.shape_cast %249 : vector<1x128x512xf32> to vector<128x512xf32>
    %cst_235 = arith.constant dense<0.000000e+00> : vector<1x512xf32>
    %251 = tpu.matmul %248, %250, %cst_235 {dimension_numbers = #tpu.dot_dimension_numbers<[1], [0], [0], [1], [0, 0, 1, 1], [], []>} : vector<1x128xf32>, vector<128x512xf32>, vector<1x512xf32> -> vector<1x512xf32>
    %252 = arith.addf %247, %251 : vector<1x512xf32>
    %c15_236 = arith.constant 15 : index
    %c0_237 = arith.constant 0 : index
    %253 = vector.load %arg13[%c15_236, %c0_237] : memref<16x128xf32, #tpu.memory_space<vmem>>, vector<1x128xf32>
    %c15_238 = arith.constant 15 : index
    %c0_239 = arith.constant 0 : index
    %c0_240 = arith.constant 0 : index
    %254 = vector.load %arg7[%c15_238, %c0_239, %c0_240] : memref<16x128x512xf32, #tpu.memory_space<vmem>>, vector<1x128x512xf32>
    %255 = vector.shape_cast %254 : vector<1x128x512xf32> to vector<128x512xf32>
    %cst_241 = arith.constant dense<0.000000e+00> : vector<1x512xf32>
    %256 = tpu.matmul %253, %255, %cst_241 {dimension_numbers = #tpu.dot_dimension_numbers<[1], [0], [0], [1], [0, 0, 1, 1], [], []>} : vector<1x128xf32>, vector<128x512xf32>, vector<1x512xf32> -> vector<1x512xf32>
    %257 = arith.addf %252, %256 : vector<1x512xf32>
    %c0_242 = arith.constant 0 : index
    %c0_243 = arith.constant 0 : index
    %258 = vector.load %arg8[%c0_242, %c0_243] : memref<1x512xf32, #tpu.memory_space<vmem>>, vector<1x512xf32>
    %259 = arith.addf %257, %258 : vector<1x512xf32>
    %cst_244 = arith.constant 0.000000e+00 : f32
    %260 = vector.broadcast %cst_244 : f32 to vector<1x512xf32>
    %261 = arith.maximumf %259, %260 : vector<1x512xf32>
    %c0_245 = arith.constant 0 : index
    %c0_246 = arith.constant 0 : index
    %262 = vector.load %arg9[%c0_245, %c0_246] : memref<512x128xf32, #tpu.memory_space<vmem>>, vector<512x128xf32>
    %cst_247 = arith.constant dense<0.000000e+00> : vector<1x128xf32>
    %263 = tpu.matmul %261, %262, %cst_247 {dimension_numbers = #tpu.dot_dimension_numbers<[1], [0], [0], [1], [0, 0, 1, 1], [], []>} : vector<1x512xf32>, vector<512x128xf32>, vector<1x128xf32> -> vector<1x128xf32>
    %c0_248 = arith.constant 0 : index
    %c0_249 = arith.constant 0 : index
    %264 = vector.load %arg10[%c0_248, %c0_249] : memref<1x128xf32, #tpu.memory_space<vmem>>, vector<1x128xf32>
    %265 = arith.addf %263, %264 : vector<1x128xf32>
    %266 = tpu.iota {dimensions = array<i32: 1>} : vector<1x128xi32>
    %c10_i32 = arith.constant 10 : i32
    %267 = vector.broadcast %c10_i32 : i32 to vector<1x128xi32>
    %268 = arith.cmpi slt, %266, %267 : vector<1x128xi32>
    %cst_250 = arith.constant -1.000000e+30 : f32
    %269 = vector.broadcast %cst_250 : f32 to vector<1x128xf32>
    %270 = arith.select %268, %265, %269 : vector<1x128xi1>, vector<1x128xf32>
    %cst_251 = arith.constant dense<0xFF800000> : vector<1xf32>
    %271 = vector.multi_reduction <maximumf>, %270, %cst_251 [1] : vector<1x128xf32> to vector<1xf32>
    %272 = vector.shape_cast %271 : vector<1xf32> to vector<1x1xf32>
    %273 = vector.broadcast %272 : vector<1x1xf32> to vector<1x128xf32>
    %274 = arith.subf %270, %273 : vector<1x128xf32>
    %275 = math.exp %274 : vector<1x128xf32>
    %cst_252 = arith.constant 0.000000e+00 : f32
    %276 = vector.broadcast %cst_252 : f32 to vector<1x128xf32>
    %277 = arith.select %268, %275, %276 : vector<1x128xi1>, vector<1x128xf32>
    %cst_253 = arith.constant dense<0.000000e+00> : vector<1xf32>
    %278 = vector.multi_reduction <add>, %277, %cst_253 [1] : vector<1x128xf32> to vector<1xf32>
    %279 = vector.shape_cast %278 : vector<1xf32> to vector<1x1xf32>
    %280 = math.log %279 : vector<1x1xf32>
    %281 = vector.broadcast %272 : vector<1x1xf32> to vector<1x128xf32>
    %282 = arith.subf %270, %281 : vector<1x128xf32>
    %283 = vector.broadcast %280 : vector<1x1xf32> to vector<1x128xf32>
    %284 = arith.subf %282, %283 : vector<1x128xf32>
    %cst_254 = arith.constant 0.000000e+00 : f32
    %285 = vector.broadcast %cst_254 : f32 to vector<1x128xf32>
    %286 = arith.select %268, %284, %285 : vector<1x128xi1>, vector<1x128xf32>
    %287 = vector.shape_cast %286 : vector<1x128xf32> to vector<1x128xf32>
    %288 = vector.broadcast %287 : vector<1x128xf32> to vector<8x128xf32>
    %c0_255 = arith.constant 0 : index
    %c0_256 = arith.constant 0 : index
    %c0_257 = arith.constant 0 : index
    %289 = vector.load %arg11[%c0_255, %c0_256, %c0_257] : memref<1x8x128xf32, #tpu.memory_space<vmem>>, vector<1x8x128xf32>
    %290 = vector.shape_cast %289 : vector<1x8x128xf32> to vector<8x128xf32>
    %291 = vector.shape_cast %288 : vector<8x128xf32> to vector<1x8x128xf32>
    tpu.vector_store %arg11[%c0_255, %c0_256, %c0_257], %291 {strides = array<i32>} : memref<1x8x128xf32, #tpu.memory_space<vmem>>, vector<1x8x128xf32>,
    return
  }
  func.func @transform_0(%arg0: i32) -> (i32, i32, i32) {
    %c0_i32 = arith.constant 0 : i32
    %c0_i32_0 = arith.constant 0 : i32
    %c0_i32_1 = arith.constant 0 : i32
    return %arg0, %c0_i32, %c0_i32_0 : i32, i32, i32
  }
  func.func @transform_1(%arg0: i32) -> (i32, i32) {
    %c0_i32 = arith.constant 0 : i32
    %c0_i32_0 = arith.constant 0 : i32
    %c0_i32_1 = arith.constant 0 : i32
    return %c0_i32, %c0_i32_0 : i32, i32
  }
  func.func @transform_2(%arg0: i32) -> (i32, i32) {
    %c0_i32 = arith.constant 0 : i32
    %c0_i32_0 = arith.constant 0 : i32
    %c0_i32_1 = arith.constant 0 : i32
    return %c0_i32, %c0_i32_0 : i32, i32
  }
  func.func @transform_3(%arg0: i32) -> (i32, i32) {
    %c0_i32 = arith.constant 0 : i32
    %c0_i32_0 = arith.constant 0 : i32
    %c0_i32_1 = arith.constant 0 : i32
    return %c0_i32, %c0_i32_0 : i32, i32
  }
  func.func @transform_4(%arg0: i32) -> (i32, i32, i32) {
    %c0_i32 = arith.constant 0 : i32
    %c0_i32_0 = arith.constant 0 : i32
    %c0_i32_1 = arith.constant 0 : i32
    %c0_i32_2 = arith.constant 0 : i32
    return %c0_i32, %c0_i32_0, %c0_i32_1 : i32, i32, i32
  }
  func.func @transform_5(%arg0: i32) -> (i32, i32) {
    %c0_i32 = arith.constant 0 : i32
    %c0_i32_0 = arith.constant 0 : i32
    %c0_i32_1 = arith.constant 0 : i32
    return %c0_i32, %c0_i32_0 : i32, i32
  }
  func.func @transform_6(%arg0: i32) -> (i32, i32, i32) {
    %c0_i32 = arith.constant 0 : i32
    %c0_i32_0 = arith.constant 0 : i32
    %c0_i32_1 = arith.constant 0 : i32
    %c0_i32_2 = arith.constant 0 : i32
    return %c0_i32, %c0_i32_0, %c0_i32_1 : i32, i32, i32
  }
  func.func @transform_7(%arg0: i32) -> (i32, i32) {
    %c0_i32 = arith.constant 0 : i32
    %c0_i32_0 = arith.constant 0 : i32
    %c0_i32_1 = arith.constant 0 : i32
    return %c0_i32, %c0_i32_0 : i32, i32
  }
  func.func @transform_8(%arg0: i32) -> (i32, i32) {
    %c0_i32 = arith.constant 0 : i32
    %c0_i32_0 = arith.constant 0 : i32
    %c0_i32_1 = arith.constant 0 : i32
    return %c0_i32, %c0_i32_0 : i32, i32
  }
  func.func @transform_9(%arg0: i32) -> (i32, i32) {
    %c0_i32 = arith.constant 0 : i32
    %c0_i32_0 = arith.constant 0 : i32
    %c0_i32_1 = arith.constant 0 : i32
    return %c0_i32, %c0_i32_0 : i32, i32
  }
  func.func @transform_10(%arg0: i32) -> (i32, i32, i32) {
    %c0_i32 = arith.constant 0 : i32
    %c0_i32_0 = arith.constant 0 : i32
    %c0_i32_1 = arith.constant 0 : i32
    return %arg0, %c0_i32, %c0_i32_0 : i32, i32, i32
  }
}

</mosaic_0001>

<llo_original>
// kernel: sudoku_net_forward.1
$region0: #{sudoku_net_forward.1}
  #allocation0 [shape = 'u32[]', space=smem, size = 0x4, offset = 0x4, fixed_abs, tag = 'smem constant byte address 0x4 - core index']
  #allocation1 [shape = 'u32[144,128]{1,0:T(1,128)}', space=vmem, size = 0x12000, scoped, tag = 'internal scratch']
  #allocation2 [shape = 'f32[160,128]{1,0:T(8,128)}', space=vmem, size = 0x14000, scoped, tag = 'scratch operand']
  #allocation3 [shape = 'f32[16,128]{1,0:T(8,128)}', space=vmem, size = 0x2000, scoped, tag = 'scratch operand']
  %s0 = inlined_call_operand.vmem [shape: f32[2,576,32], index: 0, kind: input, shape index: {}]
  %s1 = inlined_call_operand.vmem [shape: f32[64,96], index: 1, kind: input, shape index: {}]
  %s2 = inlined_call_operand.vmem [shape: f32[32,128], index: 2, kind: input, shape index: {}]
  %s3 = inlined_call_operand.vmem [shape: f32[1,128], index: 3, kind: input, shape index: {}]
  %s4 = inlined_call_operand.vmem [shape: f32[25,128,128], index: 4, kind: input, shape index: {}]
  %s5 = inlined_call_operand.vmem [shape: f32[1,128], index: 5, kind: input, shape index: {}]
  %s6 = inlined_call_operand.vmem [shape: f32[16,128,512], index: 6, kind: input, shape index: {}]
  %s7 = inlined_call_operand.vmem [shape: f32[1,512], index: 7, kind: input, shape index: {}]
  %s8 = inlined_call_operand.vmem [shape: f32[512,128], index: 8, kind: input, shape index: {}]
  %s9 = inlined_call_operand.vmem [shape: f32[1,128], index: 9, kind: input, shape index: {}]
  %s10 = inlined_call_operand.vmem [shape: f32[2,8,128], index: 10, kind: output, shape index: {}]
  %s11 = sld [smem:[#allocation0]]
  $region73: #{sudoku_net_forward.1} parent=0
    _
  %s13 = ssub.s32 1, %s11
  %s14 = scalar_select 0, %s13, %s11
  loop: start=0, step=1, limit=4
  $region2: #{sudoku_net_forward.1} parent=0 // loop_pre_header
    _
  $region3: #{sudoku_net_forward.1} parent=0 // loop_header
    %s16 = sphi 0, %s20
    %p17 = scmp.ge.s32.totalorder %s16, 4
    %s26 = sphi 0, %s28
    %s29 = sphi 0, %s26
    %s30 = sphi 0, %s29
    %s46 = sphi 0, %s30
    %s50 = sphi 0, %s50
    %s52 = sphi 0, %s50
    %s53 = sphi 0, %s52
    %s67 = sphi 0, %s53
    %s71 = sphi 0, %s71
    %s73 = sphi 0, %s71
    %s74 = sphi 0, %s73
    %s88 = sphi 0, %s74
    %s92 = sphi 0, %s92
    %s94 = sphi 0, %s92
    %s95 = sphi 0, %s94
    %s109 = sphi 0, %s95
    %s113 = sphi 0, %s113
    %s115 = sphi 0, %s113
    %s116 = sphi 0, %s115
    %s130 = sphi 0, %s116
    %s134 = sphi 0, %s134
    %s136 = sphi 0, %s134
    %s137 = sphi 0, %s136
    %s151 = sphi 0, %s137
    %s155 = sphi 0, %s155
    %s157 = sphi 0, %s155
    %s158 = sphi 0, %s157
    %s172 = sphi 0, %s158
    %s176 = sphi 0, %s176
    %s178 = sphi 0, %s176
    %s179 = sphi 0, %s178
    %s193 = sphi 0, %s179
    %s197 = sphi 0, %s197
    %s199 = sphi 0, %s197
    %s200 = sphi 0, %s199
    %s214 = sphi 0, %s200
    %s218 = sphi 0, %s218
    %s220 = sphi 0, %s218
    %s221 = sphi 0, %s220
    %s235 = sphi 0, %s221
    %s241 = sphi 0, %s243
    %s244 = sphi 0, %s241
    %s245 = sphi 0, %s244
    %s261 = sphi 0, %s245
  $region4: #{sudoku_net_forward.1} parent=0 // loop_header_branch
    %19 = sbr.rel (%p17) target = $region8
  $region5: #{sudoku_net_forward.1} parent=0 // loop_body
    %s21 = ssub.s32 %s16, 1
    %s22 = ssub.s32 %s16, 2
    %s23 = sadd.s32 %s16, 1
    %s24 = ssub.s32 %s16, %s23
    %p25 = scmp.eq.s32.totalorder %s24, 0
    %s27 = sadd.s32 %s26, 1
    %s28 = scalar_select %p25, %s26, %s27
    %p31 = pneg %p25
    %p32 = scmp.eq.s32.totalorder %s16, 1
    %p33 = por %p31, %p32
    %p34 = scmp.ne.s32.totalorder %s26, %s29
    %p35 = scmp.eq.s32.totalorder %s16, 0
    %p36 = por %p34, %p35
    %p37 = scmp.ne.s32.totalorder %s26, %s29
    %p38 = scmp.eq.s32.totalorder %s21, 1
    %p39 = por %p37, %p38
    %p40 = scmp.ne.s32.totalorder %s29, %s30
    %p41 = scmp.eq.s32.totalorder %s21, 0
    %p42 = por %p40, %p41
    %p43 = scmp.ne.s32.totalorder %s29, %s30
    %p44 = scmp.eq.s32.totalorder %s22, 1
    %p45 = por %p43, %p44
    %p47 = scmp.ne.s32.totalorder %s30, %s46
    %p48 = scmp.eq.s32.totalorder %s22, 0
    %p49 = por %p47, %p48
    %s51 = sadd.s32 %s50, 1
    %p54 = scmp.eq.s32.totalorder %s16, 1
    %p55 = scmp.ne.s32.totalorder %s50, %s52
    %p56 = scmp.eq.s32.totalorder %s16, 0
    %p57 = por %p55, %p56
    %p58 = scmp.ne.s32.totalorder %s50, %s52
    %p59 = scmp.eq.s32.totalorder %s21, 1
    %p60 = por %p58, %p59
    %p61 = scmp.ne.s32.totalorder %s52, %s53
    %p62 = scmp.eq.s32.totalorder %s21, 0
    %p63 = por %p61, %p62
    %p64 = scmp.ne.s32.totalorder %s52, %s53
    %p65 = scmp.eq.s32.totalorder %s22, 1
    %p66 = por %p64, %p65
    %p68 = scmp.ne.s32.totalorder %s53, %s67
    %p69 = scmp.eq.s32.totalorder %s22, 0
    %p70 = por %p68, %p69
    %s72 = sadd.s32 %s71, 1
    %p75 = scmp.eq.s32.totalorder %s16, 1
    %p76 = scmp.ne.s32.totalorder %s71, %s73
    %p77 = scmp.eq.s32.totalorder %s16, 0
    %p78 = por %p76, %p77
    %p79 = scmp.ne.s32.totalorder %s71, %s73
    %p80 = scmp.eq.s32.totalorder %s21, 1
    %p81 = por %p79, %p80
    %p82 = scmp.ne.s32.totalorder %s73, %s74
    %p83 = scmp.eq.s32.totalorder %s21, 0
    %p84 = por %p82, %p83
    %p85 = scmp.ne.s32.totalorder %s73, %s74
    %p86 = scmp.eq.s32.totalorder %s22, 1
    %p87 = por %p85, %p86
    %p89 = scmp.ne.s32.totalorder %s74, %s88
    %p90 = scmp.eq.s32.totalorder %s22, 0
    %p91 = por %p89, %p90
    %s93 = sadd.s32 %s92, 1
    %p96 = scmp.eq.s32.totalorder %s16, 1
    %p97 = scmp.ne.s32.totalorder %s92, %s94
    %p98 = scmp.eq.s32.totalorder %s16, 0
    %p99 = por %p97, %p98
    %p100 = scmp.ne.s32.totalorder %s92, %s94
    %p101 = scmp.eq.s32.totalorder %s21, 1
    %p102 = por %p100, %p101
    %p103 = scmp.ne.s32.totalorder %s94, %s95
    %p104 = scmp.eq.s32.totalorder %s21, 0
    %p105 = por %p103, %p104
    %p106 = scmp.ne.s32.totalorder %s94, %s95
    %p107 = scmp.eq.s32.totalorder %s22, 1
    %p108 = por %p106, %p107
    %p110 = scmp.ne.s32.totalorder %s95, %s109
    %p111 = scmp.eq.s32.totalorder %s22, 0
    %p112 = por %p110, %p111
    %s114 = sadd.s32 %s113, 1
    %p117 = scmp.eq.s32.totalorder %s16, 1
    %p118 = scmp.ne.s32.totalorder %s113, %s115
    %p119 = scmp.eq.s32.totalorder %s16, 0
    %p120 = por %p118, %p119
    %p121 = scmp.ne.s32.totalorder %s113, %s115
    %p122 = scmp.eq.s32.totalorder %s21, 1
    %p123 = por %p121, %p122
    %p124 = scmp.ne.s32.totalorder %s115, %s116
    %p125 = scmp.eq.s32.totalorder %s21, 0
    %p126 = por %p124, %p125
    %p127 = scmp.ne.s32.totalorder %s115, %s116
    %p128 = scmp.eq.s32.totalorder %s22, 1
    %p129 = por %p127, %p128
    %p131 = scmp.ne.s32.totalorder %s116, %s130
    %p132 = scmp.eq.s32.totalorder %s22, 0
    %p133 = por %p131, %p132
    %s135 = sadd.s32 %s134, 1
    %p138 = scmp.eq.s32.totalorder %s16, 1
    %p139 = scmp.ne.s32.totalorder %s134, %s136
    %p140 = scmp.eq.s32.totalorder %s16, 0
    %p141 = por %p139, %p140
    %p142 = scmp.ne.s32.totalorder %s134, %s136
    %p143 = scmp.eq.s32.totalorder %s21, 1
    %p144 = por %p142, %p143
    %p145 = scmp.ne.s32.totalorder %s136, %s137
    %p146 = scmp.eq.s32.totalorder %s21, 0
    %p147 = por %p145, %p146
    %p148 = scmp.ne.s32.totalorder %s136, %s137
    %p149 = scmp.eq.s32.totalorder %s22, 1
    %p150 = por %p148, %p149
    %p152 = scmp.ne.s32.totalorder %s137, %s151
    %p153 = scmp.eq.s32.totalorder %s22, 0
    %p154 = por %p152, %p153
    %s156 = sadd.s32 %s155, 1
    %p159 = scmp.eq.s32.totalorder %s16, 1
    %p160 = scmp.ne.s32.totalorder %s155, %s157
    %p161 = scmp.eq.s32.totalorder %s16, 0
    %p162 = por %p160, %p161
    %p163 = scmp.ne.s32.totalorder %s155, %s157
    %p164 = scmp.eq.s32.totalorder %s21, 1
    %p165 = por %p163, %p164
    %p166 = scmp.ne.s32.totalorder %s157, %s158
    %p167 = scmp.eq.s32.totalorder %s21, 0
    %p168 = por %p166, %p167
    %p169 = scmp.ne.s32.totalorder %s157, %s158
    %p170 = scmp.eq.s32.totalorder %s22, 1
    %p171 = por %p169, %p170
    %p173 = scmp.ne.s32.totalorder %s158, %s172
    %p174 = scmp.eq.s32.totalorder %s22, 0
    %p175 = por %p173, %p174
    %s177 = sadd.s32 %s176, 1
    %p180 = scmp.eq.s32.totalorder %s16, 1
    %p181 = scmp.ne.s32.totalorder %s176, %s178
    %p182 = scmp.eq.s32.totalorder %s16, 0
    %p183 = por %p181, %p182
    %p184 = scmp.ne.s32.totalorder %s176, %s178
    %p185 = scmp.eq.s32.totalorder %s21, 1
    %p186 = por %p184, %p185
    %p187 = scmp.ne.s32.totalorder %s178, %s179
    %p188 = scmp.eq.s32.totalorder %s21, 0
    %p189 = por %p187, %p188
    %p190 = scmp.ne.s32.totalorder %s178, %s179
    %p191 = scmp.eq.s32.totalorder %s22, 1
    %p192 = por %p190, %p191
    %p194 = scmp.ne.s32.totalorder %s179, %s193
    %p195 = scmp.eq.s32.totalorder %s22, 0
    %p196 = por %p194, %p195
    %s198 = sadd.s32 %s197, 1
    %p201 = scmp.eq.s32.totalorder %s16, 1
    %p202 = scmp.ne.s32.totalorder %s197, %s199
    %p203 = scmp.eq.s32.totalorder %s16, 0
    %p204 = por %p202, %p203
    %p205 = scmp.ne.s32.totalorder %s197, %s199
    %p206 = scmp.eq.s32.totalorder %s21, 1
    %p207 = por %p205, %p206
    %p208 = scmp.ne.s32.totalorder %s199, %s200
    %p209 = scmp.eq.s32.totalorder %s21, 0
    %p210 = por %p208, %p209
    %p211 = scmp.ne.s32.totalorder %s199, %s200
    %p212 = scmp.eq.s32.totalorder %s22, 1
    %p213 = por %p211, %p212
    %p215 = scmp.ne.s32.totalorder %s200, %s214
    %p216 = scmp.eq.s32.totalorder %s22, 0
    %p217 = por %p215, %p216
    %s219 = sadd.s32 %s218, 1
    %p222 = scmp.eq.s32.totalorder %s16, 1
    %p223 = scmp.ne.s32.totalorder %s218, %s220
    %p224 = scmp.eq.s32.totalorder %s16, 0
    %p225 = por %p223, %p224
    %p226 = scmp.ne.s32.totalorder %s218, %s220
    %p227 = scmp.eq.s32.totalorder %s21, 1
    %p228 = por %p226, %p227
    %p229 = scmp.ne.s32.totalorder %s220, %s221
    %p230 = scmp.eq.s32.totalorder %s21, 0
    %p231 = por %p229, %p230
    %p232 = scmp.ne.s32.totalorder %s220, %s221
    %p233 = scmp.eq.s32.totalorder %s22, 1
    %p234 = por %p232, %p233
    %p236 = scmp.ne.s32.totalorder %s221, %s235
    %p237 = scmp.eq.s32.totalorder %s22, 0
    %p238 = por %p236, %p237
    %s239 = ssub.s32 %s16, %s23
    %p240 = scmp.eq.s32.totalorder %s239, 0
    %s242 = sadd.s32 %s241, 1
    %s243 = scalar_select %p240, %s241, %s242
    %p246 = pneg %p240
    %p247 = scmp.eq.s32.totalorder %s16, 1
    %p248 = por %p246, %p247
    %p249 = scmp.ne.s32.totalorder %s241, %s244
    %p250 = scmp.eq.s32.totalorder %s16, 0
    %p251 = por %p249, %p250
    %p252 = scmp.ne.s32.totalorder %s241, %s244
    %p253 = scmp.eq.s32.totalorder %s21, 1
    %p254 = por %p252, %p253
    %p255 = scmp.ne.s32.totalorder %s244, %s245
    %p256 = scmp.eq.s32.totalorder %s21, 0
    %p257 = por %p255, %p256
    %p258 = scmp.ne.s32.totalorder %s244, %s245
    %p259 = scmp.eq.s32.totalorder %s22, 1
    %p260 = por %p258, %p259
    %p262 = scmp.ne.s32.totalorder %s245, %s261
    %p263 = scmp.eq.s32.totalorder %s22, 0
    %p264 = por %p262, %p263
    %p265 = scmp.le.s32.totalorder 1, %s16
    %p266 = scmp.lt.s32.totalorder %s16, 3
    %p267 = pnand %p265, %p266
    %p268 = pneg %p267
    // Predicated region
    $region9: #{sudoku_net_forward.1} parent=5 // pred_check
      _
    $region10: #{sudoku_net_forward.1} parent=5 // pred_check_branch
      %270 = sbr.rel (%p267) target = $region12
    $region11: #{sudoku_net_forward.1} parent=5 // pred_region
      %s271 = ssub.s32 %s16, 1
      // Predicated region
      $region13: #{sudoku_net_forward.1} parent=11 // pred_check
        %p272 = pneg %p63
      $region14: #{sudoku_net_forward.1} parent=11 // pred_check_branch
        %274 = sbr.rel (%p272) target = $region16
      $region15: #{sudoku_net_forward.1} parent=11 // pred_region
        _
      $region16: #{sudoku_net_forward.1} parent=11 // pred_fallthru
        _
      // Predicated region
      $region17: #{sudoku_net_forward.1} parent=11 // pred_check
        %p275 = pneg %p84
      $region18: #{sudoku_net_forward.1} parent=11 // pred_check_branch
        %277 = sbr.rel (%p275) target = $region20
      $region19: #{sudoku_net_forward.1} parent=11 // pred_region
        _
      $region20: #{sudoku_net_forward.1} parent=11 // pred_fallthru
        _
      // Predicated region
      $region21: #{sudoku_net_forward.1} parent=11 // pred_check
        %p278 = pneg %p105
      $region22: #{sudoku_net_forward.1} parent=11 // pred_check_branch
        %280 = sbr.rel (%p278) target = $region24
      $region23: #{sudoku_net_forward.1} parent=11 // pred_region
        _
      $region24: #{sudoku_net_forward.1} parent=11 // pred_fallthru
        _
      // Predicated region
      $region25: #{sudoku_net_forward.1} parent=11 // pred_check
        %p281 = pneg %p126
      $region26: #{sudoku_net_forward.1} parent=11 // pred_check_branch
        %283 = sbr.rel (%p281) target = $region28
      $region27: #{sudoku_net_forward.1} parent=11 // pred_region
        _
      $region28: #{sudoku_net_forward.1} parent=11 // pred_fallthru
        _
      // Predicated region
      $region29: #{sudoku_net_forward.1} parent=11 // pred_check
        %p284 = pneg %p147
      $region30: #{sudoku_net_forward.1} parent=11 // pred_check_branch
        %286 = sbr.rel (%p284) target = $region32
      $region31: #{sudoku_net_forward.1} parent=11 // pred_region
        _
      $region32: #{sudoku_net_forward.1} parent=11 // pred_fallthru
        _
      // Predicated region
      $region33: #{sudoku_net_forward.1} parent=11 // pred_check
        %p287 = pneg %p168
      $region34: #{sudoku_net_forward.1} parent=11 // pred_check_branch
        %289 = sbr.rel (%p287) target = $region36
      $region35: #{sudoku_net_forward.1} parent=11 // pred_region
        _
      $region36: #{sudoku_net_forward.1} parent=11 // pred_fallthru
        _
      // Predicated region
      $region37: #{sudoku_net_forward.1} parent=11 // pred_check
        %p290 = pneg %p189
      $region38: #{sudoku_net_forward.1} parent=11 // pred_check_branch
        %292 = sbr.rel (%p290) target = $region40
      $region39: #{sudoku_net_forward.1} parent=11 // pred_region
        _
      $region40: #{sudoku_net_forward.1} parent=11 // pred_fallthru
        _
      // Predicated region
      $region41: #{sudoku_net_forward.1} parent=11 // pred_check
        %p293 = pneg %p210
      $region42: #{sudoku_net_forward.1} parent=11 // pred_check_branch
        %295 = sbr.rel (%p293) target = $region44
      $region43: #{sudoku_net_forward.1} parent=11 // pred_region
        _
      $region44: #{sudoku_net_forward.1} parent=11 // pred_fallthru
        _
      // Predicated region
      $region45: #{sudoku_net_forward.1} parent=11 // pred_check
        %p296 = pneg %p231
      $region46: #{sudoku_net_forward.1} parent=11 // pred_check_branch
        %298 = sbr.rel (%p296) target = $region48
      $region47: #{sudoku_net_forward.1} parent=11 // pred_region
        _
      $region48: #{sudoku_net_forward.1} parent=11 // pred_fallthru
        _
    $region12: #{sudoku_net_forward.1} parent=5 // pred_fallthru
      _
    %p299 = scmp.lt.s32.totalorder %s16, 2
    // Predicated region
    $region49: #{sudoku_net_forward.1} parent=5 // pred_check
      %p300 = pneg %p299
    $region50: #{sudoku_net_forward.1} parent=5 // pred_check_branch
      %302 = sbr.rel (%p300) target = $region52
    $region51: #{sudoku_net_forward.1} parent=5 // pred_region
      // Predicated region
      $region53: #{sudoku_net_forward.1} parent=51 // pred_check
        %p303 = pneg %p36
      $region54: #{sudoku_net_forward.1} parent=51 // pred_check_branch
        %305 = sbr.rel (%p303) target = $region56
      $region55: #{sudoku_net_forward.1} parent=51 // pred_region
        %p306 = scmp.lt.s32.totalorder %s16, 1
        %s307 = scalar_select %p306, %s16, 1
        %s308 = smul.addr %s307, 72
        %s309 = smul.addr %s308, 8
        %s310 = scalar_lea.vmem %s0, %s309
      $region56: #{sudoku_net_forward.1} parent=51 // pred_fallthru
        _
    $region52: #{sudoku_net_forward.1} parent=5 // pred_fallthru
      _
    %p311 = scmp.le.s32.totalorder 1, %s16
    %p312 = scmp.lt.s32.totalorder %s16, 3
    %p313 = pnand %p311, %p312
    %p314 = pneg %p313
    // Predicated region
    $region57: #{sudoku_net_forward.1} parent=5 // pred_check
      _
    $region58: #{sudoku_net_forward.1} parent=5 // pred_check_branch
      %316 = sbr.rel (%p313) target = $region60
    $region59: #{sudoku_net_forward.1} parent=5 // pred_region
      %s317 = ssub.s32 %s16, 1
      %p318 = scmp.lt.s32.totalorder %s21, 1
      %s319 = scalar_select %p318, %s21, 1
      %s320 = smul.addr %s319, 72
      %s321 = smul.addr %s320, 8
      %s322 = scalar_lea.vmem %s0, %s321
      %p323 = pneg %p42
      %p324 = pneg %p39
      %p325 = pneg %p63
      %p326 = pneg %p60
      %p327 = pneg %p84
      %p328 = pneg %p81
      %p329 = pneg %p105
      %p330 = pneg %p102
      %p331 = pneg %p126
      %p332 = pneg %p123
      %p333 = pneg %p147
      %p334 = pneg %p144
      %p335 = pneg %p168
      %p336 = pneg %p165
      %p337 = pneg %p189
      %p338 = pneg %p186
      %p339 = pneg %p210
      %p340 = pneg %p207
      %p341 = pneg %p231
      %p342 = pneg %p228
      %p343 = pneg %p257
      %p344 = pneg %p254
      %p345 = scmp.lt.s32.totalorder %s21, 1
      %s346 = scalar_select %p345, %s21, 1
      %s347 = smul.addr %s346, 8
      %s348 = scalar_lea.vmem %s10, %s347
      %p349 = scmp.lt.s32.totalorder %s21, 1
      %s350 = scalar_select %p349, %s21, 1
      %s351 = smul.addr %s350, 72
      %s352 = smul.addr %s351, 8
      %s353 = scalar_lea.vmem %s0, %s352
      %p354 = scmp.lt.s32.totalorder %s21, 1
      %s355 = scalar_select %p354, %s21, 1
      %s356 = smul.addr %s355, 8
      %s357 = scalar_lea.vmem %s10, %s356
      %v358 = vld [vmem:[%s2] sm:$0xff]
      %v359 = vld [vmem:[%s2 + $0x8] sm:$0xff]
      %v360 = vld [vmem:[%s2 + $0x10] sm:$0xff]
      %v361 = vld [vmem:[%s2 + $0x18] sm:$0xff]
      %v362 = vld [vmem:[%s3] sm:$0x1]
      %v363 = vld [vmem:[%s353] sm:$0xff]
      %v364 = vld [vmem:[%s353 + $0x8] sm:$0xff]
      %v365 = vld [vmem:[%s353 + $0x10] sm:$0xff]
      %v366 = vld [vmem:[%s353 + $0x18] sm:$0xff]
      %v367 = vld [vmem:[%s353 + $0x20] sm:$0xff]
      %v368 = vld [vmem:[%s353 + $0x28] sm:$0xff]
      %v369 = vld [vmem:[%s353 + $0x30] sm:$0xff]
      %v370 = vld [vmem:[%s353 + $0x38] sm:$0xff]
      %v371 = vld [vmem:[%s353 + $0x40] sm:$0xff]
      %v372 = vld [vmem:[%s353 + $0x48] sm:$0xff]
      %v373 = vld [vmem:[%s353 + $0x50] sm:$0xff]
      %v374 = vld [vmem:[%s353 + $0x58] sm:$0xff]
      %v375 = vld [vmem:[%s353 + $0x60] sm:$0xff]
      %v376 = vld [vmem:[%s353 + $0x68] sm:$0xff]
      %v377 = vld [vmem:[%s353 + $0x70] sm:$0xff]
      %v378 = vld [vmem:[%s353 + $0x78] sm:$0xff]
      %v379 = vld [vmem:[%s353 + $0x80] sm:$0xff]
      %v380 = vld [vmem:[%s353 + $0x88] sm:$0xff]
      %v382 = vlaneseq
      %v383 = vshrl.u32 %v382, 7
      %v384 = vsub.s32 0, %v383
      %v385 = vrot.slane %v362, %v384
      %vm387 = vcmask 261120
      %v389 = vsel %vm387, %v363, 0
      %v392 = vsel %vm387, %v364, 0
      %v395 = vsel %vm387, %v365, 0
      %v398 = vsel %vm387, %v366, 0
      %v401 = vsel %vm387, %v367, 0
      %v404 = vsel %vm387, %v368, 0
      %v407 = vsel %vm387, %v369, 0
      %v410 = vsel %vm387, %v370, 0
      %v413 = vsel %vm387, %v371, 0
      %v416 = vsel %vm387, %v372, 0
      %v419 = vsel %vm387, %v373, 0
      %v422 = vsel %vm387, %v374, 0
      %v425 = vsel %vm387, %v375, 0
      %v428 = vsel %vm387, %v376, 0
      %v431 = vsel %vm387, %v377, 0
      %v434 = vsel %vm387, %v378, 0
      %v437 = vsel %vm387, %v379, 0
      %v440 = vsel %vm387, %v380, 0
      %442 = vmatprep.subr.mxu0 0.0
      %443 = vmatpush1.msra.mxu0 %v358
      %444 = vmatprep.subr.mxu0 0.0
      %445 = vmatpush1.msra.mxu0 %v359
      %446 = vmatprep.subr.mxu0 0.0
      %447 = vmatpush1.msra.mxu0 %v360
      %448 = vmatprep.subr.mxu0 0.0
      %449 = vmatpush1.msra.mxu0 %v361
      %450 = vmatprep.subr.mxu0 0.0
      %451 = vmatpush1.msra.mxu0 0.0
      %452 = vmatprep.subr.mxu0 0.0
      %453 = vmatpush1.msra.mxu0 0.0
      %454 = vmatprep.subr.mxu0 0.0
      %455 = vmatpush1.msra.mxu0 0.0
      %456 = vmatprep.subr.mxu0 0.0
      %457 = vmatpush1.msra.mxu0 0.0
      %458 = vmatprep.subr.mxu0 0.0
      %459 = vmatpush1.msra.mxu0 0.0
      %460 = vmatprep.subr.mxu0 0.0
      %461 = vmatpush1.msra.mxu0 0.0
      %462 = vmatprep.subr.mxu0 0.0
      %463 = vmatpush1.msra.mxu0 0.0
      %464 = vmatprep.subr.mxu0 0.0
      %465 = vmatpush1.msra.mxu0 0.0
      %466 = vmatprep.subr.mxu0 0.0
      %467 = vmatpush1.msra.mxu0 0.0
      %468 = vmatprep.subr.mxu0 0.0
      %469 = vmatpush1.msra.mxu0 0.0
      %470 = vmatprep.subr.mxu0 0.0
      %471 = vmatpush1.msra.mxu0 0.0
      %472 = vmatprep.subr.mxu0 0.0
      %473 = vmatpush1.msra.mxu0 0.0
      %474 = vmatprep.subr.mxu0 0.0
      %475 = vmatpush1.msra.mxu0 0.0
      %476 = vmatprep.subr.mxu0 0.0
      %477 = vmatpush1.msra.mxu0 0.0
      %478 = vmatprep.subr.mxu0 0.0
      %479 = vmatpush1.msra.mxu0 0.0
      %480 = vmatprep.subr.mxu0 0.0
      %481 = vmatpush1.msra.mxu0 0.0
      %482 = vmatprep.subr.mxu0 0.0
      %483 = vmatpush1.msra.mxu0 0.0
      %484 = vmatprep.subr.mxu0 0.0
      %485 = vmatpush1.msra.mxu0 0.0
      %486 = vmatprep.subr.mxu0 0.0
      %487 = vmatpush1.msra.mxu0 0.0
      %488 = vmatprep.subr.mxu0 0.0
      %489 = vmatpush1.msra.mxu0 0.0
      %490 = vmatprep.subr.mxu0 0.0
      %491 = vmatpush1.msra.mxu0 0.0
      %492 = vmatprep.subr.mxu0 0.0
      %493 = vmatpush1.msra.mxu0 0.0
      %494 = vmatprep.subr.mxu0 0.0
      %495 = vmatpush1.msra.mxu0 0.0
      %496 = vmatprep.subr.mxu0 0.0
      %497 = vmatpush1.msra.mxu0 0.0
      %498 = vmatprep.subr.mxu0 0.0
      %499 = vmatpush1.msra.mxu0 0.0
      %500 = vmatprep.subr.mxu0 0.0
      %501 = vmatpush1.msra.mxu0 0.0
      %502 = vmatprep.subr.mxu0 0.0
      %503 = vmatpush1.msra.mxu0 0.0
      %504 = vmatprep.subr.mxu0 0.0
      %505 = vmatpush1.msra.mxu0 0.0
      %506 = vmatprep.mubr.f32.mxu0 0.0
      %507 = vmatmul.mubr.f32.gmra.mrb[0].mxu0 %v389
      %v508 = vpop.f32.mrb[0].mxu0
      %v509 = vadd.f32 %v385, %v508
      %v510 = vpop.f32.mrb[0].mxu0
      %511 = vmatprep.mubr.f32.mxu0 0.0
      %512 = vmatmul.mubr.f32.gmra.mrb[0].mxu0 %v392
      %v513 = vpop.f32.mrb[0].mxu0
      %v514 = vadd.f32 %v385, %v513
      %v515 = vpop.f32.mrb[0].mxu0
      %516 = vmatprep.mubr.f32.mxu0 0.0
      %517 = vmatmul.mubr.f32.gmra.mrb[0].mxu0 %v395
      %v518 = vpop.f32.mrb[0].mxu0
      %v519 = vadd.f32 %v385, %v518
      %v520 = vpop.f32.mrb[0].mxu0
      %521 = vmatprep.mubr.f32.mxu0 0.0
      %522 = vmatmul.mubr.f32.gmra.mrb[0].mxu0 %v398
      %v523 = vpop.f32.mrb[0].mxu0
      %v524 = vadd.f32 %v385, %v523
      %v525 = vpop.f32.mrb[0].mxu0
      %526 = vmatprep.mubr.f32.mxu0 0.0
      %527 = vmatmul.mubr.f32.gmra.mrb[0].mxu0 %v401
      %v528 = vpop.f32.mrb[0].mxu0
      %v529 = vadd.f32 %v385, %v528
      %v530 = vpop.f32.mrb[0].mxu0
      %531 = vmatprep.mubr.f32.mxu0 0.0
      %532 = vmatmul.mubr.f32.gmra.mrb[0].mxu0 %v404
      %v533 = vpop.f32.mrb[0].mxu0
      %v534 = vadd.f32 %v385, %v533
      %v535 = vpop.f32.mrb[0].mxu0
      %536 = vmatprep.mubr.f32.mxu0 0.0
      %537 = vmatmul.mubr.f32.gmra.mrb[0].mxu0 %v407
      %v538 = vpop.f32.mrb[0].mxu0
      %v539 = vadd.f32 %v385, %v538
      %v540 = vpop.f32.mrb[0].mxu0
      %541 = vmatprep.mubr.f32.mxu0 0.0
      %542 = vmatmul.mubr.f32.gmra.mrb[0].mxu0 %v410
      %v543 = vpop.f32.mrb[0].mxu0
      %v544 = vadd.f32 %v385, %v543
      %v545 = vpop.f32.mrb[0].mxu0
      %546 = vmatprep.mubr.f32.mxu0 0.0
      %547 = vmatmul.mubr.f32.gmra.mrb[0].mxu0 %v413
      %v548 = vpop.f32.mrb[0].mxu0
      %v549 = vadd.f32 %v385, %v548
      %v550 = vpop.f32.mrb[0].mxu0
      %551 = vmatprep.mubr.f32.mxu0 0.0
      %552 = vmatmul.mubr.f32.gmra.mrb[0].mxu0 %v416
      %v553 = vpop.f32.mrb[0].mxu0
      %v554 = vadd.f32 %v385, %v553
      %v555 = vpop.f32.mrb[0].mxu0
      %556 = vmatprep.mubr.f32.mxu0 0.0
      %557 = vmatmul.mubr.f32.gmra.mrb[0].mxu0 %v419
      %v558 = vpop.f32.mrb[0].mxu0
      %v559 = vadd.f32 %v385, %v558
      %v560 = vpop.f32.mrb[0].mxu0
      %561 = vmatprep.mubr.f32.mxu0 0.0
      %562 = vmatmul.mubr.f32.gmra.mrb[0].mxu0 %v422
      %v563 = vpop.f32.mrb[0].mxu0
      %v564 = vadd.f32 %v385, %v563
      %v565 = vpop.f32.mrb[0].mxu0
      %566 = vmatprep.mubr.f32.mxu0 0.0
      %567 = vmatmul.mubr.f32.gmra.mrb[0].mxu0 %v425
      %v568 = vpop.f32.mrb[0].mxu0
      %v569 = vadd.f32 %v385, %v568
      %v570 = vpop.f32.mrb[0].mxu0
      %571 = vmatprep.mubr.f32.mxu0 0.0
      %572 = vmatmul.mubr.f32.gmra.mrb[0].mxu0 %v428
      %v573 = vpop.f32.mrb[0].mxu0
      %v574 = vadd.f32 %v385, %v573
      %v575 = vpop.f32.mrb[0].mxu0
      %576 = vmatprep.mubr.f32.mxu0 0.0
      %577 = vmatmul.mubr.f32.gmra.mrb[0].mxu0 %v431
      %v578 = vpop.f32.mrb[0].mxu0
      %v579 = vadd.f32 %v385, %v578
      %v580 = vpop.f32.mrb[0].mxu0
      %581 = vmatprep.mubr.f32.mxu0 0.0
      %582 = vmatmul.mubr.f32.gmra.mrb[0].mxu0 %v434
      %v583 = vpop.f32.mrb[0].mxu0
      %v584 = vadd.f32 %v385, %v583
      %v585 = vpop.f32.mrb[0].mxu0
      %586 = vmatprep.mubr.f32.mxu0 0.0
      %587 = vmatmul.mubr.f32.gmra.mrb[0].mxu0 %v437
      %v588 = vpop.f32.mrb[0].mxu0
      %v589 = vadd.f32 %v385, %v588
      %v590 = vpop.f32.mrb[0].mxu0
      %591 = vmatprep.mubr.f32.mxu0 0.0
      %592 = vmatmul.mubr.f32.gmra.mrb[0].mxu0 %v440
      %v593 = vpop.f32.mrb[0].mxu0
      %v594 = vadd.f32 %v385, %v593
      %v595 = vpop.f32.mrb[0].mxu0
      %596 = vdwg.mxu0
      %v597 = vmax.f32 %v509, 0.0
      %v598 = vmax.f32 %v514, 0.0
      %v599 = vmax.f32 %v519, 0.0
      %v600 = vmax.f32 %v524, 0.0
      %v601 = vmax.f32 %v529, 0.0
      %v602 = vmax.f32 %v534, 0.0
      %v603 = vmax.f32 %v539, 0.0
      %v604 = vmax.f32 %v544, 0.0
      %v605 = vmax.f32 %v549, 0.0
      %v606 = vmax.f32 %v554, 0.0
      %v607 = vmax.f32 %v559, 0.0
      %v608 = vmax.f32 %v564, 0.0
      %v609 = vmax.f32 %v569, 0.0
      %v610 = vmax.f32 %v574, 0.0
      %v611 = vmax.f32 %v579, 0.0
      %v612 = vmax.f32 %v584, 0.0
      %v613 = vmax.f32 %v589, 0.0
      %v614 = vmax.f32 %v594, 0.0
      %v615 = vld [vmem:[%s353 + $0x90] sm:$0xff]
      %v616 = vld [vmem:[%s353 + $0x98] sm:$0xff]
      %v617 = vld [vmem:[%s353 + $0xa0] sm:$0xff]
      %v618 = vld [vmem:[%s353 + $0xa8] sm:$0xff]
      %v619 = vld [vmem:[%s353 + $0xb0] sm:$0xff]
      %v620 = vld [vmem:[%s353 + $0xb8] sm:$0xff]
      %v621 = vld [vmem:[%s353 + $0xc0] sm:$0xff]
      %v622 = vld [vmem:[%s353 + $0xc8] sm:$0xff]
      %v623 = vld [vmem:[%s353 + $0xd0] sm:$0xff]
      %v624 = vld [vmem:[%s353 + $0xd8] sm:$0xff]
      %v625 = vld [vmem:[%s353 + $0xe0] sm:$0xff]
      %v626 = vld [vmem:[%s353 + $0xe8] sm:$0xff]
      %v627 = vld [vmem:[%s353 + $0xf0] sm:$0xff]
      %v628 = vld [vmem:[%s353 + $0xf8] sm:$0xff]
      %v629 = vld [vmem:[%s353 + $0x100] sm:$0xff]
      %v630 = vld [vmem:[%s353 + $0x108] sm:$0xff]
      %v631 = vld [vmem:[%s353 + $0x110] sm:$0xff]
      %v632 = vld [vmem:[%s353 + $0x118] sm:$0xff]
      %v634 = vsel %vm387, %v615, 0
      %v637 = vsel %vm387, %v616, 0
      %v640 = vsel %vm387, %v617, 0
      %v643 = vsel %vm387, %v618, 0
      %v646 = vsel %vm387, %v619, 0
      %v649 = vsel %vm387, %v620, 0
      %v652 = vsel %vm387, %v621, 0
      %v655 = vsel %vm387, %v622, 0
      %v658 = vsel %vm387, %v623, 0
      %v661 = vsel %vm387, %v624, 0
      %v664 = vsel %vm387, %v625, 0
      %v667 = vsel %vm387, %v626, 0
      %v670 = vsel %vm387, %v627, 0
      %v673 = vsel %vm387, %v628, 0
      %v676 = vsel %vm387, %v629, 0
      %v679 = vsel %vm387, %v630, 0
      %v682 = vsel %vm387, %v631, 0
      %v685 = vsel %vm387, %v632, 0
      %687 = vmatprep.subr.mxu0 0.0
      %688 = vmatpush1.msra.mxu0 %v358
      %689 = vmatprep.subr.mxu0 0.0
      %690 = vmatpush1.msra.mxu0 %v359
      %691 = vmatprep.subr.mxu0 0.0
      %692 = vmatpush1.msra.mxu0 %v360
      %693 = vmatprep.subr.mxu0 0.0
      %694 = vmatpush1.msra.mxu0 %v361
      %695 = vmatprep.subr.mxu0 0.0
      %696 = vmatpush1.msra.mxu0 0.0
      %697 = vmatprep.subr.mxu0 0.0
      %698 = vmatpush1.msra.mxu0 0.0
      %699 = vmatprep.subr.mxu0 0.0
      %700 = vmatpush1.msra.mxu0 0.0
      %701 = vmatprep.subr.mxu0 0.0
      %702 = vmatpush1.msra.mxu0 0.0
      %703 = vmatprep.subr.mxu0 0.0
      %704 = vmatpush1.msra.mxu0 0.0
      %705 = vmatprep.subr.mxu0 0.0
      %706 = vmatpush1.msra.mxu0 0.0
      %707 = vmatprep.subr.mxu0 0.0
      %708 = vmatpush1.msra.mxu0 0.0
      %709 = vmatprep.subr.mxu0 0.0
      %710 = vmatpush1.msra.mxu0 0.0
      %711 = vmatprep.subr.mxu0 0.0
      %712 = vmatpush1.msra.mxu0 0.0
      %713 = vmatprep.subr.mxu0 0.0
      %714 = vmatpush1.msra.mxu0 0.0
      %715 = vmatprep.subr.mxu0 0.0
      %716 = vmatpush1.msra.mxu0 0.0
      %717 = vmatprep.subr.mxu0 0.0
      %718 = vmatpush1.msra.mxu0 0.0
      %719 = vmatprep.subr.mxu0 0.0
      %720 = vmatpush1.msra.mxu0 0.0
      %721 = vmatprep.subr.mxu0 0.0
      %722 = vmatpush1.msra.mxu0 0.0
      %723 = vmatprep.subr.mxu0 0.0
      %724 = vmatpush1.msra.mxu0 0.0
      %725 = vmatprep.subr.mxu0 0.0
      %726 = vmatpush1.msra.mxu0 0.0
      %727 = vmatprep.subr.mxu0 0.0
      %728 = vmatpush1.msra.mxu0 0.0
      %729 = vmatprep.subr.mxu0 0.0
      %730 = vmatpush1.msra.mxu0 0.0
      %731 = vmatprep.subr.mxu0 0.0
      %732 = vmatpush1.msra.mxu0 0.0
      %733 = vmatprep.subr.mxu0 0.0
      %734 = vmatpush1.msra.mxu0 0.0
      %735 = vmatprep.subr.mxu0 0.0
      %736 = vmatpush1.msra.mxu0 0.0
      %737 = vmatprep.subr.mxu0 0.0
      %738 = vmatpush1.msra.mxu0 0.0
      %739 = vmatprep.subr.mxu0 0.0
      %740 = vmatpush1.msra.mxu0 0.0
      %741 = vmatprep.subr.mxu0 0.0
      %742 = vmatpush1.msra.mxu0 0.0
      %743 = vmatprep.subr.mxu0 0.0
      %744 = vmatpush1.msra.mxu0 0.0
      %745 = vmatprep.subr.mxu0 0.0
      %746 = vmatpush1.msra.mxu0 0.0
      %747 = vmatprep.subr.mxu0 0.0
      %748 = vmatpush1.msra.mxu0 0.0
      %749 = vmatprep.subr.mxu0 0.0
      %750 = vmatpush1.msra.mxu0 0.0
      %751 = vmatprep.mubr.f32.mxu0 0.0
      %752 = vmatmul.mubr.f32.gmra.mrb[0].mxu0 %v634
      %v753 = vpop.f32.mrb[0].mxu0
      %v754 = vadd.f32 %v385, %v753
      %v755 = vpop.f32.mrb[0].mxu0
      %756 = vmatprep.mubr.f32.mxu0 0.0
      %757 = vmatmul.mubr.f32.gmra.mrb[0].mxu0 %v637
      %v758 = vpop.f32.mrb[0].mxu0
      %v759 = vadd.f32 %v385, %v758
      %v760 = vpop.f32.mrb[0].mxu0
      %761 = vmatprep.mubr.f32.mxu0 0.0
      %762 = vmatmul.mubr.f32.gmra.mrb[0].mxu0 %v640
      %v763 = vpop.f32.mrb[0].mxu0
      %v764 = vadd.f32 %v385, %v763
      %v765 = vpop.f32.mrb[0].mxu0
      %766 = vmatprep.mubr.f32.mxu0 0.0
      %767 = vmatmul.mubr.f32.gmra.mrb[0].mxu0 %v643
      %v768 = vpop.f32.mrb[0].mxu0
      %v769 = vadd.f32 %v385, %v768
      %v770 = vpop.f32.mrb[0].mxu0
      %771 = vmatprep.mubr.f32.mxu0 0.0
      %772 = vmatmul.mubr.f32.gmra.mrb[0].mxu0 %v646
      %v773 = vpop.f32.mrb[0].mxu0
      %v774 = vadd.f32 %v385, %v773
      %v775 = vpop.f32.mrb[0].mxu0
      %776 = vmatprep.mubr.f32.mxu0 0.0
      %777 = vmatmul.mubr.f32.gmra.mrb[0].mxu0 %v649
      %v778 = vpop.f32.mrb[0].mxu0
      %v779 = vadd.f32 %v385, %v778
      %v780 = vpop.f32.mrb[0].mxu0
      %781 = vmatprep.mubr.f32.mxu0 0.0
      %782 = vmatmul.mubr.f32.gmra.mrb[0].mxu0 %v652
      %v783 = vpop.f32.mrb[0].mxu0
      %v784 = vadd.f32 %v385, %v783
      %v785 = vpop.f32.mrb[0].mxu0
      %786 = vmatprep.mubr.f32.mxu0 0.0
      %787 = vmatmul.mubr.f32.gmra.mrb[0].mxu0 %v655
      %v788 = vpop.f32.mrb[0].mxu0
      %v789 = vadd.f32 %v385, %v788
      %v790 = vpop.f32.mrb[0].mxu0
      %791 = vmatprep.mubr.f32.mxu0 0.0
      %792 = vmatmul.mubr.f32.gmra.mrb[0].mxu0 %v658
      %v793 = vpop.f32.mrb[0].mxu0
      %v794 = vadd.f32 %v385, %v793
      %v795 = vpop.f32.mrb[0].mxu0
      %796 = vmatprep.mubr.f32.mxu0 0.0
      %797 = vmatmul.mubr.f32.gmra.mrb[0].mxu0 %v661
      %v798 = vpop.f32.mrb[0].mxu0
      %v799 = vadd.f32 %v385, %v798
      %v800 = vpop.f32.mrb[0].mxu0
      %801 = vmatprep.mubr.f32.mxu0 0.0
      %802 = vmatmul.mubr.f32.gmra.mrb[0].mxu0 %v664
      %v803 = vpop.f32.mrb[0].mxu0
      %v804 = vadd.f32 %v385, %v803
      %v805 = vpop.f32.mrb[0].mxu0
      %806 = vmatprep.mubr.f32.mxu0 0.0
      %807 = vmatmul.mubr.f32.gmra.mrb[0].mxu0 %v667
      %v808 = vpop.f32.mrb[0].mxu0
      %v809 = vadd.f32 %v385, %v808
      %v810 = vpop.f32.mrb[0].mxu0
      %811 = vmatprep.mubr.f32.mxu0 0.0
      %812 = vmatmul.mubr.f32.gmra.mrb[0].mxu0 %v670
      %v813 = vpop.f32.mrb[0].mxu0
      %v814 = vadd.f32 %v385, %v813
      %v815 = vpop.f32.mrb[0].mxu0
      %816 = vmatprep.mubr.f32.mxu0 0.0
      %817 = vmatmul.mubr.f32.gmra.mrb[0].mxu0 %v673
      %v818 = vpop.f32.mrb[0].mxu0
      %v819 = vadd.f32 %v385, %v818
      %v820 = vpop.f32.mrb[0].mxu0
      %821 = vmatprep.mubr.f32.mxu0 0.0
      %822 = vmatmul.mubr.f32.gmra.mrb[0].mxu0 %v676
      %v823 = vpop.f32.mrb[0].mxu0
      %v824 = vadd.f32 %v385, %v823
      %v825 = vpop.f32.mrb[0].mxu0
      %826 = vmatprep.mubr.f32.mxu0 0.0
      %827 = vmatmul.mubr.f32.gmra.mrb[0].mxu0 %v679
      %v828 = vpop.f32.mrb[0].mxu0
      %v829 = vadd.f32 %v385, %v828
      %v830 = vpop.f32.mrb[0].mxu0
      %831 = vmatprep.mubr.f32.mxu0 0.0
      %832 = vmatmul.mubr.f32.gmra.mrb[0].mxu0 %v682
      %v833 = vpop.f32.mrb[0].mxu0
      %v834 = vadd.f32 %v385, %v833
      %v835 = vpop.f32.mrb[0].mxu0
      %836 = vmatprep.mubr.f32.mxu0 0.0
      %837 = vmatmul.mubr.f32.gmra.mrb[0].mxu0 %v685
      %v838 = vpop.f32.mrb[0].mxu0
      %v839 = vadd.f32 %v385, %v838
      %v840 = vpop.f32.mrb[0].mxu0
      %841 = vdwg.mxu0
      %v842 = vmax.f32 %v754, 0.0
      %v843 = vmax.f32 %v759, 0.0
      %v844 = vmax.f32 %v764, 0.0
      %v845 = vmax.f32 %v769, 0.0
      %v846 = vmax.f32 %v774, 0.0
      %v847 = vmax.f32 %v779, 0.0
      %v848 = vmax.f32 %v784, 0.0
      %v849 = vmax.f32 %v789, 0.0
      %v850 = vmax.f32 %v794, 0.0
      %v851 = vmax.f32 %v799, 0.0
      %v852 = vmax.f32 %v804, 0.0
      %v853 = vmax.f32 %v809, 0.0
      %v854 = vmax.f32 %v814, 0.0
      %v855 = vmax.f32 %v819, 0.0
      %v856 = vmax.f32 %v824, 0.0
      %v857 = vmax.f32 %v829, 0.0
      %v858 = vmax.f32 %v834, 0.0
      %v859 = vmax.f32 %v839, 0.0
      %v860 = vmax.f32 %v597, %v842
      %v861 = vmax.f32 %v598, %v843
      %v862 = vmax.f32 %v599, %v844
      %v863 = vmax.f32 %v600, %v845
      %v864 = vmax.f32 %v601, %v846
      %v865 = vmax.f32 %v602, %v847
      %v866 = vmax.f32 %v603, %v848
      %v867 = vmax.f32 %v604, %v849
      %v868 = vmax.f32 %v605, %v850
      %v869 = vmax.f32 %v606, %v851
      %v870 = vmax.f32 %v607, %v852
      %v871 = vmax.f32 %v608, %v853
      %v872 = vmax.f32 %v609, %v854
      %v873 = vmax.f32 %v610, %v855
      %v874 = vmax.f32 %v611, %v856
      %v875 = vmax.f32 %v612, %v857
      %v876 = vmax.f32 %v613, %v858
      %v877 = vmax.f32 %v614, %v859
      %v878 = vld [vmem:[%s353 + $0x120] sm:$0xff]
      %v879 = vld [vmem:[%s353 + $0x128] sm:$0xff]
      %v880 = vld [vmem:[%s353 + $0x130] sm:$0xff]
      %v881 = vld [vmem:[%s353 + $0x138] sm:$0xff]
      %v882 = vld [vmem:[%s353 + $0x140] sm:$0xff]
      %v883 = vld [vmem:[%s353 + $0x148] sm:$0xff]
      %v884 = vld [vmem:[%s353 + $0x150] sm:$0xff]
      %v885 = vld [vmem:[%s353 + $0x158] sm:$0xff]
      %v886 = vld [vmem:[%s353 + $0x160] sm:$0xff]
      %v887 = vld [vmem:[%s353 + $0x168] sm:$0xff]
      %v888 = vld [vmem:[%s353 + $0x170] sm:$0xff]
      %v889 = vld [vmem:[%s353 + $0x178] sm:$0xff]
      %v890 = vld [vmem:[%s353 + $0x180] sm:$0xff]
      %v891 = vld [vmem:[%s353 + $0x188] sm:$0xff]
      %v892 = vld [vmem:[%s353 + $0x190] sm:$0xff]
      %v893 = vld [vmem:[%s353 + $0x198] sm:$0xff]
      %v894 = vld [vmem:[%s353 + $0x1a0] sm:$0xff]
      %v895 = vld [vmem:[%s353 + $0x1a8] sm:$0xff]
      %v897 = vsel %vm387, %v878, 0
      %v900 = vsel %vm387, %v879, 0
      %v903 = vsel %vm387, %v880, 0
      %v906 = vsel %vm387, %v881, 0
      %v909 = vsel %vm387, %v882, 0
      %v912 = vsel %vm387, %v883, 0
      %v915 = vsel %vm387, %v884, 0
      %v918 = vsel %vm387, %v885, 0
      %v921 = vsel %vm387, %v886, 0
      %v924 = vsel %vm387, %v887, 0
      %v927 = vsel %vm387, %v888, 0
      %v930 = vsel %vm387, %v889, 0
      %v933 = vsel %vm387, %v890, 0
      %v936 = vsel %vm387, %v891, 0
      %v939 = vsel %vm387, %v892, 0
      %v942 = vsel %vm387, %v893, 0
      %v945 = vsel %vm387, %v894, 0
      %v948 = vsel %vm387, %v895, 0
      %950 = vmatprep.subr.mxu0 0.0
      %951 = vmatpush1.msra.mxu0 %v358
      %952 = vmatprep.subr.mxu0 0.0
      %953 = vmatpush1.msra.mxu0 %v359
      %954 = vmatprep.subr.mxu0 0.0
      %955 = vmatpush1.msra.mxu0 %v360
      %956 = vmatprep.subr.mxu0 0.0
      %957 = vmatpush1.msra.mxu0 %v361
      %958 = vmatprep.subr.mxu0 0.0
      %959 = vmatpush1.msra.mxu0 0.0
      %960 = vmatprep.subr.mxu0 0.0
      %961 = vmatpush1.msra.mxu0 0.0
      %962 = vmatprep.subr.mxu0 0.0
      %963 = vmatpush1.msra.mxu0 0.0
      %964 = vmatprep.subr.mxu0 0.0
      %965 = vmatpush1.msra.mxu0 0.0
      %966 = vmatprep.subr.mxu0 0.0
      %967 = vmatpush1.msra.mxu0 0.0
      %968 = vmatprep.subr.mxu0 0.0
      %969 = vmatpush1.msra.mxu0 0.0
      %970 = vmatprep.subr.mxu0 0.0
      %971 = vmatpush1.msra.mxu0 0.0
      %972 = vmatprep.subr.mxu0 0.0
      %973 = vmatpush1.msra.mxu0 0.0
      %974 = vmatprep.subr.mxu0 0.0
      %975 = vmatpush1.msra.mxu0 0.0
      %976 = vmatprep.subr.mxu0 0.0
      %977 = vmatpush1.msra.mxu0 0.0
      %978 = vmatprep.subr.mxu0 0.0
      %979 = vmatpush1.msra.mxu0 0.0
      %980 = vmatprep.subr.mxu0 0.0
      %981 = vmatpush1.msra.mxu0 0.0
      %982 = vmatprep.subr.mxu0 0.0
      %983 = vmatpush1.msra.mxu0 0.0
      %984 = vmatprep.subr.mxu0 0.0
      %985 = vmatpush1.msra.mxu0 0.0
      %986 = vmatprep.subr.mxu0 0.0
      %987 = vmatpush1.msra.mxu0 0.0
      %988 = vmatprep.subr.mxu0 0.0
      %989 = vmatpush1.msra.mxu0 0.0
      %990 = vmatprep.subr.mxu0 0.0
      %991 = vmatpush1.msra.mxu0 0.0
      %992 = vmatprep.subr.mxu0 0.0
      %993 = vmatpush1.msra.mxu0 0.0
      %994 = vmatprep.subr.mxu0 0.0
      %995 = vmatpush1.msra.mxu0 0.0
      %996 = vmatprep.subr.mxu0 0.0
      %997 = vmatpush1.msra.mxu0 0.0
      %998 = vmatprep.subr.mxu0 0.0
      %999 = vmatpush1.msra.mxu0 0.0
      %1000 = vmatprep.subr.mxu0 0.0
      %1001 = vmatpush1.msra.mxu0 0.0
      %1002 = vmatprep.subr.mxu0 0.0
      %1003 = vmatpush1.msra.mxu0 0.0
      %1004 = vmatprep.subr.mxu0 0.0
      %1005 = vmatpush1.msra.mxu0 0.0
      %1006 = vmatprep.subr.mxu0 0.0
      %1007 = vmatpush1.msra.mxu0 0.0
      %1008 = vmatprep.subr.mxu0 0.0
      %1009 = vmatpush1.msra.mxu0 0.0
      %1010 = vmatprep.subr.mxu0 0.0
      %1011 = vmatpush1.msra.mxu0 0.0
      %1012 = vmatprep.subr.mxu0 0.0
      %1013 = vmatpush1.msra.mxu0 0.0
      %1014 = vmatprep.mubr.f32.mxu0 0.0
      %1015 = vmatmul.mubr.f32.gmra.mrb[0].mxu0 %v897
      %v1016 = vpop.f32.mrb[0].mxu0
      %v1017 = vadd.f32 %v385, %v1016
      %v1018 = vpop.f32.mrb[0].mxu0
      %1019 = vmatprep.mubr.f32.mxu0 0.0
      %1020 = vmatmul.mubr.f32.gmra.mrb[0].mxu0 %v900
      %v1021 = vpop.f32.mrb[0].mxu0
      %v1022 = vadd.f32 %v385, %v1021
      %v1023 = vpop.f32.mrb[0].mxu0
      %1024 = vmatprep.mubr.f32.mxu0 0.0
      %1025 = vmatmul.mubr.f32.gmra.mrb[0].mxu0 %v903
      %v1026 = vpop.f32.mrb[0].mxu0
      %v1027 = vadd.f32 %v385, %v1026
      %v1028 = vpop.f32.mrb[0].mxu0
      %1029 = vmatprep.mubr.f32.mxu0 0.0
      %1030 = vmatmul.mubr.f32.gmra.mrb[0].mxu0 %v906
      %v1031 = vpop.f32.mrb[0].mxu0
      %v1032 = vadd.f32 %v385, %v1031
      %v1033 = vpop.f32.mrb[0].mxu0
      %1034 = vmatprep.mubr.f32.mxu0 0.0
      %1035 = vmatmul.mubr.f32.gmra.mrb[0].mxu0 %v909
      %v1036 = vpop.f32.mrb[0].mxu0
      %v1037 = vadd.f32 %v385, %v1036
      %v1038 = vpop.f32.mrb[0].mxu0
      %1039 = vmatprep.mubr.f32.mxu0 0.0
      %1040 = vmatmul.mubr.f32.gmra.mrb[0].mxu0 %v912
      %v1041 = vpop.f32.mrb[0].mxu0
      %v1042 = vadd.f32 %v385, %v1041
      %v1043 = vpop.f32.mrb[0].mxu0
      %1044 = vmatprep.mubr.f32.mxu0 0.0
      %1045 = vmatmul.mubr.f32.gmra.mrb[0].mxu0 %v915
      %v1046 = vpop.f32.mrb[0].mxu0
      %v1047 = vadd.f32 %v385, %v1046
      %v1048 = vpop.f32.mrb[0].mxu0
      %1049 = vmatprep.mubr.f32.mxu0 0.0
      %1050 = vmatmul.mubr.f32.gmra.mrb[0].mxu0 %v918
      %v1051 = vpop.f32.mrb[0].mxu0
      %v1052 = vadd.f32 %v385, %v1051
      %v1053 = vpop.f32.mrb[0].mxu0
      %1054 = vmatprep.mubr.f32.mxu0 0.0
      %1055 = vmatmul.mubr.f32.gmra.mrb[0].mxu0 %v921
      %v1056 = vpop.f32.mrb[0].mxu0
      %v1057 = vadd.f32 %v385, %v1056
      %v1058 = vpop.f32.mrb[0].mxu0
      %1059 = vmatprep.mubr.f32.mxu0 0.0
      %1060 = vmatmul.mubr.f32.gmra.mrb[0].mxu0 %v924
      %v1061 = vpop.f32.mrb[0].mxu0
      %v1062 = vadd.f32 %v385, %v1061
      %v1063 = vpop.f32.mrb[0].mxu0
      %1064 = vmatprep.mubr.f32.mxu0 0.0
      %1065 = vmatmul.mubr.f32.gmra.mrb[0].mxu0 %v927
      %v1066 = vpop.f32.mrb[0].mxu0
      %v1067 = vadd.f32 %v385, %v1066
      %v1068 = vpop.f32.mrb[0].mxu0
      %1069 = vmatprep.mubr.f32.mxu0 0.0
      %1070 = vmatmul.mubr.f32.gmra.mrb[0].mxu0 %v930
      %v1071 = vpop.f32.mrb[0].mxu0
      %v1072 = vadd.f32 %v385, %v1071
      %v1073 = vpop.f32.mrb[0].mxu0
      %1074 = vmatprep.mubr.f32.mxu0 0.0
      %1075 = vmatmul.mubr.f32.gmra.mrb[0].mxu0 %v933
      %v1076 = vpop.f32.mrb[0].mxu0
      %v1077 = vadd.f32 %v385, %v1076
      %v1078 = vpop.f32.mrb[0].mxu0
      %1079 = vmatprep.mubr.f32.mxu0 0.0
      %1080 = vmatmul.mubr.f32.gmra.mrb[0].mxu0 %v936
      %v1081 = vpop.f32.mrb[0].mxu0
      %v1082 = vadd.f32 %v385, %v1081
      %v1083 = vpop.f32.mrb[0].mxu0
      %1084 = vmatprep.mubr.f32.mxu0 0.0
      %1085 = vmatmul.mubr.f32.gmra.mrb[0].mxu0 %v939
      %v1086 = vpop.f32.mrb[0].mxu0
      %v1087 = vadd.f32 %v385, %v1086
      %v1088 = vpop.f32.mrb[0].mxu0
      %1089 = vmatprep.mubr.f32.mxu0 0.0
      %1090 = vmatmul.mubr.f32.gmra.mrb[0].mxu0 %v942
      %v1091 = vpop.f32.mrb[0].mxu0
      %v1092 = vadd.f32 %v385, %v1091
      %v1093 = vpop.f32.mrb[0].mxu0
      %1094 = vmatprep.mubr.f32.mxu0 0.0
      %1095 = vmatmul.mubr.f32.gmra.mrb[0].mxu0 %v945
      %v1096 = vpop.f32.mrb[0].mxu0
      %v1097 = vadd.f32 %v385, %v1096
      %v1098 = vpop.f32.mrb[0].mxu0
      %1099 = vmatprep.mubr.f32.mxu0 0.0
      %1100 = vmatmul.mubr.f32.gmra.mrb[0].mxu0 %v948
      %v1101 = vpop.f32.mrb[0].mxu0
      %v1102 = vadd.f32 %v385, %v1101
      %v1103 = vpop.f32.mrb[0].mxu0
      %1104 = vdwg.mxu0
      %v1105 = vmax.f32 %v1017, 0.0
      %v1106 = vmax.f32 %v1022, 0.0
      %v1107 = vmax.f32 %v1027, 0.0
      %v1108 = vmax.f32 %v1032, 0.0
      %v1109 = vmax.f32 %v1037, 0.0
      %v1110 = vmax.f32 %v1042, 0.0
      %v1111 = vmax.f32 %v1047, 0.0
      %v1112 = vmax.f32 %v1052, 0.0
      %v1113 = vmax.f32 %v1057, 0.0
      %v1114 = vmax.f32 %v1062, 0.0
      %v1115 = vmax.f32 %v1067, 0.0
      %v1116 = vmax.f32 %v1072, 0.0
      %v1117 = vmax.f32 %v1077, 0.0
      %v1118 = vmax.f32 %v1082, 0.0
      %v1119 = vmax.f32 %v1087, 0.0
      %v1120 = vmax.f32 %v1092, 0.0
      %v1121 = vmax.f32 %v1097, 0.0
      %v1122 = vmax.f32 %v1102, 0.0
      %v1123 = vmax.f32 %v860, %v1105
      %v1124 = vmax.f32 %v861, %v1106
      %v1125 = vmax.f32 %v862, %v1107
      %v1126 = vmax.f32 %v863, %v1108
      %v1127 = vmax.f32 %v864, %v1109
      %v1128 = vmax.f32 %v865, %v1110
      %v1129 = vmax.f32 %v866, %v1111
      %v1130 = vmax.f32 %v867, %v1112
      %v1131 = vmax.f32 %v868, %v1113
      %v1132 = vmax.f32 %v869, %v1114
      %v1133 = vmax.f32 %v870, %v1115
      %v1134 = vmax.f32 %v871, %v1116
      %v1135 = vmax.f32 %v872, %v1117
      %v1136 = vmax.f32 %v873, %v1118
      %v1137 = vmax.f32 %v874, %v1119
      %v1138 = vmax.f32 %v875, %v1120
      %v1139 = vmax.f32 %v876, %v1121
      %v1140 = vmax.f32 %v877, %v1122
      %v1141 = vld [vmem:[%s353 + $0x1b0] sm:$0xff]
      %v1142 = vld [vmem:[%s353 + $0x1b8] sm:$0xff]
      %v1143 = vld [vmem:[%s353 + $0x1c0] sm:$0xff]
      %v1144 = vld [vmem:[%s353 + $0x1c8] sm:$0xff]
      %v1145 = vld [vmem:[%s353 + $0x1d0] sm:$0xff]
      %v1146 = vld [vmem:[%s353 + $0x1d8] sm:$0xff]
      %v1147 = vld [vmem:[%s353 + $0x1e0] sm:$0xff]
      %v1148 = vld [vmem:[%s353 + $0x1e8] sm:$0xff]
      %v1149 = vld [vmem:[%s353 + $0x1f0] sm:$0xff]
      %v1150 = vld [vmem:[%s353 + $0x1f8] sm:$0xff]
      %v1151 = vld [vmem:[%s353 + $0x200] sm:$0xff]
      %v1152 = vld [vmem:[%s353 + $0x208] sm:$0xff]
      %v1153 = vld [vmem:[%s353 + $0x210] sm:$0xff]
      %v1154 = vld [vmem:[%s353 + $0x218] sm:$0xff]
      %v1155 = vld [vmem:[%s353 + $0x220] sm:$0xff]
      %v1156 = vld [vmem:[%s353 + $0x228] sm:$0xff]
      %v1157 = vld [vmem:[%s353 + $0x230] sm:$0xff]
      %v1158 = vld [vmem:[%s353 + $0x238] sm:$0xff]
      %v1160 = vsel %vm387, %v1141, 0
      %v1163 = vsel %vm387, %v1142, 0
      %v1166 = vsel %vm387, %v1143, 0
      %v1169 = vsel %vm387, %v1144, 0
      %v1172 = vsel %vm387, %v1145, 0
      %v1175 = vsel %vm387, %v1146, 0
      %v1178 = vsel %vm387, %v1147, 0
      %v1181 = vsel %vm387, %v1148, 0
      %v1184 = vsel %vm387, %v1149, 0
      %v1187 = vsel %vm387, %v1150, 0
      %v1190 = vsel %vm387, %v1151, 0
      %v1193 = vsel %vm387, %v1152, 0
      %v1196 = vsel %vm387, %v1153, 0
      %v1199 = vsel %vm387, %v1154, 0
      %v1202 = vsel %vm387, %v1155, 0
      %v1205 = vsel %vm387, %v1156, 0
      %v1208 = vsel %vm387, %v1157, 0
      %v1211 = vsel %vm387, %v1158, 0
      %1213 = vmatprep.subr.mxu0 0.0
      %1214 = vmatpush1.msra.mxu0 %v358
      %1215 = vmatprep.subr.mxu0 0.0
      %1216 = vmatpush1.msra.mxu0 %v359
      %1217 = vmatprep.subr.mxu0 0.0
      %1218 = vmatpush1.msra.mxu0 %v360
      %1219 = vmatprep.subr.mxu0 0.0
      %1220 = vmatpush1.msra.mxu0 %v361
      %1221 = vmatprep.subr.mxu0 0.0
      %1222 = vmatpush1.msra.mxu0 0.0
      %1223 = vmatprep.subr.mxu0 0.0
      %1224 = vmatpush1.msra.mxu0 0.0
      %1225 = vmatprep.subr.mxu0 0.0
      %1226 = vmatpush1.msra.mxu0 0.0
      %1227 = vmatprep.subr.mxu0 0.0
      %1228 = vmatpush1.msra.mxu0 0.0
      %1229 = vmatprep.subr.mxu0 0.0
      %1230 = vmatpush1.msra.mxu0 0.0
      %1231 = vmatprep.subr.mxu0 0.0
      %1232 = vmatpush1.msra.mxu0 0.0
      %1233 = vmatprep.subr.mxu0 0.0
      %1234 = vmatpush1.msra.mxu0 0.0
      %1235 = vmatprep.subr.mxu0 0.0
      %1236 = vmatpush1.msra.mxu0 0.0
      %1237 = vmatprep.subr.mxu0 0.0
      %1238 = vmatpush1.msra.mxu0 0.0
      %1239 = vmatprep.subr.mxu0 0.0
      %1240 = vmatpush1.msra.mxu0 0.0
      %1241 = vmatprep.subr.mxu0 0.0
      %1242 = vmatpush1.msra.mxu0 0.0
      %1243 = vmatprep.subr.mxu0 0.0
      %1244 = vmatpush1.msra.mxu0 0.0
      %1245 = vmatprep.subr.mxu0 0.0
      %1246 = vmatpush1.msra.mxu0 0.0
      %1247 = vmatprep.subr.mxu0 0.0
      %1248 = vmatpush1.msra.mxu0 0.0
      %1249 = vmatprep.subr.mxu0 0.0
      %1250 = vmatpush1.msra.mxu0 0.0
      %1251 = vmatprep.subr.mxu0 0.0
      %1252 = vmatpush1.msra.mxu0 0.0
      %1253 = vmatprep.subr.mxu0 0.0
      %1254 = vmatpush1.msra.mxu0 0.0
      %1255 = vmatprep.subr.mxu0 0.0
      %1256 = vmatpush1.msra.mxu0 0.0
      %1257 = vmatprep.subr.mxu0 0.0
      %1258 = vmatpush1.msra.mxu0 0.0
      %1259 = vmatprep.subr.mxu0 0.0
      %1260 = vmatpush1.msra.mxu0 0.0
      %1261 = vmatprep.subr.mxu0 0.0
      %1262 = vmatpush1.msra.mxu0 0.0
      %1263 = vmatprep.subr.mxu0 0.0
      %1264 = vmatpush1.msra.mxu0 0.0
      %1265 = vmatprep.subr.mxu0 0.0
      %1266 = vmatpush1.msra.mxu0 0.0
      %1267 = vmatprep.subr.mxu0 0.0
      %1268 = vmatpush1.msra.mxu0 0.0
      %1269 = vmatprep.subr.mxu0 0.0
      %1270 = vmatpush1.msra.mxu0 0.0
      %1271 = vmatprep.subr.mxu0 0.0
      %1272 = vmatpush1.msra.mxu0 0.0
      %1273 = vmatprep.subr.mxu0 0.0
      %1274 = vmatpush1.msra.mxu0 0.0
      %1275 = vmatprep.subr.mxu0 0.0
      %1276 = vmatpush1.msra.mxu0 0.0
      %1277 = vmatprep.mubr.f32.mxu0 0.0
      %1278 = vmatmul.mubr.f32.gmra.mrb[0].mxu0 %v1160
      %v1279 = vpop.f32.mrb[0].mxu0
      %v1280 = vadd.f32 %v385, %v1279
      %v1281 = vpop.f32.mrb[0].mxu0
      %1282 = vmatprep.mubr.f32.mxu0 0.0
      %1283 = vmatmul.mubr.f32.gmra.mrb[0].mxu0 %v1163
      %v1284 = vpop.f32.mrb[0].mxu0
      %v1285 = vadd.f32 %v385, %v1284
      %v1286 = vpop.f32.mrb[0].mxu0
      %1287 = vmatprep.mubr.f32.mxu0 0.0
      %1288 = vmatmul.mubr.f32.gmra.mrb[0].mxu0 %v1166
      %v1289 = vpop.f32.mrb[0].mxu0
      %v1290 = vadd.f32 %v385, %v1289
      %v1291 = vpop.f32.mrb[0].mxu0
      %1292 = vmatprep.mubr.f32.mxu0 0.0
      %1293 = vmatmul.mubr.f32.gmra.mrb[0].mxu0 %v1169
      %v1294 = vpop.f32.mrb[0].mxu0
      %v1295 = vadd.f32 %v385, %v1294
      %v1296 = vpop.f32.mrb[0].mxu0
      %1297 = vmatprep.mubr.f32.mxu0 0.0
      %1298 = vmatmul.mubr.f32.gmra.mrb[0].mxu0 %v1172
      %v1299 = vpop.f32.mrb[0].mxu0
      %v1300 = vadd.f32 %v385, %v1299
      %v1301 = vpop.f32.mrb[0].mxu0
      %1302 = vmatprep.mubr.f32.mxu0 0.0
      %1303 = vmatmul.mubr.f32.gmra.mrb[0].mxu0 %v1175
      %v1304 = vpop.f32.mrb[0].mxu0
      %v1305 = vadd.f32 %v385, %v1304
      %v1306 = vpop.f32.mrb[0].mxu0
      %1307 = vmatprep.mubr.f32.mxu0 0.0
      %1308 = vmatmul.mubr.f32.gmra.mrb[0].mxu0 %v1178
      %v1309 = vpop.f32.mrb[0].mxu0
      %v1310 = vadd.f32 %v385, %v1309
      %v1311 = vpop.f32.mrb[0].mxu0
      %1312 = vmatprep.mubr.f32.mxu0 0.0
      %1313 = vmatmul.mubr.f32.gmra.mrb[0].mxu0 %v1181
      %v1314 = vpop.f32.mrb[0].mxu0
      %v1315 = vadd.f32 %v385, %v1314
      %v1316 = vpop.f32.mrb[0].mxu0
      %1317 = vmatprep.mubr.f32.mxu0 0.0
      %1318 = vmatmul.mubr.f32.gmra.mrb[0].mxu0 %v1184
      %v1319 = vpop.f32.mrb[0].mxu0
      %v1320 = vadd.f32 %v385, %v1319
      %v1321 = vpop.f32.mrb[0].mxu0
      %1322 = vmatprep.mubr.f32.mxu0 0.0
      %1323 = vmatmul.mubr.f32.gmra.mrb[0].mxu0 %v1187
      %v1324 = vpop.f32.mrb[0].mxu0
      %v1325 = vadd.f32 %v385, %v1324
      %v1326 = vpop.f32.mrb[0].mxu0
      %1327 = vmatprep.mubr.f32.mxu0 0.0
      %1328 = vmatmul.mubr.f32.gmra.mrb[0].mxu0 %v1190
      %v1329 = vpop.f32.mrb[0].mxu0
      %v1330 = vadd.f32 %v385, %v1329
      %v1331 = vpop.f32.mrb[0].mxu0
      %1332 = vmatprep.mubr.f32.mxu0 0.0
      %1333 = vmatmul.mubr.f32.gmra.mrb[0].mxu0 %v1193
      %v1334 = vpop.f32.mrb[0].mxu0
      %v1335 = vadd.f32 %v385, %v1334
      %v1336 = vpop.f32.mrb[0].mxu0
      %1337 = vmatprep.mubr.f32.mxu0 0.0
      %1338 = vmatmul.mubr.f32.gmra.mrb[0].mxu0 %v1196
      %v1339 = vpop.f32.mrb[0].mxu0
      %v1340 = vadd.f32 %v385, %v1339
      %v1341 = vpop.f32.mrb[0].mxu0
      %1342 = vmatprep.mubr.f32.mxu0 0.0
      %1343 = vmatmul.mubr.f32.gmra.mrb[0].mxu0 %v1199
      %v1344 = vpop.f32.mrb[0].mxu0
      %v1345 = vadd.f32 %v385, %v1344
      %v1346 = vpop.f32.mrb[0].mxu0
      %1347 = vmatprep.mubr.f32.mxu0 0.0
      %1348 = vmatmul.mubr.f32.gmra.mrb[0].mxu0 %v1202
      %v1349 = vpop.f32.mrb[0].mxu0
      %v1350 = vadd.f32 %v385, %v1349
      %v1351 = vpop.f32.mrb[0].mxu0
      %1352 = vmatprep.mubr.f32.mxu0 0.0
      %1353 = vmatmul.mubr.f32.gmra.mrb[0].mxu0 %v1205
      %v1354 = vpop.f32.mrb[0].mxu0
      %v1355 = vadd.f32 %v385, %v1354
      %v1356 = vpop.f32.mrb[0].mxu0
      %1357 = vmatprep.mubr.f32.mxu0 0.0
      %1358 = vmatmul.mubr.f32.gmra.mrb[0].mxu0 %v1208
      %v1359 = vpop.f32.mrb[0].mxu0
      %v1360 = vadd.f32 %v385, %v1359
      %v1361 = vpop.f32.mrb[0].mxu0
      %1362 = vmatprep.mubr.f32.mxu0 0.0
      %1363 = vmatmul.mubr.f32.gmra.mrb[0].mxu0 %v1211
      %v1364 = vpop.f32.mrb[0].mxu0
      %v1365 = vadd.f32 %v385, %v1364
      %v1366 = vpop.f32.mrb[0].mxu0
      %1367 = vdwg.mxu0
      %v1368 = vmax.f32 %v1280, 0.0
      %v1369 = vmax.f32 %v1285, 0.0
      %v1370 = vmax.f32 %v1290, 0.0
      %v1371 = vmax.f32 %v1295, 0.0
      %v1372 = vmax.f32 %v1300, 0.0
      %v1373 = vmax.f32 %v1305, 0.0
      %v1374 = vmax.f32 %v1310, 0.0
      %v1375 = vmax.f32 %v1315, 0.0
      %v1376 = vmax.f32 %v1320, 0.0
      %v1377 = vmax.f32 %v1325, 0.0
      %v1378 = vmax.f32 %v1330, 0.0
      %v1379 = vmax.f32 %v1335, 0.0
      %v1380 = vmax.f32 %v1340, 0.0
      %v1381 = vmax.f32 %v1345, 0.0
      %v1382 = vmax.f32 %v1350, 0.0
      %v1383 = vmax.f32 %v1355, 0.0
      %v1384 = vmax.f32 %v1360, 0.0
      %v1385 = vmax.f32 %v1365, 0.0
      %v1386 = vmax.f32 %v1123, %v1368
      %v1387 = vmax.f32 %v1124, %v1369
      %v1388 = vmax.f32 %v1125, %v1370
      %v1389 = vmax.f32 %v1126, %v1371
      %v1390 = vmax.f32 %v1127, %v1372
      %v1391 = vmax.f32 %v1128, %v1373
      %v1392 = vmax.f32 %v1129, %v1374
      %v1393 = vmax.f32 %v1130, %v1375
      %v1394 = vmax.f32 %v1131, %v1376
      %v1395 = vmax.f32 %v1132, %v1377
      %v1396 = vmax.f32 %v1133, %v1378
      %v1397 = vmax.f32 %v1134, %v1379
      %v1398 = vmax.f32 %v1135, %v1380
      %v1399 = vmax.f32 %v1136, %v1381
      %v1400 = vmax.f32 %v1137, %v1382
      %v1401 = vmax.f32 %v1138, %v1383
      %v1402 = vmax.f32 %v1139, %v1384
      %v1403 = vmax.f32 %v1140, %v1385
      %1404 = vst [vmem:[#allocation2] sm:$0xff] %v1386
      %1405 = vst [vmem:[#allocation2 + $0x8] sm:$0xff] %v1387
      %1406 = vst [vmem:[#allocation2 + $0x10] sm:$0xff] %v1388
      %1407 = vst [vmem:[#allocation2 + $0x18] sm:$0xff] %v1389
      %1408 = vst [vmem:[#allocation2 + $0x20] sm:$0xff] %v1390
      %1409 = vst [vmem:[#allocation2 + $0x28] sm:$0xff] %v1391
      %1410 = vst [vmem:[#allocation2 + $0x30] sm:$0xff] %v1392
      %1411 = vst [vmem:[#allocation2 + $0x38] sm:$0xff] %v1393
      %1412 = vst [vmem:[#allocation2 + $0x40] sm:$0xff] %v1394
      %1413 = vst [vmem:[#allocation2 + $0x48] sm:$0xff] %v1395
      %1414 = vst [vmem:[#allocation2 + $0x50] sm:$0xff] %v1396
      %1415 = vst [vmem:[#allocation2 + $0x58] sm:$0xff] %v1397
      %1416 = vst [vmem:[#allocation2 + $0x60] sm:$0xff] %v1398
      %1417 = vst [vmem:[#allocation2 + $0x68] sm:$0xff] %v1399
      %1418 = vst [vmem:[#allocation2 + $0x70] sm:$0xff] %v1400
      %1419 = vst [vmem:[#allocation2 + $0x78] sm:$0xff] %v1401
      %1420 = vst [vmem:[#allocation2 + $0x80] sm:$0xff] %v1402
      %1421 = vst [vmem:[#allocation2 + $0x88] sm:$0xff] %v1403
      %1422 = vst [vmem:[#allocation2 + $0x90] sm:$0xff] 0.0
      %1423 = vst [vmem:[#allocation2 + $0x98] sm:$0xff] 0.0
      %v1424 = vld [vmem:[#allocation2] sm:$0xff]
      %v1425 = vld [vmem:[#allocation2 + $0x8] sm:$0xff]
      %v1426 = vld [vmem:[#allocation2 + $0x10] sm:$0xff]
      %v1427 = vld [vmem:[#allocation2 + $0x18] sm:$0xff]
      %v1428 = vld [vmem:[#allocation2 + $0x20] sm:$0xff]
      %v1429 = vld [vmem:[#allocation2 + $0x28] sm:$0xff]
      %v1430 = vld [vmem:[#allocation2 + $0x30] sm:$0xff]
      %v1431 = vld [vmem:[#allocation2 + $0x38] sm:$0xff]
      %v1432 = vld [vmem:[#allocation2 + $0x40] sm:$0xff]
      %v1433 = vld [vmem:[#allocation2 + $0x48] sm:$0xff]
      %v1434 = vld [vmem:[#allocation2 + $0x50] sm:$0xff]
      %v1435 = vld [vmem:[#allocation2 + $0x58] sm:$0xff]
      %v1436 = vld [vmem:[%s4] sm:$0xff]
      %v1437 = vld [vmem:[%s4 + $0x8] sm:$0xff]
      %v1438 = vld [vmem:[%s4 + $0x10] sm:$0xff]
      %v1439 = vld [vmem:[%s4 + $0x18] sm:$0xff]
      %v1440 = vld [vmem:[%s4 + $0x20] sm:$0xff]
      %v1441 = vld [vmem:[%s4 + $0x28] sm:$0xff]
      %v1442 = vld [vmem:[%s4 + $0x30] sm:$0xff]
      %v1443 = vld [vmem:[%s4 + $0x38] sm:$0xff]
      %v1444 = vld [vmem:[%s4 + $0x40] sm:$0xff]
      %v1445 = vld [vmem:[%s4 + $0x48] sm:$0xff]
      %v1446 = vld [vmem:[%s4 + $0x50] sm:$0xff]
      %v1447 = vld [vmem:[%s4 + $0x58] sm:$0xff]
      %v1448 = vld [vmem:[%s4 + $0x60] sm:$0xff]
      %v1449 = vld [vmem:[%s4 + $0x68] sm:$0xff]
      %v1450 = vld [vmem:[%s4 + $0x70] sm:$0xff]
      %v1451 = vld [vmem:[%s4 + $0x78] sm:$0xff]
      %v1452 = vld [vmem:[#allocation2 + $0x1] sm:$0xff]
      %v1453 = vld [vmem:[#allocation2 + $0x9] sm:$0xff]
      %v1454 = vld [vmem:[#allocation2 + $0x11] sm:$0xff]
      %v1455 = vld [vmem:[#allocation2 + $0x19] sm:$0xff]
      %v1456 = vld [vmem:[#allocation2 + $0x21] sm:$0xff]
      %v1457 = vld [vmem:[#allocation2 + $0x29] sm:$0xff]
      %v1458 = vld [vmem:[#allocation2 + $0x31] sm:$0xff]
      %v1459 = vld [vmem:[#allocation2 + $0x39] sm:$0xff]
      %v1460 = vld [vmem:[#allocation2 + $0x41] sm:$0xff]
      %v1461 = vld [vmem:[#allocation2 + $0x49] sm:$0xff]
      %v1462 = vld [vmem:[#allocation2 + $0x51] sm:$0xff]
      %v1463 = vld [vmem:[#allocation2 + $0x59] sm:$0xff]
      %s1464 = scalar_lea.vmem %s4, 128
      %v1465 = vld [vmem:[%s1464] sm:$0xff]
      %v1466 = vld [vmem:[%s1464 + $0x8] sm:$0xff]
      %v1467 = vld [vmem:[%s1464 + $0x10] sm:$0xff]
      %v1468 = vld [vmem:[%s1464 + $0x18] sm:$0xff]
      %v1469 = vld [vmem:[%s1464 + $0x20] sm:$0xff]
      %v1470 = vld [vmem:[%s1464 + $0x28] sm:$0xff]
      %v1471 = vld [vmem:[%s1464 + $0x30] sm:$0xff]
      %v1472 = vld [vmem:[%s1464 + $0x38] sm:$0xff]
      %v1473 = vld [vmem:[%s1464 + $0x40] sm:$0xff]
      %v1474 = vld [vmem:[%s1464 + $0x48] sm:$0xff]
      %v1475 = vld [vmem:[%s1464 + $0x50] sm:$0xff]
      %v1476 = vld [vmem:[%s1464 + $0x58] sm:$0xff]
      %v1477 = vld [vmem:[%s1464 + $0x60] sm:$0xff]
      %v1478 = vld [vmem:[%s1464 + $0x68] sm:$0xff]
      %v1479 = vld [vmem:[%s1464 + $0x70] sm:$0xff]
      %v1480 = vld [vmem:[%s1464 + $0x78] sm:$0xff]
      %1481 = vmatprep.subr.mxu0 0.0
      %1482 = vmatpush1.msra.mxu0 %v1465
      %1483 = vmatprep.subr.mxu0 0.0
      %1484 = vmatpush1.msra.mxu0 %v1466
      %1485 = vmatprep.subr.mxu0 0.0
      %1486 = vmatpush1.msra.mxu0 %v1467
      %1487 = vmatprep.subr.mxu0 0.0
      %1488 = vmatpush1.msra.mxu0 %v1468
      %1489 = vmatprep.subr.mxu0 0.0
      %1490 = vmatpush1.msra.mxu0 %v1469
      %1491 = vmatprep.subr.mxu0 0.0
      %1492 = vmatpush1.msra.mxu0 %v1470
      %1493 = vmatprep.subr.mxu0 0.0
      %1494 = vmatpush1.msra.mxu0 %v1471
      %1495 = vmatprep.subr.mxu0 0.0
      %1496 = vmatpush1.msra.mxu0 %v1472
      %1497 = vmatprep.subr.mxu0 0.0
      %1498 = vmatpush1.msra.mxu0 %v1473
      %1499 = vmatprep.subr.mxu0 0.0
      %1500 = vmatpush1.msra.mxu0 %v1474
      %1501 = vmatprep.subr.mxu0 0.0
      %1502 = vmatpush1.msra.mxu0 %v1475
      %1503 = vmatprep.subr.mxu0 0.0
      %1504 = vmatpush1.msra.mxu0 %v1476
      %1505 = vmatprep.subr.mxu0 0.0
      %1506 = vmatpush1.msra.mxu0 %v1477
      %1507 = vmatprep.subr.mxu0 0.0
      %1508 = vmatpush1.msra.mxu0 %v1478
      %1509 = vmatprep.subr.mxu0 0.0
      %1510 = vmatpush1.msra.mxu0 %v1479
      %1511 = vmatprep.subr.mxu0 0.0
      %1512 = vmatpush1.msra.mxu0 %v1480
      %1513 = vmatprep.subr.mxu0 0.0
      %1514 = vmatpush1.msra.mxu0 0.0
      %1515 = vmatprep.subr.mxu0 0.0
      %1516 = vmatpush1.msra.mxu0 0.0
      %1517 = vmatprep.subr.mxu0 0.0
      %1518 = vmatpush1.msra.mxu0 0.0
      %1519 = vmatprep.subr.mxu0 0.0
      %1520 = vmatpush1.msra.mxu0 0.0
      %1521 = vmatprep.subr.mxu0 0.0
      %1522 = vmatpush1.msra.mxu0 0.0
      %1523 = vmatprep.subr.mxu0 0.0
      %1524 = vmatpush1.msra.mxu0 0.0
      %1525 = vmatprep.subr.mxu0 0.0
      %1526 = vmatpush1.msra.mxu0 0.0
      %1527 = vmatprep.subr.mxu0 0.0
      %1528 = vmatpush1.msra.mxu0 0.0
      %1529 = vmatprep.subr.mxu0 0.0
      %1530 = vmatpush1.msra.mxu0 0.0
      %1531 = vmatprep.subr.mxu0 0.0
      %1532 = vmatpush1.msra.mxu0 0.0
      %1533 = vmatprep.subr.mxu0 0.0
      %1534 = vmatpush1.msra.mxu0 0.0
      %1535 = vmatprep.subr.mxu0 0.0
      %1536 = vmatpush1.msra.mxu0 0.0
      %1537 = vmatprep.subr.mxu0 0.0
      %1538 = vmatpush1.msra.mxu0 0.0
      %1539 = vmatprep.subr.mxu0 0.0
      %1540 = vmatpush1.msra.mxu0 0.0
      %1541 = vmatprep.subr.mxu0 0.0
      %1542 = vmatpush1.msra.mxu0 0.0
      %1543 = vmatprep.subr.mxu0 0.0
      %1544 = vmatpush1.msra.mxu0 0.0
      %1545 = vmatprep.mubr.f32.mxu0 0.0
      %1546 = vmatmul.mubr.f32.gmra.mrb[0].mxu0 %v1452
      %v1547 = vpop.f32.mrb[0].mxu0
      %v1548 = vadd.f32 0.0, %v1547
      %v1549 = vpop.f32.mrb[0].mxu0
      %1550 = vmatprep.mubr.f32.mxu0 0.0
      %1551 = vmatmul.mubr.f32.gmra.mrb[0].mxu0 %v1453
      %v1552 = vpop.f32.mrb[0].mxu0
      %v1553 = vadd.f32 0.0, %v1552
      %v1554 = vpop.f32.mrb[0].mxu0
      %1555 = vmatprep.mubr.f32.mxu0 0.0
      %1556 = vmatmul.mubr.f32.gmra.mrb[0].mxu0 %v1454
      %v1557 = vpop.f32.mrb[0].mxu0
      %v1558 = vadd.f32 0.0, %v1557
      %v1559 = vpop.f32.mrb[0].mxu0
      %1560 = vmatprep.mubr.f32.mxu0 0.0
      %1561 = vmatmul.mubr.f32.gmra.mrb[0].mxu0 %v1455
      %v1562 = vpop.f32.mrb[0].mxu0
      %v1563 = vadd.f32 0.0, %v1562
      %v1564 = vpop.f32.mrb[0].mxu0
      %1565 = vmatprep.mubr.f32.mxu0 0.0
      %1566 = vmatmul.mubr.f32.gmra.mrb[0].mxu0 %v1456
      %v1567 = vpop.f32.mrb[0].mxu0
      %v1568 = vadd.f32 0.0, %v1567
      %v1569 = vpop.f32.mrb[0].mxu0
      %1570 = vmatprep.mubr.f32.mxu0 0.0
      %1571 = vmatmul.mubr.f32.gmra.mrb[0].mxu0 %v1457
      %v1572 = vpop.f32.mrb[0].mxu0
      %v1573 = vadd.f32 0.0, %v1572
      %v1574 = vpop.f32.mrb[0].mxu0
      %1575 = vmatprep.mubr.f32.mxu0 0.0
      %1576 = vmatmul.mubr.f32.gmra.mrb[0].mxu0 %v1458
      %v1577 = vpop.f32.mrb[0].mxu0
      %v1578 = vadd.f32 0.0, %v1577
      %v1579 = vpop.f32.mrb[0].mxu0
      %1580 = vmatprep.mubr.f32.mxu0 0.0
      %1581 = vmatmul.mubr.f32.gmra.mrb[0].mxu0 %v1459
      %v1582 = vpop.f32.mrb[0].mxu0
      %v1583 = vadd.f32 0.0, %v1582
      %v1584 = vpop.f32.mrb[0].mxu0
      %1585 = vmatprep.mubr.f32.mxu0 0.0
      %1586 = vmatmul.mubr.f32.gmra.mrb[0].mxu0 %v1460
      %v1587 = vpop.f32.mrb[0].mxu0
      %v1588 = vadd.f32 0.0, %v1587
      %v1589 = vpop.f32.mrb[0].mxu0
      %1590 = vmatprep.mubr.f32.mxu0 0.0
      %1591 = vmatmul.mubr.f32.gmra.mrb[0].mxu0 %v1461
      %v1592 = vpop.f32.mrb[0].mxu0
      %v1593 = vadd.f32 0.0, %v1592
      %v1594 = vpop.f32.mrb[0].mxu0
      %1595 = vmatprep.mubr.f32.mxu0 0.0
      %1596 = vmatmul.mubr.f32.gmra.mrb[0].mxu0 %v1462
      %v1597 = vpop.f32.mrb[0].mxu0
      %v1598 = vadd.f32 0.0, %v1597
      %v1599 = vpop.f32.mrb[0].mxu0
      %1600 = vmatprep.mubr.f32.mxu0 0.0
      %1601 = vmatmul.mubr.f32.gmra.mrb[0].mxu0 %v1463
      %v1602 = vpop.f32.mrb[0].mxu0
      %v1603 = vadd.f32 0.0, %v1602
      %v1604 = vpop.f32.mrb[0].mxu0
      %1605 = vdwg.mxu0
      %1606 = vmatprep.subr.mxu0 0.0
      %1607 = vmatpush1.msra.mxu0 %v1436
      %1608 = vmatprep.subr.mxu0 0.0
      %1609 = vmatpush1.msra.mxu0 %v1437
      %1610 = vmatprep.subr.mxu0 0.0
      %1611 = vmatpush1.msra.mxu0 %v1438
      %1612 = vmatprep.subr.mxu0 0.0
      %1613 = vmatpush1.msra.mxu0 %v1439
      %1614 = vmatprep.subr.mxu0 0.0
      %1615 = vmatpush1.msra.mxu0 %v1440
      %1616 = vmatprep.subr.mxu0 0.0
      %1617 = vmatpush1.msra.mxu0 %v1441
      %1618 = vmatprep.subr.mxu0 0.0
      %1619 = vmatpush1.msra.mxu0 %v1442
      %1620 = vmatprep.subr.mxu0 0.0
      %1621 = vmatpush1.msra.mxu0 %v1443
      %1622 = vmatprep.subr.mxu0 0.0
      %1623 = vmatpush1.msra.mxu0 %v1444
      %1624 = vmatprep.subr.mxu0 0.0
      %1625 = vmatpush1.msra.mxu0 %v1445
      %1626 = vmatprep.subr.mxu0 0.0
      %1627 = vmatpush1.msra.mxu0 %v1446
      %1628 = vmatprep.subr.mxu0 0.0
      %1629 = vmatpush1.msra.mxu0 %v1447
      %1630 = vmatprep.subr.mxu0 0.0
      %1631 = vmatpush1.msra.mxu0 %v1448
      %1632 = vmatprep.subr.mxu0 0.0
      %1633 = vmatpush1.msra.mxu0 %v1449
      %1634 = vmatprep.subr.mxu0 0.0
      %1635 = vmatpush1.msra.mxu0 %v1450
      %1636 = vmatprep.subr.mxu0 0.0
      %1637 = vmatpush1.msra.mxu0 %v1451
      %1638 = vmatprep.subr.mxu0 0.0
      %1639 = vmatpush1.msra.mxu0 0.0
      %1640 = vmatprep.subr.mxu0 0.0
      %1641 = vmatpush1.msra.mxu0 0.0
      %1642 = vmatprep.subr.mxu0 0.0
      %1643 = vmatpush1.msra.mxu0 0.0
      %1644 = vmatprep.subr.mxu0 0.0
      %1645 = vmatpush1.msra.mxu0 0.0
      %1646 = vmatprep.subr.mxu0 0.0
      %1647 = vmatpush1.msra.mxu0 0.0
      %1648 = vmatprep.subr.mxu0 0.0
      %1649 = vmatpush1.msra.mxu0 0.0
      %1650 = vmatprep.subr.mxu0 0.0
      %1651 = vmatpush1.msra.mxu0 0.0
      %1652 = vmatprep.subr.mxu0 0.0
      %1653 = vmatpush1.msra.mxu0 0.0
      %1654 = vmatprep.subr.mxu0 0.0
      %1655 = vmatpush1.msra.mxu0 0.0
      %1656 = vmatprep.subr.mxu0 0.0
      %1657 = vmatpush1.msra.mxu0 0.0
      %1658 = vmatprep.subr.mxu0 0.0
      %1659 = vmatpush1.msra.mxu0 0.0
      %1660 = vmatprep.subr.mxu0 0.0
      %1661 = vmatpush1.msra.mxu0 0.0
      %1662 = vmatprep.subr.mxu0 0.0
      %1663 = vmatpush1.msra.mxu0 0.0
      %1664 = vmatprep.subr.mxu0 0.0
      %1665 = vmatpush1.msra.mxu0 0.0
      %1666 = vmatprep.subr.mxu0 0.0
      %1667 = vmatpush1.msra.mxu0 0.0
      %1668 = vmatprep.subr.mxu0 0.0
      %1669 = vmatpush1.msra.mxu0 0.0
      %1670 = vmatprep.mubr.f32.mxu0 0.0
      %1671 = vmatmul.mubr.f32.gmra.mrb[0].mxu0 %v1424
      %v1672 = vpop.f32.mrb[0].mxu0
      %v1673 = vadd.f32 %v1548, %v1672
      %v1674 = vpop.f32.mrb[0].mxu0
      %1675 = vmatprep.mubr.f32.mxu0 0.0
      %1676 = vmatmul.mubr.f32.gmra.mrb[0].mxu0 %v1425
      %v1677 = vpop.f32.mrb[0].mxu0
      %v1678 = vadd.f32 %v1553, %v1677
      %v1679 = vpop.f32.mrb[0].mxu0
      %1680 = vmatprep.mubr.f32.mxu0 0.0
      %1681 = vmatmul.mubr.f32.gmra.mrb[0].mxu0 %v1426
      %v1682 = vpop.f32.mrb[0].mxu0
      %v1683 = vadd.f32 %v1558, %v1682
      %v1684 = vpop.f32.mrb[0].mxu0
      %1685 = vmatprep.mubr.f32.mxu0 0.0
      %1686 = vmatmul.mubr.f32.gmra.mrb[0].mxu0 %v1427
      %v1687 = vpop.f32.mrb[0].mxu0
      %v1688 = vadd.f32 %v1563, %v1687
      %v1689 = vpop.f32.mrb[0].mxu0
      %1690 = vmatprep.mubr.f32.mxu0 0.0
      %1691 = vmatmul.mubr.f32.gmra.mrb[0].mxu0 %v1428
      %v1692 = vpop.f32.mrb[0].mxu0
      %v1693 = vadd.f32 %v1568, %v1692
      %v1694 = vpop.f32.mrb[0].mxu0
      %1695 = vmatprep.mubr.f32.mxu0 0.0
      %1696 = vmatmul.mubr.f32.gmra.mrb[0].mxu0 %v1429
      %v1697 = vpop.f32.mrb[0].mxu0
      %v1698 = vadd.f32 %v1573, %v1697
      %v1699 = vpop.f32.mrb[0].mxu0
      %1700 = vmatprep.mubr.f32.mxu0 0.0
      %1701 = vmatmul.mubr.f32.gmra.mrb[0].mxu0 %v1430
      %v1702 = vpop.f32.mrb[0].mxu0
      %v1703 = vadd.f32 %v1578, %v1702
      %v1704 = vpop.f32.mrb[0].mxu0
      %1705 = vmatprep.mubr.f32.mxu0 0.0
      %1706 = vmatmul.mubr.f32.gmra.mrb[0].mxu0 %v1431
      %v1707 = vpop.f32.mrb[0].mxu0
      %v1708 = vadd.f32 %v1583, %v1707
      %v1709 = vpop.f32.mrb[0].mxu0
      %1710 = vmatprep.mubr.f32.mxu0 0.0
      %1711 = vmatmul.mubr.f32.gmra.mrb[0].mxu0 %v1432
      %v1712 = vpop.f32.mrb[0].mxu0
      %v1713 = vadd.f32 %v1588, %v1712
      %v1714 = vpop.f32.mrb[0].mxu0
      %1715 = vmatprep.mubr.f32.mxu0 0.0
      %1716 = vmatmul.mubr.f32.gmra.mrb[0].mxu0 %v1433
      %v1717 = vpop.f32.mrb[0].mxu0
      %v1718 = vadd.f32 %v1593, %v1717
      %v1719 = vpop.f32.mrb[0].mxu0
      %1720 = vmatprep.mubr.f32.mxu0 0.0
      %1721 = vmatmul.mubr.f32.gmra.mrb[0].mxu0 %v1434
      %v1722 = vpop.f32.mrb[0].mxu0
      %v1723 = vadd.f32 %v1598, %v1722
      %v1724 = vpop.f32.mrb[0].mxu0
      %1725 = vmatprep.mubr.f32.mxu0 0.0
      %1726 = vmatmul.mubr.f32.gmra.mrb[0].mxu0 %v1435
      %v1727 = vpop.f32.mrb[0].mxu0
      %v1728 = vadd.f32 %v1603, %v1727
      %v1729 = vpop.f32.mrb[0].mxu0
      %1730 = vdwg.mxu0
      %v1731 = vld [vmem:[#allocation2 + $0x2] sm:$0xff]
      %v1732 = vld [vmem:[#allocation2 + $0xa] sm:$0xff]
      %v1733 = vld [vmem:[#allocation2 + $0x12] sm:$0xff]
      %v1734 = vld [vmem:[#allocation2 + $0x1a] sm:$0xff]
      %v1735 = vld [vmem:[#allocation2 + $0x22] sm:$0xff]
      %v1736 = vld [vmem:[#allocation2 + $0x2a] sm:$0xff]
      %v1737 = vld [vmem:[#allocation2 + $0x32] sm:$0xff]
      %v1738 = vld [vmem:[#allocation2 + $0x3a] sm:$0xff]
      %v1739 = vld [vmem:[#allocation2 + $0x42] sm:$0xff]
      %v1740 = vld [vmem:[#allocation2 + $0x4a] sm:$0xff]
      %v1741 = vld [vmem:[#allocation2 + $0x52] sm:$0xff]
      %v1742 = vld [vmem:[#allocation2 + $0x5a] sm:$0xff]
      %s1743 = scalar_lea.vmem %s4, 256
      %v1744 = vld [vmem:[%s1743] sm:$0xff]
      %v1745 = vld [vmem:[%s1743 + $0x8] sm:$0xff]
      %v1746 = vld [vmem:[%s1743 + $0x10] sm:$0xff]
      %v1747 = vld [vmem:[%s1743 + $0x18] sm:$0xff]
      %v1748 = vld [vmem:[%s1743 + $0x20] sm:$0xff]
      %v1749 = vld [vmem:[%s1743 + $0x28] sm:$0xff]
      %v1750 = vld [vmem:[%s1743 + $0x30] sm:$0xff]
      %v1751 = vld [vmem:[%s1743 + $0x38] sm:$0xff]
      %v1752 = vld [vmem:[%s1743 + $0x40] sm:$0xff]
      %v1753 = vld [vmem:[%s1743 + $0x48] sm:$0xff]
      %v1754 = vld [vmem:[%s1743 + $0x50] sm:$0xff]
      %v1755 = vld [vmem:[%s1743 + $0x58] sm:$0xff]
      %v1756 = vld [vmem:[%s1743 + $0x60] sm:$0xff]
      %v1757 = vld [vmem:[%s1743 + $0x68] sm:$0xff]
      %v1758 = vld [vmem:[%s1743 + $0x70] sm:$0xff]
      %v1759 = vld [vmem:[%s1743 + $0x78] sm:$0xff]
      %1760 = vmatprep.subr.mxu0 0.0
      %1761 = vmatpush1.msra.mxu0 %v1744
      %1762 = vmatprep.subr.mxu0 0.0
      %1763 = vmatpush1.msra.mxu0 %v1745
      %1764 = vmatprep.subr.mxu0 0.0
      %1765 = vmatpush1.msra.mxu0 %v1746
      %1766 = vmatprep.subr.mxu0 0.0
      %1767 = vmatpush1.msra.mxu0 %v1747
      %1768 = vmatprep.subr.mxu0 0.0
      %1769 = vmatpush1.msra.mxu0 %v1748
      %1770 = vmatprep.subr.mxu0 0.0
      %1771 = vmatpush1.msra.mxu0 %v1749
      %1772 = vmatprep.subr.mxu0 0.0
      %1773 = vmatpush1.msra.mxu0 %v1750
      %1774 = vmatprep.subr.mxu0 0.0
      %1775 = vmatpush1.msra.mxu0 %v1751
      %1776 = vmatprep.subr.mxu0 0.0
      %1777 = vmatpush1.msra.mxu0 %v1752
      %1778 = vmatprep.subr.mxu0 0.0
      %1779 = vmatpush1.msra.mxu0 %v1753
      %1780 = vmatprep.subr.mxu0 0.0
      %1781 = vmatpush1.msra.mxu0 %v1754
      %1782 = vmatprep.subr.mxu0 0.0
      %1783 = vmatpush1.msra.mxu0 %v1755
      %1784 = vmatprep.subr.mxu0 0.0
      %1785 = vmatpush1.msra.mxu0 %v1756
      %1786 = vmatprep.subr.mxu0 0.0
      %1787 = vmatpush1.msra.mxu0 %v1757
      %1788 = vmatprep.subr.mxu0 0.0
      %1789 = vmatpush1.msra.mxu0 %v1758
      %1790 = vmatprep.subr.mxu0 0.0
      %1791 = vmatpush1.msra.mxu0 %v1759
      %1792 = vmatprep.subr.mxu0 0.0
      %1793 = vmatpush1.msra.mxu0 0.0
      %1794 = vmatprep.subr.mxu0 0.0
      %1795 = vmatpush1.msra.mxu0 0.0
      %1796 = vmatprep.subr.mxu0 0.0
      %1797 = vmatpush1.msra.mxu0 0.0
      %1798 = vmatprep.subr.mxu0 0.0
      %1799 = vmatpush1.msra.mxu0 0.0
      %1800 = vmatprep.subr.mxu0 0.0
      %1801 = vmatpush1.msra.mxu0 0.0
      %1802 = vmatprep.subr.mxu0 0.0
      %1803 = vmatpush1.msra.mxu0 0.0
      %1804 = vmatprep.subr.mxu0 0.0
      %1805 = vmatpush1.msra.mxu0 0.0
      %1806 = vmatprep.subr.mxu0 0.0
      %1807 = vmatpush1.msra.mxu0 0.0
      %1808 = vmatprep.subr.mxu0 0.0
      %1809 = vmatpush1.msra.mxu0 0.0
      %1810 = vmatprep.subr.mxu0 0.0
      %1811 = vmatpush1.msra.mxu0 0.0
      %1812 = vmatprep.subr.mxu0 0.0
      %1813 = vmatpush1.msra.mxu0 0.0
      %1814 = vmatprep.subr.mxu0 0.0
      %1815 = vmatpush1.msra.mxu0 0.0
      %1816 = vmatprep.subr.mxu0 0.0
      %1817 = vmatpush1.msra.mxu0 0.0
      %1818 = vmatprep.subr.mxu0 0.0
      %1819 = vmatpush1.msra.mxu0 0.0
      %1820 = vmatprep.subr.mxu0 0.0
      %1821 = vmatpush1.msra.mxu0 0.0
      %1822 = vmatprep.subr.mxu0 0.0
      %1823 = vmatpush1.msra.mxu0 0.0
      %1824 = vmatprep.mubr.f32.mxu0 0.0
      %1825 = vmatmul.mubr.f32.gmra.mrb[0].mxu0 %v1731
      %v1826 = vpop.f32.mrb[0].mxu0
      %v1827 = vadd.f32 0.0, %v1826
      %v1828 = vpop.f32.mrb[0].mxu0
      %1829 = vmatprep.mubr.f32.mxu0 0.0
      %1830 = vmatmul.mubr.f32.gmra.mrb[0].mxu0 %v1732
      %v1831 = vpop.f32.mrb[0].mxu0
      %v1832 = vadd.f32 0.0, %v1831
      %v1833 = vpop.f32.mrb[0].mxu0
      %1834 = vmatprep.mubr.f32.mxu0 0.0
      %1835 = vmatmul.mubr.f32.gmra.mrb[0].mxu0 %v1733
      %v1836 = vpop.f32.mrb[0].mxu0
      %v1837 = vadd.f32 0.0, %v1836
      %v1838 = vpop.f32.mrb[0].mxu0
      %1839 = vmatprep.mubr.f32.mxu0 0.0
      %1840 = vmatmul.mubr.f32.gmra.mrb[0].mxu0 %v1734
      %v1841 = vpop.f32.mrb[0].mxu0
      %v1842 = vadd.f32 0.0, %v1841
      %v1843 = vpop.f32.mrb[0].mxu0
      %1844 = vmatprep.mubr.f32.mxu0 0.0
      %1845 = vmatmul.mubr.f32.gmra.mrb[0].mxu0 %v1735
      %v1846 = vpop.f32.mrb[0].mxu0
      %v1847 = vadd.f32 0.0, %v1846
      %v1848 = vpop.f32.mrb[0].mxu0
      %1849 = vmatprep.mubr.f32.mxu0 0.0
      %1850 = vmatmul.mubr.f32.gmra.mrb[0].mxu0 %v1736
      %v1851 = vpop.f32.mrb[0].mxu0
      %v1852 = vadd.f32 0.0, %v1851
      %v1853 = vpop.f32.mrb[0].mxu0
      %1854 = vmatprep.mubr.f32.mxu0 0.0
      %1855 = vmatmul.mubr.f32.gmra.mrb[0].mxu0 %v1737
      %v1856 = vpop.f32.mrb[0].mxu0
      %v1857 = vadd.f32 0.0, %v1856
      %v1858 = vpop.f32.mrb[0].mxu0
      %1859 = vmatprep.mubr.f32.mxu0 0.0
      %1860 = vmatmul.mubr.f32.gmra.mrb[0].mxu0 %v1738
      %v1861 = vpop.f32.mrb[0].mxu0
      %v1862 = vadd.f32 0.0, %v1861
      %v1863 = vpop.f32.mrb[0].mxu0
      %1864 = vmatprep.mubr.f32.mxu0 0.0
      %1865 = vmatmul.mubr.f32.gmra.mrb[0].mxu0 %v1739
      %v1866 = vpop.f32.mrb[0].mxu0
      %v1867 = vadd.f32 0.0, %v1866
      %v1868 = vpop.f32.mrb[0].mxu0
      %1869 = vmatprep.mubr.f32.mxu0 0.0
      %1870 = vmatmul.mubr.f32.gmra.mrb[0].mxu0 %v1740
      %v1871 = vpop.f32.mrb[0].mxu0
      %v1872 = vadd.f32 0.0, %v1871
      %v1873 = vpop.f32.mrb[0].mxu0
      %1874 = vmatprep.mubr.f32.mxu0 0.0
      %1875 = vmatmul.mubr.f32.gmra.mrb[0].mxu0 %v1741
      %v1876 = vpop.f32.mrb[0].mxu0
      %v1877 = vadd.f32 0.0, %v1876
      %v1878 = vpop.f32.mrb[0].mxu0
      %1879 = vmatprep.mubr.f32.mxu0 0.0
      %1880 = vmatmul.mubr.f32.gmra.mrb[0].mxu0 %v1742
      %v1881 = vpop.f32.mrb[0].mxu0
      %v1882 = vadd.f32 0.0, %v1881
      %v1883 = vpop.f32.mrb[0].mxu0
      %1884 = vdwg.mxu0
      %v1885 = vadd.f32 %v1673, %v1827
      %v1886 = vadd.f32 %v1678, %v1832
      %v1887 = vadd.f32 %v1683, %v1837
      %v1888 = vadd.f32 %v1688, %v1842
      %v1889 = vadd.f32 %v1693, %v1847
      %v1890 = vadd.f32 %v1698, %v1852
      %v1891 = vadd.f32 %v1703, %v1857
      %v1892 = vadd.f32 %v1708, %v1862
      %v1893 = vadd.f32 %v1713, %v1867
      %v1894 = vadd.f32 %v1718, %v1872
      %v1895 = vadd.f32 %v1723, %v1877
      %v1896 = vadd.f32 %v1728, %v1882
      %v1897 = vld [vmem:[#allocation2 + $0x3] sm:$0xff]
      %v1898 = vld [vmem:[#allocation2 + $0xb] sm:$0xff]
      %v1899 = vld [vmem:[#allocation2 + $0x13] sm:$0xff]
      %v1900 = vld [vmem:[#allocation2 + $0x1b] sm:$0xff]
      %v1901 = vld [vmem:[#allocation2 + $0x23] sm:$0xff]
      %v1902 = vld [vmem:[#allocation2 + $0x2b] sm:$0xff]
      %v1903 = vld [vmem:[#allocation2 + $0x33] sm:$0xff]
      %v1904 = vld [vmem:[#allocation2 + $0x3b] sm:$0xff]
      %v1905 = vld [vmem:[#allocation2 + $0x43] sm:$0xff]
      %v1906 = vld [vmem:[#allocation2 + $0x4b] sm:$0xff]
      %v1907 = vld [vmem:[#allocation2 + $0x53] sm:$0xff]
      %v1908 = vld [vmem:[#allocation2 + $0x5b] sm:$0xff]
      %s1909 = scalar_lea.vmem %s4, 384
      %v1910 = vld [vmem:[%s1909] sm:$0xff]
      %v1911 = vld [vmem:[%s1909 + $0x8] sm:$0xff]
      %v1912 = vld [vmem:[%s1909 + $0x10] sm:$0xff]
      %v1913 = vld [vmem:[%s1909 + $0x18] sm:$0xff]
      %v1914 = vld [vmem:[%s1909 + $0x20] sm:$0xff]
      %v1915 = vld [vmem:[%s1909 + $0x28] sm:$0xff]
      %v1916 = vld [vmem:[%s1909 + $0x30] sm:$0xff]
      %v1917 = vld [vmem:[%s1909 + $0x38] sm:$0xff]
      %v1918 = vld [vmem:[%s1909 + $0x40] sm:$0xff]
      %v1919 = vld [vmem:[%s1909 + $0x48] sm:$0xff]
      %v1920 = vld [vmem:[%s1909 + $0x50] sm:$0xff]
      %v1921 = vld [vmem:[%s1909 + $0x58] sm:$0xff]
      %v1922 = vld [vmem:[%s1909 + $0x60] sm:$0xff]
      %v1923 = vld [vmem:[%s1909 + $0x68] sm:$0xff]
      %v1924 = vld [vmem:[%s1909 + $0x70] sm:$0xff]
      %v1925 = vld [vmem:[%s1909 + $0x78] sm:$0xff]
      %1926 = vmatprep.subr.mxu0 0.0
      %1927 = vmatpush1.msra.mxu0 %v1910
      %1928 = vmatprep.subr.mxu0 0.0
      %1929 = vmatpush1.msra.mxu0 %v1911
      %1930 = vmatprep.subr.mxu0 0.0
      %1931 = vmatpush1.msra.mxu0 %v1912
      %1932 = vmatprep.subr.mxu0 0.0
      %1933 = vmatpush1.msra.mxu0 %v1913
      %1934 = vmatprep.subr.mxu0 0.0
      %1935 = vmatpush1.msra.mxu0 %v1914
      %1936 = vmatprep.subr.mxu0 0.0
      %1937 = vmatpush1.msra.mxu0 %v1915
      %1938 = vmatprep.subr.mxu0 0.0
      %1939 = vmatpush1.msra.mxu0 %v1916
      %1940 = vmatprep.subr.mxu0 0.0
      %1941 = vmatpush1.msra.mxu0 %v1917
      %1942 = vmatprep.subr.mxu0 0.0
      %1943 = vmatpush1.msra.mxu0 %v1918
      %1944 = vmatprep.subr.mxu0 0.0
      %1945 = vmatpush1.msra.mxu0 %v1919
      %1946 = vmatprep.subr.mxu0 0.0
      %1947 = vmatpush1.msra.mxu0 %v1920
      %1948 = vmatprep.subr.mxu0 0.0
      %1949 = vmatpush1.msra.mxu0 %v1921
      %1950 = vmatprep.subr.mxu0 0.0
      %1951 = vmatpush1.msra.mxu0 %v1922
      %1952 = vmatprep.subr.mxu0 0.0
      %1953 = vmatpush1.msra.mxu0 %v1923
      %1954 = vmatprep.subr.mxu0 0.0
      %1955 = vmatpush1.msra.mxu0 %v1924
      %1956 = vmatprep.subr.mxu0 0.0
      %1957 = vmatpush1.msra.mxu0 %v1925
      %1958 = vmatprep.subr.mxu0 0.0
      %1959 = vmatpush1.msra.mxu0 0.0
      %1960 = vmatprep.subr.mxu0 0.0
      %1961 = vmatpush1.msra.mxu0 0.0
      %1962 = vmatprep.subr.mxu0 0.0
      %1963 = vmatpush1.msra.mxu0 0.0
      %1964 = vmatprep.subr.mxu0 0.0
      %1965 = vmatpush1.msra.mxu0 0.0
      %1966 = vmatprep.subr.mxu0 0.0
      %1967 = vmatpush1.msra.mxu0 0.0
      %1968 = vmatprep.subr.mxu0 0.0
      %1969 = vmatpush1.msra.mxu0 0.0
      %1970 = vmatprep.subr.mxu0 0.0
      %1971 = vmatpush1.msra.mxu0 0.0
      %1972 = vmatprep.subr.mxu0 0.0
      %1973 = vmatpush1.msra.mxu0 0.0
      %1974 = vmatprep.subr.mxu0 0.0
      %1975 = vmatpush1.msra.mxu0 0.0
      %1976 = vmatprep.subr.mxu0 0.0
      %1977 = vmatpush1.msra.mxu0 0.0
      %1978 = vmatprep.subr.mxu0 0.0
      %1979 = vmatpush1.msra.mxu0 0.0
      %1980 = vmatprep.subr.mxu0 0.0
      %1981 = vmatpush1.msra.mxu0 0.0
      %1982 = vmatprep.subr.mxu0 0.0
      %1983 = vmatpush1.msra.mxu0 0.0
      %1984 = vmatprep.subr.mxu0 0.0
      %1985 = vmatpush1.msra.mxu0 0.0
      %1986 = vmatprep.subr.mxu0 0.0
      %1987 = vmatpush1.msra.mxu0 0.0
      %1988 = vmatprep.subr.mxu0 0.0
      %1989 = vmatpush1.msra.mxu0 0.0
      %1990 = vmatprep.mubr.f32.mxu0 0.0
      %1991 = vmatmul.mubr.f32.gmra.mrb[0].mxu0 %v1897
      %v1992 = vpop.f32.mrb[0].mxu0
      %v1993 = vadd.f32 0.0, %v1992
      %v1994 = vpop.f32.mrb[0].mxu0
      %1995 = vmatprep.mubr.f32.mxu0 0.0
      %1996 = vmatmul.mubr.f32.gmra.mrb[0].mxu0 %v1898
      %v1997 = vpop.f32.mrb[0].mxu0
      %v1998 = vadd.f32 0.0, %v1997
      %v1999 = vpop.f32.mrb[0].mxu0
      %2000 = vmatprep.mubr.f32.mxu0 0.0
      %2001 = vmatmul.mubr.f32.gmra.mrb[0].mxu0 %v1899
      %v2002 = vpop.f32.mrb[0].mxu0
      %v2003 = vadd.f32 0.0, %v2002
      %v2004 = vpop.f32.mrb[0].mxu0
      %2005 = vmatprep.mubr.f32.mxu0 0.0
      %2006 = vmatmul.mubr.f32.gmra.mrb[0].mxu0 %v1900
      %v2007 = vpop.f32.mrb[0].mxu0
      %v2008 = vadd.f32 0.0, %v2007
      %v2009 = vpop.f32.mrb[0].mxu0
      %2010 = vmatprep.mubr.f32.mxu0 0.0
      %2011 = vmatmul.mubr.f32.gmra.mrb[0].mxu0 %v1901
      %v2012 = vpop.f32.mrb[0].mxu0
      %v2013 = vadd.f32 0.0, %v2012
      %v2014 = vpop.f32.mrb[0].mxu0
      %2015 = vmatprep.mubr.f32.mxu0 0.0
      %2016 = vmatmul.mubr.f32.gmra.mrb[0].mxu0 %v1902
      %v2017 = vpop.f32.mrb[0].mxu0
      %v2018 = vadd.f32 0.0, %v2017
      %v2019 = vpop.f32.mrb[0].mxu0
      %2020 = vmatprep.mubr.f32.mxu0 0.0
      %2021 = vmatmul.mubr.f32.gmra.mrb[0].mxu0 %v1903
      %v2022 = vpop.f32.mrb[0].mxu0
      %v2023 = vadd.f32 0.0, %v2022
      %v2024 = vpop.f32.mrb[0].mxu0
      %2025 = vmatprep.mubr.f32.mxu0 0.0
      %2026 = vmatmul.mubr.f32.gmra.mrb[0].mxu0 %v1904
      %v2027 = vpop.f32.mrb[0].mxu0
      %v2028 = vadd.f32 0.0, %v2027
      %v2029 = vpop.f32.mrb[0].mxu0
      %2030 = vmatprep.mubr.f32.mxu0 0.0
      %2031 = vmatmul.mubr.f32.gmra.mrb[0].mxu0 %v1905
      %v2032 = vpop.f32.mrb[0].mxu0
      %v2033 = vadd.f32 0.0, %v2032
      %v2034 = vpop.f32.mrb[0].mxu0
      %2035 = vmatprep.mubr.f32.mxu0 0.0
      %2036 = vmatmul.mubr.f32.gmra.mrb[0].mxu0 %v1906
      %v2037 = vpop.f32.mrb[0].mxu0
      %v2038 = vadd.f32 0.0, %v2037
      %v2039 = vpop.f32.mrb[0].mxu0
      %2040 = vmatprep.mubr.f32.mxu0 0.0
      %2041 = vmatmul.mubr.f32.gmra.mrb[0].mxu0 %v1907
      %v2042 = vpop.f32.mrb[0].mxu0
      %v2043 = vadd.f32 0.0, %v2042
      %v2044 = vpop.f32.mrb[0].mxu0
      %2045 = vmatprep.mubr.f32.mxu0 0.0
      %2046 = vmatmul.mubr.f32.gmra.mrb[0].mxu0 %v1908
      %v2047 = vpop.f32.mrb[0].mxu0
      %v2048 = vadd.f32 0.0, %v2047
      %v2049 = vpop.f32.mrb[0].mxu0
      %2050 = vdwg.mxu0
      %v2051 = vadd.f32 %v1885, %v1993
      %v2052 = vadd.f32 %v1886, %v1998
      %v2053 = vadd.f32 %v1887, %v2003
      %v2054 = vadd.f32 %v1888, %v2008
      %v2055 = vadd.f32 %v1889, %v2013
      %v2056 = vadd.f32 %v1890, %v2018
      %v2057 = vadd.f32 %v1891, %v2023
      %v2058 = vadd.f32 %v1892, %v2028
      %v2059 = vadd.f32 %v1893, %v2033
      %v2060 = vadd.f32 %v1894, %v2038
      %v2061 = vadd.f32 %v1895, %v2043
      %v2062 = vadd.f32 %v1896, %v2048
      %v2063 = vld [vmem:[#allocation2 + $0x4] sm:$0xff]
      %v2064 = vld [vmem:[#allocation2 + $0xc] sm:$0xff]
      %v2065 = vld [vmem:[#allocation2 + $0x14] sm:$0xff]
      %v2066 = vld [vmem:[#allocation2 + $0x1c] sm:$0xff]
      %v2067 = vld [vmem:[#allocation2 + $0x24] sm:$0xff]
      %v2068 = vld [vmem:[#allocation2 + $0x2c] sm:$0xff]
      %v2069 = vld [vmem:[#allocation2 + $0x34] sm:$0xff]
      %v2070 = vld [vmem:[#allocation2 + $0x3c] sm:$0xff]
      %v2071 = vld [vmem:[#allocation2 + $0x44] sm:$0xff]
      %v2072 = vld [vmem:[#allocation2 + $0x4c] sm:$0xff]
      %v2073 = vld [vmem:[#allocation2 + $0x54] sm:$0xff]
      %v2074 = vld [vmem:[#allocation2 + $0x5c] sm:$0xff]
      %s2075 = scalar_lea.vmem %s4, 512
      %v2076 = vld [vmem:[%s2075] sm:$0xff]
      %v2077 = vld [vmem:[%s2075 + $0x8] sm:$0xff]
      %v2078 = vld [vmem:[%s2075 + $0x10] sm:$0xff]
      %v2079 = vld [vmem:[%s2075 + $0x18] sm:$0xff]
      %v2080 = vld [vmem:[%s2075 + $0x20] sm:$0xff]
      %v2081 = vld [vmem:[%s2075 + $0x28] sm:$0xff]
      %v2082 = vld [vmem:[%s2075 + $0x30] sm:$0xff]
      %v2083 = vld [vmem:[%s2075 + $0x38] sm:$0xff]
      %v2084 = vld [vmem:[%s2075 + $0x40] sm:$0xff]
      %v2085 = vld [vmem:[%s2075 + $0x48] sm:$0xff]
      %v2086 = vld [vmem:[%s2075 + $0x50] sm:$0xff]
      %v2087 = vld [vmem:[%s2075 + $0x58] sm:$0xff]
      %v2088 = vld [vmem:[%s2075 + $0x60] sm:$0xff]
      %v2089 = vld [vmem:[%s2075 + $0x68] sm:$0xff]
      %v2090 = vld [vmem:[%s2075 + $0x70] sm:$0xff]
      %v2091 = vld [vmem:[%s2075 + $0x78] sm:$0xff]
      %2092 = vmatprep.subr.mxu0 0.0
      %2093 = vmatpush1.msra.mxu0 %v2076
      %2094 = vmatprep.subr.mxu0 0.0
      %2095 = vmatpush1.msra.mxu0 %v2077
      %2096 = vmatprep.subr.mxu0 0.0
      %2097 = vmatpush1.msra.mxu0 %v2078
      %2098 = vmatprep.subr.mxu0 0.0
      %2099 = vmatpush1.msra.mxu0 %v2079
      %2100 = vmatprep.subr.mxu0 0.0
      %2101 = vmatpush1.msra.mxu0 %v2080
      %2102 = vmatprep.subr.mxu0 0.0
      %2103 = vmatpush1.msra.mxu0 %v2081
      %2104 = vmatprep.subr.mxu0 0.0
      %2105 = vmatpush1.msra.mxu0 %v2082
      %2106 = vmatprep.subr.mxu0 0.0
      %2107 = vmatpush1.msra.mxu0 %v2083
      %2108 = vmatprep.subr.mxu0 0.0
      %2109 = vmatpush1.msra.mxu0 %v2084
      %2110 = vmatprep.subr.mxu0 0.0
      %2111 = vmatpush1.msra.mxu0 %v2085
      %2112 = vmatprep.subr.mxu0 0.0
      %2113 = vmatpush1.msra.mxu0 %v2086
      %2114 = vmatprep.subr.mxu0 0.0
      %2115 = vmatpush1.msra.mxu0 %v2087
      %2116 = vmatprep.subr.mxu0 0.0
      %2117 = vmatpush1.msra.mxu0 %v2088
      %2118 = vmatprep.subr.mxu0 0.0
      %2119 = vmatpush1.msra.mxu0 %v2089
      %2120 = vmatprep.subr.mxu0 0.0
      %2121 = vmatpush1.msra.mxu0 %v2090
      %2122 = vmatprep.subr.mxu0 0.0
      %2123 = vmatpush1.msra.mxu0 %v2091
      %2124 = vmatprep.subr.mxu0 0.0
      %2125 = vmatpush1.msra.mxu0 0.0
      %2126 = vmatprep.subr.mxu0 0.0
      %2127 = vmatpush1.msra.mxu0 0.0
      %2128 = vmatprep.subr.mxu0 0.0
      %2129 = vmatpush1.msra.mxu0 0.0
      %2130 = vmatprep.subr.mxu0 0.0
      %2131 = vmatpush1.msra.mxu0 0.0
      %2132 = vmatprep.subr.mxu0 0.0
      %2133 = vmatpush1.msra.mxu0 0.0
      %2134 = vmatprep.subr.mxu0 0.0
      %2135 = vmatpush1.msra.mxu0 0.0
      %2136 = vmatprep.subr.mxu0 0.0
      %2137 = vmatpush1.msra.mxu0 0.0
      %2138 = vmatprep.subr.mxu0 0.0
      %2139 = vmatpush1.msra.mxu0 0.0
      %2140 = vmatprep.subr.mxu0 0.0
      %2141 = vmatpush1.msra.mxu0 0.0
      %2142 = vmatprep.subr.mxu0 0.0
      %2143 = vmatpush1.msra.mxu0 0.0
      %2144 = vmatprep.subr.mxu0 0.0
      %2145 = vmatpush1.msra.mxu0 0.0
      %2146 = vmatprep.subr.mxu0 0.0
      %2147 = vmatpush1.msra.mxu0 0.0
      %2148 = vmatprep.subr.mxu0 0.0
      %2149 = vmatpush1.msra.mxu0 0.0
      %2150 = vmatprep.subr.mxu0 0.0
      %2151 = vmatpush1.msra.mxu0 0.0
      %2152 = vmatprep.subr.mxu0 0.0
      %2153 = vmatpush1.msra.mxu0 0.0
      %2154 = vmatprep.subr.mxu0 0.0
      %2155 = vmatpush1.msra.mxu0 0.0
      %2156 = vmatprep.mubr.f32.mxu0 0.0
      %2157 = vmatmul.mubr.f32.gmra.mrb[0].mxu0 %v2063
      %v2158 = vpop.f32.mrb[0].mxu0
      %v2159 = vadd.f32 0.0, %v2158
      %v2160 = vpop.f32.mrb[0].mxu0
      %2161 = vmatprep.mubr.f32.mxu0 0.0
      %2162 = vmatmul.mubr.f32.gmra.mrb[0].mxu0 %v2064
      %v2163 = vpop.f32.mrb[0].mxu0
      %v2164 = vadd.f32 0.0, %v2163
      %v2165 = vpop.f32.mrb[0].mxu0
      %2166 = vmatprep.mubr.f32.mxu0 0.0
      %2167 = vmatmul.mubr.f32.gmra.mrb[0].mxu0 %v2065
      %v2168 = vpop.f32.mrb[0].mxu0
      %v2169 = vadd.f32 0.0, %v2168
      %v2170 = vpop.f32.mrb[0].mxu0
      %2171 = vmatprep.mubr.f32.mxu0 0.0
      %2172 = vmatmul.mubr.f32.gmra.mrb[0].mxu0 %v2066
      %v2173 = vpop.f32.mrb[0].mxu0
      %v2174 = vadd.f32 0.0, %v2173
      %v2175 = vpop.f32.mrb[0].mxu0
      %2176 = vmatprep.mubr.f32.mxu0 0.0
      %2177 = vmatmul.mubr.f32.gmra.mrb[0].mxu0 %v2067
      %v2178 = vpop.f32.mrb[0].mxu0
      %v2179 = vadd.f32 0.0, %v2178
      %v2180 = vpop.f32.mrb[0].mxu0
      %2181 = vmatprep.mubr.f32.mxu0 0.0
      %2182 = vmatmul.mubr.f32.gmra.mrb[0].mxu0 %v2068
      %v2183 = vpop.f32.mrb[0].mxu0
      %v2184 = vadd.f32 0.0, %v2183
      %v2185 = vpop.f32.mrb[0].mxu0
      %2186 = vmatprep.mubr.f32.mxu0 0.0
      %2187 = vmatmul.mubr.f32.gmra.mrb[0].mxu0 %v2069
      %v2188 = vpop.f32.mrb[0].mxu0
      %v2189 = vadd.f32 0.0, %v2188
      %v2190 = vpop.f32.mrb[0].mxu0
      %2191 = vmatprep.mubr.f32.mxu0 0.0
      %2192 = vmatmul.mubr.f32.gmra.mrb[0].mxu0 %v2070
      %v2193 = vpop.f32.mrb[0].mxu0
      %v2194 = vadd.f32 0.0, %v2193
      %v2195 = vpop.f32.mrb[0].mxu0
      %2196 = vmatprep.mubr.f32.mxu0 0.0
      %2197 = vmatmul.mubr.f32.gmra.mrb[0].mxu0 %v2071
      %v2198 = vpop.f32.mrb[0].mxu0
      %v2199 = vadd.f32 0.0, %v2198
      %v2200 = vpop.f32.mrb[0].mxu0
      %2201 = vmatprep.mubr.f32.mxu0 0.0
      %2202 = vmatmul.mubr.f32.gmra.mrb[0].mxu0 %v2072
      %v2203 = vpop.f32.mrb[0].mxu0
      %v2204 = vadd.f32 0.0, %v2203
      %v2205 = vpop.f32.mrb[0].mxu0
      %2206 = vmatprep.mubr.f32.mxu0 0.0
      %2207 = vmatmul.mubr.f32.gmra.mrb[0].mxu0 %v2073
      %v2208 = vpop.f32.mrb[0].mxu0
      %v2209 = vadd.f32 0.0, %v2208
      %v2210 = vpop.f32.mrb[0].mxu0
      %2211 = vmatprep.mubr.f32.mxu0 0.0
      %2212 = vmatmul.mubr.f32.gmra.mrb[0].mxu0 %v2074
      %v2213 = vpop.f32.mrb[0].mxu0
      %v2214 = vadd.f32 0.0, %v2213
      %v2215 = vpop.f32.mrb[0].mxu0
      %2216 = vdwg.mxu0
      %v2217 = vadd.f32 %v2051, %v2159
      %v2218 = vadd.f32 %v2052, %v2164
      %v2219 = vadd.f32 %v2053, %v2169
      %v2220 = vadd.f32 %v2054, %v2174
      %v2221 = vadd.f32 %v2055, %v2179
      %v2222 = vadd.f32 %v2056, %v2184
      %v2223 = vadd.f32 %v2057, %v2189
      %v2224 = vadd.f32 %v2058, %v2194
      %v2225 = vadd.f32 %v2059, %v2199
      %v2226 = vadd.f32 %v2060, %v2204
      %v2227 = vadd.f32 %v2061, %v2209
      %v2228 = vadd.f32 %v2062, %v2214
      %v2229 = vld [vmem:[#allocation2 + $0xc] sm:$0xff]
      %v2230 = vld [vmem:[#allocation2 + $0x14] sm:$0xff]
      %v2231 = vld [vmem:[#allocation2 + $0x1c] sm:$0xff]
      %v2232 = vld [vmem:[#allocation2 + $0x24] sm:$0xff]
      %v2233 = vld [vmem:[#allocation2 + $0x2c] sm:$0xff]
      %v2234 = vld [vmem:[#allocation2 + $0x34] sm:$0xff]
      %v2235 = vld [vmem:[#allocation2 + $0x3c] sm:$0xff]
      %v2236 = vld [vmem:[#allocation2 + $0x44] sm:$0xff]
      %v2237 = vld [vmem:[#allocation2 + $0x4c] sm:$0xff]
      %v2238 = vld [vmem:[#allocation2 + $0x54] sm:$0xff]
      %v2239 = vld [vmem:[#allocation2 + $0x5c] sm:$0xff]
      %v2240 = vld [vmem:[#allocation2 + $0x64] sm:$0xff]
      %s2241 = scalar_lea.vmem %s4, 640
      %v2242 = vld [vmem:[%s2241] sm:$0xff]
      %v2243 = vld [vmem:[%s2241 + $0x8] sm:$0xff]
      %v2244 = vld [vmem:[%s2241 + $0x10] sm:$0xff]
      %v2245 = vld [vmem:[%s2241 + $0x18] sm:$0xff]
      %v2246 = vld [vmem:[%s2241 + $0x20] sm:$0xff]
      %v2247 = vld [vmem:[%s2241 + $0x28] sm:$0xff]
      %v2248 = vld [vmem:[%s2241 + $0x30] sm:$0xff]
      %v2249 = vld [vmem:[%s2241 + $0x38] sm:$0xff]
      %v2250 = vld [vmem:[%s2241 + $0x40] sm:$0xff]
      %v2251 = vld [vmem:[%s2241 + $0x48] sm:$0xff]
      %v2252 = vld [vmem:[%s2241 + $0x50] sm:$0xff]
      %v2253 = vld [vmem:[%s2241 + $0x58] sm:$0xff]
      %v2254 = vld [vmem:[%s2241 + $0x60] sm:$0xff]
      %v2255 = vld [vmem:[%s2241 + $0x68] sm:$0xff]
      %v2256 = vld [vmem:[%s2241 + $0x70] sm:$0xff]
      %v2257 = vld [vmem:[%s2241 + $0x78] sm:$0xff]
      %2258 = vmatprep.subr.mxu0 0.0
      %2259 = vmatpush1.msra.mxu0 %v2242
      %2260 = vmatprep.subr.mxu0 0.0
      %2261 = vmatpush1.msra.mxu0 %v2243
      %2262 = vmatprep.subr.mxu0 0.0
      %2263 = vmatpush1.msra.mxu0 %v2244
      %2264 = vmatprep.subr.mxu0 0.0
      %2265 = vmatpush1.msra.mxu0 %v2245
      %2266 = vmatprep.subr.mxu0 0.0
      %2267 = vmatpush1.msra.mxu0 %v2246
      %2268 = vmatprep.subr.mxu0 0.0
      %2269 = vmatpush1.msra.mxu0 %v2247
      %2270 = vmatprep.subr.mxu0 0.0
      %2271 = vmatpush1.msra.mxu0 %v2248
      %2272 = vmatprep.subr.mxu0 0.0
      %2273 = vmatpush1.msra.mxu0 %v2249
      %2274 = vmatprep.subr.mxu0 0.0
      %2275 = vmatpush1.msra.mxu0 %v2250
      %2276 = vmatprep.subr.mxu0 0.0
      %2277 = vmatpush1.msra.mxu0 %v2251
      %2278 = vmatprep.subr.mxu0 0.0
      %2279 = vmatpush1.msra.mxu0 %v2252
      %2280 = vmatprep.subr.mxu0 0.0
      %2281 = vmatpush1.msra.mxu0 %v2253
      %2282 = vmatprep.subr.mxu0 0.0
      %2283 = vmatpush1.msra.mxu0 %v2254
      %2284 = vmatprep.subr.mxu0 0.0
      %2285 = vmatpush1.msra.mxu0 %v2255
      %2286 = vmatprep.subr.mxu0 0.0
      %2287 = vmatpush1.msra.mxu0 %v2256
      %2288 = vmatprep.subr.mxu0 0.0
      %2289 = vmatpush1.msra.mxu0 %v2257
      %2290 = vmatprep.subr.mxu0 0.0
      %2291 = vmatpush1.msra.mxu0 0.0
      %2292 = vmatprep.subr.mxu0 0.0
      %2293 = vmatpush1.msra.mxu0 0.0
      %2294 = vmatprep.subr.mxu0 0.0
      %2295 = vmatpush1.msra.mxu0 0.0
      %2296 = vmatprep.subr.mxu0 0.0
      %2297 = vmatpush1.msra.mxu0 0.0
      %2298 = vmatprep.subr.mxu0 0.0
      %2299 = vmatpush1.msra.mxu0 0.0
      %2300 = vmatprep.subr.mxu0 0.0
      %2301 = vmatpush1.msra.mxu0 0.0
      %2302 = vmatprep.subr.mxu0 0.0
      %2303 = vmatpush1.msra.mxu0 0.0
      %2304 = vmatprep.subr.mxu0 0.0
      %2305 = vmatpush1.msra.mxu0 0.0
      %2306 = vmatprep.subr.mxu0 0.0
      %2307 = vmatpush1.msra.mxu0 0.0
      %2308 = vmatprep.subr.mxu0 0.0
      %2309 = vmatpush1.msra.mxu0 0.0
      %2310 = vmatprep.subr.mxu0 0.0
      %2311 = vmatpush1.msra.mxu0 0.0
      %2312 = vmatprep.subr.mxu0 0.0
      %2313 = vmatpush1.msra.mxu0 0.0
      %2314 = vmatprep.subr.mxu0 0.0
      %2315 = vmatpush1.msra.mxu0 0.0
      %2316 = vmatprep.subr.mxu0 0.0
      %2317 = vmatpush1.msra.mxu0 0.0
      %2318 = vmatprep.subr.mxu0 0.0
      %2319 = vmatpush1.msra.mxu0 0.0
      %2320 = vmatprep.subr.mxu0 0.0
      %2321 = vmatpush1.msra.mxu0 0.0
      %2322 = vmatprep.mubr.f32.mxu0 0.0
      %2323 = vmatmul.mubr.f32.gmra.mrb[0].mxu0 %v2229
      %v2324 = vpop.f32.mrb[0].mxu0
      %v2325 = vadd.f32 0.0, %v2324
      %v2326 = vpop.f32.mrb[0].mxu0
      %2327 = vmatprep.mubr.f32.mxu0 0.0
      %2328 = vmatmul.mubr.f32.gmra.mrb[0].mxu0 %v2230
      %v2329 = vpop.f32.mrb[0].mxu0
      %v2330 = vadd.f32 0.0, %v2329
      %v2331 = vpop.f32.mrb[0].mxu0
      %2332 = vmatprep.mubr.f32.mxu0 0.0
      %2333 = vmatmul.mubr.f32.gmra.mrb[0].mxu0 %v2231
      %v2334 = vpop.f32.mrb[0].mxu0
      %v2335 = vadd.f32 0.0, %v2334
      %v2336 = vpop.f32.mrb[0].mxu0
      %2337 = vmatprep.mubr.f32.mxu0 0.0
      %2338 = vmatmul.mubr.f32.gmra.mrb[0].mxu0 %v2232
      %v2339 = vpop.f32.mrb[0].mxu0
      %v2340 = vadd.f32 0.0, %v2339
      %v2341 = vpop.f32.mrb[0].mxu0
      %2342 = vmatprep.mubr.f32.mxu0 0.0
      %2343 = vmatmul.mubr.f32.gmra.mrb[0].mxu0 %v2233
      %v2344 = vpop.f32.mrb[0].mxu0
      %v2345 = vadd.f32 0.0, %v2344
      %v2346 = vpop.f32.mrb[0].mxu0
      %2347 = vmatprep.mubr.f32.mxu0 0.0
      %2348 = vmatmul.mubr.f32.gmra.mrb[0].mxu0 %v2234
      %v2349 = vpop.f32.mrb[0].mxu0
      %v2350 = vadd.f32 0.0, %v2349
      %v2351 = vpop.f32.mrb[0].mxu0
      %2352 = vmatprep.mubr.f32.mxu0 0.0
      %2353 = vmatmul.mubr.f32.gmra.mrb[0].mxu0 %v2235
      %v2354 = vpop.f32.mrb[0].mxu0
      %v2355 = vadd.f32 0.0, %v2354
      %v2356 = vpop.f32.mrb[0].mxu0
      %2357 = vmatprep.mubr.f32.mxu0 0.0
      %2358 = vmatmul.mubr.f32.gmra.mrb[0].mxu0 %v2236
      %v2359 = vpop.f32.mrb[0].mxu0
      %v2360 = vadd.f32 0.0, %v2359
      %v2361 = vpop.f32.mrb[0].mxu0
      %2362 = vmatprep.mubr.f32.mxu0 0.0
      %2363 = vmatmul.mubr.f32.gmra.mrb[0].mxu0 %v2237
      %v2364 = vpop.f32.mrb[0].mxu0
      %v2365 = vadd.f32 0.0, %v2364
      %v2366 = vpop.f32.mrb[0].mxu0
      %2367 = vmatprep.mubr.f32.mxu0 0.0
      %2368 = vmatmul.mubr.f32.gmra.mrb[0].mxu0 %v2238
      %v2369 = vpop.f32.mrb[0].mxu0
      %v2370 = vadd.f32 0.0, %v2369
      %v2371 = vpop.f32.mrb[0].mxu0
      %2372 = vmatprep.mubr.f32.mxu0 0.0
      %2373 = vmatmul.mubr.f32.gmra.mrb[0].mxu0 %v2239
      %v2374 = vpop.f32.mrb[0].mxu0
      %v2375 = vadd.f32 0.0, %v2374
      %v2376 = vpop.f32.mrb[0].mxu0
      %2377 = vmatprep.mubr.f32.mxu0 0.0
      %2378 = vmatmul.mubr.f32.gmra.mrb[0].mxu0 %v2240
      %v2379 = vpop.f32.mrb[0].mxu0
      %v2380 = vadd.f32 0.0, %v2379
      %v2381 = vpop.f32.mrb[0].mxu0
      %2382 = vdwg.mxu0
      %v2383 = vadd.f32 %v2217, %v2325
      %v2384 = vadd.f32 %v2218, %v2330
      %v2385 = vadd.f32 %v2219, %v2335
      %v2386 = vadd.f32 %v2220, %v2340
      %v2387 = vadd.f32 %v2221, %v2345
      %v2388 = vadd.f32 %v2222, %v2350
      %v2389 = vadd.f32 %v2223, %v2355
      %v2390 = vadd.f32 %v2224, %v2360
      %v2391 = vadd.f32 %v2225, %v2365
      %v2392 = vadd.f32 %v2226, %v2370
      %v2393 = vadd.f32 %v2227, %v2375
      %v2394 = vadd.f32 %v2228, %v2380
      %v2395 = vld [vmem:[#allocation2 + $0xd] sm:$0xff]
      %v2396 = vld [vmem:[#allocation2 + $0x15] sm:$0xff]
      %v2397 = vld [vmem:[#allocation2 + $0x1d] sm:$0xff]
      %v2398 = vld [vmem:[#allocation2 + $0x25] sm:$0xff]
      %v2399 = vld [vmem:[#allocation2 + $0x2d] sm:$0xff]
      %v2400 = vld [vmem:[#allocation2 + $0x35] sm:$0xff]
      %v2401 = vld [vmem:[#allocation2 + $0x3d] sm:$0xff]
      %v2402 = vld [vmem:[#allocation2 + $0x45] sm:$0xff]
      %v2403 = vld [vmem:[#allocation2 + $0x4d] sm:$0xff]
      %v2404 = vld [vmem:[#allocation2 + $0x55] sm:$0xff]
      %v2405 = vld [vmem:[#allocation2 + $0x5d] sm:$0xff]
      %v2406 = vld [vmem:[#allocation2 + $0x65] sm:$0xff]
      %s2407 = scalar_lea.vmem %s4, 768
      %v2408 = vld [vmem:[%s2407] sm:$0xff]
      %v2409 = vld [vmem:[%s2407 + $0x8] sm:$0xff]
      %v2410 = vld [vmem:[%s2407 + $0x10] sm:$0xff]
      %v2411 = vld [vmem:[%s2407 + $0x18] sm:$0xff]
      %v2412 = vld [vmem:[%s2407 + $0x20] sm:$0xff]
      %v2413 = vld [vmem:[%s2407 + $0x28] sm:$0xff]
      %v2414 = vld [vmem:[%s2407 + $0x30] sm:$0xff]
      %v2415 = vld [vmem:[%s2407 + $0x38] sm:$0xff]
      %v2416 = vld [vmem:[%s2407 + $0x40] sm:$0xff]
      %v2417 = vld [vmem:[%s2407 + $0x48] sm:$0xff]
      %v2418 = vld [vmem:[%s2407 + $0x50] sm:$0xff]
      %v2419 = vld [vmem:[%s2407 + $0x58] sm:$0xff]
      %v2420 = vld [vmem:[%s2407 + $0x60] sm:$0xff]
      %v2421 = vld [vmem:[%s2407 + $0x68] sm:$0xff]
      %v2422 = vld [vmem:[%s2407 + $0x70] sm:$0xff]
      %v2423 = vld [vmem:[%s2407 + $0x78] sm:$0xff]
      %2424 = vmatprep.subr.mxu0 0.0
      %2425 = vmatpush1.msra.mxu0 %v2408
      %2426 = vmatprep.subr.mxu0 0.0
      %2427 = vmatpush1.msra.mxu0 %v2409
      %2428 = vmatprep.subr.mxu0 0.0
      %2429 = vmatpush1.msra.mxu0 %v2410
      %2430 = vmatprep.subr.mxu0 0.0
      %2431 = vmatpush1.msra.mxu0 %v2411
      %2432 = vmatprep.subr.mxu0 0.0
      %2433 = vmatpush1.msra.mxu0 %v2412
      %2434 = vmatprep.subr.mxu0 0.0
      %2435 = vmatpush1.msra.mxu0 %v2413
      %2436 = vmatprep.subr.mxu0 0.0
      %2437 = vmatpush1.msra.mxu0 %v2414
      %2438 = vmatprep.subr.mxu0 0.0
      %2439 = vmatpush1.msra.mxu0 %v2415
      %2440 = vmatprep.subr.mxu0 0.0
      %2441 = vmatpush1.msra.mxu0 %v2416
      %2442 = vmatprep.subr.mxu0 0.0
      %2443 = vmatpush1.msra.mxu0 %v2417
      %2444 = vmatprep.subr.mxu0 0.0
      %2445 = vmatpush1.msra.mxu0 %v2418
      %2446 = vmatprep.subr.mxu0 0.0
      %2447 = vmatpush1.msra.mxu0 %v2419
      %2448 = vmatprep.subr.mxu0 0.0
      %2449 = vmatpush1.msra.mxu0 %v2420
      %2450 = vmatprep.subr.mxu0 0.0
      %2451 = vmatpush1.msra.mxu0 %v2421
      %2452 = vmatprep.subr.mxu0 0.0
      %2453 = vmatpush1.msra.mxu0 %v2422
      %2454 = vmatprep.subr.mxu0 0.0
      %2455 = vmatpush1.msra.mxu0 %v2423
      %2456 = vmatprep.subr.mxu0 0.0
      %2457 = vmatpush1.msra.mxu0 0.0
      %2458 = vmatprep.subr.mxu0 0.0
      %2459 = vmatpush1.msra.mxu0 0.0
      %2460 = vmatprep.subr.mxu0 0.0
      %2461 = vmatpush1.msra.mxu0 0.0
      %2462 = vmatprep.subr.mxu0 0.0
      %2463 = vmatpush1.msra.mxu0 0.0
      %2464 = vmatprep.subr.mxu0 0.0
      %2465 = vmatpush1.msra.mxu0 0.0
      %2466 = vmatprep.subr.mxu0 0.0
      %2467 = vmatpush1.msra.mxu0 0.0
      %2468 = vmatprep.subr.mxu0 0.0
      %2469 = vmatpush1.msra.mxu0 0.0
      %2470 = vmatprep.subr.mxu0 0.0
      %2471 = vmatpush1.msra.mxu0 0.0
      %2472 = vmatprep.subr.mxu0 0.0
      %2473 = vmatpush1.msra.mxu0 0.0
      %2474 = vmatprep.subr.mxu0 0.0
      %2475 = vmatpush1.msra.mxu0 0.0
      %2476 = vmatprep.subr.mxu0 0.0
      %2477 = vmatpush1.msra.mxu0 0.0
      %2478 = vmatprep.subr.mxu0 0.0
      %2479 = vmatpush1.msra.mxu0 0.0
      %2480 = vmatprep.subr.mxu0 0.0
      %2481 = vmatpush1.msra.mxu0 0.0
      %2482 = vmatprep.subr.mxu0 0.0
      %2483 = vmatpush1.msra.mxu0 0.0
      %2484 = vmatprep.subr.mxu0 0.0
      %2485 = vmatpush1.msra.mxu0 0.0
      %2486 = vmatprep.subr.mxu0 0.0
      %2487 = vmatpush1.msra.mxu0 0.0
      %2488 = vmatprep.mubr.f32.mxu0 0.0
      %2489 = vmatmul.mubr.f32.gmra.mrb[0].mxu0 %v2395
      %v2490 = vpop.f32.mrb[0].mxu0
      %v2491 = vadd.f32 0.0, %v2490
      %v2492 = vpop.f32.mrb[0].mxu0
      %2493 = vmatprep.mubr.f32.mxu0 0.0
      %2494 = vmatmul.mubr.f32.gmra.mrb[0].mxu0 %v2396
      %v2495 = vpop.f32.mrb[0].mxu0
      %v2496 = vadd.f32 0.0, %v2495
      %v2497 = vpop.f32.mrb[0].mxu0
      %2498 = vmatprep.mubr.f32.mxu0 0.0
      %2499 = vmatmul.mubr.f32.gmra.mrb[0].mxu0 %v2397
      %v2500 = vpop.f32.mrb[0].mxu0
      %v2501 = vadd.f32 0.0, %v2500
      %v2502 = vpop.f32.mrb[0].mxu0
      %2503 = vmatprep.mubr.f32.mxu0 0.0
      %2504 = vmatmul.mubr.f32.gmra.mrb[0].mxu0 %v2398
      %v2505 = vpop.f32.mrb[0].mxu0
      %v2506 = vadd.f32 0.0, %v2505
      %v2507 = vpop.f32.mrb[0].mxu0
      %2508 = vmatprep.mubr.f32.mxu0 0.0
      %2509 = vmatmul.mubr.f32.gmra.mrb[0].mxu0 %v2399
      %v2510 = vpop.f32.mrb[0].mxu0
      %v2511 = vadd.f32 0.0, %v2510
      %v2512 = vpop.f32.mrb[0].mxu0
      %2513 = vmatprep.mubr.f32.mxu0 0.0
      %2514 = vmatmul.mubr.f32.gmra.mrb[0].mxu0 %v2400
      %v2515 = vpop.f32.mrb[0].mxu0
      %v2516 = vadd.f32 0.0, %v2515
      %v2517 = vpop.f32.mrb[0].mxu0
      %2518 = vmatprep.mubr.f32.mxu0 0.0
      %2519 = vmatmul.mubr.f32.gmra.mrb[0].mxu0 %v2401
      %v2520 = vpop.f32.mrb[0].mxu0
      %v2521 = vadd.f32 0.0, %v2520
      %v2522 = vpop.f32.mrb[0].mxu0
      %2523 = vmatprep.mubr.f32.mxu0 0.0
      %2524 = vmatmul.mubr.f32.gmra.mrb[0].mxu0 %v2402
      %v2525 = vpop.f32.mrb[0].mxu0
      %v2526 = vadd.f32 0.0, %v2525
      %v2527 = vpop.f32.mrb[0].mxu0
      %2528 = vmatprep.mubr.f32.mxu0 0.0
      %2529 = vmatmul.mubr.f32.gmra.mrb[0].mxu0 %v2403
      %v2530 = vpop.f32.mrb[0].mxu0
      %v2531 = vadd.f32 0.0, %v2530
      %v2532 = vpop.f32.mrb[0].mxu0
      %2533 = vmatprep.mubr.f32.mxu0 0.0
      %2534 = vmatmul.mubr.f32.gmra.mrb[0].mxu0 %v2404
      %v2535 = vpop.f32.mrb[0].mxu0
      %v2536 = vadd.f32 0.0, %v2535
      %v2537 = vpop.f32.mrb[0].mxu0
      %2538 = vmatprep.mubr.f32.mxu0 0.0
      %2539 = vmatmul.mubr.f32.gmra.mrb[0].mxu0 %v2405
      %v2540 = vpop.f32.mrb[0].mxu0
      %v2541 = vadd.f32 0.0, %v2540
      %v2542 = vpop.f32.mrb[0].mxu0
      %2543 = vmatprep.mubr.f32.mxu0 0.0
      %2544 = vmatmul.mubr.f32.gmra.mrb[0].mxu0 %v2406
      %v2545 = vpop.f32.mrb[0].mxu0
      %v2546 = vadd.f32 0.0, %v2545
      %v2547 = vpop.f32.mrb[0].mxu0
      %2548 = vdwg.mxu0
      %v2549 = vadd.f32 %v2383, %v2491
      %v2550 = vadd.f32 %v2384, %v2496
      %v2551 = vadd.f32 %v2385, %v2501
      %v2552 = vadd.f32 %v2386, %v2506
      %v2553 = vadd.f32 %v2387, %v2511
      %v2554 = vadd.f32 %v2388, %v2516
      %v2555 = vadd.f32 %v2389, %v2521
      %v2556 = vadd.f32 %v2390, %v2526
      %v2557 = vadd.f32 %v2391, %v2531
      %v2558 = vadd.f32 %v2392, %v2536
      %v2559 = vadd.f32 %v2393, %v2541
      %v2560 = vadd.f32 %v2394, %v2546
      %v2561 = vld [vmem:[#allocation2 + $0xe] sm:$0xff]
      %v2562 = vld [vmem:[#allocation2 + $0x16] sm:$0xff]
      %v2563 = vld [vmem:[#allocation2 + $0x1e] sm:$0xff]
      %v2564 = vld [vmem:[#allocation2 + $0x26] sm:$0xff]
      %v2565 = vld [vmem:[#allocation2 + $0x2e] sm:$0xff]
      %v2566 = vld [vmem:[#allocation2 + $0x36] sm:$0xff]
      %v2567 = vld [vmem:[#allocation2 + $0x3e] sm:$0xff]
      %v2568 = vld [vmem:[#allocation2 + $0x46] sm:$0xff]
      %v2569 = vld [vmem:[#allocation2 + $0x4e] sm:$0xff]
      %v2570 = vld [vmem:[#allocation2 + $0x56] sm:$0xff]
      %v2571 = vld [vmem:[#allocation2 + $0x5e] sm:$0xff]
      %v2572 = vld [vmem:[#allocation2 + $0x66] sm:$0xff]
      %s2573 = scalar_lea.vmem %s4, 896
      %v2574 = vld [vmem:[%s2573] sm:$0xff]
      %v2575 = vld [vmem:[%s2573 + $0x8] sm:$0xff]
      %v2576 = vld [vmem:[%s2573 + $0x10] sm:$0xff]
      %v2577 = vld [vmem:[%s2573 + $0x18] sm:$0xff]
      %v2578 = vld [vmem:[%s2573 + $0x20] sm:$0xff]
      %v2579 = vld [vmem:[%s2573 + $0x28] sm:$0xff]
      %v2580 = vld [vmem:[%s2573 + $0x30] sm:$0xff]
      %v2581 = vld [vmem:[%s2573 + $0x38] sm:$0xff]
      %v2582 = vld [vmem:[%s2573 + $0x40] sm:$0xff]
      %v2583 = vld [vmem:[%s2573 + $0x48] sm:$0xff]
      %v2584 = vld [vmem:[%s2573 + $0x50] sm:$0xff]
      %v2585 = vld [vmem:[%s2573 + $0x58] sm:$0xff]
      %v2586 = vld [vmem:[%s2573 + $0x60] sm:$0xff]
      %v2587 = vld [vmem:[%s2573 + $0x68] sm:$0xff]
      %v2588 = vld [vmem:[%s2573 + $0x70] sm:$0xff]
      %v2589 = vld [vmem:[%s2573 + $0x78] sm:$0xff]
      %2590 = vmatprep.subr.mxu0 0.0
      %2591 = vmatpush1.msra.mxu0 %v2574
      %2592 = vmatprep.subr.mxu0 0.0
      %2593 = vmatpush1.msra.mxu0 %v2575
      %2594 = vmatprep.subr.mxu0 0.0
      %2595 = vmatpush1.msra.mxu0 %v2576
      %2596 = vmatprep.subr.mxu0 0.0
      %2597 = vmatpush1.msra.mxu0 %v2577
      %2598 = vmatprep.subr.mxu0 0.0
      %2599 = vmatpush1.msra.mxu0 %v2578
      %2600 = vmatprep.subr.mxu0 0.0
      %2601 = vmatpush1.msra.mxu0 %v2579
      %2602 = vmatprep.subr.mxu0 0.0
      %2603 = vmatpush1.msra.mxu0 %v2580
      %2604 = vmatprep.subr.mxu0 0.0
      %2605 = vmatpush1.msra.mxu0 %v2581
      %2606 = vmatprep.subr.mxu0 0.0
      %2607 = vmatpush1.msra.mxu0 %v2582
      %2608 = vmatprep.subr.mxu0 0.0
      %2609 = vmatpush1.msra.mxu0 %v2583
      %2610 = vmatprep.subr.mxu0 0.0
      %2611 = vmatpush1.msra.mxu0 %v2584
      %2612 = vmatprep.subr.mxu0 0.0
      %2613 = vmatpush1.msra.mxu0 %v2585
      %2614 = vmatprep.subr.mxu0 0.0
      %2615 = vmatpush1.msra.mxu0 %v2586
      %2616 = vmatprep.subr.mxu0 0.0
      %2617 = vmatpush1.msra.mxu0 %v2587
      %2618 = vmatprep.subr.mxu0 0.0
      %2619 = vmatpush1.msra.mxu0 %v2588
      %2620 = vmatprep.subr.mxu0 0.0
      %2621 = vmatpush1.msra.mxu0 %v2589
      %2622 = vmatprep.subr.mxu0 0.0
      %2623 = vmatpush1.msra.mxu0 0.0
      %2624 = vmatprep.subr.mxu0 0.0
      %2625 = vmatpush1.msra.mxu0 0.0
      %2626 = vmatprep.subr.mxu0 0.0
      %2627 = vmatpush1.msra.mxu0 0.0
      %2628 = vmatprep.subr.mxu0 0.0
      %2629 = vmatpush1.msra.mxu0 0.0
      %2630 = vmatprep.subr.mxu0 0.0
      %2631 = vmatpush1.msra.mxu0 0.0
      %2632 = vmatprep.subr.mxu0 0.0
      %2633 = vmatpush1.msra.mxu0 0.0
      %2634 = vmatprep.subr.mxu0 0.0
      %2635 = vmatpush1.msra.mxu0 0.0
      %2636 = vmatprep.subr.mxu0 0.0
      %2637 = vmatpush1.msra.mxu0 0.0
      %2638 = vmatprep.subr.mxu0 0.0
      %2639 = vmatpush1.msra.mxu0 0.0
      %2640 = vmatprep.subr.mxu0 0.0
      %2641 = vmatpush1.msra.mxu0 0.0
      %2642 = vmatprep.subr.mxu0 0.0
      %2643 = vmatpush1.msra.mxu0 0.0
      %2644 = vmatprep.subr.mxu0 0.0
      %2645 = vmatpush1.msra.mxu0 0.0
      %2646 = vmatprep.subr.mxu0 0.0
      %2647 = vmatpush1.msra.mxu0 0.0
      %2648 = vmatprep.subr.mxu0 0.0
      %2649 = vmatpush1.msra.mxu0 0.0
      %2650 = vmatprep.subr.mxu0 0.0
      %2651 = vmatpush1.msra.mxu0 0.0
      %2652 = vmatprep.subr.mxu0 0.0
      %2653 = vmatpush1.msra.mxu0 0.0
      %2654 = vmatprep.mubr.f32.mxu0 0.0
      %2655 = vmatmul.mubr.f32.gmra.mrb[0].mxu0 %v2561
      %v2656 = vpop.f32.mrb[0].mxu0
      %v2657 = vadd.f32 0.0, %v2656
      %v2658 = vpop.f32.mrb[0].mxu0
      %2659 = vmatprep.mubr.f32.mxu0 0.0
      %2660 = vmatmul.mubr.f32.gmra.mrb[0].mxu0 %v2562
      %v2661 = vpop.f32.mrb[0].mxu0
      %v2662 = vadd.f32 0.0, %v2661
      %v2663 = vpop.f32.mrb[0].mxu0
      %2664 = vmatprep.mubr.f32.mxu0 0.0
      %2665 = vmatmul.mubr.f32.gmra.mrb[0].mxu0 %v2563
      %v2666 = vpop.f32.mrb[0].mxu0
      %v2667 = vadd.f32 0.0, %v2666
      %v2668 = vpop.f32.mrb[0].mxu0
      %2669 = vmatprep.mubr.f32.mxu0 0.0
      %2670 = vmatmul.mubr.f32.gmra.mrb[0].mxu0 %v2564
      %v2671 = vpop.f32.mrb[0].mxu0
      %v2672 = vadd.f32 0.0, %v2671
      %v2673 = vpop.f32.mrb[0].mxu0
      %2674 = vmatprep.mubr.f32.mxu0 0.0
      %2675 = vmatmul.mubr.f32.gmra.mrb[0].mxu0 %v2565
      %v2676 = vpop.f32.mrb[0].mxu0
      %v2677 = vadd.f32 0.0, %v2676
      %v2678 = vpop.f32.mrb[0].mxu0
      %2679 = vmatprep.mubr.f32.mxu0 0.0
      %2680 = vmatmul.mubr.f32.gmra.mrb[0].mxu0 %v2566
      %v2681 = vpop.f32.mrb[0].mxu0
      %v2682 = vadd.f32 0.0, %v2681
      %v2683 = vpop.f32.mrb[0].mxu0
      %2684 = vmatprep.mubr.f32.mxu0 0.0
      %2685 = vmatmul.mubr.f32.gmra.mrb[0].mxu0 %v2567
      %v2686 = vpop.f32.mrb[0].mxu0
      %v2687 = vadd.f32 0.0, %v2686
      %v2688 = vpop.f32.mrb[0].mxu0
      %2689 = vmatprep.mubr.f32.mxu0 0.0
      %2690 = vmatmul.mubr.f32.gmra.mrb[0].mxu0 %v2568
      %v2691 = vpop.f32.mrb[0].mxu0
      %v2692 = vadd.f32 0.0, %v2691
      %v2693 = vpop.f32.mrb[0].mxu0
      %2694 = vmatprep.mubr.f32.mxu0 0.0
      %2695 = vmatmul.mubr.f32.gmra.mrb[0].mxu0 %v2569
      %v2696 = vpop.f32.mrb[0].mxu0
      %v2697 = vadd.f32 0.0, %v2696
      %v2698 = vpop.f32.mrb[0].mxu0
      %2699 = vmatprep.mubr.f32.mxu0 0.0
      %2700 = vmatmul.mubr.f32.gmra.mrb[0].mxu0 %v2570
      %v2701 = vpop.f32.mrb[0].mxu0
      %v2702 = vadd.f32 0.0, %v2701
      %v2703 = vpop.f32.mrb[0].mxu0
      %2704 = vmatprep.mubr.f32.mxu0 0.0
      %2705 = vmatmul.mubr.f32.gmra.mrb[0].mxu0 %v2571
      %v2706 = vpop.f32.mrb[0].mxu0
      %v2707 = vadd.f32 0.0, %v2706
      %v2708 = vpop.f32.mrb[0].mxu0
      %2709 = vmatprep.mubr.f32.mxu0 0.0
      %2710 = vmatmul.mubr.f32.gmra.mrb[0].mxu0 %v2572
      %v2711 = vpop.f32.mrb[0].mxu0
      %v2712 = vadd.f32 0.0, %v2711
      %v2713 = vpop.f32.mrb[0].mxu0
      %2714 = vdwg.mxu0
      %v2715 = vadd.f32 %v2549, %v2657
      %v2716 = vadd.f32 %v2550, %v2662
      %v2717 = vadd.f32 %v2551, %v2667
      %v2718 = vadd.f32 %v2552, %v2672
      %v2719 = vadd.f32 %v2553, %v2677
      %v2720 = vadd.f32 %v2554, %v2682
      %v2721 = vadd.f32 %v2555, %v2687
      %v2722 = vadd.f32 %v2556, %v2692
      %v2723 = vadd.f32 %v2557, %v2697
      %v2724 = vadd.f32 %v2558, %v2702
      %v2725 = vadd.f32 %v2559, %v2707
      %v2726 = vadd.f32 %v2560, %v2712
      %v2727 = vld [vmem:[#allocation2 + $0xf] sm:$0xff]
      %v2728 = vld [vmem:[#allocation2 + $0x17] sm:$0xff]
      %v2729 = vld [vmem:[#allocation2 + $0x1f] sm:$0xff]
      %v2730 = vld [vmem:[#allocation2 + $0x27] sm:$0xff]
      %v2731 = vld [vmem:[#allocation2 + $0x2f] sm:$0xff]
      %v2732 = vld [vmem:[#allocation2 + $0x37] sm:$0xff]
      %v2733 = vld [vmem:[#allocation2 + $0x3f] sm:$0xff]
      %v2734 = vld [vmem:[#allocation2 + $0x47] sm:$0xff]
      %v2735 = vld [vmem:[#allocation2 + $0x4f] sm:$0xff]
      %v2736 = vld [vmem:[#allocation2 + $0x57] sm:$0xff]
      %v2737 = vld [vmem:[#allocation2 + $0x5f] sm:$0xff]
      %v2738 = vld [vmem:[#allocation2 + $0x67] sm:$0xff]
      %s2739 = scalar_lea.vmem %s4, 1024
      %v2740 = vld [vmem:[%s2739] sm:$0xff]
      %v2741 = vld [vmem:[%s2739 + $0x8] sm:$0xff]
      %v2742 = vld [vmem:[%s2739 + $0x10] sm:$0xff]
      %v2743 = vld [vmem:[%s2739 + $0x18] sm:$0xff]
      %v2744 = vld [vmem:[%s2739 + $0x20] sm:$0xff]
      %v2745 = vld [vmem:[%s2739 + $0x28] sm:$0xff]
      %v2746 = vld [vmem:[%s2739 + $0x30] sm:$0xff]
      %v2747 = vld [vmem:[%s2739 + $0x38] sm:$0xff]
      %v2748 = vld [vmem:[%s2739 + $0x40] sm:$0xff]
      %v2749 = vld [vmem:[%s2739 + $0x48] sm:$0xff]
      %v2750 = vld [vmem:[%s2739 + $0x50] sm:$0xff]
      %v2751 = vld [vmem:[%s2739 + $0x58] sm:$0xff]
      %v2752 = vld [vmem:[%s2739 + $0x60] sm:$0xff]
      %v2753 = vld [vmem:[%s2739 + $0x68] sm:$0xff]
      %v2754 = vld [vmem:[%s2739 + $0x70] sm:$0xff]
      %v2755 = vld [vmem:[%s2739 + $0x78] sm:$0xff]
      %2756 = vmatprep.subr.mxu0 0.0
      %2757 = vmatpush1.msra.mxu0 %v2740
      %2758 = vmatprep.subr.mxu0 0.0
      %2759 = vmatpush1.msra.mxu0 %v2741
      %2760 = vmatprep.subr.mxu0 0.0
      %2761 = vmatpush1.msra.mxu0 %v2742
      %2762 = vmatprep.subr.mxu0 0.0
      %2763 = vmatpush1.msra.mxu0 %v2743
      %2764 = vmatprep.subr.mxu0 0.0
      %2765 = vmatpush1.msra.mxu0 %v2744
      %2766 = vmatprep.subr.mxu0 0.0
      %2767 = vmatpush1.msra.mxu0 %v2745
      %2768 = vmatprep.subr.mxu0 0.0
      %2769 = vmatpush1.msra.mxu0 %v2746
      %2770 = vmatprep.subr.mxu0 0.0
      %2771 = vmatpush1.msra.mxu0 %v2747
      %2772 = vmatprep.subr.mxu0 0.0
      %2773 = vmatpush1.msra.mxu0 %v2748
      %2774 = vmatprep.subr.mxu0 0.0
      %2775 = vmatpush1.msra.mxu0 %v2749
      %2776 = vmatprep.subr.mxu0 0.0
      %2777 = vmatpush1.msra.mxu0 %v2750
      %2778 = vmatprep.subr.mxu0 0.0
      %2779 = vmatpush1.msra.mxu0 %v2751
      %2780 = vmatprep.subr.mxu0 0.0
      %2781 = vmatpush1.msra.mxu0 %v2752
      %2782 = vmatprep.subr.mxu0 0.0
      %2783 = vmatpush1.msra.mxu0 %v2753
      %2784 = vmatprep.subr.mxu0 0.0
      %2785 = vmatpush1.msra.mxu0 %v2754
      %2786 = vmatprep.subr.mxu0 0.0
      %2787 = vmatpush1.msra.mxu0 %v2755
      %2788 = vmatprep.subr.mxu0 0.0
      %2789 = vmatpush1.msra.mxu0 0.0
      %2790 = vmatprep.subr.mxu0 0.0
      %2791 = vmatpush1.msra.mxu0 0.0
      %2792 = vmatprep.subr.mxu0 0.0
      %2793 = vmatpush1.msra.mxu0 0.0
      %2794 = vmatprep.subr.mxu0 0.0
      %2795 = vmatpush1.msra.mxu0 0.0
      %2796 = vmatprep.subr.mxu0 0.0
      %2797 = vmatpush1.msra.mxu0 0.0
      %2798 = vmatprep.subr.mxu0 0.0
      %2799 = vmatpush1.msra.mxu0 0.0
      %2800 = vmatprep.subr.mxu0 0.0
      %2801 = vmatpush1.msra.mxu0 0.0
      %2802 = vmatprep.subr.mxu0 0.0
      %2803 = vmatpush1.msra.mxu0 0.0
      %2804 = vmatprep.subr.mxu0 0.0
      %2805 = vmatpush1.msra.mxu0 0.0
      %2806 = vmatprep.subr.mxu0 0.0
      %2807 = vmatpush1.msra.mxu0 0.0
      %2808 = vmatprep.subr.mxu0 0.0
      %2809 = vmatpush1.msra.mxu0 0.0
      %2810 = vmatprep.subr.mxu0 0.0
      %2811 = vmatpush1.msra.mxu0 0.0
      %2812 = vmatprep.subr.mxu0 0.0
      %2813 = vmatpush1.msra.mxu0 0.0
      %2814 = vmatprep.subr.mxu0 0.0
      %2815 = vmatpush1.msra.mxu0 0.0
      %2816 = vmatprep.subr.mxu0 0.0
      %2817 = vmatpush1.msra.mxu0 0.0
      %2818 = vmatprep.subr.mxu0 0.0
      %2819 = vmatpush1.msra.mxu0 0.0
      %2820 = vmatprep.mubr.f32.mxu0 0.0
      %2821 = vmatmul.mubr.f32.gmra.mrb[0].mxu0 %v2727
      %v2822 = vpop.f32.mrb[0].mxu0
      %v2823 = vadd.f32 0.0, %v2822
      %v2824 = vpop.f32.mrb[0].mxu0
      %2825 = vmatprep.mubr.f32.mxu0 0.0
      %2826 = vmatmul.mubr.f32.gmra.mrb[0].mxu0 %v2728
      %v2827 = vpop.f32.mrb[0].mxu0
      %v2828 = vadd.f32 0.0, %v2827
      %v2829 = vpop.f32.mrb[0].mxu0
      %2830 = vmatprep.mubr.f32.mxu0 0.0
      %2831 = vmatmul.mubr.f32.gmra.mrb[0].mxu0 %v2729
      %v2832 = vpop.f32.mrb[0].mxu0
      %v2833 = vadd.f32 0.0, %v2832
      %v2834 = vpop.f32.mrb[0].mxu0
      %2835 = vmatprep.mubr.f32.mxu0 0.0
      %2836 = vmatmul.mubr.f32.gmra.mrb[0].mxu0 %v2730
      %v2837 = vpop.f32.mrb[0].mxu0
      %v2838 = vadd.f32 0.0, %v2837
      %v2839 = vpop.f32.mrb[0].mxu0
      %2840 = vmatprep.mubr.f32.mxu0 0.0
      %2841 = vmatmul.mubr.f32.gmra.mrb[0].mxu0 %v2731
      %v2842 = vpop.f32.mrb[0].mxu0
      %v2843 = vadd.f32 0.0, %v2842
      %v2844 = vpop.f32.mrb[0].mxu0
      %2845 = vmatprep.mubr.f32.mxu0 0.0
      %2846 = vmatmul.mubr.f32.gmra.mrb[0].mxu0 %v2732
      %v2847 = vpop.f32.mrb[0].mxu0
      %v2848 = vadd.f32 0.0, %v2847
      %v2849 = vpop.f32.mrb[0].mxu0
      %2850 = vmatprep.mubr.f32.mxu0 0.0
      %2851 = vmatmul.mubr.f32.gmra.mrb[0].mxu0 %v2733
      %v2852 = vpop.f32.mrb[0].mxu0
      %v2853 = vadd.f32 0.0, %v2852
      %v2854 = vpop.f32.mrb[0].mxu0
      %2855 = vmatprep.mubr.f32.mxu0 0.0
      %2856 = vmatmul.mubr.f32.gmra.mrb[0].mxu0 %v2734
      %v2857 = vpop.f32.mrb[0].mxu0
      %v2858 = vadd.f32 0.0, %v2857
      %v2859 = vpop.f32.mrb[0].mxu0
      %2860 = vmatprep.mubr.f32.mxu0 0.0
      %2861 = vmatmul.mubr.f32.gmra.mrb[0].mxu0 %v2735
      %v2862 = vpop.f32.mrb[0].mxu0
      %v2863 = vadd.f32 0.0, %v2862
      %v2864 = vpop.f32.mrb[0].mxu0
      %2865 = vmatprep.mubr.f32.mxu0 0.0
      %2866 = vmatmul.mubr.f32.gmra.mrb[0].mxu0 %v2736
      %v2867 = vpop.f32.mrb[0].mxu0
      %v2868 = vadd.f32 0.0, %v2867
      %v2869 = vpop.f32.mrb[0].mxu0
      %2870 = vmatprep.mubr.f32.mxu0 0.0
      %2871 = vmatmul.mubr.f32.gmra.mrb[0].mxu0 %v2737
      %v2872 = vpop.f32.mrb[0].mxu0
      %v2873 = vadd.f32 0.0, %v2872
      %v2874 = vpop.f32.mrb[0].mxu0
      %2875 = vmatprep.mubr.f32.mxu0 0.0
      %2876 = vmatmul.mubr.f32.gmra.mrb[0].mxu0 %v2738
      %v2877 = vpop.f32.mrb[0].mxu0
      %v2878 = vadd.f32 0.0, %v2877
      %v2879 = vpop.f32.mrb[0].mxu0
      %2880 = vdwg.mxu0
      %v2881 = vadd.f32 %v2715, %v2823
      %v2882 = vadd.f32 %v2716, %v2828
      %v2883 = vadd.f32 %v2717, %v2833
      %v2884 = vadd.f32 %v2718, %v2838
      %v2885 = vadd.f32 %v2719, %v2843
      %v2886 = vadd.f32 %v2720, %v2848
      %v2887 = vadd.f32 %v2721, %v2853
      %v2888 = vadd.f32 %v2722, %v2858
      %v2889 = vadd.f32 %v2723, %v2863
      %v2890 = vadd.f32 %v2724, %v2868
      %v2891 = vadd.f32 %v2725, %v2873
      %v2892 = vadd.f32 %v2726, %v2878
      %v2893 = vld [vmem:[#allocation2 + $0x10] sm:$0xff]
      %v2894 = vld [vmem:[#allocation2 + $0x18] sm:$0xff]
      %v2895 = vld [vmem:[#allocation2 + $0x20] sm:$0xff]
      %v2896 = vld [vmem:[#allocation2 + $0x28] sm:$0xff]
      %v2897 = vld [vmem:[#allocation2 + $0x30] sm:$0xff]
      %v2898 = vld [vmem:[#allocation2 + $0x38] sm:$0xff]
      %v2899 = vld [vmem:[#allocation2 + $0x40] sm:$0xff]
      %v2900 = vld [vmem:[#allocation2 + $0x48] sm:$0xff]
      %v2901 = vld [vmem:[#allocation2 + $0x50] sm:$0xff]
      %v2902 = vld [vmem:[#allocation2 + $0x58] sm:$0xff]
      %v2903 = vld [vmem:[#allocation2 + $0x60] sm:$0xff]
      %v2904 = vld [vmem:[#allocation2 + $0x68] sm:$0xff]
      %s2905 = scalar_lea.vmem %s4, 1152
      %v2906 = vld [vmem:[%s2905] sm:$0xff]
      %v2907 = vld [vmem:[%s2905 + $0x8] sm:$0xff]
      %v2908 = vld [vmem:[%s2905 + $0x10] sm:$0xff]
      %v2909 = vld [vmem:[%s2905 + $0x18] sm:$0xff]
      %v2910 = vld [vmem:[%s2905 + $0x20] sm:$0xff]
      %v2911 = vld [vmem:[%s2905 + $0x28] sm:$0xff]
      %v2912 = vld [vmem:[%s2905 + $0x30] sm:$0xff]
      %v2913 = vld [vmem:[%s2905 + $0x38] sm:$0xff]
      %v2914 = vld [vmem:[%s2905 + $0x40] sm:$0xff]
      %v2915 = vld [vmem:[%s2905 + $0x48] sm:$0xff]
      %v2916 = vld [vmem:[%s2905 + $0x50] sm:$0xff]
      %v2917 = vld [vmem:[%s2905 + $0x58] sm:$0xff]
      %v2918 = vld [vmem:[%s2905 + $0x60] sm:$0xff]
      %v2919 = vld [vmem:[%s2905 + $0x68] sm:$0xff]
      %v2920 = vld [vmem:[%s2905 + $0x70] sm:$0xff]
      %v2921 = vld [vmem:[%s2905 + $0x78] sm:$0xff]
      %2922 = vmatprep.subr.mxu0 0.0
      %2923 = vmatpush1.msra.mxu0 %v2906
      %2924 = vmatprep.subr.mxu0 0.0
      %2925 = vmatpush1.msra.mxu0 %v2907
      %2926 = vmatprep.subr.mxu0 0.0
      %2927 = vmatpush1.msra.mxu0 %v2908
      %2928 = vmatprep.subr.mxu0 0.0
      %2929 = vmatpush1.msra.mxu0 %v2909
      %2930 = vmatprep.subr.mxu0 0.0
      %2931 = vmatpush1.msra.mxu0 %v2910
      %2932 = vmatprep.subr.mxu0 0.0
      %2933 = vmatpush1.msra.mxu0 %v2911
      %2934 = vmatprep.subr.mxu0 0.0
      %2935 = vmatpush1.msra.mxu0 %v2912
      %2936 = vmatprep.subr.mxu0 0.0
      %2937 = vmatpush1.msra.mxu0 %v2913
      %2938 = vmatprep.subr.mxu0 0.0
      %2939 = vmatpush1.msra.mxu0 %v2914
      %2940 = vmatprep.subr.mxu0 0.0
      %2941 = vmatpush1.msra.mxu0 %v2915
      %2942 = vmatprep.subr.mxu0 0.0
      %2943 = vmatpush1.msra.mxu0 %v2916
      %2944 = vmatprep.subr.mxu0 0.0
      %2945 = vmatpush1.msra.mxu0 %v2917
      %2946 = vmatprep.subr.mxu0 0.0
      %2947 = vmatpush1.msra.mxu0 %v2918
      %2948 = vmatprep.subr.mxu0 0.0
      %2949 = vmatpush1.msra.mxu0 %v2919
      %2950 = vmatprep.subr.mxu0 0.0
      %2951 = vmatpush1.msra.mxu0 %v2920
      %2952 = vmatprep.subr.mxu0 0.0
      %2953 = vmatpush1.msra.mxu0 %v2921
      %2954 = vmatprep.subr.mxu0 0.0
      %2955 = vmatpush1.msra.mxu0 0.0
      %2956 = vmatprep.subr.mxu0 0.0
      %2957 = vmatpush1.msra.mxu0 0.0
      %2958 = vmatprep.subr.mxu0 0.0
      %2959 = vmatpush1.msra.mxu0 0.0
      %2960 = vmatprep.subr.mxu0 0.0
      %2961 = vmatpush1.msra.mxu0 0.0
      %2962 = vmatprep.subr.mxu0 0.0
      %2963 = vmatpush1.msra.mxu0 0.0
      %2964 = vmatprep.subr.mxu0 0.0
      %2965 = vmatpush1.msra.mxu0 0.0
      %2966 = vmatprep.subr.mxu0 0.0
      %2967 = vmatpush1.msra.mxu0 0.0
      %2968 = vmatprep.subr.mxu0 0.0
      %2969 = vmatpush1.msra.mxu0 0.0
      %2970 = vmatprep.subr.mxu0 0.0
      %2971 = vmatpush1.msra.mxu0 0.0
      %2972 = vmatprep.subr.mxu0 0.0
      %2973 = vmatpush1.msra.mxu0 0.0
      %2974 = vmatprep.subr.mxu0 0.0
      %2975 = vmatpush1.msra.mxu0 0.0
      %2976 = vmatprep.subr.mxu0 0.0
      %2977 = vmatpush1.msra.mxu0 0.0
      %2978 = vmatprep.subr.mxu0 0.0
      %2979 = vmatpush1.msra.mxu0 0.0
      %2980 = vmatprep.subr.mxu0 0.0
      %2981 = vmatpush1.msra.mxu0 0.0
      %2982 = vmatprep.subr.mxu0 0.0
      %2983 = vmatpush1.msra.mxu0 0.0
      %2984 = vmatprep.subr.mxu0 0.0
      %2985 = vmatpush1.msra.mxu0 0.0
      %2986 = vmatprep.mubr.f32.mxu0 0.0
      %2987 = vmatmul.mubr.f32.gmra.mrb[0].mxu0 %v2893
      %v2988 = vpop.f32.mrb[0].mxu0
      %v2989 = vadd.f32 0.0, %v2988
      %v2990 = vpop.f32.mrb[0].mxu0
      %2991 = vmatprep.mubr.f32.mxu0 0.0
      %2992 = vmatmul.mubr.f32.gmra.mrb[0].mxu0 %v2894
      %v2993 = vpop.f32.mrb[0].mxu0
      %v2994 = vadd.f32 0.0, %v2993
      %v2995 = vpop.f32.mrb[0].mxu0
      %2996 = vmatprep.mubr.f32.mxu0 0.0
      %2997 = vmatmul.mubr.f32.gmra.mrb[0].mxu0 %v2895
      %v2998 = vpop.f32.mrb[0].mxu0
      %v2999 = vadd.f32 0.0, %v2998
      %v3000 = vpop.f32.mrb[0].mxu0
      %3001 = vmatprep.mubr.f32.mxu0 0.0
      %3002 = vmatmul.mubr.f32.gmra.mrb[0].mxu0 %v2896
      %v3003 = vpop.f32.mrb[0].mxu0
      %v3004 = vadd.f32 0.0, %v3003
      %v3005 = vpop.f32.mrb[0].mxu0
      %3006 = vmatprep.mubr.f32.mxu0 0.0
      %3007 = vmatmul.mubr.f32.gmra.mrb[0].mxu0 %v2897
      %v3008 = vpop.f32.mrb[0].mxu0
      %v3009 = vadd.f32 0.0, %v3008
      %v3010 = vpop.f32.mrb[0].mxu0
      %3011 = vmatprep.mubr.f32.mxu0 0.0
      %3012 = vmatmul.mubr.f32.gmra.mrb[0].mxu0 %v2898
      %v3013 = vpop.f32.mrb[0].mxu0
      %v3014 = vadd.f32 0.0, %v3013
      %v3015 = vpop.f32.mrb[0].mxu0
      %3016 = vmatprep.mubr.f32.mxu0 0.0
      %3017 = vmatmul.mubr.f32.gmra.mrb[0].mxu0 %v2899
      %v3018 = vpop.f32.mrb[0].mxu0
      %v3019 = vadd.f32 0.0, %v3018
      %v3020 = vpop.f32.mrb[0].mxu0
      %3021 = vmatprep.mubr.f32.mxu0 0.0
      %3022 = vmatmul.mubr.f32.gmra.mrb[0].mxu0 %v2900
      %v3023 = vpop.f32.mrb[0].mxu0
      %v3024 = vadd.f32 0.0, %v3023
      %v3025 = vpop.f32.mrb[0].mxu0
      %3026 = vmatprep.mubr.f32.mxu0 0.0
      %3027 = vmatmul.mubr.f32.gmra.mrb[0].mxu0 %v2901
      %v3028 = vpop.f32.mrb[0].mxu0
      %v3029 = vadd.f32 0.0, %v3028
      %v3030 = vpop.f32.mrb[0].mxu0
      %3031 = vmatprep.mubr.f32.mxu0 0.0
      %3032 = vmatmul.mubr.f32.gmra.mrb[0].mxu0 %v2902
      %v3033 = vpop.f32.mrb[0].mxu0
      %v3034 = vadd.f32 0.0, %v3033
      %v3035 = vpop.f32.mrb[0].mxu0
      %3036 = vmatprep.mubr.f32.mxu0 0.0
      %3037 = vmatmul.mubr.f32.gmra.mrb[0].mxu0 %v2903
      %v3038 = vpop.f32.mrb[0].mxu0
      %v3039 = vadd.f32 0.0, %v3038
      %v3040 = vpop.f32.mrb[0].mxu0
      %3041 = vmatprep.mubr.f32.mxu0 0.0
      %3042 = vmatmul.mubr.f32.gmra.mrb[0].mxu0 %v2904
      %v3043 = vpop.f32.mrb[0].mxu0
      %v3044 = vadd.f32 0.0, %v3043
      %v3045 = vpop.f32.mrb[0].mxu0
      %3046 = vdwg.mxu0
      %v3047 = vadd.f32 %v2881, %v2989
      %v3048 = vadd.f32 %v2882, %v2994
      %v3049 = vadd.f32 %v2883, %v2999
      %v3050 = vadd.f32 %v2884, %v3004
      %v3051 = vadd.f32 %v2885, %v3009
      %v3052 = vadd.f32 %v2886, %v3014
      %v3053 = vadd.f32 %v2887, %v3019
      %v3054 = vadd.f32 %v2888, %v3024
      %v3055 = vadd.f32 %v2889, %v3029
      %v3056 = vadd.f32 %v2890, %v3034
      %v3057 = vadd.f32 %v2891, %v3039
      %v3058 = vadd.f32 %v2892, %v3044
      %v3059 = vld [vmem:[#allocation2 + $0x18] sm:$0xff]
      %v3060 = vld [vmem:[#allocation2 + $0x20] sm:$0xff]
      %v3061 = vld [vmem:[#allocation2 + $0x28] sm:$0xff]
      %v3062 = vld [vmem:[#allocation2 + $0x30] sm:$0xff]
      %v3063 = vld [vmem:[#allocation2 + $0x38] sm:$0xff]
      %v3064 = vld [vmem:[#allocation2 + $0x40] sm:$0xff]
      %v3065 = vld [vmem:[#allocation2 + $0x48] sm:$0xff]
      %v3066 = vld [vmem:[#allocation2 + $0x50] sm:$0xff]
      %v3067 = vld [vmem:[#allocation2 + $0x58] sm:$0xff]
      %v3068 = vld [vmem:[#allocation2 + $0x60] sm:$0xff]
      %v3069 = vld [vmem:[#allocation2 + $0x68] sm:$0xff]
      %v3070 = vld [vmem:[#allocation2 + $0x70] sm:$0xff]
      %s3071 = scalar_lea.vmem %s4, 1280
      %v3072 = vld [vmem:[%s3071] sm:$0xff]
      %v3073 = vld [vmem:[%s3071 + $0x8] sm:$0xff]
      %v3074 = vld [vmem:[%s3071 + $0x10] sm:$0xff]
      %v3075 = vld [vmem:[%s3071 + $0x18] sm:$0xff]
      %v3076 = vld [vmem:[%s3071 + $0x20] sm:$0xff]
      %v3077 = vld [vmem:[%s3071 + $0x28] sm:$0xff]
      %v3078 = vld [vmem:[%s3071 + $0x30] sm:$0xff]
      %v3079 = vld [vmem:[%s3071 + $0x38] sm:$0xff]
      %v3080 = vld [vmem:[%s3071 + $0x40] sm:$0xff]
      %v3081 = vld [vmem:[%s3071 + $0x48] sm:$0xff]
      %v3082 = vld [vmem:[%s3071 + $0x50] sm:$0xff]
      %v3083 = vld [vmem:[%s3071 + $0x58] sm:$0xff]
      %v3084 = vld [vmem:[%s3071 + $0x60] sm:$0xff]
      %v3085 = vld [vmem:[%s3071 + $0x68] sm:$0xff]
      %v3086 = vld [vmem:[%s3071 + $0x70] sm:$0xff]
      %v3087 = vld [vmem:[%s3071 + $0x78] sm:$0xff]
      %3088 = vmatprep.subr.mxu0 0.0
      %3089 = vmatpush1.msra.mxu0 %v3072
      %3090 = vmatprep.subr.mxu0 0.0
      %3091 = vmatpush1.msra.mxu0 %v3073
      %3092 = vmatprep.subr.mxu0 0.0
      %3093 = vmatpush1.msra.mxu0 %v3074
      %3094 = vmatprep.subr.mxu0 0.0
      %3095 = vmatpush1.msra.mxu0 %v3075
      %3096 = vmatprep.subr.mxu0 0.0
      %3097 = vmatpush1.msra.mxu0 %v3076
      %3098 = vmatprep.subr.mxu0 0.0
      %3099 = vmatpush1.msra.mxu0 %v3077
      %3100 = vmatprep.subr.mxu0 0.0
      %3101 = vmatpush1.msra.mxu0 %v3078
      %3102 = vmatprep.subr.mxu0 0.0
      %3103 = vmatpush1.msra.mxu0 %v3079
      %3104 = vmatprep.subr.mxu0 0.0
      %3105 = vmatpush1.msra.mxu0 %v3080
      %3106 = vmatprep.subr.mxu0 0.0
      %3107 = vmatpush1.msra.mxu0 %v3081
      %3108 = vmatprep.subr.mxu0 0.0
      %3109 = vmatpush1.msra.mxu0 %v3082
      %3110 = vmatprep.subr.mxu0 0.0
      %3111 = vmatpush1.msra.mxu0 %v3083
      %3112 = vmatprep.subr.mxu0 0.0
      %3113 = vmatpush1.msra.mxu0 %v3084
      %3114 = vmatprep.subr.mxu0 0.0
      %3115 = vmatpush1.msra.mxu0 %v3085
      %3116 = vmatprep.subr.mxu0 0.0
      %3117 = vmatpush1.msra.mxu0 %v3086
      %3118 = vmatprep.subr.mxu0 0.0
      %3119 = vmatpush1.msra.mxu0 %v3087
      %3120 = vmatprep.subr.mxu0 0.0
      %3121 = vmatpush1.msra.mxu0 0.0
      %3122 = vmatprep.subr.mxu0 0.0
      %3123 = vmatpush1.msra.mxu0 0.0
      %3124 = vmatprep.subr.mxu0 0.0
      %3125 = vmatpush1.msra.mxu0 0.0
      %3126 = vmatprep.subr.mxu0 0.0
      %3127 = vmatpush1.msra.mxu0 0.0
      %3128 = vmatprep.subr.mxu0 0.0
      %3129 = vmatpush1.msra.mxu0 0.0
      %3130 = vmatprep.subr.mxu0 0.0
      %3131 = vmatpush1.msra.mxu0 0.0
      %3132 = vmatprep.subr.mxu0 0.0
      %3133 = vmatpush1.msra.mxu0 0.0
      %3134 = vmatprep.subr.mxu0 0.0
      %3135 = vmatpush1.msra.mxu0 0.0
      %3136 = vmatprep.subr.mxu0 0.0
      %3137 = vmatpush1.msra.mxu0 0.0
      %3138 = vmatprep.subr.mxu0 0.0
      %3139 = vmatpush1.msra.mxu0 0.0
      %3140 = vmatprep.subr.mxu0 0.0
      %3141 = vmatpush1.msra.mxu0 0.0
      %3142 = vmatprep.subr.mxu0 0.0
      %3143 = vmatpush1.msra.mxu0 0.0
      %3144 = vmatprep.subr.mxu0 0.0
      %3145 = vmatpush1.msra.mxu0 0.0
      %3146 = vmatprep.subr.mxu0 0.0
      %3147 = vmatpush1.msra.mxu0 0.0
      %3148 = vmatprep.subr.mxu0 0.0
      %3149 = vmatpush1.msra.mxu0 0.0
      %3150 = vmatprep.subr.mxu0 0.0
      %3151 = vmatpush1.msra.mxu0 0.0
      %3152 = vmatprep.mubr.f32.mxu0 0.0
      %3153 = vmatmul.mubr.f32.gmra.mrb[0].mxu0 %v3059
      %v3154 = vpop.f32.mrb[0].mxu0
      %v3155 = vadd.f32 0.0, %v3154
      %v3156 = vpop.f32.mrb[0].mxu0
      %3157 = vmatprep.mubr.f32.mxu0 0.0
      %3158 = vmatmul.mubr.f32.gmra.mrb[0].mxu0 %v3060
      %v3159 = vpop.f32.mrb[0].mxu0
      %v3160 = vadd.f32 0.0, %v3159
      %v3161 = vpop.f32.mrb[0].mxu0
      %3162 = vmatprep.mubr.f32.mxu0 0.0
      %3163 = vmatmul.mubr.f32.gmra.mrb[0].mxu0 %v3061
      %v3164 = vpop.f32.mrb[0].mxu0
      %v3165 = vadd.f32 0.0, %v3164
      %v3166 = vpop.f32.mrb[0].mxu0
      %3167 = vmatprep.mubr.f32.mxu0 0.0
      %3168 = vmatmul.mubr.f32.gmra.mrb[0].mxu0 %v3062
      %v3169 = vpop.f32.mrb[0].mxu0
      %v3170 = vadd.f32 0.0, %v3169
      %v3171 = vpop.f32.mrb[0].mxu0
      %3172 = vmatprep.mubr.f32.mxu0 0.0
      %3173 = vmatmul.mubr.f32.gmra.mrb[0].mxu0 %v3063
      %v3174 = vpop.f32.mrb[0].mxu0
      %v3175 = vadd.f32 0.0, %v3174
      %v3176 = vpop.f32.mrb[0].mxu0
      %3177 = vmatprep.mubr.f32.mxu0 0.0
      %3178 = vmatmul.mubr.f32.gmra.mrb[0].mxu0 %v3064
      %v3179 = vpop.f32.mrb[0].mxu0
      %v3180 = vadd.f32 0.0, %v3179
      %v3181 = vpop.f32.mrb[0].mxu0
      %3182 = vmatprep.mubr.f32.mxu0 0.0
      %3183 = vmatmul.mubr.f32.gmra.mrb[0].mxu0 %v3065
      %v3184 = vpop.f32.mrb[0].mxu0
      %v3185 = vadd.f32 0.0, %v3184
      %v3186 = vpop.f32.mrb[0].mxu0
      %3187 = vmatprep.mubr.f32.mxu0 0.0
      %3188 = vmatmul.mubr.f32.gmra.mrb[0].mxu0 %v3066
      %v3189 = vpop.f32.mrb[0].mxu0
      %v3190 = vadd.f32 0.0, %v3189
      %v3191 = vpop.f32.mrb[0].mxu0
      %3192 = vmatprep.mubr.f32.mxu0 0.0
      %3193 = vmatmul.mubr.f32.gmra.mrb[0].mxu0 %v3067
      %v3194 = vpop.f32.mrb[0].mxu0
      %v3195 = vadd.f32 0.0, %v3194
      %v3196 = vpop.f32.mrb[0].mxu0
      %3197 = vmatprep.mubr.f32.mxu0 0.0
      %3198 = vmatmul.mubr.f32.gmra.mrb[0].mxu0 %v3068
      %v3199 = vpop.f32.mrb[0].mxu0
      %v3200 = vadd.f32 0.0, %v3199
      %v3201 = vpop.f32.mrb[0].mxu0
      %3202 = vmatprep.mubr.f32.mxu0 0.0
      %3203 = vmatmul.mubr.f32.gmra.mrb[0].mxu0 %v3069
      %v3204 = vpop.f32.mrb[0].mxu0
      %v3205 = vadd.f32 0.0, %v3204
      %v3206 = vpop.f32.mrb[0].mxu0
      %3207 = vmatprep.mubr.f32.mxu0 0.0
      %3208 = vmatmul.mubr.f32.gmra.mrb[0].mxu0 %v3070
      %v3209 = vpop.f32.mrb[0].mxu0
      %v3210 = vadd.f32 0.0, %v3209
      %v3211 = vpop.f32.mrb[0].mxu0
      %3212 = vdwg.mxu0
      %v3213 = vadd.f32 %v3047, %v3155
      %v3214 = vadd.f32 %v3048, %v3160
      %v3215 = vadd.f32 %v3049, %v3165
      %v3216 = vadd.f32 %v3050, %v3170
      %v3217 = vadd.f32 %v3051, %v3175
      %v3218 = vadd.f32 %v3052, %v3180
      %v3219 = vadd.f32 %v3053, %v3185
      %v3220 = vadd.f32 %v3054, %v3190
      %v3221 = vadd.f32 %v3055, %v3195
      %v3222 = vadd.f32 %v3056, %v3200
      %v3223 = vadd.f32 %v3057, %v3205
      %v3224 = vadd.f32 %v3058, %v3210
      %v3225 = vld [vmem:[#allocation2 + $0x19] sm:$0xff]
      %v3226 = vld [vmem:[#allocation2 + $0x21] sm:$0xff]
      %v3227 = vld [vmem:[#allocation2 + $0x29] sm:$0xff]
      %v3228 = vld [vmem:[#allocation2 + $0x31] sm:$0xff]
      %v3229 = vld [vmem:[#allocation2 + $0x39] sm:$0xff]
      %v3230 = vld [vmem:[#allocation2 + $0x41] sm:$0xff]
      %v3231 = vld [vmem:[#allocation2 + $0x49] sm:$0xff]
      %v3232 = vld [vmem:[#allocation2 + $0x51] sm:$0xff]
      %v3233 = vld [vmem:[#allocation2 + $0x59] sm:$0xff]
      %v3234 = vld [vmem:[#allocation2 + $0x61] sm:$0xff]
      %v3235 = vld [vmem:[#allocation2 + $0x69] sm:$0xff]
      %v3236 = vld [vmem:[#allocation2 + $0x71] sm:$0xff]
      %s3237 = scalar_lea.vmem %s4, 1408
      %v3238 = vld [vmem:[%s3237] sm:$0xff]
      %v3239 = vld [vmem:[%s3237 + $0x8] sm:$0xff]
      %v3240 = vld [vmem:[%s3237 + $0x10] sm:$0xff]
      %v3241 = vld [vmem:[%s3237 + $0x18] sm:$0xff]
      %v3242 = vld [vmem:[%s3237 + $0x20] sm:$0xff]
      %v3243 = vld [vmem:[%s3237 + $0x28] sm:$0xff]
      %v3244 = vld [vmem:[%s3237 + $0x30] sm:$0xff]
      %v3245 = vld [vmem:[%s3237 + $0x38] sm:$0xff]
      %v3246 = vld [vmem:[%s3237 + $0x40] sm:$0xff]
      %v3247 = vld [vmem:[%s3237 + $0x48] sm:$0xff]
      %v3248 = vld [vmem:[%s3237 + $0x50] sm:$0xff]
      %v3249 = vld [vmem:[%s3237 + $0x58] sm:$0xff]
      %v3250 = vld [vmem:[%s3237 + $0x60] sm:$0xff]
      %v3251 = vld [vmem:[%s3237 + $0x68] sm:$0xff]
      %v3252 = vld [vmem:[%s3237 + $0x70] sm:$0xff]
      %v3253 = vld [vmem:[%s3237 + $0x78] sm:$0xff]
      %3254 = vmatprep.subr.mxu0 0.0
      %3255 = vmatpush1.msra.mxu0 %v3238
      %3256 = vmatprep.subr.mxu0 0.0
      %3257 = vmatpush1.msra.mxu0 %v3239
      %3258 = vmatprep.subr.mxu0 0.0
      %3259 = vmatpush1.msra.mxu0 %v3240
      %3260 = vmatprep.subr.mxu0 0.0
      %3261 = vmatpush1.msra.mxu0 %v3241
      %3262 = vmatprep.subr.mxu0 0.0
      %3263 = vmatpush1.msra.mxu0 %v3242
      %3264 = vmatprep.subr.mxu0 0.0
      %3265 = vmatpush1.msra.mxu0 %v3243
      %3266 = vmatprep.subr.mxu0 0.0
      %3267 = vmatpush1.msra.mxu0 %v3244
      %3268 = vmatprep.subr.mxu0 0.0
      %3269 = vmatpush1.msra.mxu0 %v3245
      %3270 = vmatprep.subr.mxu0 0.0
      %3271 = vmatpush1.msra.mxu0 %v3246
      %3272 = vmatprep.subr.mxu0 0.0
      %3273 = vmatpush1.msra.mxu0 %v3247
      %3274 = vmatprep.subr.mxu0 0.0
      %3275 = vmatpush1.msra.mxu0 %v3248
      %3276 = vmatprep.subr.mxu0 0.0
      %3277 = vmatpush1.msra.mxu0 %v3249
      %3278 = vmatprep.subr.mxu0 0.0
      %3279 = vmatpush1.msra.mxu0 %v3250
      %3280 = vmatprep.subr.mxu0 0.0
      %3281 = vmatpush1.msra.mxu0 %v3251
      %3282 = vmatprep.subr.mxu0 0.0
      %3283 = vmatpush1.msra.mxu0 %v3252
      %3284 = vmatprep.subr.mxu0 0.0
      %3285 = vmatpush1.msra.mxu0 %v3253
      %3286 = vmatprep.subr.mxu0 0.0
      %3287 = vmatpush1.msra.mxu0 0.0
      %3288 = vmatprep.subr.mxu0 0.0
      %3289 = vmatpush1.msra.mxu0 0.0
      %3290 = vmatprep.subr.mxu0 0.0
      %3291 = vmatpush1.msra.mxu0 0.0
      %3292 = vmatprep.subr.mxu0 0.0
      %3293 = vmatpush1.msra.mxu0 0.0
      %3294 = vmatprep.subr.mxu0 0.0
      %3295 = vmatpush1.msra.mxu0 0.0
      %3296 = vmatprep.subr.mxu0 0.0
      %3297 = vmatpush1.msra.mxu0 0.0
      %3298 = vmatprep.subr.mxu0 0.0
      %3299 = vmatpush1.msra.mxu0 0.0
      %3300 = vmatprep.subr.mxu0 0.0
      %3301 = vmatpush1.msra.mxu0 0.0
      %3302 = vmatprep.subr.mxu0 0.0
      %3303 = vmatpush1.msra.mxu0 0.0
      %3304 = vmatprep.subr.mxu0 0.0
      %3305 = vmatpush1.msra.mxu0 0.0
      %3306 = vmatprep.subr.mxu0 0.0
      %3307 = vmatpush1.msra.mxu0 0.0
      %3308 = vmatprep.subr.mxu0 0.0
      %3309 = vmatpush1.msra.mxu0 0.0
      %3310 = vmatprep.subr.mxu0 0.0
      %3311 = vmatpush1.msra.mxu0 0.0
      %3312 = vmatprep.subr.mxu0 0.0
      %3313 = vmatpush1.msra.mxu0 0.0
      %3314 = vmatprep.subr.mxu0 0.0
      %3315 = vmatpush1.msra.mxu0 0.0
      %3316 = vmatprep.subr.mxu0 0.0
      %3317 = vmatpush1.msra.mxu0 0.0
      %3318 = vmatprep.mubr.f32.mxu0 0.0
      %3319 = vmatmul.mubr.f32.gmra.mrb[0].mxu0 %v3225
      %v3320 = vpop.f32.mrb[0].mxu0
      %v3321 = vadd.f32 0.0, %v3320
      %v3322 = vpop.f32.mrb[0].mxu0
      %3323 = vmatprep.mubr.f32.mxu0 0.0
      %3324 = vmatmul.mubr.f32.gmra.mrb[0].mxu0 %v3226
      %v3325 = vpop.f32.mrb[0].mxu0
      %v3326 = vadd.f32 0.0, %v3325
      %v3327 = vpop.f32.mrb[0].mxu0
      %3328 = vmatprep.mubr.f32.mxu0 0.0
      %3329 = vmatmul.mubr.f32.gmra.mrb[0].mxu0 %v3227
      %v3330 = vpop.f32.mrb[0].mxu0
      %v3331 = vadd.f32 0.0, %v3330
      %v3332 = vpop.f32.mrb[0].mxu0
      %3333 = vmatprep.mubr.f32.mxu0 0.0
      %3334 = vmatmul.mubr.f32.gmra.mrb[0].mxu0 %v3228
      %v3335 = vpop.f32.mrb[0].mxu0
      %v3336 = vadd.f32 0.0, %v3335
      %v3337 = vpop.f32.mrb[0].mxu0
      %3338 = vmatprep.mubr.f32.mxu0 0.0
      %3339 = vmatmul.mubr.f32.gmra.mrb[0].mxu0 %v3229
      %v3340 = vpop.f32.mrb[0].mxu0
      %v3341 = vadd.f32 0.0, %v3340
      %v3342 = vpop.f32.mrb[0].mxu0
      %3343 = vmatprep.mubr.f32.mxu0 0.0
      %3344 = vmatmul.mubr.f32.gmra.mrb[0].mxu0 %v3230
      %v3345 = vpop.f32.mrb[0].mxu0
      %v3346 = vadd.f32 0.0, %v3345
      %v3347 = vpop.f32.mrb[0].mxu0
      %3348 = vmatprep.mubr.f32.mxu0 0.0
      %3349 = vmatmul.mubr.f32.gmra.mrb[0].mxu0 %v3231
      %v3350 = vpop.f32.mrb[0].mxu0
      %v3351 = vadd.f32 0.0, %v3350
      %v3352 = vpop.f32.mrb[0].mxu0
      %3353 = vmatprep.mubr.f32.mxu0 0.0
      %3354 = vmatmul.mubr.f32.gmra.mrb[0].mxu0 %v3232
      %v3355 = vpop.f32.mrb[0].mxu0
      %v3356 = vadd.f32 0.0, %v3355
      %v3357 = vpop.f32.mrb[0].mxu0
      %3358 = vmatprep.mubr.f32.mxu0 0.0
      %3359 = vmatmul.mubr.f32.gmra.mrb[0].mxu0 %v3233
      %v3360 = vpop.f32.mrb[0].mxu0
      %v3361 = vadd.f32 0.0, %v3360
      %v3362 = vpop.f32.mrb[0].mxu0
      %3363 = vmatprep.mubr.f32.mxu0 0.0
      %3364 = vmatmul.mubr.f32.gmra.mrb[0].mxu0 %v3234
      %v3365 = vpop.f32.mrb[0].mxu0
      %v3366 = vadd.f32 0.0, %v3365
      %v3367 = vpop.f32.mrb[0].mxu0
      %3368 = vmatprep.mubr.f32.mxu0 0.0
      %3369 = vmatmul.mubr.f32.gmra.mrb[0].mxu0 %v3235
      %v3370 = vpop.f32.mrb[0].mxu0
      %v3371 = vadd.f32 0.0, %v3370
      %v3372 = vpop.f32.mrb[0].mxu0
      %3373 = vmatprep.mubr.f32.mxu0 0.0
      %3374 = vmatmul.mubr.f32.gmra.mrb[0].mxu0 %v3236
      %v3375 = vpop.f32.mrb[0].mxu0
      %v3376 = vadd.f32 0.0, %v3375
      %v3377 = vpop.f32.mrb[0].mxu0
      %3378 = vdwg.mxu0
      %v3379 = vadd.f32 %v3213, %v3321
      %v3380 = vadd.f32 %v3214, %v3326
      %v3381 = vadd.f32 %v3215, %v3331
      %v3382 = vadd.f32 %v3216, %v3336
      %v3383 = vadd.f32 %v3217, %v3341
      %v3384 = vadd.f32 %v3218, %v3346
      %v3385 = vadd.f32 %v3219, %v3351
      %v3386 = vadd.f32 %v3220, %v3356
      %v3387 = vadd.f32 %v3221, %v3361
      %v3388 = vadd.f32 %v3222, %v3366
      %v3389 = vadd.f32 %v3223, %v3371
      %v3390 = vadd.f32 %v3224, %v3376
      %v3391 = vld [vmem:[#allocation2 + $0x1a] sm:$0xff]
      %v3392 = vld [vmem:[#allocation2 + $0x22] sm:$0xff]
      %v3393 = vld [vmem:[#allocation2 + $0x2a] sm:$0xff]
      %v3394 = vld [vmem:[#allocation2 + $0x32] sm:$0xff]
      %v3395 = vld [vmem:[#allocation2 + $0x3a] sm:$0xff]
      %v3396 = vld [vmem:[#allocation2 + $0x42] sm:$0xff]
      %v3397 = vld [vmem:[#allocation2 + $0x4a] sm:$0xff]
      %v3398 = vld [vmem:[#allocation2 + $0x52] sm:$0xff]
      %v3399 = vld [vmem:[#allocation2 + $0x5a] sm:$0xff]
      %v3400 = vld [vmem:[#allocation2 + $0x62] sm:$0xff]
      %v3401 = vld [vmem:[#allocation2 + $0x6a] sm:$0xff]
      %v3402 = vld [vmem:[#allocation2 + $0x72] sm:$0xff]
      %s3403 = scalar_lea.vmem %s4, 1536
      %v3404 = vld [vmem:[%s3403] sm:$0xff]
      %v3405 = vld [vmem:[%s3403 + $0x8] sm:$0xff]
      %v3406 = vld [vmem:[%s3403 + $0x10] sm:$0xff]
      %v3407 = vld [vmem:[%s3403 + $0x18] sm:$0xff]
      %v3408 = vld [vmem:[%s3403 + $0x20] sm:$0xff]
      %v3409 = vld [vmem:[%s3403 + $0x28] sm:$0xff]
      %v3410 = vld [vmem:[%s3403 + $0x30] sm:$0xff]
      %v3411 = vld [vmem:[%s3403 + $0x38] sm:$0xff]
      %v3412 = vld [vmem:[%s3403 + $0x40] sm:$0xff]
      %v3413 = vld [vmem:[%s3403 + $0x48] sm:$0xff]
      %v3414 = vld [vmem:[%s3403 + $0x50] sm:$0xff]
      %v3415 = vld [vmem:[%s3403 + $0x58] sm:$0xff]
      %v3416 = vld [vmem:[%s3403 + $0x60] sm:$0xff]
      %v3417 = vld [vmem:[%s3403 + $0x68] sm:$0xff]
      %v3418 = vld [vmem:[%s3403 + $0x70] sm:$0xff]
      %v3419 = vld [vmem:[%s3403 + $0x78] sm:$0xff]
      %3420 = vmatprep.subr.mxu0 0.0
      %3421 = vmatpush1.msra.mxu0 %v3404
      %3422 = vmatprep.subr.mxu0 0.0
      %3423 = vmatpush1.msra.mxu0 %v3405
      %3424 = vmatprep.subr.mxu0 0.0
      %3425 = vmatpush1.msra.mxu0 %v3406
      %3426 = vmatprep.subr.mxu0 0.0
      %3427 = vmatpush1.msra.mxu0 %v3407
      %3428 = vmatprep.subr.mxu0 0.0
      %3429 = vmatpush1.msra.mxu0 %v3408
      %3430 = vmatprep.subr.mxu0 0.0
      %3431 = vmatpush1.msra.mxu0 %v3409
      %3432 = vmatprep.subr.mxu0 0.0
      %3433 = vmatpush1.msra.mxu0 %v3410
      %3434 = vmatprep.subr.mxu0 0.0
      %3435 = vmatpush1.msra.mxu0 %v3411
      %3436 = vmatprep.subr.mxu0 0.0
      %3437 = vmatpush1.msra.mxu0 %v3412
      %3438 = vmatprep.subr.mxu0 0.0
      %3439 = vmatpush1.msra.mxu0 %v3413
      %3440 = vmatprep.subr.mxu0 0.0
      %3441 = vmatpush1.msra.mxu0 %v3414
      %3442 = vmatprep.subr.mxu0 0.0
      %3443 = vmatpush1.msra.mxu0 %v3415
      %3444 = vmatprep.subr.mxu0 0.0
      %3445 = vmatpush1.msra.mxu0 %v3416
      %3446 = vmatprep.subr.mxu0 0.0
      %3447 = vmatpush1.msra.mxu0 %v3417
      %3448 = vmatprep.subr.mxu0 0.0
      %3449 = vmatpush1.msra.mxu0 %v3418
      %3450 = vmatprep.subr.mxu0 0.0
      %3451 = vmatpush1.msra.mxu0 %v3419
      %3452 = vmatprep.subr.mxu0 0.0
      %3453 = vmatpush1.msra.mxu0 0.0
      %3454 = vmatprep.subr.mxu0 0.0
      %3455 = vmatpush1.msra.mxu0 0.0
      %3456 = vmatprep.subr.mxu0 0.0
      %3457 = vmatpush1.msra.mxu0 0.0
      %3458 = vmatprep.subr.mxu0 0.0
      %3459 = vmatpush1.msra.mxu0 0.0
      %3460 = vmatprep.subr.mxu0 0.0
      %3461 = vmatpush1.msra.mxu0 0.0
      %3462 = vmatprep.subr.mxu0 0.0
      %3463 = vmatpush1.msra.mxu0 0.0
      %3464 = vmatprep.subr.mxu0 0.0
      %3465 = vmatpush1.msra.mxu0 0.0
      %3466 = vmatprep.subr.mxu0 0.0
      %3467 = vmatpush1.msra.mxu0 0.0
      %3468 = vmatprep.subr.mxu0 0.0
      %3469 = vmatpush1.msra.mxu0 0.0
      %3470 = vmatprep.subr.mxu0 0.0
      %3471 = vmatpush1.msra.mxu0 0.0
      %3472 = vmatprep.subr.mxu0 0.0
      %3473 = vmatpush1.msra.mxu0 0.0
      %3474 = vmatprep.subr.mxu0 0.0
      %3475 = vmatpush1.msra.mxu0 0.0
      %3476 = vmatprep.subr.mxu0 0.0
      %3477 = vmatpush1.msra.mxu0 0.0
      %3478 = vmatprep.subr.mxu0 0.0
      %3479 = vmatpush1.msra.mxu0 0.0
      %3480 = vmatprep.subr.mxu0 0.0
      %3481 = vmatpush1.msra.mxu0 0.0
      %3482 = vmatprep.subr.mxu0 0.0
      %3483 = vmatpush1.msra.mxu0 0.0
      %3484 = vmatprep.mubr.f32.mxu0 0.0
      %3485 = vmatmul.mubr.f32.gmra.mrb[0].mxu0 %v3391
      %v3486 = vpop.f32.mrb[0].mxu0
      %v3487 = vadd.f32 0.0, %v3486
      %v3488 = vpop.f32.mrb[0].mxu0
      %3489 = vmatprep.mubr.f32.mxu0 0.0
      %3490 = vmatmul.mubr.f32.gmra.mrb[0].mxu0 %v3392
      %v3491 = vpop.f32.mrb[0].mxu0
      %v3492 = vadd.f32 0.0, %v3491
      %v3493 = vpop.f32.mrb[0].mxu0
      %3494 = vmatprep.mubr.f32.mxu0 0.0
      %3495 = vmatmul.mubr.f32.gmra.mrb[0].mxu0 %v3393
      %v3496 = vpop.f32.mrb[0].mxu0
      %v3497 = vadd.f32 0.0, %v3496
      %v3498 = vpop.f32.mrb[0].mxu0
      %3499 = vmatprep.mubr.f32.mxu0 0.0
      %3500 = vmatmul.mubr.f32.gmra.mrb[0].mxu0 %v3394
      %v3501 = vpop.f32.mrb[0].mxu0
      %v3502 = vadd.f32 0.0, %v3501
      %v3503 = vpop.f32.mrb[0].mxu0
      %3504 = vmatprep.mubr.f32.mxu0 0.0
      %3505 = vmatmul.mubr.f32.gmra.mrb[0].mxu0 %v3395
      %v3506 = vpop.f32.mrb[0].mxu0
      %v3507 = vadd.f32 0.0, %v3506
      %v3508 = vpop.f32.mrb[0].mxu0
      %3509 = vmatprep.mubr.f32.mxu0 0.0
      %3510 = vmatmul.mubr.f32.gmra.mrb[0].mxu0 %v3396
      %v3511 = vpop.f32.mrb[0].mxu0
      %v3512 = vadd.f32 0.0, %v3511
      %v3513 = vpop.f32.mrb[0].mxu0
      %3514 = vmatprep.mubr.f32.mxu0 0.0
      %3515 = vmatmul.mubr.f32.gmra.mrb[0].mxu0 %v3397
      %v3516 = vpop.f32.mrb[0].mxu0
      %v3517 = vadd.f32 0.0, %v3516
      %v3518 = vpop.f32.mrb[0].mxu0
      %3519 = vmatprep.mubr.f32.mxu0 0.0
      %3520 = vmatmul.mubr.f32.gmra.mrb[0].mxu0 %v3398
      %v3521 = vpop.f32.mrb[0].mxu0
      %v3522 = vadd.f32 0.0, %v3521
      %v3523 = vpop.f32.mrb[0].mxu0
      %3524 = vmatprep.mubr.f32.mxu0 0.0
      %3525 = vmatmul.mubr.f32.gmra.mrb[0].mxu0 %v3399
      %v3526 = vpop.f32.mrb[0].mxu0
      %v3527 = vadd.f32 0.0, %v3526
      %v3528 = vpop.f32.mrb[0].mxu0
      %3529 = vmatprep.mubr.f32.mxu0 0.0
      %3530 = vmatmul.mubr.f32.gmra.mrb[0].mxu0 %v3400
      %v3531 = vpop.f32.mrb[0].mxu0
      %v3532 = vadd.f32 0.0, %v3531
      %v3533 = vpop.f32.mrb[0].mxu0
      %3534 = vmatprep.mubr.f32.mxu0 0.0
      %3535 = vmatmul.mubr.f32.gmra.mrb[0].mxu0 %v3401
      %v3536 = vpop.f32.mrb[0].mxu0
      %v3537 = vadd.f32 0.0, %v3536
      %v3538 = vpop.f32.mrb[0].mxu0
      %3539 = vmatprep.mubr.f32.mxu0 0.0
      %3540 = vmatmul.mubr.f32.gmra.mrb[0].mxu0 %v3402
      %v3541 = vpop.f32.mrb[0].mxu0
      %v3542 = vadd.f32 0.0, %v3541
      %v3543 = vpop.f32.mrb[0].mxu0
      %3544 = vdwg.mxu0
      %v3545 = vadd.f32 %v3379, %v3487
      %v3546 = vadd.f32 %v3380, %v3492
      %v3547 = vadd.f32 %v3381, %v3497
      %v3548 = vadd.f32 %v3382, %v3502
      %v3549 = vadd.f32 %v3383, %v3507
      %v3550 = vadd.f32 %v3384, %v3512
      %v3551 = vadd.f32 %v3385, %v3517
      %v3552 = vadd.f32 %v3386, %v3522
      %v3553 = vadd.f32 %v3387, %v3527
      %v3554 = vadd.f32 %v3388, %v3532
      %v3555 = vadd.f32 %v3389, %v3537
      %v3556 = vadd.f32 %v3390, %v3542
      %v3557 = vld [vmem:[#allocation2 + $0x1b] sm:$0xff]
      %v3558 = vld [vmem:[#allocation2 + $0x23] sm:$0xff]
      %v3559 = vld [vmem:[#allocation2 + $0x2b] sm:$0xff]
      %v3560 = vld [vmem:[#allocation2 + $0x33] sm:$0xff]
      %v3561 = vld [vmem:[#allocation2 + $0x3b] sm:$0xff]
      %v3562 = vld [vmem:[#allocation2 + $0x43] sm:$0xff]
      %v3563 = vld [vmem:[#allocation2 + $0x4b] sm:$0xff]
      %v3564 = vld [vmem:[#allocation2 + $0x53] sm:$0xff]
      %v3565 = vld [vmem:[#allocation2 + $0x5b] sm:$0xff]
      %v3566 = vld [vmem:[#allocation2 + $0x63] sm:$0xff]
      %v3567 = vld [vmem:[#allocation2 + $0x6b] sm:$0xff]
      %v3568 = vld [vmem:[#allocation2 + $0x73] sm:$0xff]
      %s3569 = scalar_lea.vmem %s4, 1664
      %v3570 = vld [vmem:[%s3569] sm:$0xff]
      %v3571 = vld [vmem:[%s3569 + $0x8] sm:$0xff]
      %v3572 = vld [vmem:[%s3569 + $0x10] sm:$0xff]
      %v3573 = vld [vmem:[%s3569 + $0x18] sm:$0xff]
      %v3574 = vld [vmem:[%s3569 + $0x20] sm:$0xff]
      %v3575 = vld [vmem:[%s3569 + $0x28] sm:$0xff]
      %v3576 = vld [vmem:[%s3569 + $0x30] sm:$0xff]
      %v3577 = vld [vmem:[%s3569 + $0x38] sm:$0xff]
      %v3578 = vld [vmem:[%s3569 + $0x40] sm:$0xff]
      %v3579 = vld [vmem:[%s3569 + $0x48] sm:$0xff]
      %v3580 = vld [vmem:[%s3569 + $0x50] sm:$0xff]
      %v3581 = vld [vmem:[%s3569 + $0x58] sm:$0xff]
      %v3582 = vld [vmem:[%s3569 + $0x60] sm:$0xff]
      %v3583 = vld [vmem:[%s3569 + $0x68] sm:$0xff]
      %v3584 = vld [vmem:[%s3569 + $0x70] sm:$0xff]
      %v3585 = vld [vmem:[%s3569 + $0x78] sm:$0xff]
      %3586 = vmatprep.subr.mxu0 0.0
      %3587 = vmatpush1.msra.mxu0 %v3570
      %3588 = vmatprep.subr.mxu0 0.0
      %3589 = vmatpush1.msra.mxu0 %v3571
      %3590 = vmatprep.subr.mxu0 0.0
      %3591 = vmatpush1.msra.mxu0 %v3572
      %3592 = vmatprep.subr.mxu0 0.0
      %3593 = vmatpush1.msra.mxu0 %v3573
      %3594 = vmatprep.subr.mxu0 0.0
      %3595 = vmatpush1.msra.mxu0 %v3574
      %3596 = vmatprep.subr.mxu0 0.0
      %3597 = vmatpush1.msra.mxu0 %v3575
      %3598 = vmatprep.subr.mxu0 0.0
      %3599 = vmatpush1.msra.mxu0 %v3576
      %3600 = vmatprep.subr.mxu0 0.0
      %3601 = vmatpush1.msra.mxu0 %v3577
      %3602 = vmatprep.subr.mxu0 0.0
      %3603 = vmatpush1.msra.mxu0 %v3578
      %3604 = vmatprep.subr.mxu0 0.0
      %3605 = vmatpush1.msra.mxu0 %v3579
      %3606 = vmatprep.subr.mxu0 0.0
      %3607 = vmatpush1.msra.mxu0 %v3580
      %3608 = vmatprep.subr.mxu0 0.0
      %3609 = vmatpush1.msra.mxu0 %v3581
      %3610 = vmatprep.subr.mxu0 0.0
      %3611 = vmatpush1.msra.mxu0 %v3582
      %3612 = vmatprep.subr.mxu0 0.0
      %3613 = vmatpush1.msra.mxu0 %v3583
      %3614 = vmatprep.subr.mxu0 0.0
      %3615 = vmatpush1.msra.mxu0 %v3584
      %3616 = vmatprep.subr.mxu0 0.0
      %3617 = vmatpush1.msra.mxu0 %v3585
      %3618 = vmatprep.subr.mxu0 0.0
      %3619 = vmatpush1.msra.mxu0 0.0
      %3620 = vmatprep.subr.mxu0 0.0
      %3621 = vmatpush1.msra.mxu0 0.0
      %3622 = vmatprep.subr.mxu0 0.0
      %3623 = vmatpush1.msra.mxu0 0.0
      %3624 = vmatprep.subr.mxu0 0.0
      %3625 = vmatpush1.msra.mxu0 0.0
      %3626 = vmatprep.subr.mxu0 0.0
      %3627 = vmatpush1.msra.mxu0 0.0
      %3628 = vmatprep.subr.mxu0 0.0
      %3629 = vmatpush1.msra.mxu0 0.0
      %3630 = vmatprep.subr.mxu0 0.0
      %3631 = vmatpush1.msra.mxu0 0.0
      %3632 = vmatprep.subr.mxu0 0.0
      %3633 = vmatpush1.msra.mxu0 0.0
      %3634 = vmatprep.subr.mxu0 0.0
      %3635 = vmatpush1.msra.mxu0 0.0
      %3636 = vmatprep.subr.mxu0 0.0
      %3637 = vmatpush1.msra.mxu0 0.0
      %3638 = vmatprep.subr.mxu0 0.0
      %3639 = vmatpush1.msra.mxu0 0.0
      %3640 = vmatprep.subr.mxu0 0.0
      %3641 = vmatpush1.msra.mxu0 0.0
      %3642 = vmatprep.subr.mxu0 0.0
      %3643 = vmatpush1.msra.mxu0 0.0
      %3644 = vmatprep.subr.mxu0 0.0
      %3645 = vmatpush1.msra.mxu0 0.0
      %3646 = vmatprep.subr.mxu0 0.0
      %3647 = vmatpush1.msra.mxu0 0.0
      %3648 = vmatprep.subr.mxu0 0.0
      %3649 = vmatpush1.msra.mxu0 0.0
      %3650 = vmatprep.mubr.f32.mxu0 0.0
      %3651 = vmatmul.mubr.f32.gmra.mrb[0].mxu0 %v3557
      %v3652 = vpop.f32.mrb[0].mxu0
      %v3653 = vadd.f32 0.0, %v3652
      %v3654 = vpop.f32.mrb[0].mxu0
      %3655 = vmatprep.mubr.f32.mxu0 0.0
      %3656 = vmatmul.mubr.f32.gmra.mrb[0].mxu0 %v3558
      %v3657 = vpop.f32.mrb[0].mxu0
      %v3658 = vadd.f32 0.0, %v3657
      %v3659 = vpop.f32.mrb[0].mxu0
      %3660 = vmatprep.mubr.f32.mxu0 0.0
      %3661 = vmatmul.mubr.f32.gmra.mrb[0].mxu0 %v3559
      %v3662 = vpop.f32.mrb[0].mxu0
      %v3663 = vadd.f32 0.0, %v3662
      %v3664 = vpop.f32.mrb[0].mxu0
      %3665 = vmatprep.mubr.f32.mxu0 0.0
      %3666 = vmatmul.mubr.f32.gmra.mrb[0].mxu0 %v3560
      %v3667 = vpop.f32.mrb[0].mxu0
      %v3668 = vadd.f32 0.0, %v3667
      %v3669 = vpop.f32.mrb[0].mxu0
      %3670 = vmatprep.mubr.f32.mxu0 0.0
      %3671 = vmatmul.mubr.f32.gmra.mrb[0].mxu0 %v3561
      %v3672 = vpop.f32.mrb[0].mxu0
      %v3673 = vadd.f32 0.0, %v3672
      %v3674 = vpop.f32.mrb[0].mxu0
      %3675 = vmatprep.mubr.f32.mxu0 0.0
      %3676 = vmatmul.mubr.f32.gmra.mrb[0].mxu0 %v3562
      %v3677 = vpop.f32.mrb[0].mxu0
      %v3678 = vadd.f32 0.0, %v3677
      %v3679 = vpop.f32.mrb[0].mxu0
      %3680 = vmatprep.mubr.f32.mxu0 0.0
      %3681 = vmatmul.mubr.f32.gmra.mrb[0].mxu0 %v3563
      %v3682 = vpop.f32.mrb[0].mxu0
      %v3683 = vadd.f32 0.0, %v3682
      %v3684 = vpop.f32.mrb[0].mxu0
      %3685 = vmatprep.mubr.f32.mxu0 0.0
      %3686 = vmatmul.mubr.f32.gmra.mrb[0].mxu0 %v3564
      %v3687 = vpop.f32.mrb[0].mxu0
      %v3688 = vadd.f32 0.0, %v3687
      %v3689 = vpop.f32.mrb[0].mxu0
      %3690 = vmatprep.mubr.f32.mxu0 0.0
      %3691 = vmatmul.mubr.f32.gmra.mrb[0].mxu0 %v3565
      %v3692 = vpop.f32.mrb[0].mxu0
      %v3693 = vadd.f32 0.0, %v3692
      %v3694 = vpop.f32.mrb[0].mxu0
      %3695 = vmatprep.mubr.f32.mxu0 0.0
      %3696 = vmatmul.mubr.f32.gmra.mrb[0].mxu0 %v3566
      %v3697 = vpop.f32.mrb[0].mxu0
      %v3698 = vadd.f32 0.0, %v3697
      %v3699 = vpop.f32.mrb[0].mxu0
      %3700 = vmatprep.mubr.f32.mxu0 0.0
      %3701 = vmatmul.mubr.f32.gmra.mrb[0].mxu0 %v3567
      %v3702 = vpop.f32.mrb[0].mxu0
      %v3703 = vadd.f32 0.0, %v3702
      %v3704 = vpop.f32.mrb[0].mxu0
      %3705 = vmatprep.mubr.f32.mxu0 0.0
      %3706 = vmatmul.mubr.f32.gmra.mrb[0].mxu0 %v3568
      %v3707 = vpop.f32.mrb[0].mxu0
      %v3708 = vadd.f32 0.0, %v3707
      %v3709 = vpop.f32.mrb[0].mxu0
      %3710 = vdwg.mxu0
      %v3711 = vadd.f32 %v3545, %v3653
      %v3712 = vadd.f32 %v3546, %v3658
      %v3713 = vadd.f32 %v3547, %v3663
      %v3714 = vadd.f32 %v3548, %v3668
      %v3715 = vadd.f32 %v3549, %v3673
      %v3716 = vadd.f32 %v3550, %v3678
      %v3717 = vadd.f32 %v3551, %v3683
      %v3718 = vadd.f32 %v3552, %v3688
      %v3719 = vadd.f32 %v3553, %v3693
      %v3720 = vadd.f32 %v3554, %v3698
      %v3721 = vadd.f32 %v3555, %v3703
      %v3722 = vadd.f32 %v3556, %v3708
      %v3723 = vld [vmem:[#allocation2 + $0x1c] sm:$0xff]
      %v3724 = vld [vmem:[#allocation2 + $0x24] sm:$0xff]
      %v3725 = vld [vmem:[#allocation2 + $0x2c] sm:$0xff]
      %v3726 = vld [vmem:[#allocation2 + $0x34] sm:$0xff]
      %v3727 = vld [vmem:[#allocation2 + $0x3c] sm:$0xff]
      %v3728 = vld [vmem:[#allocation2 + $0x44] sm:$0xff]
      %v3729 = vld [vmem:[#allocation2 + $0x4c] sm:$0xff]
      %v3730 = vld [vmem:[#allocation2 + $0x54] sm:$0xff]
      %v3731 = vld [vmem:[#allocation2 + $0x5c] sm:$0xff]
      %v3732 = vld [vmem:[#allocation2 + $0x64] sm:$0xff]
      %v3733 = vld [vmem:[#allocation2 + $0x6c] sm:$0xff]
      %v3734 = vld [vmem:[#allocation2 + $0x74] sm:$0xff]
      %s3735 = scalar_lea.vmem %s4, 1792
      %v3736 = vld [vmem:[%s3735] sm:$0xff]
      %v3737 = vld [vmem:[%s3735 + $0x8] sm:$0xff]
      %v3738 = vld [vmem:[%s3735 + $0x10] sm:$0xff]
      %v3739 = vld [vmem:[%s3735 + $0x18] sm:$0xff]
      %v3740 = vld [vmem:[%s3735 + $0x20] sm:$0xff]
      %v3741 = vld [vmem:[%s3735 + $0x28] sm:$0xff]
      %v3742 = vld [vmem:[%s3735 + $0x30] sm:$0xff]
      %v3743 = vld [vmem:[%s3735 + $0x38] sm:$0xff]
      %v3744 = vld [vmem:[%s3735 + $0x40] sm:$0xff]
      %v3745 = vld [vmem:[%s3735 + $0x48] sm:$0xff]
      %v3746 = vld [vmem:[%s3735 + $0x50] sm:$0xff]
      %v3747 = vld [vmem:[%s3735 + $0x58] sm:$0xff]
      %v3748 = vld [vmem:[%s3735 + $0x60] sm:$0xff]
      %v3749 = vld [vmem:[%s3735 + $0x68] sm:$0xff]
      %v3750 = vld [vmem:[%s3735 + $0x70] sm:$0xff]
      %v3751 = vld [vmem:[%s3735 + $0x78] sm:$0xff]
      %3752 = vmatprep.subr.mxu0 0.0
      %3753 = vmatpush1.msra.mxu0 %v3736
      %3754 = vmatprep.subr.mxu0 0.0
      %3755 = vmatpush1.msra.mxu0 %v3737
      %3756 = vmatprep.subr.mxu0 0.0
      %3757 = vmatpush1.msra.mxu0 %v3738
      %3758 = vmatprep.subr.mxu0 0.0
      %3759 = vmatpush1.msra.mxu0 %v3739
      %3760 = vmatprep.subr.mxu0 0.0
      %3761 = vmatpush1.msra.mxu0 %v3740
      %3762 = vmatprep.subr.mxu0 0.0
      %3763 = vmatpush1.msra.mxu0 %v3741
      %3764 = vmatprep.subr.mxu0 0.0
      %3765 = vmatpush1.msra.mxu0 %v3742
      %3766 = vmatprep.subr.mxu0 0.0
      %3767 = vmatpush1.msra.mxu0 %v3743
      %3768 = vmatprep.subr.mxu0 0.0
      %3769 = vmatpush1.msra.mxu0 %v3744
      %3770 = vmatprep.subr.mxu0 0.0
      %3771 = vmatpush1.msra.mxu0 %v3745
      %3772 = vmatprep.subr.mxu0 0.0
      %3773 = vmatpush1.msra.mxu0 %v3746
      %3774 = vmatprep.subr.mxu0 0.0
      %3775 = vmatpush1.msra.mxu0 %v3747
      %3776 = vmatprep.subr.mxu0 0.0
      %3777 = vmatpush1.msra.mxu0 %v3748
      %3778 = vmatprep.subr.mxu0 0.0
      %3779 = vmatpush1.msra.mxu0 %v3749
      %3780 = vmatprep.subr.mxu0 0.0
      %3781 = vmatpush1.msra.mxu0 %v3750
      %3782 = vmatprep.subr.mxu0 0.0
      %3783 = vmatpush1.msra.mxu0 %v3751
      %3784 = vmatprep.subr.mxu0 0.0
      %3785 = vmatpush1.msra.mxu0 0.0
      %3786 = vmatprep.subr.mxu0 0.0
      %3787 = vmatpush1.msra.mxu0 0.0
      %3788 = vmatprep.subr.mxu0 0.0
      %3789 = vmatpush1.msra.mxu0 0.0
      %3790 = vmatprep.subr.mxu0 0.0
      %3791 = vmatpush1.msra.mxu0 0.0
      %3792 = vmatprep.subr.mxu0 0.0
      %3793 = vmatpush1.msra.mxu0 0.0
      %3794 = vmatprep.subr.mxu0 0.0
      %3795 = vmatpush1.msra.mxu0 0.0
      %3796 = vmatprep.subr.mxu0 0.0
      %3797 = vmatpush1.msra.mxu0 0.0
      %3798 = vmatprep.subr.mxu0 0.0
      %3799 = vmatpush1.msra.mxu0 0.0
      %3800 = vmatprep.subr.mxu0 0.0
      %3801 = vmatpush1.msra.mxu0 0.0
      %3802 = vmatprep.subr.mxu0 0.0
      %3803 = vmatpush1.msra.mxu0 0.0
      %3804 = vmatprep.subr.mxu0 0.0
      %3805 = vmatpush1.msra.mxu0 0.0
      %3806 = vmatprep.subr.mxu0 0.0
      %3807 = vmatpush1.msra.mxu0 0.0
      %3808 = vmatprep.subr.mxu0 0.0
      %3809 = vmatpush1.msra.mxu0 0.0
      %3810 = vmatprep.subr.mxu0 0.0
      %3811 = vmatpush1.msra.mxu0 0.0
      %3812 = vmatprep.subr.mxu0 0.0
      %3813 = vmatpush1.msra.mxu0 0.0
      %3814 = vmatprep.subr.mxu0 0.0
      %3815 = vmatpush1.msra.mxu0 0.0
      %3816 = vmatprep.mubr.f32.mxu0 0.0
      %3817 = vmatmul.mubr.f32.gmra.mrb[0].mxu0 %v3723
      %v3818 = vpop.f32.mrb[0].mxu0
      %v3819 = vadd.f32 0.0, %v3818
      %v3820 = vpop.f32.mrb[0].mxu0
      %3821 = vmatprep.mubr.f32.mxu0 0.0
      %3822 = vmatmul.mubr.f32.gmra.mrb[0].mxu0 %v3724
      %v3823 = vpop.f32.mrb[0].mxu0
      %v3824 = vadd.f32 0.0, %v3823
      %v3825 = vpop.f32.mrb[0].mxu0
      %3826 = vmatprep.mubr.f32.mxu0 0.0
      %3827 = vmatmul.mubr.f32.gmra.mrb[0].mxu0 %v3725
      %v3828 = vpop.f32.mrb[0].mxu0
      %v3829 = vadd.f32 0.0, %v3828
      %v3830 = vpop.f32.mrb[0].mxu0
      %3831 = vmatprep.mubr.f32.mxu0 0.0
      %3832 = vmatmul.mubr.f32.gmra.mrb[0].mxu0 %v3726
      %v3833 = vpop.f32.mrb[0].mxu0
      %v3834 = vadd.f32 0.0, %v3833
      %v3835 = vpop.f32.mrb[0].mxu0
      %3836 = vmatprep.mubr.f32.mxu0 0.0
      %3837 = vmatmul.mubr.f32.gmra.mrb[0].mxu0 %v3727
      %v3838 = vpop.f32.mrb[0].mxu0
      %v3839 = vadd.f32 0.0, %v3838
      %v3840 = vpop.f32.mrb[0].mxu0
      %3841 = vmatprep.mubr.f32.mxu0 0.0
      %3842 = vmatmul.mubr.f32.gmra.mrb[0].mxu0 %v3728
      %v3843 = vpop.f32.mrb[0].mxu0
      %v3844 = vadd.f32 0.0, %v3843
      %v3845 = vpop.f32.mrb[0].mxu0
      %3846 = vmatprep.mubr.f32.mxu0 0.0
      %3847 = vmatmul.mubr.f32.gmra.mrb[0].mxu0 %v3729
      %v3848 = vpop.f32.mrb[0].mxu0
      %v3849 = vadd.f32 0.0, %v3848
      %v3850 = vpop.f32.mrb[0].mxu0
      %3851 = vmatprep.mubr.f32.mxu0 0.0
      %3852 = vmatmul.mubr.f32.gmra.mrb[0].mxu0 %v3730
      %v3853 = vpop.f32.mrb[0].mxu0
      %v3854 = vadd.f32 0.0, %v3853
      %v3855 = vpop.f32.mrb[0].mxu0
      %3856 = vmatprep.mubr.f32.mxu0 0.0
      %3857 = vmatmul.mubr.f32.gmra.mrb[0].mxu0 %v3731
      %v3858 = vpop.f32.mrb[0].mxu0
      %v3859 = vadd.f32 0.0, %v3858
      %v3860 = vpop.f32.mrb[0].mxu0
      %3861 = vmatprep.mubr.f32.mxu0 0.0
      %3862 = vmatmul.mubr.f32.gmra.mrb[0].mxu0 %v3732
      %v3863 = vpop.f32.mrb[0].mxu0
      %v3864 = vadd.f32 0.0, %v3863
      %v3865 = vpop.f32.mrb[0].mxu0
      %3866 = vmatprep.mubr.f32.mxu0 0.0
      %3867 = vmatmul.mubr.f32.gmra.mrb[0].mxu0 %v3733
      %v3868 = vpop.f32.mrb[0].mxu0
      %v3869 = vadd.f32 0.0, %v3868
      %v3870 = vpop.f32.mrb[0].mxu0
      %3871 = vmatprep.mubr.f32.mxu0 0.0
      %3872 = vmatmul.mubr.f32.gmra.mrb[0].mxu0 %v3734
      %v3873 = vpop.f32.mrb[0].mxu0
      %v3874 = vadd.f32 0.0, %v3873
      %v3875 = vpop.f32.mrb[0].mxu0
      %3876 = vdwg.mxu0
      %v3877 = vadd.f32 %v3711, %v3819
      %v3878 = vadd.f32 %v3712, %v3824
      %v3879 = vadd.f32 %v3713, %v3829
      %v3880 = vadd.f32 %v3714, %v3834
      %v3881 = vadd.f32 %v3715, %v3839
      %v3882 = vadd.f32 %v3716, %v3844
      %v3883 = vadd.f32 %v3717, %v3849
      %v3884 = vadd.f32 %v3718, %v3854
      %v3885 = vadd.f32 %v3719, %v3859
      %v3886 = vadd.f32 %v3720, %v3864
      %v3887 = vadd.f32 %v3721, %v3869
      %v3888 = vadd.f32 %v3722, %v3874
      %v3889 = vld [vmem:[#allocation2 + $0x24] sm:$0xff]
      %v3890 = vld [vmem:[#allocation2 + $0x2c] sm:$0xff]
      %v3891 = vld [vmem:[#allocation2 + $0x34] sm:$0xff]
      %v3892 = vld [vmem:[#allocation2 + $0x3c] sm:$0xff]
      %v3893 = vld [vmem:[#allocation2 + $0x44] sm:$0xff]
      %v3894 = vld [vmem:[#allocation2 + $0x4c] sm:$0xff]
      %v3895 = vld [vmem:[#allocation2 + $0x54] sm:$0xff]
      %v3896 = vld [vmem:[#allocation2 + $0x5c] sm:$0xff]
      %v3897 = vld [vmem:[#allocation2 + $0x64] sm:$0xff]
      %v3898 = vld [vmem:[#allocation2 + $0x6c] sm:$0xff]
      %v3899 = vld [vmem:[#allocation2 + $0x74] sm:$0xff]
      %v3900 = vld [vmem:[#allocation2 + $0x7c] sm:$0xff]
      %s3901 = scalar_lea.vmem %s4, 1920
      %v3902 = vld [vmem:[%s3901] sm:$0xff]
      %v3903 = vld [vmem:[%s3901 + $0x8] sm:$0xff]
      %v3904 = vld [vmem:[%s3901 + $0x10] sm:$0xff]
      %v3905 = vld [vmem:[%s3901 + $0x18] sm:$0xff]
      %v3906 = vld [vmem:[%s3901 + $0x20] sm:$0xff]
      %v3907 = vld [vmem:[%s3901 + $0x28] sm:$0xff]
      %v3908 = vld [vmem:[%s3901 + $0x30] sm:$0xff]
      %v3909 = vld [vmem:[%s3901 + $0x38] sm:$0xff]
      %v3910 = vld [vmem:[%s3901 + $0x40] sm:$0xff]
      %v3911 = vld [vmem:[%s3901 + $0x48] sm:$0xff]
      %v3912 = vld [vmem:[%s3901 + $0x50] sm:$0xff]
      %v3913 = vld [vmem:[%s3901 + $0x58] sm:$0xff]
      %v3914 = vld [vmem:[%s3901 + $0x60] sm:$0xff]
      %v3915 = vld [vmem:[%s3901 + $0x68] sm:$0xff]
      %v3916 = vld [vmem:[%s3901 + $0x70] sm:$0xff]
      %v3917 = vld [vmem:[%s3901 + $0x78] sm:$0xff]
      %3918 = vmatprep.subr.mxu0 0.0
      %3919 = vmatpush1.msra.mxu0 %v3902
      %3920 = vmatprep.subr.mxu0 0.0
      %3921 = vmatpush1.msra.mxu0 %v3903
      %3922 = vmatprep.subr.mxu0 0.0
      %3923 = vmatpush1.msra.mxu0 %v3904
      %3924 = vmatprep.subr.mxu0 0.0
      %3925 = vmatpush1.msra.mxu0 %v3905
      %3926 = vmatprep.subr.mxu0 0.0
      %3927 = vmatpush1.msra.mxu0 %v3906
      %3928 = vmatprep.subr.mxu0 0.0
      %3929 = vmatpush1.msra.mxu0 %v3907
      %3930 = vmatprep.subr.mxu0 0.0
      %3931 = vmatpush1.msra.mxu0 %v3908
      %3932 = vmatprep.subr.mxu0 0.0
      %3933 = vmatpush1.msra.mxu0 %v3909
      %3934 = vmatprep.subr.mxu0 0.0
      %3935 = vmatpush1.msra.mxu0 %v3910
      %3936 = vmatprep.subr.mxu0 0.0
      %3937 = vmatpush1.msra.mxu0 %v3911
      %3938 = vmatprep.subr.mxu0 0.0
      %3939 = vmatpush1.msra.mxu0 %v3912
      %3940 = vmatprep.subr.mxu0 0.0
      %3941 = vmatpush1.msra.mxu0 %v3913
      %3942 = vmatprep.subr.mxu0 0.0
      %3943 = vmatpush1.msra.mxu0 %v3914
      %3944 = vmatprep.subr.mxu0 0.0
      %3945 = vmatpush1.msra.mxu0 %v3915
      %3946 = vmatprep.subr.mxu0 0.0
      %3947 = vmatpush1.msra.mxu0 %v3916
      %3948 = vmatprep.subr.mxu0 0.0
      %3949 = vmatpush1.msra.mxu0 %v3917
      %3950 = vmatprep.subr.mxu0 0.0
      %3951 = vmatpush1.msra.mxu0 0.0
      %3952 = vmatprep.subr.mxu0 0.0
      %3953 = vmatpush1.msra.mxu0 0.0
      %3954 = vmatprep.subr.mxu0 0.0
      %3955 = vmatpush1.msra.mxu0 0.0
      %3956 = vmatprep.subr.mxu0 0.0
      %3957 = vmatpush1.msra.mxu0 0.0
      %3958 = vmatprep.subr.mxu0 0.0
      %3959 = vmatpush1.msra.mxu0 0.0
      %3960 = vmatprep.subr.mxu0 0.0
      %3961 = vmatpush1.msra.mxu0 0.0
      %3962 = vmatprep.subr.mxu0 0.0
      %3963 = vmatpush1.msra.mxu0 0.0
      %3964 = vmatprep.subr.mxu0 0.0
      %3965 = vmatpush1.msra.mxu0 0.0
      %3966 = vmatprep.subr.mxu0 0.0
      %3967 = vmatpush1.msra.mxu0 0.0
      %3968 = vmatprep.subr.mxu0 0.0
      %3969 = vmatpush1.msra.mxu0 0.0
      %3970 = vmatprep.subr.mxu0 0.0
      %3971 = vmatpush1.msra.mxu0 0.0
      %3972 = vmatprep.subr.mxu0 0.0
      %3973 = vmatpush1.msra.mxu0 0.0
      %3974 = vmatprep.subr.mxu0 0.0
      %3975 = vmatpush1.msra.mxu0 0.0
      %3976 = vmatprep.subr.mxu0 0.0
      %3977 = vmatpush1.msra.mxu0 0.0
      %3978 = vmatprep.subr.mxu0 0.0
      %3979 = vmatpush1.msra.mxu0 0.0
      %3980 = vmatprep.subr.mxu0 0.0
      %3981 = vmatpush1.msra.mxu0 0.0
      %3982 = vmatprep.mubr.f32.mxu0 0.0
      %3983 = vmatmul.mubr.f32.gmra.mrb[0].mxu0 %v3889
      %v3984 = vpop.f32.mrb[0].mxu0
      %v3985 = vadd.f32 0.0, %v3984
      %v3986 = vpop.f32.mrb[0].mxu0
      %3987 = vmatprep.mubr.f32.mxu0 0.0
      %3988 = vmatmul.mubr.f32.gmra.mrb[0].mxu0 %v3890
      %v3989 = vpop.f32.mrb[0].mxu0
      %v3990 = vadd.f32 0.0, %v3989
      %v3991 = vpop.f32.mrb[0].mxu0
      %3992 = vmatprep.mubr.f32.mxu0 0.0
      %3993 = vmatmul.mubr.f32.gmra.mrb[0].mxu0 %v3891
      %v3994 = vpop.f32.mrb[0].mxu0
      %v3995 = vadd.f32 0.0, %v3994
      %v3996 = vpop.f32.mrb[0].mxu0
      %3997 = vmatprep.mubr.f32.mxu0 0.0
      %3998 = vmatmul.mubr.f32.gmra.mrb[0].mxu0 %v3892
      %v3999 = vpop.f32.mrb[0].mxu0
      %v4000 = vadd.f32 0.0, %v3999
      %v4001 = vpop.f32.mrb[0].mxu0
      %4002 = vmatprep.mubr.f32.mxu0 0.0
      %4003 = vmatmul.mubr.f32.gmra.mrb[0].mxu0 %v3893
      %v4004 = vpop.f32.mrb[0].mxu0
      %v4005 = vadd.f32 0.0, %v4004
      %v4006 = vpop.f32.mrb[0].mxu0
      %4007 = vmatprep.mubr.f32.mxu0 0.0
      %4008 = vmatmul.mubr.f32.gmra.mrb[0].mxu0 %v3894
      %v4009 = vpop.f32.mrb[0].mxu0
      %v4010 = vadd.f32 0.0, %v4009
      %v4011 = vpop.f32.mrb[0].mxu0
      %4012 = vmatprep.mubr.f32.mxu0 0.0
      %4013 = vmatmul.mubr.f32.gmra.mrb[0].mxu0 %v3895
      %v4014 = vpop.f32.mrb[0].mxu0
      %v4015 = vadd.f32 0.0, %v4014
      %v4016 = vpop.f32.mrb[0].mxu0
      %4017 = vmatprep.mubr.f32.mxu0 0.0
      %4018 = vmatmul.mubr.f32.gmra.mrb[0].mxu0 %v3896
      %v4019 = vpop.f32.mrb[0].mxu0
      %v4020 = vadd.f32 0.0, %v4019
      %v4021 = vpop.f32.mrb[0].mxu0
      %4022 = vmatprep.mubr.f32.mxu0 0.0
      %4023 = vmatmul.mubr.f32.gmra.mrb[0].mxu0 %v3897
      %v4024 = vpop.f32.mrb[0].mxu0
      %v4025 = vadd.f32 0.0, %v4024
      %v4026 = vpop.f32.mrb[0].mxu0
      %4027 = vmatprep.mubr.f32.mxu0 0.0
      %4028 = vmatmul.mubr.f32.gmra.mrb[0].mxu0 %v3898
      %v4029 = vpop.f32.mrb[0].mxu0
      %v4030 = vadd.f32 0.0, %v4029
      %v4031 = vpop.f32.mrb[0].mxu0
      %4032 = vmatprep.mubr.f32.mxu0 0.0
      %4033 = vmatmul.mubr.f32.gmra.mrb[0].mxu0 %v3899
      %v4034 = vpop.f32.mrb[0].mxu0
      %v4035 = vadd.f32 0.0, %v4034
      %v4036 = vpop.f32.mrb[0].mxu0
      %4037 = vmatprep.mubr.f32.mxu0 0.0
      %4038 = vmatmul.mubr.f32.gmra.mrb[0].mxu0 %v3900
      %v4039 = vpop.f32.mrb[0].mxu0
      %v4040 = vadd.f32 0.0, %v4039
      %v4041 = vpop.f32.mrb[0].mxu0
      %4042 = vdwg.mxu0
      %v4043 = vadd.f32 %v3877, %v3985
      %v4044 = vadd.f32 %v3878, %v3990
      %v4045 = vadd.f32 %v3879, %v3995
      %v4046 = vadd.f32 %v3880, %v4000
      %v4047 = vadd.f32 %v3881, %v4005
      %v4048 = vadd.f32 %v3882, %v4010
      %v4049 = vadd.f32 %v3883, %v4015
      %v4050 = vadd.f32 %v3884, %v4020
      %v4051 = vadd.f32 %v3885, %v4025
      %v4052 = vadd.f32 %v3886, %v4030
      %v4053 = vadd.f32 %v3887, %v4035
      %v4054 = vadd.f32 %v3888, %v4040
      %v4055 = vld [vmem:[#allocation2 + $0x25] sm:$0xff]
      %v4056 = vld [vmem:[#allocation2 + $0x2d] sm:$0xff]
      %v4057 = vld [vmem:[#allocation2 + $0x35] sm:$0xff]
      %v4058 = vld [vmem:[#allocation2 + $0x3d] sm:$0xff]
      %v4059 = vld [vmem:[#allocation2 + $0x45] sm:$0xff]
      %v4060 = vld [vmem:[#allocation2 + $0x4d] sm:$0xff]
      %v4061 = vld [vmem:[#allocation2 + $0x55] sm:$0xff]
      %v4062 = vld [vmem:[#allocation2 + $0x5d] sm:$0xff]
      %v4063 = vld [vmem:[#allocation2 + $0x65] sm:$0xff]
      %v4064 = vld [vmem:[#allocation2 + $0x6d] sm:$0xff]
      %v4065 = vld [vmem:[#allocation2 + $0x75] sm:$0xff]
      %v4066 = vld [vmem:[#allocation2 + $0x7d] sm:$0xff]
      %s4067 = scalar_lea.vmem %s4, 2048
      %v4068 = vld [vmem:[%s4067] sm:$0xff]
      %v4069 = vld [vmem:[%s4067 + $0x8] sm:$0xff]
      %v4070 = vld [vmem:[%s4067 + $0x10] sm:$0xff]
      %v4071 = vld [vmem:[%s4067 + $0x18] sm:$0xff]
      %v4072 = vld [vmem:[%s4067 + $0x20] sm:$0xff]
      %v4073 = vld [vmem:[%s4067 + $0x28] sm:$0xff]
      %v4074 = vld [vmem:[%s4067 + $0x30] sm:$0xff]
      %v4075 = vld [vmem:[%s4067 + $0x38] sm:$0xff]
      %v4076 = vld [vmem:[%s4067 + $0x40] sm:$0xff]
      %v4077 = vld [vmem:[%s4067 + $0x48] sm:$0xff]
      %v4078 = vld [vmem:[%s4067 + $0x50] sm:$0xff]
      %v4079 = vld [vmem:[%s4067 + $0x58] sm:$0xff]
      %v4080 = vld [vmem:[%s4067 + $0x60] sm:$0xff]
      %v4081 = vld [vmem:[%s4067 + $0x68] sm:$0xff]
      %v4082 = vld [vmem:[%s4067 + $0x70] sm:$0xff]
      %v4083 = vld [vmem:[%s4067 + $0x78] sm:$0xff]
      %4084 = vmatprep.subr.mxu0 0.0
      %4085 = vmatpush1.msra.mxu0 %v4068
      %4086 = vmatprep.subr.mxu0 0.0
      %4087 = vmatpush1.msra.mxu0 %v4069
      %4088 = vmatprep.subr.mxu0 0.0
      %4089 = vmatpush1.msra.mxu0 %v4070
      %4090 = vmatprep.subr.mxu0 0.0
      %4091 = vmatpush1.msra.mxu0 %v4071
      %4092 = vmatprep.subr.mxu0 0.0
      %4093 = vmatpush1.msra.mxu0 %v4072
      %4094 = vmatprep.subr.mxu0 0.0
      %4095 = vmatpush1.msra.mxu0 %v4073
      %4096 = vmatprep.subr.mxu0 0.0
      %4097 = vmatpush1.msra.mxu0 %v4074
      %4098 = vmatprep.subr.mxu0 0.0
      %4099 = vmatpush1.msra.mxu0 %v4075
      %4100 = vmatprep.subr.mxu0 0.0
      %4101 = vmatpush1.msra.mxu0 %v4076
      %4102 = vmatprep.subr.mxu0 0.0
      %4103 = vmatpush1.msra.mxu0 %v4077
      %4104 = vmatprep.subr.mxu0 0.0
      %4105 = vmatpush1.msra.mxu0 %v4078
      %4106 = vmatprep.subr.mxu0 0.0
      %4107 = vmatpush1.msra.mxu0 %v4079
      %4108 = vmatprep.subr.mxu0 0.0
      %4109 = vmatpush1.msra.mxu0 %v4080
      %4110 = vmatprep.subr.mxu0 0.0
      %4111 = vmatpush1.msra.mxu0 %v4081
      %4112 = vmatprep.subr.mxu0 0.0
      %4113 = vmatpush1.msra.mxu0 %v4082
      %4114 = vmatprep.subr.mxu0 0.0
      %4115 = vmatpush1.msra.mxu0 %v4083
      %4116 = vmatprep.subr.mxu0 0.0
      %4117 = vmatpush1.msra.mxu0 0.0
      %4118 = vmatprep.subr.mxu0 0.0
      %4119 = vmatpush1.msra.mxu0 0.0
      %4120 = vmatprep.subr.mxu0 0.0
      %4121 = vmatpush1.msra.mxu0 0.0
      %4122 = vmatprep.subr.mxu0 0.0
      %4123 = vmatpush1.msra.mxu0 0.0
      %4124 = vmatprep.subr.mxu0 0.0
      %4125 = vmatpush1.msra.mxu0 0.0
      %4126 = vmatprep.subr.mxu0 0.0
      %4127 = vmatpush1.msra.mxu0 0.0
      %4128 = vmatprep.subr.mxu0 0.0
      %4129 = vmatpush1.msra.mxu0 0.0
      %4130 = vmatprep.subr.mxu0 0.0
      %4131 = vmatpush1.msra.mxu0 0.0
      %4132 = vmatprep.subr.mxu0 0.0
      %4133 = vmatpush1.msra.mxu0 0.0
      %4134 = vmatprep.subr.mxu0 0.0
      %4135 = vmatpush1.msra.mxu0 0.0
      %4136 = vmatprep.subr.mxu0 0.0
      %4137 = vmatpush1.msra.mxu0 0.0
      %4138 = vmatprep.subr.mxu0 0.0
      %4139 = vmatpush1.msra.mxu0 0.0
      %4140 = vmatprep.subr.mxu0 0.0
      %4141 = vmatpush1.msra.mxu0 0.0
      %4142 = vmatprep.subr.mxu0 0.0
      %4143 = vmatpush1.msra.mxu0 0.0
      %4144 = vmatprep.subr.mxu0 0.0
      %4145 = vmatpush1.msra.mxu0 0.0
      %4146 = vmatprep.subr.mxu0 0.0
      %4147 = vmatpush1.msra.mxu0 0.0
      %4148 = vmatprep.mubr.f32.mxu0 0.0
      %4149 = vmatmul.mubr.f32.gmra.mrb[0].mxu0 %v4055
      %v4150 = vpop.f32.mrb[0].mxu0
      %v4151 = vadd.f32 0.0, %v4150
      %v4152 = vpop.f32.mrb[0].mxu0
      %4153 = vmatprep.mubr.f32.mxu0 0.0
      %4154 = vmatmul.mubr.f32.gmra.mrb[0].mxu0 %v4056
      %v4155 = vpop.f32.mrb[0].mxu0
      %v4156 = vadd.f32 0.0, %v4155
      %v4157 = vpop.f32.mrb[0].mxu0
      %4158 = vmatprep.mubr.f32.mxu0 0.0
      %4159 = vmatmul.mubr.f32.gmra.mrb[0].mxu0 %v4057
      %v4160 = vpop.f32.mrb[0].mxu0
      %v4161 = vadd.f32 0.0, %v4160
      %v4162 = vpop.f32.mrb[0].mxu0
      %4163 = vmatprep.mubr.f32.mxu0 0.0
      %4164 = vmatmul.mubr.f32.gmra.mrb[0].mxu0 %v4058
      %v4165 = vpop.f32.mrb[0].mxu0
      %v4166 = vadd.f32 0.0, %v4165
      %v4167 = vpop.f32.mrb[0].mxu0
      %4168 = vmatprep.mubr.f32.mxu0 0.0
      %4169 = vmatmul.mubr.f32.gmra.mrb[0].mxu0 %v4059
      %v4170 = vpop.f32.mrb[0].mxu0
      %v4171 = vadd.f32 0.0, %v4170
      %v4172 = vpop.f32.mrb[0].mxu0
      %4173 = vmatprep.mubr.f32.mxu0 0.0
      %4174 = vmatmul.mubr.f32.gmra.mrb[0].mxu0 %v4060
      %v4175 = vpop.f32.mrb[0].mxu0
      %v4176 = vadd.f32 0.0, %v4175
      %v4177 = vpop.f32.mrb[0].mxu0
      %4178 = vmatprep.mubr.f32.mxu0 0.0
      %4179 = vmatmul.mubr.f32.gmra.mrb[0].mxu0 %v4061
      %v4180 = vpop.f32.mrb[0].mxu0
      %v4181 = vadd.f32 0.0, %v4180
      %v4182 = vpop.f32.mrb[0].mxu0
      %4183 = vmatprep.mubr.f32.mxu0 0.0
      %4184 = vmatmul.mubr.f32.gmra.mrb[0].mxu0 %v4062
      %v4185 = vpop.f32.mrb[0].mxu0
      %v4186 = vadd.f32 0.0, %v4185
      %v4187 = vpop.f32.mrb[0].mxu0
      %4188 = vmatprep.mubr.f32.mxu0 0.0
      %4189 = vmatmul.mubr.f32.gmra.mrb[0].mxu0 %v4063
      %v4190 = vpop.f32.mrb[0].mxu0
      %v4191 = vadd.f32 0.0, %v4190
      %v4192 = vpop.f32.mrb[0].mxu0
      %4193 = vmatprep.mubr.f32.mxu0 0.0
      %4194 = vmatmul.mubr.f32.gmra.mrb[0].mxu0 %v4064
      %v4195 = vpop.f32.mrb[0].mxu0
      %v4196 = vadd.f32 0.0, %v4195
      %v4197 = vpop.f32.mrb[0].mxu0
      %4198 = vmatprep.mubr.f32.mxu0 0.0
      %4199 = vmatmul.mubr.f32.gmra.mrb[0].mxu0 %v4065
      %v4200 = vpop.f32.mrb[0].mxu0
      %v4201 = vadd.f32 0.0, %v4200
      %v4202 = vpop.f32.mrb[0].mxu0
      %4203 = vmatprep.mubr.f32.mxu0 0.0
      %4204 = vmatmul.mubr.f32.gmra.mrb[0].mxu0 %v4066
      %v4205 = vpop.f32.mrb[0].mxu0
      %v4206 = vadd.f32 0.0, %v4205
      %v4207 = vpop.f32.mrb[0].mxu0
      %4208 = vdwg.mxu0
      %v4209 = vadd.f32 %v4043, %v4151
      %v4210 = vadd.f32 %v4044, %v4156
      %v4211 = vadd.f32 %v4045, %v4161
      %v4212 = vadd.f32 %v4046, %v4166
      %v4213 = vadd.f32 %v4047, %v4171
      %v4214 = vadd.f32 %v4048, %v4176
      %v4215 = vadd.f32 %v4049, %v4181
      %v4216 = vadd.f32 %v4050, %v4186
      %v4217 = vadd.f32 %v4051, %v4191
      %v4218 = vadd.f32 %v4052, %v4196
      %v4219 = vadd.f32 %v4053, %v4201
      %v4220 = vadd.f32 %v4054, %v4206
      %v4221 = vld [vmem:[#allocation2 + $0x26] sm:$0xff]
      %v4222 = vld [vmem:[#allocation2 + $0x2e] sm:$0xff]
      %v4223 = vld [vmem:[#allocation2 + $0x36] sm:$0xff]
      %v4224 = vld [vmem:[#allocation2 + $0x3e] sm:$0xff]
      %v4225 = vld [vmem:[#allocation2 + $0x46] sm:$0xff]
      %v4226 = vld [vmem:[#allocation2 + $0x4e] sm:$0xff]
      %v4227 = vld [vmem:[#allocation2 + $0x56] sm:$0xff]
      %v4228 = vld [vmem:[#allocation2 + $0x5e] sm:$0xff]
      %v4229 = vld [vmem:[#allocation2 + $0x66] sm:$0xff]
      %v4230 = vld [vmem:[#allocation2 + $0x6e] sm:$0xff]
      %v4231 = vld [vmem:[#allocation2 + $0x76] sm:$0xff]
      %v4232 = vld [vmem:[#allocation2 + $0x7e] sm:$0xff]
      %s4233 = scalar_lea.vmem %s4, 2176
      %v4234 = vld [vmem:[%s4233] sm:$0xff]
      %v4235 = vld [vmem:[%s4233 + $0x8] sm:$0xff]
      %v4236 = vld [vmem:[%s4233 + $0x10] sm:$0xff]
      %v4237 = vld [vmem:[%s4233 + $0x18] sm:$0xff]
      %v4238 = vld [vmem:[%s4233 + $0x20] sm:$0xff]
      %v4239 = vld [vmem:[%s4233 + $0x28] sm:$0xff]
      %v4240 = vld [vmem:[%s4233 + $0x30] sm:$0xff]
      %v4241 = vld [vmem:[%s4233 + $0x38] sm:$0xff]
      %v4242 = vld [vmem:[%s4233 + $0x40] sm:$0xff]
      %v4243 = vld [vmem:[%s4233 + $0x48] sm:$0xff]
      %v4244 = vld [vmem:[%s4233 + $0x50] sm:$0xff]
      %v4245 = vld [vmem:[%s4233 + $0x58] sm:$0xff]
      %v4246 = vld [vmem:[%s4233 + $0x60] sm:$0xff]
      %v4247 = vld [vmem:[%s4233 + $0x68] sm:$0xff]
      %v4248 = vld [vmem:[%s4233 + $0x70] sm:$0xff]
      %v4249 = vld [vmem:[%s4233 + $0x78] sm:$0xff]
      %4250 = vmatprep.subr.mxu0 0.0
      %4251 = vmatpush1.msra.mxu0 %v4234
      %4252 = vmatprep.subr.mxu0 0.0
      %4253 = vmatpush1.msra.mxu0 %v4235
      %4254 = vmatprep.subr.mxu0 0.0
      %4255 = vmatpush1.msra.mxu0 %v4236
      %4256 = vmatprep.subr.mxu0 0.0
      %4257 = vmatpush1.msra.mxu0 %v4237
      %4258 = vmatprep.subr.mxu0 0.0
      %4259 = vmatpush1.msra.mxu0 %v4238
      %4260 = vmatprep.subr.mxu0 0.0
      %4261 = vmatpush1.msra.mxu0 %v4239
      %4262 = vmatprep.subr.mxu0 0.0
      %4263 = vmatpush1.msra.mxu0 %v4240
      %4264 = vmatprep.subr.mxu0 0.0
      %4265 = vmatpush1.msra.mxu0 %v4241
      %4266 = vmatprep.subr.mxu0 0.0
      %4267 = vmatpush1.msra.mxu0 %v4242
      %4268 = vmatprep.subr.mxu0 0.0
      %4269 = vmatpush1.msra.mxu0 %v4243
      %4270 = vmatprep.subr.mxu0 0.0
      %4271 = vmatpush1.msra.mxu0 %v4244
      %4272 = vmatprep.subr.mxu0 0.0
      %4273 = vmatpush1.msra.mxu0 %v4245
      %4274 = vmatprep.subr.mxu0 0.0
      %4275 = vmatpush1.msra.mxu0 %v4246
      %4276 = vmatprep.subr.mxu0 0.0
      %4277 = vmatpush1.msra.mxu0 %v4247
      %4278 = vmatprep.subr.mxu0 0.0
      %4279 = vmatpush1.msra.mxu0 %v4248
      %4280 = vmatprep.subr.mxu0 0.0
      %4281 = vmatpush1.msra.mxu0 %v4249
      %4282 = vmatprep.subr.mxu0 0.0
      %4283 = vmatpush1.msra.mxu0 0.0
      %4284 = vmatprep.subr.mxu0 0.0
      %4285 = vmatpush1.msra.mxu0 0.0
      %4286 = vmatprep.subr.mxu0 0.0
      %4287 = vmatpush1.msra.mxu0 0.0
      %4288 = vmatprep.subr.mxu0 0.0
      %4289 = vmatpush1.msra.mxu0 0.0
      %4290 = vmatprep.subr.mxu0 0.0
      %4291 = vmatpush1.msra.mxu0 0.0
      %4292 = vmatprep.subr.mxu0 0.0
      %4293 = vmatpush1.msra.mxu0 0.0
      %4294 = vmatprep.subr.mxu0 0.0
      %4295 = vmatpush1.msra.mxu0 0.0
      %4296 = vmatprep.subr.mxu0 0.0
      %4297 = vmatpush1.msra.mxu0 0.0
      %4298 = vmatprep.subr.mxu0 0.0
      %4299 = vmatpush1.msra.mxu0 0.0
      %4300 = vmatprep.subr.mxu0 0.0
      %4301 = vmatpush1.msra.mxu0 0.0
      %4302 = vmatprep.subr.mxu0 0.0
      %4303 = vmatpush1.msra.mxu0 0.0
      %4304 = vmatprep.subr.mxu0 0.0
      %4305 = vmatpush1.msra.mxu0 0.0
      %4306 = vmatprep.subr.mxu0 0.0
      %4307 = vmatpush1.msra.mxu0 0.0
      %4308 = vmatprep.subr.mxu0 0.0
      %4309 = vmatpush1.msra.mxu0 0.0
      %4310 = vmatprep.subr.mxu0 0.0
      %4311 = vmatpush1.msra.mxu0 0.0
      %4312 = vmatprep.subr.mxu0 0.0
      %4313 = vmatpush1.msra.mxu0 0.0
      %4314 = vmatprep.mubr.f32.mxu0 0.0
      %4315 = vmatmul.mubr.f32.gmra.mrb[0].mxu0 %v4221
      %v4316 = vpop.f32.mrb[0].mxu0
      %v4317 = vadd.f32 0.0, %v4316
      %v4318 = vpop.f32.mrb[0].mxu0
      %4319 = vmatprep.mubr.f32.mxu0 0.0
      %4320 = vmatmul.mubr.f32.gmra.mrb[0].mxu0 %v4222
      %v4321 = vpop.f32.mrb[0].mxu0
      %v4322 = vadd.f32 0.0, %v4321
      %v4323 = vpop.f32.mrb[0].mxu0
      %4324 = vmatprep.mubr.f32.mxu0 0.0
      %4325 = vmatmul.mubr.f32.gmra.mrb[0].mxu0 %v4223
      %v4326 = vpop.f32.mrb[0].mxu0
      %v4327 = vadd.f32 0.0, %v4326
      %v4328 = vpop.f32.mrb[0].mxu0
      %4329 = vmatprep.mubr.f32.mxu0 0.0
      %4330 = vmatmul.mubr.f32.gmra.mrb[0].mxu0 %v4224
      %v4331 = vpop.f32.mrb[0].mxu0
      %v4332 = vadd.f32 0.0, %v4331
      %v4333 = vpop.f32.mrb[0].mxu0
      %4334 = vmatprep.mubr.f32.mxu0 0.0
      %4335 = vmatmul.mubr.f32.gmra.mrb[0].mxu0 %v4225
      %v4336 = vpop.f32.mrb[0].mxu0
      %v4337 = vadd.f32 0.0, %v4336
      %v4338 = vpop.f32.mrb[0].mxu0
      %4339 = vmatprep.mubr.f32.mxu0 0.0
      %4340 = vmatmul.mubr.f32.gmra.mrb[0].mxu0 %v4226
      %v4341 = vpop.f32.mrb[0].mxu0
      %v4342 = vadd.f32 0.0, %v4341
      %v4343 = vpop.f32.mrb[0].mxu0
      %4344 = vmatprep.mubr.f32.mxu0 0.0
      %4345 = vmatmul.mubr.f32.gmra.mrb[0].mxu0 %v4227
      %v4346 = vpop.f32.mrb[0].mxu0
      %v4347 = vadd.f32 0.0, %v4346
      %v4348 = vpop.f32.mrb[0].mxu0
      %4349 = vmatprep.mubr.f32.mxu0 0.0
      %4350 = vmatmul.mubr.f32.gmra.mrb[0].mxu0 %v4228
      %v4351 = vpop.f32.mrb[0].mxu0
      %v4352 = vadd.f32 0.0, %v4351
      %v4353 = vpop.f32.mrb[0].mxu0
      %4354 = vmatprep.mubr.f32.mxu0 0.0
      %4355 = vmatmul.mubr.f32.gmra.mrb[0].mxu0 %v4229
      %v4356 = vpop.f32.mrb[0].mxu0
      %v4357 = vadd.f32 0.0, %v4356
      %v4358 = vpop.f32.mrb[0].mxu0
      %4359 = vmatprep.mubr.f32.mxu0 0.0
      %4360 = vmatmul.mubr.f32.gmra.mrb[0].mxu0 %v4230
      %v4361 = vpop.f32.mrb[0].mxu0
      %v4362 = vadd.f32 0.0, %v4361
      %v4363 = vpop.f32.mrb[0].mxu0
      %4364 = vmatprep.mubr.f32.mxu0 0.0
      %4365 = vmatmul.mubr.f32.gmra.mrb[0].mxu0 %v4231
      %v4366 = vpop.f32.mrb[0].mxu0
      %v4367 = vadd.f32 0.0, %v4366
      %v4368 = vpop.f32.mrb[0].mxu0
      %4369 = vmatprep.mubr.f32.mxu0 0.0
      %4370 = vmatmul.mubr.f32.gmra.mrb[0].mxu0 %v4232
      %v4371 = vpop.f32.mrb[0].mxu0
      %v4372 = vadd.f32 0.0, %v4371
      %v4373 = vpop.f32.mrb[0].mxu0
      %4374 = vdwg.mxu0
      %v4375 = vadd.f32 %v4209, %v4317
      %v4376 = vadd.f32 %v4210, %v4322
      %v4377 = vadd.f32 %v4211, %v4327
      %v4378 = vadd.f32 %v4212, %v4332
      %v4379 = vadd.f32 %v4213, %v4337
      %v4380 = vadd.f32 %v4214, %v4342
      %v4381 = vadd.f32 %v4215, %v4347
      %v4382 = vadd.f32 %v4216, %v4352
      %v4383 = vadd.f32 %v4217, %v4357
      %v4384 = vadd.f32 %v4218, %v4362
      %v4385 = vadd.f32 %v4219, %v4367
      %v4386 = vadd.f32 %v4220, %v4372
      %v4387 = vld [vmem:[#allocation2 + $0x27] sm:$0xff]
      %v4388 = vld [vmem:[#allocation2 + $0x2f] sm:$0xff]
      %v4389 = vld [vmem:[#allocation2 + $0x37] sm:$0xff]
      %v4390 = vld [vmem:[#allocation2 + $0x3f] sm:$0xff]
      %v4391 = vld [vmem:[#allocation2 + $0x47] sm:$0xff]
      %v4392 = vld [vmem:[#allocation2 + $0x4f] sm:$0xff]
      %v4393 = vld [vmem:[#allocation2 + $0x57] sm:$0xff]
      %v4394 = vld [vmem:[#allocation2 + $0x5f] sm:$0xff]
      %v4395 = vld [vmem:[#allocation2 + $0x67] sm:$0xff]
      %v4396 = vld [vmem:[#allocation2 + $0x6f] sm:$0xff]
      %v4397 = vld [vmem:[#allocation2 + $0x77] sm:$0xff]
      %v4398 = vld [vmem:[#allocation2 + $0x7f] sm:$0xff]
      %s4399 = scalar_lea.vmem %s4, 2304
      %v4400 = vld [vmem:[%s4399] sm:$0xff]
      %v4401 = vld [vmem:[%s4399 + $0x8] sm:$0xff]
      %v4402 = vld [vmem:[%s4399 + $0x10] sm:$0xff]
      %v4403 = vld [vmem:[%s4399 + $0x18] sm:$0xff]
      %v4404 = vld [vmem:[%s4399 + $0x20] sm:$0xff]
      %v4405 = vld [vmem:[%s4399 + $0x28] sm:$0xff]
      %v4406 = vld [vmem:[%s4399 + $0x30] sm:$0xff]
      %v4407 = vld [vmem:[%s4399 + $0x38] sm:$0xff]
      %v4408 = vld [vmem:[%s4399 + $0x40] sm:$0xff]
      %v4409 = vld [vmem:[%s4399 + $0x48] sm:$0xff]
      %v4410 = vld [vmem:[%s4399 + $0x50] sm:$0xff]
      %v4411 = vld [vmem:[%s4399 + $0x58] sm:$0xff]
      %v4412 = vld [vmem:[%s4399 + $0x60] sm:$0xff]
      %v4413 = vld [vmem:[%s4399 + $0x68] sm:$0xff]
      %v4414 = vld [vmem:[%s4399 + $0x70] sm:$0xff]
      %v4415 = vld [vmem:[%s4399 + $0x78] sm:$0xff]
      %4416 = vmatprep.subr.mxu0 0.0
      %4417 = vmatpush1.msra.mxu0 %v4400
      %4418 = vmatprep.subr.mxu0 0.0
      %4419 = vmatpush1.msra.mxu0 %v4401
      %4420 = vmatprep.subr.mxu0 0.0
      %4421 = vmatpush1.msra.mxu0 %v4402
      %4422 = vmatprep.subr.mxu0 0.0
      %4423 = vmatpush1.msra.mxu0 %v4403
      %4424 = vmatprep.subr.mxu0 0.0
      %4425 = vmatpush1.msra.mxu0 %v4404
      %4426 = vmatprep.subr.mxu0 0.0
      %4427 = vmatpush1.msra.mxu0 %v4405
      %4428 = vmatprep.subr.mxu0 0.0
      %4429 = vmatpush1.msra.mxu0 %v4406
      %4430 = vmatprep.subr.mxu0 0.0
      %4431 = vmatpush1.msra.mxu0 %v4407
      %4432 = vmatprep.subr.mxu0 0.0
      %4433 = vmatpush1.msra.mxu0 %v4408
      %4434 = vmatprep.subr.mxu0 0.0
      %4435 = vmatpush1.msra.mxu0 %v4409
      %4436 = vmatprep.subr.mxu0 0.0
      %4437 = vmatpush1.msra.mxu0 %v4410
      %4438 = vmatprep.subr.mxu0 0.0
      %4439 = vmatpush1.msra.mxu0 %v4411
      %4440 = vmatprep.subr.mxu0 0.0
      %4441 = vmatpush1.msra.mxu0 %v4412
      %4442 = vmatprep.subr.mxu0 0.0
      %4443 = vmatpush1.msra.mxu0 %v4413
      %4444 = vmatprep.subr.mxu0 0.0
      %4445 = vmatpush1.msra.mxu0 %v4414
      %4446 = vmatprep.subr.mxu0 0.0
      %4447 = vmatpush1.msra.mxu0 %v4415
      %4448 = vmatprep.subr.mxu0 0.0
      %4449 = vmatpush1.msra.mxu0 0.0
      %4450 = vmatprep.subr.mxu0 0.0
      %4451 = vmatpush1.msra.mxu0 0.0
      %4452 = vmatprep.subr.mxu0 0.0
      %4453 = vmatpush1.msra.mxu0 0.0
      %4454 = vmatprep.subr.mxu0 0.0
      %4455 = vmatpush1.msra.mxu0 0.0
      %4456 = vmatprep.subr.mxu0 0.0
      %4457 = vmatpush1.msra.mxu0 0.0
      %4458 = vmatprep.subr.mxu0 0.0
      %4459 = vmatpush1.msra.mxu0 0.0
      %4460 = vmatprep.subr.mxu0 0.0
      %4461 = vmatpush1.msra.mxu0 0.0
      %4462 = vmatprep.subr.mxu0 0.0
      %4463 = vmatpush1.msra.mxu0 0.0
      %4464 = vmatprep.subr.mxu0 0.0
      %4465 = vmatpush1.msra.mxu0 0.0
      %4466 = vmatprep.subr.mxu0 0.0
      %4467 = vmatpush1.msra.mxu0 0.0
      %4468 = vmatprep.subr.mxu0 0.0
      %4469 = vmatpush1.msra.mxu0 0.0
      %4470 = vmatprep.subr.mxu0 0.0
      %4471 = vmatpush1.msra.mxu0 0.0
      %4472 = vmatprep.subr.mxu0 0.0
      %4473 = vmatpush1.msra.mxu0 0.0
      %4474 = vmatprep.subr.mxu0 0.0
      %4475 = vmatpush1.msra.mxu0 0.0
      %4476 = vmatprep.subr.mxu0 0.0
      %4477 = vmatpush1.msra.mxu0 0.0
      %4478 = vmatprep.subr.mxu0 0.0
      %4479 = vmatpush1.msra.mxu0 0.0
      %4480 = vmatprep.mubr.f32.mxu0 0.0
      %4481 = vmatmul.mubr.f32.gmra.mrb[0].mxu0 %v4387
      %v4482 = vpop.f32.mrb[0].mxu0
      %v4483 = vadd.f32 0.0, %v4482
      %v4484 = vpop.f32.mrb[0].mxu0
      %4485 = vmatprep.mubr.f32.mxu0 0.0
      %4486 = vmatmul.mubr.f32.gmra.mrb[0].mxu0 %v4388
      %v4487 = vpop.f32.mrb[0].mxu0
      %v4488 = vadd.f32 0.0, %v4487
      %v4489 = vpop.f32.mrb[0].mxu0
      %4490 = vmatprep.mubr.f32.mxu0 0.0
      %4491 = vmatmul.mubr.f32.gmra.mrb[0].mxu0 %v4389
      %v4492 = vpop.f32.mrb[0].mxu0
      %v4493 = vadd.f32 0.0, %v4492
      %v4494 = vpop.f32.mrb[0].mxu0
      %4495 = vmatprep.mubr.f32.mxu0 0.0
      %4496 = vmatmul.mubr.f32.gmra.mrb[0].mxu0 %v4390
      %v4497 = vpop.f32.mrb[0].mxu0
      %v4498 = vadd.f32 0.0, %v4497
      %v4499 = vpop.f32.mrb[0].mxu0
      %4500 = vmatprep.mubr.f32.mxu0 0.0
      %4501 = vmatmul.mubr.f32.gmra.mrb[0].mxu0 %v4391
      %v4502 = vpop.f32.mrb[0].mxu0
      %v4503 = vadd.f32 0.0, %v4502
      %v4504 = vpop.f32.mrb[0].mxu0
      %4505 = vmatprep.mubr.f32.mxu0 0.0
      %4506 = vmatmul.mubr.f32.gmra.mrb[0].mxu0 %v4392
      %v4507 = vpop.f32.mrb[0].mxu0
      %v4508 = vadd.f32 0.0, %v4507
      %v4509 = vpop.f32.mrb[0].mxu0
      %4510 = vmatprep.mubr.f32.mxu0 0.0
      %4511 = vmatmul.mubr.f32.gmra.mrb[0].mxu0 %v4393
      %v4512 = vpop.f32.mrb[0].mxu0
      %v4513 = vadd.f32 0.0, %v4512
      %v4514 = vpop.f32.mrb[0].mxu0
      %4515 = vmatprep.mubr.f32.mxu0 0.0
      %4516 = vmatmul.mubr.f32.gmra.mrb[0].mxu0 %v4394
      %v4517 = vpop.f32.mrb[0].mxu0
      %v4518 = vadd.f32 0.0, %v4517
      %v4519 = vpop.f32.mrb[0].mxu0
      %4520 = vmatprep.mubr.f32.mxu0 0.0
      %4521 = vmatmul.mubr.f32.gmra.mrb[0].mxu0 %v4395
      %v4522 = vpop.f32.mrb[0].mxu0
      %v4523 = vadd.f32 0.0, %v4522
      %v4524 = vpop.f32.mrb[0].mxu0
      %4525 = vmatprep.mubr.f32.mxu0 0.0
      %4526 = vmatmul.mubr.f32.gmra.mrb[0].mxu0 %v4396
      %v4527 = vpop.f32.mrb[0].mxu0
      %v4528 = vadd.f32 0.0, %v4527
      %v4529 = vpop.f32.mrb[0].mxu0
      %4530 = vmatprep.mubr.f32.mxu0 0.0
      %4531 = vmatmul.mubr.f32.gmra.mrb[0].mxu0 %v4397
      %v4532 = vpop.f32.mrb[0].mxu0
      %v4533 = vadd.f32 0.0, %v4532
      %v4534 = vpop.f32.mrb[0].mxu0
      %4535 = vmatprep.mubr.f32.mxu0 0.0
      %4536 = vmatmul.mubr.f32.gmra.mrb[0].mxu0 %v4398
      %v4537 = vpop.f32.mrb[0].mxu0
      %v4538 = vadd.f32 0.0, %v4537
      %v4539 = vpop.f32.mrb[0].mxu0
      %4540 = vdwg.mxu0
      %v4541 = vadd.f32 %v4375, %v4483
      %v4542 = vadd.f32 %v4376, %v4488
      %v4543 = vadd.f32 %v4377, %v4493
      %v4544 = vadd.f32 %v4378, %v4498
      %v4545 = vadd.f32 %v4379, %v4503
      %v4546 = vadd.f32 %v4380, %v4508
      %v4547 = vadd.f32 %v4381, %v4513
      %v4548 = vadd.f32 %v4382, %v4518
      %v4549 = vadd.f32 %v4383, %v4523
      %v4550 = vadd.f32 %v4384, %v4528
      %v4551 = vadd.f32 %v4385, %v4533
      %v4552 = vadd.f32 %v4386, %v4538
      %v4553 = vld [vmem:[#allocation2 + $0x28] sm:$0xff]
      %v4554 = vld [vmem:[#allocation2 + $0x30] sm:$0xff]
      %v4555 = vld [vmem:[#allocation2 + $0x38] sm:$0xff]
      %v4556 = vld [vmem:[#allocation2 + $0x40] sm:$0xff]
      %v4557 = vld [vmem:[#allocation2 + $0x48] sm:$0xff]
      %v4558 = vld [vmem:[#allocation2 + $0x50] sm:$0xff]
      %v4559 = vld [vmem:[#allocation2 + $0x58] sm:$0xff]
      %v4560 = vld [vmem:[#allocation2 + $0x60] sm:$0xff]
      %v4561 = vld [vmem:[#allocation2 + $0x68] sm:$0xff]
      %v4562 = vld [vmem:[#allocation2 + $0x70] sm:$0xff]
      %v4563 = vld [vmem:[#allocation2 + $0x78] sm:$0xff]
      %v4564 = vld [vmem:[#allocation2 + $0x80] sm:$0xff]
      %s4565 = scalar_lea.vmem %s4, 2432
      %v4566 = vld [vmem:[%s4565] sm:$0xff]
      %v4567 = vld [vmem:[%s4565 + $0x8] sm:$0xff]
      %v4568 = vld [vmem:[%s4565 + $0x10] sm:$0xff]
      %v4569 = vld [vmem:[%s4565 + $0x18] sm:$0xff]
      %v4570 = vld [vmem:[%s4565 + $0x20] sm:$0xff]
      %v4571 = vld [vmem:[%s4565 + $0x28] sm:$0xff]
      %v4572 = vld [vmem:[%s4565 + $0x30] sm:$0xff]
      %v4573 = vld [vmem:[%s4565 + $0x38] sm:$0xff]
      %v4574 = vld [vmem:[%s4565 + $0x40] sm:$0xff]
      %v4575 = vld [vmem:[%s4565 + $0x48] sm:$0xff]
      %v4576 = vld [vmem:[%s4565 + $0x50] sm:$0xff]
      %v4577 = vld [vmem:[%s4565 + $0x58] sm:$0xff]
      %v4578 = vld [vmem:[%s4565 + $0x60] sm:$0xff]
      %v4579 = vld [vmem:[%s4565 + $0x68] sm:$0xff]
      %v4580 = vld [vmem:[%s4565 + $0x70] sm:$0xff]
      %v4581 = vld [vmem:[%s4565 + $0x78] sm:$0xff]
      %4582 = vmatprep.subr.mxu0 0.0
      %4583 = vmatpush1.msra.mxu0 %v4566
      %4584 = vmatprep.subr.mxu0 0.0
      %4585 = vmatpush1.msra.mxu0 %v4567
      %4586 = vmatprep.subr.mxu0 0.0
      %4587 = vmatpush1.msra.mxu0 %v4568
      %4588 = vmatprep.subr.mxu0 0.0
      %4589 = vmatpush1.msra.mxu0 %v4569
      %4590 = vmatprep.subr.mxu0 0.0
      %4591 = vmatpush1.msra.mxu0 %v4570
      %4592 = vmatprep.subr.mxu0 0.0
      %4593 = vmatpush1.msra.mxu0 %v4571
      %4594 = vmatprep.subr.mxu0 0.0
      %4595 = vmatpush1.msra.mxu0 %v4572
      %4596 = vmatprep.subr.mxu0 0.0
      %4597 = vmatpush1.msra.mxu0 %v4573
      %4598 = vmatprep.subr.mxu0 0.0
      %4599 = vmatpush1.msra.mxu0 %v4574
      %4600 = vmatprep.subr.mxu0 0.0
      %4601 = vmatpush1.msra.mxu0 %v4575
      %4602 = vmatprep.subr.mxu0 0.0
      %4603 = vmatpush1.msra.mxu0 %v4576
      %4604 = vmatprep.subr.mxu0 0.0
      %4605 = vmatpush1.msra.mxu0 %v4577
      %4606 = vmatprep.subr.mxu0 0.0
      %4607 = vmatpush1.msra.mxu0 %v4578
      %4608 = vmatprep.subr.mxu0 0.0
      %4609 = vmatpush1.msra.mxu0 %v4579
      %4610 = vmatprep.subr.mxu0 0.0
      %4611 = vmatpush1.msra.mxu0 %v4580
      %4612 = vmatprep.subr.mxu0 0.0
      %4613 = vmatpush1.msra.mxu0 %v4581
      %4614 = vmatprep.subr.mxu0 0.0
      %4615 = vmatpush1.msra.mxu0 0.0
      %4616 = vmatprep.subr.mxu0 0.0
      %4617 = vmatpush1.msra.mxu0 0.0
      %4618 = vmatprep.subr.mxu0 0.0
      %4619 = vmatpush1.msra.mxu0 0.0
      %4620 = vmatprep.subr.mxu0 0.0
      %4621 = vmatpush1.msra.mxu0 0.0
      %4622 = vmatprep.subr.mxu0 0.0
      %4623 = vmatpush1.msra.mxu0 0.0
      %4624 = vmatprep.subr.mxu0 0.0
      %4625 = vmatpush1.msra.mxu0 0.0
      %4626 = vmatprep.subr.mxu0 0.0
      %4627 = vmatpush1.msra.mxu0 0.0
      %4628 = vmatprep.subr.mxu0 0.0
      %4629 = vmatpush1.msra.mxu0 0.0
      %4630 = vmatprep.subr.mxu0 0.0
      %4631 = vmatpush1.msra.mxu0 0.0
      %4632 = vmatprep.subr.mxu0 0.0
      %4633 = vmatpush1.msra.mxu0 0.0
      %4634 = vmatprep.subr.mxu0 0.0
      %4635 = vmatpush1.msra.mxu0 0.0
      %4636 = vmatprep.subr.mxu0 0.0
      %4637 = vmatpush1.msra.mxu0 0.0
      %4638 = vmatprep.subr.mxu0 0.0
      %4639 = vmatpush1.msra.mxu0 0.0
      %4640 = vmatprep.subr.mxu0 0.0
      %4641 = vmatpush1.msra.mxu0 0.0
      %4642 = vmatprep.subr.mxu0 0.0
      %4643 = vmatpush1.msra.mxu0 0.0
      %4644 = vmatprep.subr.mxu0 0.0
      %4645 = vmatpush1.msra.mxu0 0.0
      %4646 = vmatprep.mubr.f32.mxu0 0.0
      %4647 = vmatmul.mubr.f32.gmra.mrb[0].mxu0 %v4553
      %v4648 = vpop.f32.mrb[0].mxu0
      %v4649 = vadd.f32 0.0, %v4648
      %v4650 = vpop.f32.mrb[0].mxu0
      %4651 = vmatprep.mubr.f32.mxu0 0.0
      %4652 = vmatmul.mubr.f32.gmra.mrb[0].mxu0 %v4554
      %v4653 = vpop.f32.mrb[0].mxu0
      %v4654 = vadd.f32 0.0, %v4653
      %v4655 = vpop.f32.mrb[0].mxu0
      %4656 = vmatprep.mubr.f32.mxu0 0.0
      %4657 = vmatmul.mubr.f32.gmra.mrb[0].mxu0 %v4555
      %v4658 = vpop.f32.mrb[0].mxu0
      %v4659 = vadd.f32 0.0, %v4658
      %v4660 = vpop.f32.mrb[0].mxu0
      %4661 = vmatprep.mubr.f32.mxu0 0.0
      %4662 = vmatmul.mubr.f32.gmra.mrb[0].mxu0 %v4556
      %v4663 = vpop.f32.mrb[0].mxu0
      %v4664 = vadd.f32 0.0, %v4663
      %v4665 = vpop.f32.mrb[0].mxu0
      %4666 = vmatprep.mubr.f32.mxu0 0.0
      %4667 = vmatmul.mubr.f32.gmra.mrb[0].mxu0 %v4557
      %v4668 = vpop.f32.mrb[0].mxu0
      %v4669 = vadd.f32 0.0, %v4668
      %v4670 = vpop.f32.mrb[0].mxu0
      %4671 = vmatprep.mubr.f32.mxu0 0.0
      %4672 = vmatmul.mubr.f32.gmra.mrb[0].mxu0 %v4558
      %v4673 = vpop.f32.mrb[0].mxu0
      %v4674 = vadd.f32 0.0, %v4673
      %v4675 = vpop.f32.mrb[0].mxu0
      %4676 = vmatprep.mubr.f32.mxu0 0.0
      %4677 = vmatmul.mubr.f32.gmra.mrb[0].mxu0 %v4559
      %v4678 = vpop.f32.mrb[0].mxu0
      %v4679 = vadd.f32 0.0, %v4678
      %v4680 = vpop.f32.mrb[0].mxu0
      %4681 = vmatprep.mubr.f32.mxu0 0.0
      %4682 = vmatmul.mubr.f32.gmra.mrb[0].mxu0 %v4560
      %v4683 = vpop.f32.mrb[0].mxu0
      %v4684 = vadd.f32 0.0, %v4683
      %v4685 = vpop.f32.mrb[0].mxu0
      %4686 = vmatprep.mubr.f32.mxu0 0.0
      %4687 = vmatmul.mubr.f32.gmra.mrb[0].mxu0 %v4561
      %v4688 = vpop.f32.mrb[0].mxu0
      %v4689 = vadd.f32 0.0, %v4688
      %v4690 = vpop.f32.mrb[0].mxu0
      %4691 = vmatprep.mubr.f32.mxu0 0.0
      %4692 = vmatmul.mubr.f32.gmra.mrb[0].mxu0 %v4562
      %v4693 = vpop.f32.mrb[0].mxu0
      %v4694 = vadd.f32 0.0, %v4693
      %v4695 = vpop.f32.mrb[0].mxu0
      %4696 = vmatprep.mubr.f32.mxu0 0.0
      %4697 = vmatmul.mubr.f32.gmra.mrb[0].mxu0 %v4563
      %v4698 = vpop.f32.mrb[0].mxu0
      %v4699 = vadd.f32 0.0, %v4698
      %v4700 = vpop.f32.mrb[0].mxu0
      %4701 = vmatprep.mubr.f32.mxu0 0.0
      %4702 = vmatmul.mubr.f32.gmra.mrb[0].mxu0 %v4564
      %v4703 = vpop.f32.mrb[0].mxu0
      %v4704 = vadd.f32 0.0, %v4703
      %v4705 = vpop.f32.mrb[0].mxu0
      %4706 = vdwg.mxu0
      %v4707 = vadd.f32 %v4541, %v4649
      %v4708 = vadd.f32 %v4542, %v4654
      %v4709 = vadd.f32 %v4543, %v4659
      %v4710 = vadd.f32 %v4544, %v4664
      %v4711 = vadd.f32 %v4545, %v4669
      %v4712 = vadd.f32 %v4546, %v4674
      %v4713 = vadd.f32 %v4547, %v4679
      %v4714 = vadd.f32 %v4548, %v4684
      %v4715 = vadd.f32 %v4549, %v4689
      %v4716 = vadd.f32 %v4550, %v4694
      %v4717 = vadd.f32 %v4551, %v4699
      %v4718 = vadd.f32 %v4552, %v4704
      %v4719 = vld [vmem:[#allocation2 + $0x30] sm:$0xff]
      %v4720 = vld [vmem:[#allocation2 + $0x38] sm:$0xff]
      %v4721 = vld [vmem:[#allocation2 + $0x40] sm:$0xff]
      %v4722 = vld [vmem:[#allocation2 + $0x48] sm:$0xff]
      %v4723 = vld [vmem:[#allocation2 + $0x50] sm:$0xff]
      %v4724 = vld [vmem:[#allocation2 + $0x58] sm:$0xff]
      %v4725 = vld [vmem:[#allocation2 + $0x60] sm:$0xff]
      %v4726 = vld [vmem:[#allocation2 + $0x68] sm:$0xff]
      %v4727 = vld [vmem:[#allocation2 + $0x70] sm:$0xff]
      %v4728 = vld [vmem:[#allocation2 + $0x78] sm:$0xff]
      %v4729 = vld [vmem:[#allocation2 + $0x80] sm:$0xff]
      %v4730 = vld [vmem:[#allocation2 + $0x88] sm:$0xff]
      %s4731 = scalar_lea.vmem %s4, 2560
      %v4732 = vld [vmem:[%s4731] sm:$0xff]
      %v4733 = vld [vmem:[%s4731 + $0x8] sm:$0xff]
      %v4734 = vld [vmem:[%s4731 + $0x10] sm:$0xff]
      %v4735 = vld [vmem:[%s4731 + $0x18] sm:$0xff]
      %v4736 = vld [vmem:[%s4731 + $0x20] sm:$0xff]
      %v4737 = vld [vmem:[%s4731 + $0x28] sm:$0xff]
      %v4738 = vld [vmem:[%s4731 + $0x30] sm:$0xff]
      %v4739 = vld [vmem:[%s4731 + $0x38] sm:$0xff]
      %v4740 = vld [vmem:[%s4731 + $0x40] sm:$0xff]
      %v4741 = vld [vmem:[%s4731 + $0x48] sm:$0xff]
      %v4742 = vld [vmem:[%s4731 + $0x50] sm:$0xff]
      %v4743 = vld [vmem:[%s4731 + $0x58] sm:$0xff]
      %v4744 = vld [vmem:[%s4731 + $0x60] sm:$0xff]
      %v4745 = vld [vmem:[%s4731 + $0x68] sm:$0xff]
      %v4746 = vld [vmem:[%s4731 + $0x70] sm:$0xff]
      %v4747 = vld [vmem:[%s4731 + $0x78] sm:$0xff]
      %4748 = vmatprep.subr.mxu0 0.0
      %4749 = vmatpush1.msra.mxu0 %v4732
      %4750 = vmatprep.subr.mxu0 0.0
      %4751 = vmatpush1.msra.mxu0 %v4733
      %4752 = vmatprep.subr.mxu0 0.0
      %4753 = vmatpush1.msra.mxu0 %v4734
      %4754 = vmatprep.subr.mxu0 0.0
      %4755 = vmatpush1.msra.mxu0 %v4735
      %4756 = vmatprep.subr.mxu0 0.0
      %4757 = vmatpush1.msra.mxu0 %v4736
      %4758 = vmatprep.subr.mxu0 0.0
      %4759 = vmatpush1.msra.mxu0 %v4737
      %4760 = vmatprep.subr.mxu0 0.0
      %4761 = vmatpush1.msra.mxu0 %v4738
      %4762 = vmatprep.subr.mxu0 0.0
      %4763 = vmatpush1.msra.mxu0 %v4739
      %4764 = vmatprep.subr.mxu0 0.0
      %4765 = vmatpush1.msra.mxu0 %v4740
      %4766 = vmatprep.subr.mxu0 0.0
      %4767 = vmatpush1.msra.mxu0 %v4741
      %4768 = vmatprep.subr.mxu0 0.0
      %4769 = vmatpush1.msra.mxu0 %v4742
      %4770 = vmatprep.subr.mxu0 0.0
      %4771 = vmatpush1.msra.mxu0 %v4743
      %4772 = vmatprep.subr.mxu0 0.0
      %4773 = vmatpush1.msra.mxu0 %v4744
      %4774 = vmatprep.subr.mxu0 0.0
      %4775 = vmatpush1.msra.mxu0 %v4745
      %4776 = vmatprep.subr.mxu0 0.0
      %4777 = vmatpush1.msra.mxu0 %v4746
      %4778 = vmatprep.subr.mxu0 0.0
      %4779 = vmatpush1.msra.mxu0 %v4747
      %4780 = vmatprep.subr.mxu0 0.0
      %4781 = vmatpush1.msra.mxu0 0.0
      %4782 = vmatprep.subr.mxu0 0.0
      %4783 = vmatpush1.msra.mxu0 0.0
      %4784 = vmatprep.subr.mxu0 0.0
      %4785 = vmatpush1.msra.mxu0 0.0
      %4786 = vmatprep.subr.mxu0 0.0
      %4787 = vmatpush1.msra.mxu0 0.0
      %4788 = vmatprep.subr.mxu0 0.0
      %4789 = vmatpush1.msra.mxu0 0.0
      %4790 = vmatprep.subr.mxu0 0.0
      %4791 = vmatpush1.msra.mxu0 0.0
      %4792 = vmatprep.subr.mxu0 0.0
      %4793 = vmatpush1.msra.mxu0 0.0
      %4794 = vmatprep.subr.mxu0 0.0
      %4795 = vmatpush1.msra.mxu0 0.0
      %4796 = vmatprep.subr.mxu0 0.0
      %4797 = vmatpush1.msra.mxu0 0.0
      %4798 = vmatprep.subr.mxu0 0.0
      %4799 = vmatpush1.msra.mxu0 0.0
      %4800 = vmatprep.subr.mxu0 0.0
      %4801 = vmatpush1.msra.mxu0 0.0
      %4802 = vmatprep.subr.mxu0 0.0
      %4803 = vmatpush1.msra.mxu0 0.0
      %4804 = vmatprep.subr.mxu0 0.0
      %4805 = vmatpush1.msra.mxu0 0.0
      %4806 = vmatprep.subr.mxu0 0.0
      %4807 = vmatpush1.msra.mxu0 0.0
      %4808 = vmatprep.subr.mxu0 0.0
      %4809 = vmatpush1.msra.mxu0 0.0
      %4810 = vmatprep.subr.mxu0 0.0
      %4811 = vmatpush1.msra.mxu0 0.0
      %4812 = vmatprep.mubr.f32.mxu0 0.0
      %4813 = vmatmul.mubr.f32.gmra.mrb[0].mxu0 %v4719
      %v4814 = vpop.f32.mrb[0].mxu0
      %v4815 = vadd.f32 0.0, %v4814
      %v4816 = vpop.f32.mrb[0].mxu0
      %4817 = vmatprep.mubr.f32.mxu0 0.0
      %4818 = vmatmul.mubr.f32.gmra.mrb[0].mxu0 %v4720
      %v4819 = vpop.f32.mrb[0].mxu0
      %v4820 = vadd.f32 0.0, %v4819
      %v4821 = vpop.f32.mrb[0].mxu0
      %4822 = vmatprep.mubr.f32.mxu0 0.0
      %4823 = vmatmul.mubr.f32.gmra.mrb[0].mxu0 %v4721
      %v4824 = vpop.f32.mrb[0].mxu0
      %v4825 = vadd.f32 0.0, %v4824
      %v4826 = vpop.f32.mrb[0].mxu0
      %4827 = vmatprep.mubr.f32.mxu0 0.0
      %4828 = vmatmul.mubr.f32.gmra.mrb[0].mxu0 %v4722
      %v4829 = vpop.f32.mrb[0].mxu0
      %v4830 = vadd.f32 0.0, %v4829
      %v4831 = vpop.f32.mrb[0].mxu0
      %4832 = vmatprep.mubr.f32.mxu0 0.0
      %4833 = vmatmul.mubr.f32.gmra.mrb[0].mxu0 %v4723
      %v4834 = vpop.f32.mrb[0].mxu0
      %v4835 = vadd.f32 0.0, %v4834
      %v4836 = vpop.f32.mrb[0].mxu0
      %4837 = vmatprep.mubr.f32.mxu0 0.0
      %4838 = vmatmul.mubr.f32.gmra.mrb[0].mxu0 %v4724
      %v4839 = vpop.f32.mrb[0].mxu0
      %v4840 = vadd.f32 0.0, %v4839
      %v4841 = vpop.f32.mrb[0].mxu0
      %4842 = vmatprep.mubr.f32.mxu0 0.0
      %4843 = vmatmul.mubr.f32.gmra.mrb[0].mxu0 %v4725
      %v4844 = vpop.f32.mrb[0].mxu0
      %v4845 = vadd.f32 0.0, %v4844
      %v4846 = vpop.f32.mrb[0].mxu0
      %4847 = vmatprep.mubr.f32.mxu0 0.0
      %4848 = vmatmul.mubr.f32.gmra.mrb[0].mxu0 %v4726
      %v4849 = vpop.f32.mrb[0].mxu0
      %v4850 = vadd.f32 0.0, %v4849
      %v4851 = vpop.f32.mrb[0].mxu0
      %4852 = vmatprep.mubr.f32.mxu0 0.0
      %4853 = vmatmul.mubr.f32.gmra.mrb[0].mxu0 %v4727
      %v4854 = vpop.f32.mrb[0].mxu0
      %v4855 = vadd.f32 0.0, %v4854
      %v4856 = vpop.f32.mrb[0].mxu0
      %4857 = vmatprep.mubr.f32.mxu0 0.0
      %4858 = vmatmul.mubr.f32.gmra.mrb[0].mxu0 %v4728
      %v4859 = vpop.f32.mrb[0].mxu0
      %v4860 = vadd.f32 0.0, %v4859
      %v4861 = vpop.f32.mrb[0].mxu0
      %4862 = vmatprep.mubr.f32.mxu0 0.0
      %4863 = vmatmul.mubr.f32.gmra.mrb[0].mxu0 %v4729
      %v4864 = vpop.f32.mrb[0].mxu0
      %v4865 = vadd.f32 0.0, %v4864
      %v4866 = vpop.f32.mrb[0].mxu0
      %4867 = vmatprep.mubr.f32.mxu0 0.0
      %4868 = vmatmul.mubr.f32.gmra.mrb[0].mxu0 %v4730
      %v4869 = vpop.f32.mrb[0].mxu0
      %v4870 = vadd.f32 0.0, %v4869
      %v4871 = vpop.f32.mrb[0].mxu0
      %4872 = vdwg.mxu0
      %v4873 = vadd.f32 %v4707, %v4815
      %v4874 = vadd.f32 %v4708, %v4820
      %v4875 = vadd.f32 %v4709, %v4825
      %v4876 = vadd.f32 %v4710, %v4830
      %v4877 = vadd.f32 %v4711, %v4835
      %v4878 = vadd.f32 %v4712, %v4840
      %v4879 = vadd.f32 %v4713, %v4845
      %v4880 = vadd.f32 %v4714, %v4850
      %v4881 = vadd.f32 %v4715, %v4855
      %v4882 = vadd.f32 %v4716, %v4860
      %v4883 = vadd.f32 %v4717, %v4865
      %v4884 = vadd.f32 %v4718, %v4870
      %v4885 = vld [vmem:[#allocation2 + $0x31] sm:$0xff]
      %v4886 = vld [vmem:[#allocation2 + $0x39] sm:$0xff]
      %v4887 = vld [vmem:[#allocation2 + $0x41] sm:$0xff]
      %v4888 = vld [vmem:[#allocation2 + $0x49] sm:$0xff]
      %v4889 = vld [vmem:[#allocation2 + $0x51] sm:$0xff]
      %v4890 = vld [vmem:[#allocation2 + $0x59] sm:$0xff]
      %v4891 = vld [vmem:[#allocation2 + $0x61] sm:$0xff]
      %v4892 = vld [vmem:[#allocation2 + $0x69] sm:$0xff]
      %v4893 = vld [vmem:[#allocation2 + $0x71] sm:$0xff]
      %v4894 = vld [vmem:[#allocation2 + $0x79] sm:$0xff]
      %v4895 = vld [vmem:[#allocation2 + $0x81] sm:$0xff]
      %v4896 = vld [vmem:[#allocation2 + $0x89] sm:$0xff]
      %s4897 = scalar_lea.vmem %s4, 2688
      %v4898 = vld [vmem:[%s4897] sm:$0xff]
      %v4899 = vld [vmem:[%s4897 + $0x8] sm:$0xff]
      %v4900 = vld [vmem:[%s4897 + $0x10] sm:$0xff]
      %v4901 = vld [vmem:[%s4897 + $0x18] sm:$0xff]
      %v4902 = vld [vmem:[%s4897 + $0x20] sm:$0xff]
      %v4903 = vld [vmem:[%s4897 + $0x28] sm:$0xff]
      %v4904 = vld [vmem:[%s4897 + $0x30] sm:$0xff]
      %v4905 = vld [vmem:[%s4897 + $0x38] sm:$0xff]
      %v4906 = vld [vmem:[%s4897 + $0x40] sm:$0xff]
      %v4907 = vld [vmem:[%s4897 + $0x48] sm:$0xff]
      %v4908 = vld [vmem:[%s4897 + $0x50] sm:$0xff]
      %v4909 = vld [vmem:[%s4897 + $0x58] sm:$0xff]
      %v4910 = vld [vmem:[%s4897 + $0x60] sm:$0xff]
      %v4911 = vld [vmem:[%s4897 + $0x68] sm:$0xff]
      %v4912 = vld [vmem:[%s4897 + $0x70] sm:$0xff]
      %v4913 = vld [vmem:[%s4897 + $0x78] sm:$0xff]
      %4914 = vmatprep.subr.mxu0 0.0
      %4915 = vmatpush1.msra.mxu0 %v4898
      %4916 = vmatprep.subr.mxu0 0.0
      %4917 = vmatpush1.msra.mxu0 %v4899
      %4918 = vmatprep.subr.mxu0 0.0
      %4919 = vmatpush1.msra.mxu0 %v4900
      %4920 = vmatprep.subr.mxu0 0.0
      %4921 = vmatpush1.msra.mxu0 %v4901
      %4922 = vmatprep.subr.mxu0 0.0
      %4923 = vmatpush1.msra.mxu0 %v4902
      %4924 = vmatprep.subr.mxu0 0.0
      %4925 = vmatpush1.msra.mxu0 %v4903
      %4926 = vmatprep.subr.mxu0 0.0
      %4927 = vmatpush1.msra.mxu0 %v4904
      %4928 = vmatprep.subr.mxu0 0.0
      %4929 = vmatpush1.msra.mxu0 %v4905
      %4930 = vmatprep.subr.mxu0 0.0
      %4931 = vmatpush1.msra.mxu0 %v4906
      %4932 = vmatprep.subr.mxu0 0.0
      %4933 = vmatpush1.msra.mxu0 %v4907
      %4934 = vmatprep.subr.mxu0 0.0
      %4935 = vmatpush1.msra.mxu0 %v4908
      %4936 = vmatprep.subr.mxu0 0.0
      %4937 = vmatpush1.msra.mxu0 %v4909
      %4938 = vmatprep.subr.mxu0 0.0
      %4939 = vmatpush1.msra.mxu0 %v4910
      %4940 = vmatprep.subr.mxu0 0.0
      %4941 = vmatpush1.msra.mxu0 %v4911
      %4942 = vmatprep.subr.mxu0 0.0
      %4943 = vmatpush1.msra.mxu0 %v4912
      %4944 = vmatprep.subr.mxu0 0.0
      %4945 = vmatpush1.msra.mxu0 %v4913
      %4946 = vmatprep.subr.mxu0 0.0
      %4947 = vmatpush1.msra.mxu0 0.0
      %4948 = vmatprep.subr.mxu0 0.0
      %4949 = vmatpush1.msra.mxu0 0.0
      %4950 = vmatprep.subr.mxu0 0.0
      %4951 = vmatpush1.msra.mxu0 0.0
      %4952 = vmatprep.subr.mxu0 0.0
      %4953 = vmatpush1.msra.mxu0 0.0
      %4954 = vmatprep.subr.mxu0 0.0
      %4955 = vmatpush1.msra.mxu0 0.0
      %4956 = vmatprep.subr.mxu0 0.0
      %4957 = vmatpush1.msra.mxu0 0.0
      %4958 = vmatprep.subr.mxu0 0.0
      %4959 = vmatpush1.msra.mxu0 0.0
      %4960 = vmatprep.subr.mxu0 0.0
      %4961 = vmatpush1.msra.mxu0 0.0
      %4962 = vmatprep.subr.mxu0 0.0
      %4963 = vmatpush1.msra.mxu0 0.0
      %4964 = vmatprep.subr.mxu0 0.0
      %4965 = vmatpush1.msra.mxu0 0.0
      %4966 = vmatprep.subr.mxu0 0.0
      %4967 = vmatpush1.msra.mxu0 0.0
      %4968 = vmatprep.subr.mxu0 0.0
      %4969 = vmatpush1.msra.mxu0 0.0
      %4970 = vmatprep.subr.mxu0 0.0
      %4971 = vmatpush1.msra.mxu0 0.0
      %4972 = vmatprep.subr.mxu0 0.0
      %4973 = vmatpush1.msra.mxu0 0.0
      %4974 = vmatprep.subr.mxu0 0.0
      %4975 = vmatpush1.msra.mxu0 0.0
      %4976 = vmatprep.subr.mxu0 0.0
      %4977 = vmatpush1.msra.mxu0 0.0
      %4978 = vmatprep.mubr.f32.mxu0 0.0
      %4979 = vmatmul.mubr.f32.gmra.mrb[0].mxu0 %v4885
      %v4980 = vpop.f32.mrb[0].mxu0
      %v4981 = vadd.f32 0.0, %v4980
      %v4982 = vpop.f32.mrb[0].mxu0
      %4983 = vmatprep.mubr.f32.mxu0 0.0
      %4984 = vmatmul.mubr.f32.gmra.mrb[0].mxu0 %v4886
      %v4985 = vpop.f32.mrb[0].mxu0
      %v4986 = vadd.f32 0.0, %v4985
      %v4987 = vpop.f32.mrb[0].mxu0
      %4988 = vmatprep.mubr.f32.mxu0 0.0
      %4989 = vmatmul.mubr.f32.gmra.mrb[0].mxu0 %v4887
      %v4990 = vpop.f32.mrb[0].mxu0
      %v4991 = vadd.f32 0.0, %v4990
      %v4992 = vpop.f32.mrb[0].mxu0
      %4993 = vmatprep.mubr.f32.mxu0 0.0
      %4994 = vmatmul.mubr.f32.gmra.mrb[0].mxu0 %v4888
      %v4995 = vpop.f32.mrb[0].mxu0
      %v4996 = vadd.f32 0.0, %v4995
      %v4997 = vpop.f32.mrb[0].mxu0
      %4998 = vmatprep.mubr.f32.mxu0 0.0
      %4999 = vmatmul.mubr.f32.gmra.mrb[0].mxu0 %v4889
      %v5000 = vpop.f32.mrb[0].mxu0
      %v5001 = vadd.f32 0.0, %v5000
      %v5002 = vpop.f32.mrb[0].mxu0
      %5003 = vmatprep.mubr.f32.mxu0 0.0
      %5004 = vmatmul.mubr.f32.gmra.mrb[0].mxu0 %v4890
      %v5005 = vpop.f32.mrb[0].mxu0
      %v5006 = vadd.f32 0.0, %v5005
      %v5007 = vpop.f32.mrb[0].mxu0
      %5008 = vmatprep.mubr.f32.mxu0 0.0
      %5009 = vmatmul.mubr.f32.gmra.mrb[0].mxu0 %v4891
      %v5010 = vpop.f32.mrb[0].mxu0
      %v5011 = vadd.f32 0.0, %v5010
      %v5012 = vpop.f32.mrb[0].mxu0
      %5013 = vmatprep.mubr.f32.mxu0 0.0
      %5014 = vmatmul.mubr.f32.gmra.mrb[0].mxu0 %v4892
      %v5015 = vpop.f32.mrb[0].mxu0
      %v5016 = vadd.f32 0.0, %v5015
      %v5017 = vpop.f32.mrb[0].mxu0
      %5018 = vmatprep.mubr.f32.mxu0 0.0
      %5019 = vmatmul.mubr.f32.gmra.mrb[0].mxu0 %v4893
      %v5020 = vpop.f32.mrb[0].mxu0
      %v5021 = vadd.f32 0.0, %v5020
      %v5022 = vpop.f32.mrb[0].mxu0
      %5023 = vmatprep.mubr.f32.mxu0 0.0
      %5024 = vmatmul.mubr.f32.gmra.mrb[0].mxu0 %v4894
      %v5025 = vpop.f32.mrb[0].mxu0
      %v5026 = vadd.f32 0.0, %v5025
      %v5027 = vpop.f32.mrb[0].mxu0
      %5028 = vmatprep.mubr.f32.mxu0 0.0
      %5029 = vmatmul.mubr.f32.gmra.mrb[0].mxu0 %v4895
      %v5030 = vpop.f32.mrb[0].mxu0
      %v5031 = vadd.f32 0.0, %v5030
      %v5032 = vpop.f32.mrb[0].mxu0
      %5033 = vmatprep.mubr.f32.mxu0 0.0
      %5034 = vmatmul.mubr.f32.gmra.mrb[0].mxu0 %v4896
      %v5035 = vpop.f32.mrb[0].mxu0
      %v5036 = vadd.f32 0.0, %v5035
      %v5037 = vpop.f32.mrb[0].mxu0
      %5038 = vdwg.mxu0
      %v5039 = vadd.f32 %v4873, %v4981
      %v5040 = vadd.f32 %v4874, %v4986
      %v5041 = vadd.f32 %v4875, %v4991
      %v5042 = vadd.f32 %v4876, %v4996
      %v5043 = vadd.f32 %v4877, %v5001
      %v5044 = vadd.f32 %v4878, %v5006
      %v5045 = vadd.f32 %v4879, %v5011
      %v5046 = vadd.f32 %v4880, %v5016
      %v5047 = vadd.f32 %v4881, %v5021
      %v5048 = vadd.f32 %v4882, %v5026
      %v5049 = vadd.f32 %v4883, %v5031
      %v5050 = vadd.f32 %v4884, %v5036
      %v5051 = vld [vmem:[#allocation2 + $0x32] sm:$0xff]
      %v5052 = vld [vmem:[#allocation2 + $0x3a] sm:$0xff]
      %v5053 = vld [vmem:[#allocation2 + $0x42] sm:$0xff]
      %v5054 = vld [vmem:[#allocation2 + $0x4a] sm:$0xff]
      %v5055 = vld [vmem:[#allocation2 + $0x52] sm:$0xff]
      %v5056 = vld [vmem:[#allocation2 + $0x5a] sm:$0xff]
      %v5057 = vld [vmem:[#allocation2 + $0x62] sm:$0xff]
      %v5058 = vld [vmem:[#allocation2 + $0x6a] sm:$0xff]
      %v5059 = vld [vmem:[#allocation2 + $0x72] sm:$0xff]
      %v5060 = vld [vmem:[#allocation2 + $0x7a] sm:$0xff]
      %v5061 = vld [vmem:[#allocation2 + $0x82] sm:$0xff]
      %v5062 = vld [vmem:[#allocation2 + $0x8a] sm:$0xff]
      %s5063 = scalar_lea.vmem %s4, 2816
      %v5064 = vld [vmem:[%s5063] sm:$0xff]
      %v5065 = vld [vmem:[%s5063 + $0x8] sm:$0xff]
      %v5066 = vld [vmem:[%s5063 + $0x10] sm:$0xff]
      %v5067 = vld [vmem:[%s5063 + $0x18] sm:$0xff]
      %v5068 = vld [vmem:[%s5063 + $0x20] sm:$0xff]
      %v5069 = vld [vmem:[%s5063 + $0x28] sm:$0xff]
      %v5070 = vld [vmem:[%s5063 + $0x30] sm:$0xff]
      %v5071 = vld [vmem:[%s5063 + $0x38] sm:$0xff]
      %v5072 = vld [vmem:[%s5063 + $0x40] sm:$0xff]
      %v5073 = vld [vmem:[%s5063 + $0x48] sm:$0xff]
      %v5074 = vld [vmem:[%s5063 + $0x50] sm:$0xff]
      %v5075 = vld [vmem:[%s5063 + $0x58] sm:$0xff]
      %v5076 = vld [vmem:[%s5063 + $0x60] sm:$0xff]
      %v5077 = vld [vmem:[%s5063 + $0x68] sm:$0xff]
      %v5078 = vld [vmem:[%s5063 + $0x70] sm:$0xff]
      %v5079 = vld [vmem:[%s5063 + $0x78] sm:$0xff]
      %5080 = vmatprep.subr.mxu0 0.0
      %5081 = vmatpush1.msra.mxu0 %v5064
      %5082 = vmatprep.subr.mxu0 0.0
      %5083 = vmatpush1.msra.mxu0 %v5065
      %5084 = vmatprep.subr.mxu0 0.0
      %5085 = vmatpush1.msra.mxu0 %v5066
      %5086 = vmatprep.subr.mxu0 0.0
      %5087 = vmatpush1.msra.mxu0 %v5067
      %5088 = vmatprep.subr.mxu0 0.0
      %5089 = vmatpush1.msra.mxu0 %v5068
      %5090 = vmatprep.subr.mxu0 0.0
      %5091 = vmatpush1.msra.mxu0 %v5069
      %5092 = vmatprep.subr.mxu0 0.0
      %5093 = vmatpush1.msra.mxu0 %v5070
      %5094 = vmatprep.subr.mxu0 0.0
      %5095 = vmatpush1.msra.mxu0 %v5071
      %5096 = vmatprep.subr.mxu0 0.0
      %5097 = vmatpush1.msra.mxu0 %v5072
      %5098 = vmatprep.subr.mxu0 0.0
      %5099 = vmatpush1.msra.mxu0 %v5073
      %5100 = vmatprep.subr.mxu0 0.0
      %5101 = vmatpush1.msra.mxu0 %v5074
      %5102 = vmatprep.subr.mxu0 0.0
      %5103 = vmatpush1.msra.mxu0 %v5075
      %5104 = vmatprep.subr.mxu0 0.0
      %5105 = vmatpush1.msra.mxu0 %v5076
      %5106 = vmatprep.subr.mxu0 0.0
      %5107 = vmatpush1.msra.mxu0 %v5077
      %5108 = vmatprep.subr.mxu0 0.0
      %5109 = vmatpush1.msra.mxu0 %v5078
      %5110 = vmatprep.subr.mxu0 0.0
      %5111 = vmatpush1.msra.mxu0 %v5079
      %5112 = vmatprep.subr.mxu0 0.0
      %5113 = vmatpush1.msra.mxu0 0.0
      %5114 = vmatprep.subr.mxu0 0.0
      %5115 = vmatpush1.msra.mxu0 0.0
      %5116 = vmatprep.subr.mxu0 0.0
      %5117 = vmatpush1.msra.mxu0 0.0
      %5118 = vmatprep.subr.mxu0 0.0
      %5119 = vmatpush1.msra.mxu0 0.0
      %5120 = vmatprep.subr.mxu0 0.0
      %5121 = vmatpush1.msra.mxu0 0.0
      %5122 = vmatprep.subr.mxu0 0.0
      %5123 = vmatpush1.msra.mxu0 0.0
      %5124 = vmatprep.subr.mxu0 0.0
      %5125 = vmatpush1.msra.mxu0 0.0
      %5126 = vmatprep.subr.mxu0 0.0
      %5127 = vmatpush1.msra.mxu0 0.0
      %5128 = vmatprep.subr.mxu0 0.0
      %5129 = vmatpush1.msra.mxu0 0.0
      %5130 = vmatprep.subr.mxu0 0.0
      %5131 = vmatpush1.msra.mxu0 0.0
      %5132 = vmatprep.subr.mxu0 0.0
      %5133 = vmatpush1.msra.mxu0 0.0
      %5134 = vmatprep.subr.mxu0 0.0
      %5135 = vmatpush1.msra.mxu0 0.0
      %5136 = vmatprep.subr.mxu0 0.0
      %5137 = vmatpush1.msra.mxu0 0.0
      %5138 = vmatprep.subr.mxu0 0.0
      %5139 = vmatpush1.msra.mxu0 0.0
      %5140 = vmatprep.subr.mxu0 0.0
      %5141 = vmatpush1.msra.mxu0 0.0
      %5142 = vmatprep.subr.mxu0 0.0
      %5143 = vmatpush1.msra.mxu0 0.0
      %5144 = vmatprep.mubr.f32.mxu0 0.0
      %5145 = vmatmul.mubr.f32.gmra.mrb[0].mxu0 %v5051
      %v5146 = vpop.f32.mrb[0].mxu0
      %v5147 = vadd.f32 0.0, %v5146
      %v5148 = vpop.f32.mrb[0].mxu0
      %5149 = vmatprep.mubr.f32.mxu0 0.0
      %5150 = vmatmul.mubr.f32.gmra.mrb[0].mxu0 %v5052
      %v5151 = vpop.f32.mrb[0].mxu0
      %v5152 = vadd.f32 0.0, %v5151
      %v5153 = vpop.f32.mrb[0].mxu0
      %5154 = vmatprep.mubr.f32.mxu0 0.0
      %5155 = vmatmul.mubr.f32.gmra.mrb[0].mxu0 %v5053
      %v5156 = vpop.f32.mrb[0].mxu0
      %v5157 = vadd.f32 0.0, %v5156
      %v5158 = vpop.f32.mrb[0].mxu0
      %5159 = vmatprep.mubr.f32.mxu0 0.0
      %5160 = vmatmul.mubr.f32.gmra.mrb[0].mxu0 %v5054
      %v5161 = vpop.f32.mrb[0].mxu0
      %v5162 = vadd.f32 0.0, %v5161
      %v5163 = vpop.f32.mrb[0].mxu0
      %5164 = vmatprep.mubr.f32.mxu0 0.0
      %5165 = vmatmul.mubr.f32.gmra.mrb[0].mxu0 %v5055
      %v5166 = vpop.f32.mrb[0].mxu0
      %v5167 = vadd.f32 0.0, %v5166
      %v5168 = vpop.f32.mrb[0].mxu0
      %5169 = vmatprep.mubr.f32.mxu0 0.0
      %5170 = vmatmul.mubr.f32.gmra.mrb[0].mxu0 %v5056
      %v5171 = vpop.f32.mrb[0].mxu0
      %v5172 = vadd.f32 0.0, %v5171
      %v5173 = vpop.f32.mrb[0].mxu0
      %5174 = vmatprep.mubr.f32.mxu0 0.0
      %5175 = vmatmul.mubr.f32.gmra.mrb[0].mxu0 %v5057
      %v5176 = vpop.f32.mrb[0].mxu0
      %v5177 = vadd.f32 0.0, %v5176
      %v5178 = vpop.f32.mrb[0].mxu0
      %5179 = vmatprep.mubr.f32.mxu0 0.0
      %5180 = vmatmul.mubr.f32.gmra.mrb[0].mxu0 %v5058
      %v5181 = vpop.f32.mrb[0].mxu0
      %v5182 = vadd.f32 0.0, %v5181
      %v5183 = vpop.f32.mrb[0].mxu0
      %5184 = vmatprep.mubr.f32.mxu0 0.0
      %5185 = vmatmul.mubr.f32.gmra.mrb[0].mxu0 %v5059
      %v5186 = vpop.f32.mrb[0].mxu0
      %v5187 = vadd.f32 0.0, %v5186
      %v5188 = vpop.f32.mrb[0].mxu0
      %5189 = vmatprep.mubr.f32.mxu0 0.0
      %5190 = vmatmul.mubr.f32.gmra.mrb[0].mxu0 %v5060
      %v5191 = vpop.f32.mrb[0].mxu0
      %v5192 = vadd.f32 0.0, %v5191
      %v5193 = vpop.f32.mrb[0].mxu0
      %5194 = vmatprep.mubr.f32.mxu0 0.0
      %5195 = vmatmul.mubr.f32.gmra.mrb[0].mxu0 %v5061
      %v5196 = vpop.f32.mrb[0].mxu0
      %v5197 = vadd.f32 0.0, %v5196
      %v5198 = vpop.f32.mrb[0].mxu0
      %5199 = vmatprep.mubr.f32.mxu0 0.0
      %5200 = vmatmul.mubr.f32.gmra.mrb[0].mxu0 %v5062
      %v5201 = vpop.f32.mrb[0].mxu0
      %v5202 = vadd.f32 0.0, %v5201
      %v5203 = vpop.f32.mrb[0].mxu0
      %5204 = vdwg.mxu0
      %v5205 = vadd.f32 %v5039, %v5147
      %v5206 = vadd.f32 %v5040, %v5152
      %v5207 = vadd.f32 %v5041, %v5157
      %v5208 = vadd.f32 %v5042, %v5162
      %v5209 = vadd.f32 %v5043, %v5167
      %v5210 = vadd.f32 %v5044, %v5172
      %v5211 = vadd.f32 %v5045, %v5177
      %v5212 = vadd.f32 %v5046, %v5182
      %v5213 = vadd.f32 %v5047, %v5187
      %v5214 = vadd.f32 %v5048, %v5192
      %v5215 = vadd.f32 %v5049, %v5197
      %v5216 = vadd.f32 %v5050, %v5202
      %v5217 = vld [vmem:[#allocation2 + $0x33] sm:$0xff]
      %v5218 = vld [vmem:[#allocation2 + $0x3b] sm:$0xff]
      %v5219 = vld [vmem:[#allocation2 + $0x43] sm:$0xff]
      %v5220 = vld [vmem:[#allocation2 + $0x4b] sm:$0xff]
      %v5221 = vld [vmem:[#allocation2 + $0x53] sm:$0xff]
      %v5222 = vld [vmem:[#allocation2 + $0x5b] sm:$0xff]
      %v5223 = vld [vmem:[#allocation2 + $0x63] sm:$0xff]
      %v5224 = vld [vmem:[#allocation2 + $0x6b] sm:$0xff]
      %v5225 = vld [vmem:[#allocation2 + $0x73] sm:$0xff]
      %v5226 = vld [vmem:[#allocation2 + $0x7b] sm:$0xff]
      %v5227 = vld [vmem:[#allocation2 + $0x83] sm:$0xff]
      %v5228 = vld [vmem:[#allocation2 + $0x8b] sm:$0xff]
      %s5229 = scalar_lea.vmem %s4, 2944
      %v5230 = vld [vmem:[%s5229] sm:$0xff]
      %v5231 = vld [vmem:[%s5229 + $0x8] sm:$0xff]
      %v5232 = vld [vmem:[%s5229 + $0x10] sm:$0xff]
      %v5233 = vld [vmem:[%s5229 + $0x18] sm:$0xff]
      %v5234 = vld [vmem:[%s5229 + $0x20] sm:$0xff]
      %v5235 = vld [vmem:[%s5229 + $0x28] sm:$0xff]
      %v5236 = vld [vmem:[%s5229 + $0x30] sm:$0xff]
      %v5237 = vld [vmem:[%s5229 + $0x38] sm:$0xff]
      %v5238 = vld [vmem:[%s5229 + $0x40] sm:$0xff]
      %v5239 = vld [vmem:[%s5229 + $0x48] sm:$0xff]
      %v5240 = vld [vmem:[%s5229 + $0x50] sm:$0xff]
      %v5241 = vld [vmem:[%s5229 + $0x58] sm:$0xff]
      %v5242 = vld [vmem:[%s5229 + $0x60] sm:$0xff]
      %v5243 = vld [vmem:[%s5229 + $0x68] sm:$0xff]
      %v5244 = vld [vmem:[%s5229 + $0x70] sm:$0xff]
      %v5245 = vld [vmem:[%s5229 + $0x78] sm:$0xff]
      %5246 = vmatprep.subr.mxu0 0.0
      %5247 = vmatpush1.msra.mxu0 %v5230
      %5248 = vmatprep.subr.mxu0 0.0
      %5249 = vmatpush1.msra.mxu0 %v5231
      %5250 = vmatprep.subr.mxu0 0.0
      %5251 = vmatpush1.msra.mxu0 %v5232
      %5252 = vmatprep.subr.mxu0 0.0
      %5253 = vmatpush1.msra.mxu0 %v5233
      %5254 = vmatprep.subr.mxu0 0.0
      %5255 = vmatpush1.msra.mxu0 %v5234
      %5256 = vmatprep.subr.mxu0 0.0
      %5257 = vmatpush1.msra.mxu0 %v5235
      %5258 = vmatprep.subr.mxu0 0.0
      %5259 = vmatpush1.msra.mxu0 %v5236
      %5260 = vmatprep.subr.mxu0 0.0
      %5261 = vmatpush1.msra.mxu0 %v5237
      %5262 = vmatprep.subr.mxu0 0.0
      %5263 = vmatpush1.msra.mxu0 %v5238
      %5264 = vmatprep.subr.mxu0 0.0
      %5265 = vmatpush1.msra.mxu0 %v5239
      %5266 = vmatprep.subr.mxu0 0.0
      %5267 = vmatpush1.msra.mxu0 %v5240
      %5268 = vmatprep.subr.mxu0 0.0
      %5269 = vmatpush1.msra.mxu0 %v5241
      %5270 = vmatprep.subr.mxu0 0.0
      %5271 = vmatpush1.msra.mxu0 %v5242
      %5272 = vmatprep.subr.mxu0 0.0
      %5273 = vmatpush1.msra.mxu0 %v5243
      %5274 = vmatprep.subr.mxu0 0.0
      %5275 = vmatpush1.msra.mxu0 %v5244
      %5276 = vmatprep.subr.mxu0 0.0
      %5277 = vmatpush1.msra.mxu0 %v5245
      %5278 = vmatprep.subr.mxu0 0.0
      %5279 = vmatpush1.msra.mxu0 0.0
      %5280 = vmatprep.subr.mxu0 0.0
      %5281 = vmatpush1.msra.mxu0 0.0
      %5282 = vmatprep.subr.mxu0 0.0
      %5283 = vmatpush1.msra.mxu0 0.0
      %5284 = vmatprep.subr.mxu0 0.0
      %5285 = vmatpush1.msra.mxu0 0.0
      %5286 = vmatprep.subr.mxu0 0.0
      %5287 = vmatpush1.msra.mxu0 0.0
      %5288 = vmatprep.subr.mxu0 0.0
      %5289 = vmatpush1.msra.mxu0 0.0
      %5290 = vmatprep.subr.mxu0 0.0
      %5291 = vmatpush1.msra.mxu0 0.0
      %5292 = vmatprep.subr.mxu0 0.0
      %5293 = vmatpush1.msra.mxu0 0.0
      %5294 = vmatprep.subr.mxu0 0.0
      %5295 = vmatpush1.msra.mxu0 0.0
      %5296 = vmatprep.subr.mxu0 0.0
      %5297 = vmatpush1.msra.mxu0 0.0
      %5298 = vmatprep.subr.mxu0 0.0
      %5299 = vmatpush1.msra.mxu0 0.0
      %5300 = vmatprep.subr.mxu0 0.0
      %5301 = vmatpush1.msra.mxu0 0.0
      %5302 = vmatprep.subr.mxu0 0.0
      %5303 = vmatpush1.msra.mxu0 0.0
      %5304 = vmatprep.subr.mxu0 0.0
      %5305 = vmatpush1.msra.mxu0 0.0
      %5306 = vmatprep.subr.mxu0 0.0
      %5307 = vmatpush1.msra.mxu0 0.0
      %5308 = vmatprep.subr.mxu0 0.0
      %5309 = vmatpush1.msra.mxu0 0.0
      %5310 = vmatprep.mubr.f32.mxu0 0.0
      %5311 = vmatmul.mubr.f32.gmra.mrb[0].mxu0 %v5217
      %v5312 = vpop.f32.mrb[0].mxu0
      %v5313 = vadd.f32 0.0, %v5312
      %v5314 = vpop.f32.mrb[0].mxu0
      %5315 = vmatprep.mubr.f32.mxu0 0.0
      %5316 = vmatmul.mubr.f32.gmra.mrb[0].mxu0 %v5218
      %v5317 = vpop.f32.mrb[0].mxu0
      %v5318 = vadd.f32 0.0, %v5317
      %v5319 = vpop.f32.mrb[0].mxu0
      %5320 = vmatprep.mubr.f32.mxu0 0.0
      %5321 = vmatmul.mubr.f32.gmra.mrb[0].mxu0 %v5219
      %v5322 = vpop.f32.mrb[0].mxu0
      %v5323 = vadd.f32 0.0, %v5322
      %v5324 = vpop.f32.mrb[0].mxu0
      %5325 = vmatprep.mubr.f32.mxu0 0.0
      %5326 = vmatmul.mubr.f32.gmra.mrb[0].mxu0 %v5220
      %v5327 = vpop.f32.mrb[0].mxu0
      %v5328 = vadd.f32 0.0, %v5327
      %v5329 = vpop.f32.mrb[0].mxu0
      %5330 = vmatprep.mubr.f32.mxu0 0.0
      %5331 = vmatmul.mubr.f32.gmra.mrb[0].mxu0 %v5221
      %v5332 = vpop.f32.mrb[0].mxu0
      %v5333 = vadd.f32 0.0, %v5332
      %v5334 = vpop.f32.mrb[0].mxu0
      %5335 = vmatprep.mubr.f32.mxu0 0.0
      %5336 = vmatmul.mubr.f32.gmra.mrb[0].mxu0 %v5222
      %v5337 = vpop.f32.mrb[0].mxu0
      %v5338 = vadd.f32 0.0, %v5337
      %v5339 = vpop.f32.mrb[0].mxu0
      %5340 = vmatprep.mubr.f32.mxu0 0.0
      %5341 = vmatmul.mubr.f32.gmra.mrb[0].mxu0 %v5223
      %v5342 = vpop.f32.mrb[0].mxu0
      %v5343 = vadd.f32 0.0, %v5342
      %v5344 = vpop.f32.mrb[0].mxu0
      %5345 = vmatprep.mubr.f32.mxu0 0.0
      %5346 = vmatmul.mubr.f32.gmra.mrb[0].mxu0 %v5224
      %v5347 = vpop.f32.mrb[0].mxu0
      %v5348 = vadd.f32 0.0, %v5347
      %v5349 = vpop.f32.mrb[0].mxu0
      %5350 = vmatprep.mubr.f32.mxu0 0.0
      %5351 = vmatmul.mubr.f32.gmra.mrb[0].mxu0 %v5225
      %v5352 = vpop.f32.mrb[0].mxu0
      %v5353 = vadd.f32 0.0, %v5352
      %v5354 = vpop.f32.mrb[0].mxu0
      %5355 = vmatprep.mubr.f32.mxu0 0.0
      %5356 = vmatmul.mubr.f32.gmra.mrb[0].mxu0 %v5226
      %v5357 = vpop.f32.mrb[0].mxu0
      %v5358 = vadd.f32 0.0, %v5357
      %v5359 = vpop.f32.mrb[0].mxu0
      %5360 = vmatprep.mubr.f32.mxu0 0.0
      %5361 = vmatmul.mubr.f32.gmra.mrb[0].mxu0 %v5227
      %v5362 = vpop.f32.mrb[0].mxu0
      %v5363 = vadd.f32 0.0, %v5362
      %v5364 = vpop.f32.mrb[0].mxu0
      %5365 = vmatprep.mubr.f32.mxu0 0.0
      %5366 = vmatmul.mubr.f32.gmra.mrb[0].mxu0 %v5228
      %v5367 = vpop.f32.mrb[0].mxu0
      %v5368 = vadd.f32 0.0, %v5367
      %v5369 = vpop.f32.mrb[0].mxu0
      %5370 = vdwg.mxu0
      %v5371 = vadd.f32 %v5205, %v5313
      %v5372 = vadd.f32 %v5206, %v5318
      %v5373 = vadd.f32 %v5207, %v5323
      %v5374 = vadd.f32 %v5208, %v5328
      %v5375 = vadd.f32 %v5209, %v5333
      %v5376 = vadd.f32 %v5210, %v5338
      %v5377 = vadd.f32 %v5211, %v5343
      %v5378 = vadd.f32 %v5212, %v5348
      %v5379 = vadd.f32 %v5213, %v5353
      %v5380 = vadd.f32 %v5214, %v5358
      %v5381 = vadd.f32 %v5215, %v5363
      %v5382 = vadd.f32 %v5216, %v5368
      %v5383 = vld [vmem:[#allocation2 + $0x34] sm:$0xff]
      %v5384 = vld [vmem:[#allocation2 + $0x3c] sm:$0xff]
      %v5385 = vld [vmem:[#allocation2 + $0x44] sm:$0xff]
      %v5386 = vld [vmem:[#allocation2 + $0x4c] sm:$0xff]
      %v5387 = vld [vmem:[#allocation2 + $0x54] sm:$0xff]
      %v5388 = vld [vmem:[#allocation2 + $0x5c] sm:$0xff]
      %v5389 = vld [vmem:[#allocation2 + $0x64] sm:$0xff]
      %v5390 = vld [vmem:[#allocation2 + $0x6c] sm:$0xff]
      %v5391 = vld [vmem:[#allocation2 + $0x74] sm:$0xff]
      %v5392 = vld [vmem:[#allocation2 + $0x7c] sm:$0xff]
      %v5393 = vld [vmem:[#allocation2 + $0x84] sm:$0xff]
      %v5394 = vld [vmem:[#allocation2 + $0x8c] sm:$0xff]
      %s5395 = scalar_lea.vmem %s4, 3072
      %v5396 = vld [vmem:[%s5395] sm:$0xff]
      %v5397 = vld [vmem:[%s5395 + $0x8] sm:$0xff]
      %v5398 = vld [vmem:[%s5395 + $0x10] sm:$0xff]
      %v5399 = vld [vmem:[%s5395 + $0x18] sm:$0xff]
      %v5400 = vld [vmem:[%s5395 + $0x20] sm:$0xff]
      %v5401 = vld [vmem:[%s5395 + $0x28] sm:$0xff]
      %v5402 = vld [vmem:[%s5395 + $0x30] sm:$0xff]
      %v5403 = vld [vmem:[%s5395 + $0x38] sm:$0xff]
      %v5404 = vld [vmem:[%s5395 + $0x40] sm:$0xff]
      %v5405 = vld [vmem:[%s5395 + $0x48] sm:$0xff]
      %v5406 = vld [vmem:[%s5395 + $0x50] sm:$0xff]
      %v5407 = vld [vmem:[%s5395 + $0x58] sm:$0xff]
      %v5408 = vld [vmem:[%s5395 + $0x60] sm:$0xff]
      %v5409 = vld [vmem:[%s5395 + $0x68] sm:$0xff]
      %v5410 = vld [vmem:[%s5395 + $0x70] sm:$0xff]
      %v5411 = vld [vmem:[%s5395 + $0x78] sm:$0xff]
      %5412 = vmatprep.subr.mxu0 0.0
      %5413 = vmatpush1.msra.mxu0 %v5396
      %5414 = vmatprep.subr.mxu0 0.0
      %5415 = vmatpush1.msra.mxu0 %v5397
      %5416 = vmatprep.subr.mxu0 0.0
      %5417 = vmatpush1.msra.mxu0 %v5398
      %5418 = vmatprep.subr.mxu0 0.0
      %5419 = vmatpush1.msra.mxu0 %v5399
      %5420 = vmatprep.subr.mxu0 0.0
      %5421 = vmatpush1.msra.mxu0 %v5400
      %5422 = vmatprep.subr.mxu0 0.0
      %5423 = vmatpush1.msra.mxu0 %v5401
      %5424 = vmatprep.subr.mxu0 0.0
      %5425 = vmatpush1.msra.mxu0 %v5402
      %5426 = vmatprep.subr.mxu0 0.0
      %5427 = vmatpush1.msra.mxu0 %v5403
      %5428 = vmatprep.subr.mxu0 0.0
      %5429 = vmatpush1.msra.mxu0 %v5404
      %5430 = vmatprep.subr.mxu0 0.0
      %5431 = vmatpush1.msra.mxu0 %v5405
      %5432 = vmatprep.subr.mxu0 0.0
      %5433 = vmatpush1.msra.mxu0 %v5406
      %5434 = vmatprep.subr.mxu0 0.0
      %5435 = vmatpush1.msra.mxu0 %v5407
      %5436 = vmatprep.subr.mxu0 0.0
      %5437 = vmatpush1.msra.mxu0 %v5408
      %5438 = vmatprep.subr.mxu0 0.0
      %5439 = vmatpush1.msra.mxu0 %v5409
      %5440 = vmatprep.subr.mxu0 0.0
      %5441 = vmatpush1.msra.mxu0 %v5410
      %5442 = vmatprep.subr.mxu0 0.0
      %5443 = vmatpush1.msra.mxu0 %v5411
      %5444 = vmatprep.subr.mxu0 0.0
      %5445 = vmatpush1.msra.mxu0 0.0
      %5446 = vmatprep.subr.mxu0 0.0
      %5447 = vmatpush1.msra.mxu0 0.0
      %5448 = vmatprep.subr.mxu0 0.0
      %5449 = vmatpush1.msra.mxu0 0.0
      %5450 = vmatprep.subr.mxu0 0.0
      %5451 = vmatpush1.msra.mxu0 0.0
      %5452 = vmatprep.subr.mxu0 0.0
      %5453 = vmatpush1.msra.mxu0 0.0
      %5454 = vmatprep.subr.mxu0 0.0
      %5455 = vmatpush1.msra.mxu0 0.0
      %5456 = vmatprep.subr.mxu0 0.0
      %5457 = vmatpush1.msra.mxu0 0.0
      %5458 = vmatprep.subr.mxu0 0.0
      %5459 = vmatpush1.msra.mxu0 0.0
      %5460 = vmatprep.subr.mxu0 0.0
      %5461 = vmatpush1.msra.mxu0 0.0
      %5462 = vmatprep.subr.mxu0 0.0
      %5463 = vmatpush1.msra.mxu0 0.0
      %5464 = vmatprep.subr.mxu0 0.0
      %5465 = vmatpush1.msra.mxu0 0.0
      %5466 = vmatprep.subr.mxu0 0.0
      %5467 = vmatpush1.msra.mxu0 0.0
      %5468 = vmatprep.subr.mxu0 0.0
      %5469 = vmatpush1.msra.mxu0 0.0
      %5470 = vmatprep.subr.mxu0 0.0
      %5471 = vmatpush1.msra.mxu0 0.0
      %5472 = vmatprep.subr.mxu0 0.0
      %5473 = vmatpush1.msra.mxu0 0.0
      %5474 = vmatprep.subr.mxu0 0.0
      %5475 = vmatpush1.msra.mxu0 0.0
      %5476 = vmatprep.mubr.f32.mxu0 0.0
      %5477 = vmatmul.mubr.f32.gmra.mrb[0].mxu0 %v5383
      %v5478 = vpop.f32.mrb[0].mxu0
      %v5479 = vadd.f32 0.0, %v5478
      %v5480 = vpop.f32.mrb[0].mxu0
      %5481 = vmatprep.mubr.f32.mxu0 0.0
      %5482 = vmatmul.mubr.f32.gmra.mrb[0].mxu0 %v5384
      %v5483 = vpop.f32.mrb[0].mxu0
      %v5484 = vadd.f32 0.0, %v5483
      %v5485 = vpop.f32.mrb[0].mxu0
      %5486 = vmatprep.mubr.f32.mxu0 0.0
      %5487 = vmatmul.mubr.f32.gmra.mrb[0].mxu0 %v5385
      %v5488 = vpop.f32.mrb[0].mxu0
      %v5489 = vadd.f32 0.0, %v5488
      %v5490 = vpop.f32.mrb[0].mxu0
      %5491 = vmatprep.mubr.f32.mxu0 0.0
      %5492 = vmatmul.mubr.f32.gmra.mrb[0].mxu0 %v5386
      %v5493 = vpop.f32.mrb[0].mxu0
      %v5494 = vadd.f32 0.0, %v5493
      %v5495 = vpop.f32.mrb[0].mxu0
      %5496 = vmatprep.mubr.f32.mxu0 0.0
      %5497 = vmatmul.mubr.f32.gmra.mrb[0].mxu0 %v5387
      %v5498 = vpop.f32.mrb[0].mxu0
      %v5499 = vadd.f32 0.0, %v5498
      %v5500 = vpop.f32.mrb[0].mxu0
      %5501 = vmatprep.mubr.f32.mxu0 0.0
      %5502 = vmatmul.mubr.f32.gmra.mrb[0].mxu0 %v5388
      %v5503 = vpop.f32.mrb[0].mxu0
      %v5504 = vadd.f32 0.0, %v5503
      %v5505 = vpop.f32.mrb[0].mxu0
      %5506 = vmatprep.mubr.f32.mxu0 0.0
      %5507 = vmatmul.mubr.f32.gmra.mrb[0].mxu0 %v5389
      %v5508 = vpop.f32.mrb[0].mxu0
      %v5509 = vadd.f32 0.0, %v5508
      %v5510 = vpop.f32.mrb[0].mxu0
      %5511 = vmatprep.mubr.f32.mxu0 0.0
      %5512 = vmatmul.mubr.f32.gmra.mrb[0].mxu0 %v5390
      %v5513 = vpop.f32.mrb[0].mxu0
      %v5514 = vadd.f32 0.0, %v5513
      %v5515 = vpop.f32.mrb[0].mxu0
      %5516 = vmatprep.mubr.f32.mxu0 0.0
      %5517 = vmatmul.mubr.f32.gmra.mrb[0].mxu0 %v5391
      %v5518 = vpop.f32.mrb[0].mxu0
      %v5519 = vadd.f32 0.0, %v5518
      %v5520 = vpop.f32.mrb[0].mxu0
      %5521 = vmatprep.mubr.f32.mxu0 0.0
      %5522 = vmatmul.mubr.f32.gmra.mrb[0].mxu0 %v5392
      %v5523 = vpop.f32.mrb[0].mxu0
      %v5524 = vadd.f32 0.0, %v5523
      %v5525 = vpop.f32.mrb[0].mxu0
      %5526 = vmatprep.mubr.f32.mxu0 0.0
      %5527 = vmatmul.mubr.f32.gmra.mrb[0].mxu0 %v5393
      %v5528 = vpop.f32.mrb[0].mxu0
      %v5529 = vadd.f32 0.0, %v5528
      %v5530 = vpop.f32.mrb[0].mxu0
      %5531 = vmatprep.mubr.f32.mxu0 0.0
      %5532 = vmatmul.mubr.f32.gmra.mrb[0].mxu0 %v5394
      %v5533 = vpop.f32.mrb[0].mxu0
      %v5534 = vadd.f32 0.0, %v5533
      %v5535 = vpop.f32.mrb[0].mxu0
      %5536 = vdwg.mxu0
      %v5537 = vadd.f32 %v5371, %v5479
      %v5538 = vadd.f32 %v5372, %v5484
      %v5539 = vadd.f32 %v5373, %v5489
      %v5540 = vadd.f32 %v5374, %v5494
      %v5541 = vadd.f32 %v5375, %v5499
      %v5542 = vadd.f32 %v5376, %v5504
      %v5543 = vadd.f32 %v5377, %v5509
      %v5544 = vadd.f32 %v5378, %v5514
      %v5545 = vadd.f32 %v5379, %v5519
      %v5546 = vadd.f32 %v5380, %v5524
      %v5547 = vadd.f32 %v5381, %v5529
      %v5548 = vadd.f32 %v5382, %v5534
      %v5549 = vld [vmem:[%s5] sm:$0x1]
      %v5551 = vlaneseq
      %v5552 = vshrl.u32 %v5551, 7
      %v5553 = vsub.s32 0, %v5552
      %v5554 = vrot.slane %v5549, %v5553
      %v5556 = vadd.f32 %v5537, %v5554
      %v5557 = vadd.f32 %v5538, %v5554
      %v5558 = vadd.f32 %v5539, %v5554
      %v5559 = vadd.f32 %v5540, %v5554
      %v5560 = vadd.f32 %v5541, %v5554
      %v5561 = vadd.f32 %v5542, %v5554
      %v5562 = vadd.f32 %v5543, %v5554
      %v5563 = vadd.f32 %v5544, %v5554
      %v5564 = vadd.f32 %v5545, %v5554
      %v5565 = vadd.f32 %v5546, %v5554
      %v5566 = vadd.f32 %v5547, %v5554
      %v5567 = vadd.f32 %v5548, %v5554
      %v5568 = vmax.f32 %v5556, 0.0
      %v5569 = vmax.f32 %v5557, 0.0
      %v5570 = vmax.f32 %v5558, 0.0
      %v5571 = vmax.f32 %v5559, 0.0
      %v5572 = vmax.f32 %v5560, 0.0
      %v5573 = vmax.f32 %v5561, 0.0
      %v5574 = vmax.f32 %v5562, 0.0
      %v5575 = vmax.f32 %v5563, 0.0
      %v5576 = vmax.f32 %v5564, 0.0
      %v5577 = vmax.f32 %v5565, 0.0
      %v5578 = vmax.f32 %v5566, 0.0
      %v5579 = vmax.f32 %v5567, 0.0
      %v5580 = vld [vmem:[%s1] sm:$0xff]
      %v5581 = vld [vmem:[%s1 + $0x8] sm:$0xff]
      %v5582 = vld [vmem:[%s1 + $0x10] sm:$0xff]
      %v5583 = vld [vmem:[%s1 + $0x18] sm:$0xff]
      %v5584 = vld [vmem:[%s1 + $0x20] sm:$0xff]
      %v5585 = vld [vmem:[%s1 + $0x28] sm:$0xff]
      %v5586 = vld [vmem:[%s1 + $0x30] sm:$0xff]
      %v5587 = vld [vmem:[%s1 + $0x38] sm:$0xff]
      %vm5588 = vcmask 785408
      %v5590 = vsel %vm5588, %v5580, 0
      %v5593 = vsel %vm5588, %v5581, 0
      %v5596 = vsel %vm5588, %v5582, 0
      %v5599 = vsel %vm5588, %v5583, 0
      %v5602 = vsel %vm5588, %v5584, 0
      %v5605 = vsel %vm5588, %v5585, 0
      %v5608 = vsel %vm5588, %v5586, 0
      %v5611 = vsel %vm5588, %v5587, 0
      %5613 = vmatprep.subr.mxu0 0.0
      %5614 = vmatpush1.msra.mxu0 %v5568
      %5615 = vmatprep.subr.mxu0 0.0
      %5616 = vmatpush1.msra.mxu0 %v5569
      %5617 = vmatprep.subr.mxu0 0.0
      %5618 = vmatpush1.msra.mxu0 %v5570
      %5619 = vmatprep.subr.mxu0 0.0
      %5620 = vmatpush1.msra.mxu0 %v5571
      %5621 = vmatprep.subr.mxu0 0.0
      %5622 = vmatpush1.msra.mxu0 %v5572
      %5623 = vmatprep.subr.mxu0 0.0
      %5624 = vmatpush1.msra.mxu0 %v5573
      %5625 = vmatprep.subr.mxu0 0.0
      %5626 = vmatpush1.msra.mxu0 %v5574
      %5627 = vmatprep.subr.mxu0 0.0
      %5628 = vmatpush1.msra.mxu0 %v5575
      %5629 = vmatprep.subr.mxu0 0.0
      %5630 = vmatpush1.msra.mxu0 %v5576
      %5631 = vmatprep.subr.mxu0 0.0
      %5632 = vmatpush1.msra.mxu0 %v5577
      %5633 = vmatprep.subr.mxu0 0.0
      %5634 = vmatpush1.msra.mxu0 %v5578
      %5635 = vmatprep.subr.mxu0 0.0
      %5636 = vmatpush1.msra.mxu0 %v5579
      %5637 = vmatprep.subr.mxu0 0.0
      %5638 = vmatpush1.msra.mxu0 0.0
      %5639 = vmatprep.subr.mxu0 0.0
      %5640 = vmatpush1.msra.mxu0 0.0
      %5641 = vmatprep.subr.mxu0 0.0
      %5642 = vmatpush1.msra.mxu0 0.0
      %5643 = vmatprep.subr.mxu0 0.0
      %5644 = vmatpush1.msra.mxu0 0.0
      %5645 = vmatprep.subr.mxu0 0.0
      %5646 = vmatpush1.msra.mxu0 0.0
      %5647 = vmatprep.subr.mxu0 0.0
      %5648 = vmatpush1.msra.mxu0 0.0
      %5649 = vmatprep.subr.mxu0 0.0
      %5650 = vmatpush1.msra.mxu0 0.0
      %5651 = vmatprep.subr.mxu0 0.0
      %5652 = vmatpush1.msra.mxu0 0.0
      %5653 = vmatprep.subr.mxu0 0.0
      %5654 = vmatpush1.msra.mxu0 0.0
      %5655 = vmatprep.subr.mxu0 0.0
      %5656 = vmatpush1.msra.mxu0 0.0
      %5657 = vmatprep.subr.mxu0 0.0
      %5658 = vmatpush1.msra.mxu0 0.0
      %5659 = vmatprep.subr.mxu0 0.0
      %5660 = vmatpush1.msra.mxu0 0.0
      %5661 = vmatprep.subr.mxu0 0.0
      %5662 = vmatpush1.msra.mxu0 0.0
      %5663 = vmatprep.subr.mxu0 0.0
      %5664 = vmatpush1.msra.mxu0 0.0
      %5665 = vmatprep.subr.mxu0 0.0
      %5666 = vmatpush1.msra.mxu0 0.0
      %5667 = vmatprep.subr.mxu0 0.0
      %5668 = vmatpush1.msra.mxu0 0.0
      %5669 = vmatprep.subr.mxu0 0.0
      %5670 = vmatpush1.msra.mxu0 0.0
      %5671 = vmatprep.subr.mxu0 0.0
      %5672 = vmatpush1.msra.mxu0 0.0
      %5673 = vmatprep.subr.mxu0 0.0
      %5674 = vmatpush1.msra.mxu0 0.0
      %5675 = vmatprep.subr.mxu0 0.0
      %5676 = vmatpush1.msra.mxu0 0.0
      %5677 = vmatprep.mubr.f32.mxu0 0.0
      %5678 = vmatmul.mubr.f32.gmra.mrb[0].mxu0 %v5590
      %v5679 = vpop.f32.mrb[0].mxu0
      %v5680 = vadd.f32 0.0, %v5679
      %v5681 = vpop.f32.mrb[0].mxu0
      %5682 = vmatprep.mubr.f32.mxu0 0.0
      %5683 = vmatmul.mubr.f32.gmra.mrb[0].mxu0 %v5593
      %v5684 = vpop.f32.mrb[0].mxu0
      %v5685 = vadd.f32 0.0, %v5684
      %v5686 = vpop.f32.mrb[0].mxu0
      %5687 = vmatprep.mubr.f32.mxu0 0.0
      %5688 = vmatmul.mubr.f32.gmra.mrb[0].mxu0 %v5596
      %v5689 = vpop.f32.mrb[0].mxu0
      %v5690 = vadd.f32 0.0, %v5689
      %v5691 = vpop.f32.mrb[0].mxu0
      %5692 = vmatprep.mubr.f32.mxu0 0.0
      %5693 = vmatmul.mubr.f32.gmra.mrb[0].mxu0 %v5599
      %v5694 = vpop.f32.mrb[0].mxu0
      %v5695 = vadd.f32 0.0, %v5694
      %v5696 = vpop.f32.mrb[0].mxu0
      %5697 = vmatprep.mubr.f32.mxu0 0.0
      %5698 = vmatmul.mubr.f32.gmra.mrb[0].mxu0 %v5602
      %v5699 = vpop.f32.mrb[0].mxu0
      %v5700 = vadd.f32 0.0, %v5699
      %v5701 = vpop.f32.mrb[0].mxu0
      %5702 = vmatprep.mubr.f32.mxu0 0.0
      %5703 = vmatmul.mubr.f32.gmra.mrb[0].mxu0 %v5605
      %v5704 = vpop.f32.mrb[0].mxu0
      %v5705 = vadd.f32 0.0, %v5704
      %v5706 = vpop.f32.mrb[0].mxu0
      %5707 = vmatprep.mubr.f32.mxu0 0.0
      %5708 = vmatmul.mubr.f32.gmra.mrb[0].mxu0 %v5608
      %v5709 = vpop.f32.mrb[0].mxu0
      %v5710 = vadd.f32 0.0, %v5709
      %v5711 = vpop.f32.mrb[0].mxu0
      %5712 = vmatprep.mubr.f32.mxu0 0.0
      %5713 = vmatmul.mubr.f32.gmra.mrb[0].mxu0 %v5611
      %v5714 = vpop.f32.mrb[0].mxu0
      %v5715 = vadd.f32 0.0, %v5714
      %v5716 = vpop.f32.mrb[0].mxu0
      %5717 = vdwg.mxu0
      %v5718 = vmax.f32 %v5680, %v5690
      %v5719 = vmax.f32 %v5685, %v5695
      %v5720 = vmax.f32 %v5700, %v5710
      %v5721 = vmax.f32 %v5705, %v5715
      %v5722 = vmax.f32 %v5718, %v5720
      %v5723 = vmax.f32 %v5719, %v5721
      %5724 = vst [vmem:[#allocation3] sm:$0xff] %v5722
      %5725 = vst [vmem:[#allocation3 + $0x8] sm:$0xff] %v5723
      %v5726 = vld [vmem:[#allocation3] sm:$0x1]
      %v5727 = vld [vmem:[%s6] sm:$0xff]
      %v5728 = vld [vmem:[%s6 + $0x8] sm:$0xff]
      %v5729 = vld [vmem:[%s6 + $0x10] sm:$0xff]
      %v5730 = vld [vmem:[%s6 + $0x18] sm:$0xff]
      %v5731 = vld [vmem:[%s6 + $0x20] sm:$0xff]
      %v5732 = vld [vmem:[%s6 + $0x28] sm:$0xff]
      %v5733 = vld [vmem:[%s6 + $0x30] sm:$0xff]
      %v5734 = vld [vmem:[%s6 + $0x38] sm:$0xff]
      %v5735 = vld [vmem:[%s6 + $0x40] sm:$0xff]
      %v5736 = vld [vmem:[%s6 + $0x48] sm:$0xff]
      %v5737 = vld [vmem:[%s6 + $0x50] sm:$0xff]
      %v5738 = vld [vmem:[%s6 + $0x58] sm:$0xff]
      %v5739 = vld [vmem:[%s6 + $0x60] sm:$0xff]
      %v5740 = vld [vmem:[%s6 + $0x68] sm:$0xff]
      %v5741 = vld [vmem:[%s6 + $0x70] sm:$0xff]
      %v5742 = vld [vmem:[%s6 + $0x78] sm:$0xff]
      %v5743 = vld [vmem:[%s6 + $0x80] sm:$0xff]
      %v5744 = vld [vmem:[%s6 + $0x88] sm:$0xff]
      %v5745 = vld [vmem:[%s6 + $0x90] sm:$0xff]
      %v5746 = vld [vmem:[%s6 + $0x98] sm:$0xff]
      %v5747 = vld [vmem:[%s6 + $0xa0] sm:$0xff]
      %v5748 = vld [vmem:[%s6 + $0xa8] sm:$0xff]
      %v5749 = vld [vmem:[%s6 + $0xb0] sm:$0xff]
      %v5750 = vld [vmem:[%s6 + $0xb8] sm:$0xff]
      %v5751 = vld [vmem:[%s6 + $0xc0] sm:$0xff]
      %v5752 = vld [vmem:[%s6 + $0xc8] sm:$0xff]
      %v5753 = vld [vmem:[%s6 + $0xd0] sm:$0xff]
      %v5754 = vld [vmem:[%s6 + $0xd8] sm:$0xff]
      %v5755 = vld [vmem:[%s6 + $0xe0] sm:$0xff]
      %v5756 = vld [vmem:[%s6 + $0xe8] sm:$0xff]
      %v5757 = vld [vmem:[%s6 + $0xf0] sm:$0xff]
      %v5758 = vld [vmem:[%s6 + $0xf8] sm:$0xff]
      %v5759 = vld [vmem:[%s6 + $0x100] sm:$0xff]
      %v5760 = vld [vmem:[%s6 + $0x108] sm:$0xff]
      %v5761 = vld [vmem:[%s6 + $0x110] sm:$0xff]
      %v5762 = vld [vmem:[%s6 + $0x118] sm:$0xff]
      %v5763 = vld [vmem:[%s6 + $0x120] sm:$0xff]
      %v5764 = vld [vmem:[%s6 + $0x128] sm:$0xff]
      %v5765 = vld [vmem:[%s6 + $0x130] sm:$0xff]
      %v5766 = vld [vmem:[%s6 + $0x138] sm:$0xff]
      %v5767 = vld [vmem:[%s6 + $0x140] sm:$0xff]
      %v5768 = vld [vmem:[%s6 + $0x148] sm:$0xff]
      %v5769 = vld [vmem:[%s6 + $0x150] sm:$0xff]
      %v5770 = vld [vmem:[%s6 + $0x158] sm:$0xff]
      %v5771 = vld [vmem:[%s6 + $0x160] sm:$0xff]
      %v5772 = vld [vmem:[%s6 + $0x168] sm:$0xff]
      %v5773 = vld [vmem:[%s6 + $0x170] sm:$0xff]
      %v5774 = vld [vmem:[%s6 + $0x178] sm:$0xff]
      %v5775 = vld [vmem:[%s6 + $0x180] sm:$0xff]
      %v5776 = vld [vmem:[%s6 + $0x188] sm:$0xff]
      %v5777 = vld [vmem:[%s6 + $0x190] sm:$0xff]
      %v5778 = vld [vmem:[%s6 + $0x198] sm:$0xff]
      %v5779 = vld [vmem:[%s6 + $0x1a0] sm:$0xff]
      %v5780 = vld [vmem:[%s6 + $0x1a8] sm:$0xff]
      %v5781 = vld [vmem:[%s6 + $0x1b0] sm:$0xff]
      %v5782 = vld [vmem:[%s6 + $0x1b8] sm:$0xff]
      %v5783 = vld [vmem:[%s6 + $0x1c0] sm:$0xff]
      %v5784 = vld [vmem:[%s6 + $0x1c8] sm:$0xff]
      %v5785 = vld [vmem:[%s6 + $0x1d0] sm:$0xff]
      %v5786 = vld [vmem:[%s6 + $0x1d8] sm:$0xff]
      %v5787 = vld [vmem:[%s6 + $0x1e0] sm:$0xff]
      %v5788 = vld [vmem:[%s6 + $0x1e8] sm:$0xff]
      %v5789 = vld [vmem:[%s6 + $0x1f0] sm:$0xff]
      %v5790 = vld [vmem:[%s6 + $0x1f8] sm:$0xff]
      %v5791 = vld [vmem:[#allocation3 + $0x1] sm:$0x1]
      %s5792 = scalar_lea.vmem %s6, 512
      %v5793 = vld [vmem:[%s5792] sm:$0xff]
      %v5794 = vld [vmem:[%s5792 + $0x8] sm:$0xff]
      %v5795 = vld [vmem:[%s5792 + $0x10] sm:$0xff]
      %v5796 = vld [vmem:[%s5792 + $0x18] sm:$0xff]
      %v5797 = vld [vmem:[%s5792 + $0x20] sm:$0xff]
      %v5798 = vld [vmem:[%s5792 + $0x28] sm:$0xff]
      %v5799 = vld [vmem:[%s5792 + $0x30] sm:$0xff]
      %v5800 = vld [vmem:[%s5792 + $0x38] sm:$0xff]
      %v5801 = vld [vmem:[%s5792 + $0x40] sm:$0xff]
      %v5802 = vld [vmem:[%s5792 + $0x48] sm:$0xff]
      %v5803 = vld [vmem:[%s5792 + $0x50] sm:$0xff]
      %v5804 = vld [vmem:[%s5792 + $0x58] sm:$0xff]
      %v5805 = vld [vmem:[%s5792 + $0x60] sm:$0xff]
      %v5806 = vld [vmem:[%s5792 + $0x68] sm:$0xff]
      %v5807 = vld [vmem:[%s5792 + $0x70] sm:$0xff]
      %v5808 = vld [vmem:[%s5792 + $0x78] sm:$0xff]
      %v5809 = vld [vmem:[%s5792 + $0x80] sm:$0xff]
      %v5810 = vld [vmem:[%s5792 + $0x88] sm:$0xff]
      %v5811 = vld [vmem:[%s5792 + $0x90] sm:$0xff]
      %v5812 = vld [vmem:[%s5792 + $0x98] sm:$0xff]
      %v5813 = vld [vmem:[%s5792 + $0xa0] sm:$0xff]
      %v5814 = vld [vmem:[%s5792 + $0xa8] sm:$0xff]
      %v5815 = vld [vmem:[%s5792 + $0xb0] sm:$0xff]
      %v5816 = vld [vmem:[%s5792 + $0xb8] sm:$0xff]
      %v5817 = vld [vmem:[%s5792 + $0xc0] sm:$0xff]
      %v5818 = vld [vmem:[%s5792 + $0xc8] sm:$0xff]
      %v5819 = vld [vmem:[%s5792 + $0xd0] sm:$0xff]
      %v5820 = vld [vmem:[%s5792 + $0xd8] sm:$0xff]
      %v5821 = vld [vmem:[%s5792 + $0xe0] sm:$0xff]
      %v5822 = vld [vmem:[%s5792 + $0xe8] sm:$0xff]
      %v5823 = vld [vmem:[%s5792 + $0xf0] sm:$0xff]
      %v5824 = vld [vmem:[%s5792 + $0xf8] sm:$0xff]
      %v5825 = vld [vmem:[%s5792 + $0x100] sm:$0xff]
      %v5826 = vld [vmem:[%s5792 + $0x108] sm:$0xff]
      %v5827 = vld [vmem:[%s5792 + $0x110] sm:$0xff]
      %v5828 = vld [vmem:[%s5792 + $0x118] sm:$0xff]
      %v5829 = vld [vmem:[%s5792 + $0x120] sm:$0xff]
      %v5830 = vld [vmem:[%s5792 + $0x128] sm:$0xff]
      %v5831 = vld [vmem:[%s5792 + $0x130] sm:$0xff]
      %v5832 = vld [vmem:[%s5792 + $0x138] sm:$0xff]
      %v5833 = vld [vmem:[%s5792 + $0x140] sm:$0xff]
      %v5834 = vld [vmem:[%s5792 + $0x148] sm:$0xff]
      %v5835 = vld [vmem:[%s5792 + $0x150] sm:$0xff]
      %v5836 = vld [vmem:[%s5792 + $0x158] sm:$0xff]
      %v5837 = vld [vmem:[%s5792 + $0x160] sm:$0xff]
      %v5838 = vld [vmem:[%s5792 + $0x168] sm:$0xff]
      %v5839 = vld [vmem:[%s5792 + $0x170] sm:$0xff]
      %v5840 = vld [vmem:[%s5792 + $0x178] sm:$0xff]
      %v5841 = vld [vmem:[%s5792 + $0x180] sm:$0xff]
      %v5842 = vld [vmem:[%s5792 + $0x188] sm:$0xff]
      %v5843 = vld [vmem:[%s5792 + $0x190] sm:$0xff]
      %v5844 = vld [vmem:[%s5792 + $0x198] sm:$0xff]
      %v5845 = vld [vmem:[%s5792 + $0x1a0] sm:$0xff]
      %v5846 = vld [vmem:[%s5792 + $0x1a8] sm:$0xff]
      %v5847 = vld [vmem:[%s5792 + $0x1b0] sm:$0xff]
      %v5848 = vld [vmem:[%s5792 + $0x1b8] sm:$0xff]
      %v5849 = vld [vmem:[%s5792 + $0x1c0] sm:$0xff]
      %v5850 = vld [vmem:[%s5792 + $0x1c8] sm:$0xff]
      %v5851 = vld [vmem:[%s5792 + $0x1d0] sm:$0xff]
      %v5852 = vld [vmem:[%s5792 + $0x1d8] sm:$0xff]
      %v5853 = vld [vmem:[%s5792 + $0x1e0] sm:$0xff]
      %v5854 = vld [vmem:[%s5792 + $0x1e8] sm:$0xff]
      %v5855 = vld [vmem:[%s5792 + $0x1f0] sm:$0xff]
      %v5856 = vld [vmem:[%s5792 + $0x1f8] sm:$0xff]
      %5857 = vmatprep.subr.mxu0 %v5794
      %5858 = vmatpush1.msra.mxu0 %v5793
      %5859 = vmatprep.subr.mxu0 %v5798
      %5860 = vmatpush1.msra.mxu0 %v5797
      %5861 = vmatprep.subr.mxu0 %v5802
      %5862 = vmatpush1.msra.mxu0 %v5801
      %5863 = vmatprep.subr.mxu0 %v5806
      %5864 = vmatpush1.msra.mxu0 %v5805
      %5865 = vmatprep.subr.mxu0 %v5810
      %5866 = vmatpush1.msra.mxu0 %v5809
      %5867 = vmatprep.subr.mxu0 %v5814
      %5868 = vmatpush1.msra.mxu0 %v5813
      %5869 = vmatprep.subr.mxu0 %v5818
      %5870 = vmatpush1.msra.mxu0 %v5817
      %5871 = vmatprep.subr.mxu0 %v5822
      %5872 = vmatpush1.msra.mxu0 %v5821
      %5873 = vmatprep.subr.mxu0 %v5826
      %5874 = vmatpush1.msra.mxu0 %v5825
      %5875 = vmatprep.subr.mxu0 %v5830
      %5876 = vmatpush1.msra.mxu0 %v5829
      %5877 = vmatprep.subr.mxu0 %v5834
      %5878 = vmatpush1.msra.mxu0 %v5833
      %5879 = vmatprep.subr.mxu0 %v5838
      %5880 = vmatpush1.msra.mxu0 %v5837
      %5881 = vmatprep.subr.mxu0 %v5842
      %5882 = vmatpush1.msra.mxu0 %v5841
      %5883 = vmatprep.subr.mxu0 %v5846
      %5884 = vmatpush1.msra.mxu0 %v5845
      %5885 = vmatprep.subr.mxu0 %v5850
      %5886 = vmatpush1.msra.mxu0 %v5849
      %5887 = vmatprep.subr.mxu0 %v5854
      %5888 = vmatpush1.msra.mxu0 %v5853
      %5889 = vmatprep.subr.mxu0 0.0
      %5890 = vmatpush1.msra.mxu0 0.0
      %5891 = vmatprep.subr.mxu0 0.0
      %5892 = vmatpush1.msra.mxu0 0.0
      %5893 = vmatprep.subr.mxu0 0.0
      %5894 = vmatpush1.msra.mxu0 0.0
      %5895 = vmatprep.subr.mxu0 0.0
      %5896 = vmatpush1.msra.mxu0 0.0
      %5897 = vmatprep.subr.mxu0 0.0
      %5898 = vmatpush1.msra.mxu0 0.0
      %5899 = vmatprep.subr.mxu0 0.0
      %5900 = vmatpush1.msra.mxu0 0.0
      %5901 = vmatprep.subr.mxu0 0.0
      %5902 = vmatpush1.msra.mxu0 0.0
      %5903 = vmatprep.subr.mxu0 0.0
      %5904 = vmatpush1.msra.mxu0 0.0
      %5905 = vmatprep.subr.mxu0 0.0
      %5906 = vmatpush1.msra.mxu0 0.0
      %5907 = vmatprep.subr.mxu0 0.0
      %5908 = vmatpush1.msra.mxu0 0.0
      %5909 = vmatprep.subr.mxu0 0.0
      %5910 = vmatpush1.msra.mxu0 0.0
      %5911 = vmatprep.subr.mxu0 0.0
      %5912 = vmatpush1.msra.mxu0 0.0
      %5913 = vmatprep.subr.mxu0 0.0
      %5914 = vmatpush1.msra.mxu0 0.0
      %5915 = vmatprep.subr.mxu0 0.0
      %5916 = vmatpush1.msra.mxu0 0.0
      %5917 = vmatprep.subr.mxu0 0.0
      %5918 = vmatpush1.msra.mxu0 0.0
      %5919 = vmatprep.subr.mxu0 0.0
      %5920 = vmatpush1.msra.mxu0 0.0
      %5921 = vmatprep.mubr.f32.mxu0 0.0
      %5922 = vmatmul.mubr.f32.gmra.mrb[0].mxu0 %v5791
      %v5923 = vpop.f32.mrb[0].mxu0
      %v5924 = vadd.f32 0.0, %v5923
      %v5925 = vpop.f32.mrb[0].mxu0
      %v5926 = vadd.f32 0.0, %v5925
      %5927 = vdwg.mxu0
      %5928 = vmatprep.subr.mxu0 %v5796
      %5929 = vmatpush1.msra.mxu0 %v5795
      %5930 = vmatprep.subr.mxu0 %v5800
      %5931 = vmatpush1.msra.mxu0 %v5799
      %5932 = vmatprep.subr.mxu0 %v5804
      %5933 = vmatpush1.msra.mxu0 %v5803
      %5934 = vmatprep.subr.mxu0 %v5808
      %5935 = vmatpush1.msra.mxu0 %v5807
      %5936 = vmatprep.subr.mxu0 %v5812
      %5937 = vmatpush1.msra.mxu0 %v5811
      %5938 = vmatprep.subr.mxu0 %v5816
      %5939 = vmatpush1.msra.mxu0 %v5815
      %5940 = vmatprep.subr.mxu0 %v5820
      %5941 = vmatpush1.msra.mxu0 %v5819
      %5942 = vmatprep.subr.mxu0 %v5824
      %5943 = vmatpush1.msra.mxu0 %v5823
      %5944 = vmatprep.subr.mxu0 %v5828
      %5945 = vmatpush1.msra.mxu0 %v5827
      %5946 = vmatprep.subr.mxu0 %v5832
      %5947 = vmatpush1.msra.mxu0 %v5831
      %5948 = vmatprep.subr.mxu0 %v5836
      %5949 = vmatpush1.msra.mxu0 %v5835
      %5950 = vmatprep.subr.mxu0 %v5840
      %5951 = vmatpush1.msra.mxu0 %v5839
      %5952 = vmatprep.subr.mxu0 %v5844
      %5953 = vmatpush1.msra.mxu0 %v5843
      %5954 = vmatprep.subr.mxu0 %v5848
      %5955 = vmatpush1.msra.mxu0 %v5847
      %5956 = vmatprep.subr.mxu0 %v5852
      %5957 = vmatpush1.msra.mxu0 %v5851
      %5958 = vmatprep.subr.mxu0 %v5856
      %5959 = vmatpush1.msra.mxu0 %v5855
      %5960 = vmatprep.subr.mxu0 0.0
      %5961 = vmatpush1.msra.mxu0 0.0
      %5962 = vmatprep.subr.mxu0 0.0
      %5963 = vmatpush1.msra.mxu0 0.0
      %5964 = vmatprep.subr.mxu0 0.0
      %5965 = vmatpush1.msra.mxu0 0.0
      %5966 = vmatprep.subr.mxu0 0.0
      %5967 = vmatpush1.msra.mxu0 0.0
      %5968 = vmatprep.subr.mxu0 0.0
      %5969 = vmatpush1.msra.mxu0 0.0
      %5970 = vmatprep.subr.mxu0 0.0
      %5971 = vmatpush1.msra.mxu0 0.0
      %5972 = vmatprep.subr.mxu0 0.0
      %5973 = vmatpush1.msra.mxu0 0.0
      %5974 = vmatprep.subr.mxu0 0.0
      %5975 = vmatpush1.msra.mxu0 0.0
      %5976 = vmatprep.subr.mxu0 0.0
      %5977 = vmatpush1.msra.mxu0 0.0
      %5978 = vmatprep.subr.mxu0 0.0
      %5979 = vmatpush1.msra.mxu0 0.0
      %5980 = vmatprep.subr.mxu0 0.0
      %5981 = vmatpush1.msra.mxu0 0.0
      %5982 = vmatprep.subr.mxu0 0.0
      %5983 = vmatpush1.msra.mxu0 0.0
      %5984 = vmatprep.subr.mxu0 0.0
      %5985 = vmatpush1.msra.mxu0 0.0
      %5986 = vmatprep.subr.mxu0 0.0
      %5987 = vmatpush1.msra.mxu0 0.0
      %5988 = vmatprep.subr.mxu0 0.0
      %5989 = vmatpush1.msra.mxu0 0.0
      %5990 = vmatprep.subr.mxu0 0.0
      %5991 = vmatpush1.msra.mxu0 0.0
      %5992 = vmatprep.mubr.f32.mxu0 0.0
      %5993 = vmatmul.mubr.f32.gmra.mrb[0].mxu0 %v5791
      %v5994 = vpop.f32.mrb[0].mxu0
      %v5995 = vadd.f32 0.0, %v5994
      %v5996 = vpop.f32.mrb[0].mxu0
      %v5997 = vadd.f32 0.0, %v5996
      %5998 = vdwg.mxu0
      %5999 = vmatprep.subr.mxu0 %v5728
      %6000 = vmatpush1.msra.mxu0 %v5727
      %6001 = vmatprep.subr.mxu0 %v5732
      %6002 = vmatpush1.msra.mxu0 %v5731
      %6003 = vmatprep.subr.mxu0 %v5736
      %6004 = vmatpush1.msra.mxu0 %v5735
      %6005 = vmatprep.subr.mxu0 %v5740
      %6006 = vmatpush1.msra.mxu0 %v5739
      %6007 = vmatprep.subr.mxu0 %v5744
      %6008 = vmatpush1.msra.mxu0 %v5743
      %6009 = vmatprep.subr.mxu0 %v5748
      %6010 = vmatpush1.msra.mxu0 %v5747
      %6011 = vmatprep.subr.mxu0 %v5752
      %6012 = vmatpush1.msra.mxu0 %v5751
      %6013 = vmatprep.subr.mxu0 %v5756
      %6014 = vmatpush1.msra.mxu0 %v5755
      %6015 = vmatprep.subr.mxu0 %v5760
      %6016 = vmatpush1.msra.mxu0 %v5759
      %6017 = vmatprep.subr.mxu0 %v5764
      %6018 = vmatpush1.msra.mxu0 %v5763
      %6019 = vmatprep.subr.mxu0 %v5768
      %6020 = vmatpush1.msra.mxu0 %v5767
      %6021 = vmatprep.subr.mxu0 %v5772
      %6022 = vmatpush1.msra.mxu0 %v5771
      %6023 = vmatprep.subr.mxu0 %v5776
      %6024 = vmatpush1.msra.mxu0 %v5775
      %6025 = vmatprep.subr.mxu0 %v5780
      %6026 = vmatpush1.msra.mxu0 %v5779
      %6027 = vmatprep.subr.mxu0 %v5784
      %6028 = vmatpush1.msra.mxu0 %v5783
      %6029 = vmatprep.subr.mxu0 %v5788
      %6030 = vmatpush1.msra.mxu0 %v5787
      %6031 = vmatprep.subr.mxu0 0.0
      %6032 = vmatpush1.msra.mxu0 0.0
      %6033 = vmatprep.subr.mxu0 0.0
      %6034 = vmatpush1.msra.mxu0 0.0
      %6035 = vmatprep.subr.mxu0 0.0
      %6036 = vmatpush1.msra.mxu0 0.0
      %6037 = vmatprep.subr.mxu0 0.0
      %6038 = vmatpush1.msra.mxu0 0.0
      %6039 = vmatprep.subr.mxu0 0.0
      %6040 = vmatpush1.msra.mxu0 0.0
      %6041 = vmatprep.subr.mxu0 0.0
      %6042 = vmatpush1.msra.mxu0 0.0
      %6043 = vmatprep.subr.mxu0 0.0
      %6044 = vmatpush1.msra.mxu0 0.0
      %6045 = vmatprep.subr.mxu0 0.0
      %6046 = vmatpush1.msra.mxu0 0.0
      %6047 = vmatprep.subr.mxu0 0.0
      %6048 = vmatpush1.msra.mxu0 0.0
      %6049 = vmatprep.subr.mxu0 0.0
      %6050 = vmatpush1.msra.mxu0 0.0
      %6051 = vmatprep.subr.mxu0 0.0
      %6052 = vmatpush1.msra.mxu0 0.0
      %6053 = vmatprep.subr.mxu0 0.0
      %6054 = vmatpush1.msra.mxu0 0.0
      %6055 = vmatprep.subr.mxu0 0.0
      %6056 = vmatpush1.msra.mxu0 0.0
      %6057 = vmatprep.subr.mxu0 0.0
      %6058 = vmatpush1.msra.mxu0 0.0
      %6059 = vmatprep.subr.mxu0 0.0
      %6060 = vmatpush1.msra.mxu0 0.0
      %6061 = vmatprep.subr.mxu0 0.0
      %6062 = vmatpush1.msra.mxu0 0.0
      %6063 = vmatprep.mubr.f32.mxu0 0.0
      %6064 = vmatmul.mubr.f32.gmra.mrb[0].mxu0 %v5726
      %v6065 = vpop.f32.mrb[0].mxu0
      %v6066 = vadd.f32 %v5924, %v6065
      %v6067 = vpop.f32.mrb[0].mxu0
      %v6068 = vadd.f32 %v5926, %v6067
      %6069 = vdwg.mxu0
      %6070 = vmatprep.subr.mxu0 %v5730
      %6071 = vmatpush1.msra.mxu0 %v5729
      %6072 = vmatprep.subr.mxu0 %v5734
      %6073 = vmatpush1.msra.mxu0 %v5733
      %6074 = vmatprep.subr.mxu0 %v5738
      %6075 = vmatpush1.msra.mxu0 %v5737
      %6076 = vmatprep.subr.mxu0 %v5742
      %6077 = vmatpush1.msra.mxu0 %v5741
      %6078 = vmatprep.subr.mxu0 %v5746
      %6079 = vmatpush1.msra.mxu0 %v5745
      %6080 = vmatprep.subr.mxu0 %v5750
      %6081 = vmatpush1.msra.mxu0 %v5749
      %6082 = vmatprep.subr.mxu0 %v5754
      %6083 = vmatpush1.msra.mxu0 %v5753
      %6084 = vmatprep.subr.mxu0 %v5758
      %6085 = vmatpush1.msra.mxu0 %v5757
      %6086 = vmatprep.subr.mxu0 %v5762
      %6087 = vmatpush1.msra.mxu0 %v5761
      %6088 = vmatprep.subr.mxu0 %v5766
      %6089 = vmatpush1.msra.mxu0 %v5765
      %6090 = vmatprep.subr.mxu0 %v5770
      %6091 = vmatpush1.msra.mxu0 %v5769
      %6092 = vmatprep.subr.mxu0 %v5774
      %6093 = vmatpush1.msra.mxu0 %v5773
      %6094 = vmatprep.subr.mxu0 %v5778
      %6095 = vmatpush1.msra.mxu0 %v5777
      %6096 = vmatprep.subr.mxu0 %v5782
      %6097 = vmatpush1.msra.mxu0 %v5781
      %6098 = vmatprep.subr.mxu0 %v5786
      %6099 = vmatpush1.msra.mxu0 %v5785
      %6100 = vmatprep.subr.mxu0 %v5790
      %6101 = vmatpush1.msra.mxu0 %v5789
      %6102 = vmatprep.subr.mxu0 0.0
      %6103 = vmatpush1.msra.mxu0 0.0
      %6104 = vmatprep.subr.mxu0 0.0
      %6105 = vmatpush1.msra.mxu0 0.0
      %6106 = vmatprep.subr.mxu0 0.0
      %6107 = vmatpush1.msra.mxu0 0.0
      %6108 = vmatprep.subr.mxu0 0.0
      %6109 = vmatpush1.msra.mxu0 0.0
      %6110 = vmatprep.subr.mxu0 0.0
      %6111 = vmatpush1.msra.mxu0 0.0
      %6112 = vmatprep.subr.mxu0 0.0
      %6113 = vmatpush1.msra.mxu0 0.0
      %6114 = vmatprep.subr.mxu0 0.0
      %6115 = vmatpush1.msra.mxu0 0.0
      %6116 = vmatprep.subr.mxu0 0.0
      %6117 = vmatpush1.msra.mxu0 0.0
      %6118 = vmatprep.subr.mxu0 0.0
      %6119 = vmatpush1.msra.mxu0 0.0
      %6120 = vmatprep.subr.mxu0 0.0
      %6121 = vmatpush1.msra.mxu0 0.0
      %6122 = vmatprep.subr.mxu0 0.0
      %6123 = vmatpush1.msra.mxu0 0.0
      %6124 = vmatprep.subr.mxu0 0.0
      %6125 = vmatpush1.msra.mxu0 0.0
      %6126 = vmatprep.subr.mxu0 0.0
      %6127 = vmatpush1.msra.mxu0 0.0
      %6128 = vmatprep.subr.mxu0 0.0
      %6129 = vmatpush1.msra.mxu0 0.0
      %6130 = vmatprep.subr.mxu0 0.0
      %6131 = vmatpush1.msra.mxu0 0.0
      %6132 = vmatprep.subr.mxu0 0.0
      %6133 = vmatpush1.msra.mxu0 0.0
      %6134 = vmatprep.mubr.f32.mxu0 0.0
      %6135 = vmatmul.mubr.f32.gmra.mrb[0].mxu0 %v5726
      %v6136 = vpop.f32.mrb[0].mxu0
      %v6137 = vadd.f32 %v5995, %v6136
      %v6138 = vpop.f32.mrb[0].mxu0
      %v6139 = vadd.f32 %v5997, %v6138
      %6140 = vdwg.mxu0
      %v6141 = vld [vmem:[#allocation3 + $0x2] sm:$0x1]
      %s6142 = scalar_lea.vmem %s6, 1024
      %v6143 = vld [vmem:[%s6142] sm:$0xff]
      %v6144 = vld [vmem:[%s6142 + $0x8] sm:$0xff]
      %v6145 = vld [vmem:[%s6142 + $0x10] sm:$0xff]
      %v6146 = vld [vmem:[%s6142 + $0x18] sm:$0xff]
      %v6147 = vld [vmem:[%s6142 + $0x20] sm:$0xff]
      %v6148 = vld [vmem:[%s6142 + $0x28] sm:$0xff]
      %v6149 = vld [vmem:[%s6142 + $0x30] sm:$0xff]
      %v6150 = vld [vmem:[%s6142 + $0x38] sm:$0xff]
      %v6151 = vld [vmem:[%s6142 + $0x40] sm:$0xff]
      %v6152 = vld [vmem:[%s6142 + $0x48] sm:$0xff]
      %v6153 = vld [vmem:[%s6142 + $0x50] sm:$0xff]
      %v6154 = vld [vmem:[%s6142 + $0x58] sm:$0xff]
      %v6155 = vld [vmem:[%s6142 + $0x60] sm:$0xff]
      %v6156 = vld [vmem:[%s6142 + $0x68] sm:$0xff]
      %v6157 = vld [vmem:[%s6142 + $0x70] sm:$0xff]
      %v6158 = vld [vmem:[%s6142 + $0x78] sm:$0xff]
      %v6159 = vld [vmem:[%s6142 + $0x80] sm:$0xff]
      %v6160 = vld [vmem:[%s6142 + $0x88] sm:$0xff]
      %v6161 = vld [vmem:[%s6142 + $0x90] sm:$0xff]
      %v6162 = vld [vmem:[%s6142 + $0x98] sm:$0xff]
      %v6163 = vld [vmem:[%s6142 + $0xa0] sm:$0xff]
      %v6164 = vld [vmem:[%s6142 + $0xa8] sm:$0xff]
      %v6165 = vld [vmem:[%s6142 + $0xb0] sm:$0xff]
      %v6166 = vld [vmem:[%s6142 + $0xb8] sm:$0xff]
      %v6167 = vld [vmem:[%s6142 + $0xc0] sm:$0xff]
      %v6168 = vld [vmem:[%s6142 + $0xc8] sm:$0xff]
      %v6169 = vld [vmem:[%s6142 + $0xd0] sm:$0xff]
      %v6170 = vld [vmem:[%s6142 + $0xd8] sm:$0xff]
      %v6171 = vld [vmem:[%s6142 + $0xe0] sm:$0xff]
      %v6172 = vld [vmem:[%s6142 + $0xe8] sm:$0xff]
      %v6173 = vld [vmem:[%s6142 + $0xf0] sm:$0xff]
      %v6174 = vld [vmem:[%s6142 + $0xf8] sm:$0xff]
      %v6175 = vld [vmem:[%s6142 + $0x100] sm:$0xff]
      %v6176 = vld [vmem:[%s6142 + $0x108] sm:$0xff]
      %v6177 = vld [vmem:[%s6142 + $0x110] sm:$0xff]
      %v6178 = vld [vmem:[%s6142 + $0x118] sm:$0xff]
      %v6179 = vld [vmem:[%s6142 + $0x120] sm:$0xff]
      %v6180 = vld [vmem:[%s6142 + $0x128] sm:$0xff]
      %v6181 = vld [vmem:[%s6142 + $0x130] sm:$0xff]
      %v6182 = vld [vmem:[%s6142 + $0x138] sm:$0xff]
      %v6183 = vld [vmem:[%s6142 + $0x140] sm:$0xff]
      %v6184 = vld [vmem:[%s6142 + $0x148] sm:$0xff]
      %v6185 = vld [vmem:[%s6142 + $0x150] sm:$0xff]
      %v6186 = vld [vmem:[%s6142 + $0x158] sm:$0xff]
      %v6187 = vld [vmem:[%s6142 + $0x160] sm:$0xff]
      %v6188 = vld [vmem:[%s6142 + $0x168] sm:$0xff]
      %v6189 = vld [vmem:[%s6142 + $0x170] sm:$0xff]
      %v6190 = vld [vmem:[%s6142 + $0x178] sm:$0xff]
      %v6191 = vld [vmem:[%s6142 + $0x180] sm:$0xff]
      %v6192 = vld [vmem:[%s6142 + $0x188] sm:$0xff]
      %v6193 = vld [vmem:[%s6142 + $0x190] sm:$0xff]
      %v6194 = vld [vmem:[%s6142 + $0x198] sm:$0xff]
      %v6195 = vld [vmem:[%s6142 + $0x1a0] sm:$0xff]
      %v6196 = vld [vmem:[%s6142 + $0x1a8] sm:$0xff]
      %v6197 = vld [vmem:[%s6142 + $0x1b0] sm:$0xff]
      %v6198 = vld [vmem:[%s6142 + $0x1b8] sm:$0xff]
      %v6199 = vld [vmem:[%s6142 + $0x1c0] sm:$0xff]
      %v6200 = vld [vmem:[%s6142 + $0x1c8] sm:$0xff]
      %v6201 = vld [vmem:[%s6142 + $0x1d0] sm:$0xff]
      %v6202 = vld [vmem:[%s6142 + $0x1d8] sm:$0xff]
      %v6203 = vld [vmem:[%s6142 + $0x1e0] sm:$0xff]
      %v6204 = vld [vmem:[%s6142 + $0x1e8] sm:$0xff]
      %v6205 = vld [vmem:[%s6142 + $0x1f0] sm:$0xff]
      %v6206 = vld [vmem:[%s6142 + $0x1f8] sm:$0xff]
      %6207 = vmatprep.subr.mxu0 %v6144
      %6208 = vmatpush1.msra.mxu0 %v6143
      %6209 = vmatprep.subr.mxu0 %v6148
      %6210 = vmatpush1.msra.mxu0 %v6147
      %6211 = vmatprep.subr.mxu0 %v6152
      %6212 = vmatpush1.msra.mxu0 %v6151
      %6213 = vmatprep.subr.mxu0 %v6156
      %6214 = vmatpush1.msra.mxu0 %v6155
      %6215 = vmatprep.subr.mxu0 %v6160
      %6216 = vmatpush1.msra.mxu0 %v6159
      %6217 = vmatprep.subr.mxu0 %v6164
      %6218 = vmatpush1.msra.mxu0 %v6163
      %6219 = vmatprep.subr.mxu0 %v6168
      %6220 = vmatpush1.msra.mxu0 %v6167
      %6221 = vmatprep.subr.mxu0 %v6172
      %6222 = vmatpush1.msra.mxu0 %v6171
      %6223 = vmatprep.subr.mxu0 %v6176
      %6224 = vmatpush1.msra.mxu0 %v6175
      %6225 = vmatprep.subr.mxu0 %v6180
      %6226 = vmatpush1.msra.mxu0 %v6179
      %6227 = vmatprep.subr.mxu0 %v6184
      %6228 = vmatpush1.msra.mxu0 %v6183
      %6229 = vmatprep.subr.mxu0 %v6188
      %6230 = vmatpush1.msra.mxu0 %v6187
      %6231 = vmatprep.subr.mxu0 %v6192
      %6232 = vmatpush1.msra.mxu0 %v6191
      %6233 = vmatprep.subr.mxu0 %v6196
      %6234 = vmatpush1.msra.mxu0 %v6195
      %6235 = vmatprep.subr.mxu0 %v6200
      %6236 = vmatpush1.msra.mxu0 %v6199
      %6237 = vmatprep.subr.mxu0 %v6204
      %6238 = vmatpush1.msra.mxu0 %v6203
      %6239 = vmatprep.subr.mxu0 0.0
      %6240 = vmatpush1.msra.mxu0 0.0
      %6241 = vmatprep.subr.mxu0 0.0
      %6242 = vmatpush1.msra.mxu0 0.0
      %6243 = vmatprep.subr.mxu0 0.0
      %6244 = vmatpush1.msra.mxu0 0.0
      %6245 = vmatprep.subr.mxu0 0.0
      %6246 = vmatpush1.msra.mxu0 0.0
      %6247 = vmatprep.subr.mxu0 0.0
      %6248 = vmatpush1.msra.mxu0 0.0
      %6249 = vmatprep.subr.mxu0 0.0
      %6250 = vmatpush1.msra.mxu0 0.0
      %6251 = vmatprep.subr.mxu0 0.0
      %6252 = vmatpush1.msra.mxu0 0.0
      %6253 = vmatprep.subr.mxu0 0.0
      %6254 = vmatpush1.msra.mxu0 0.0
      %6255 = vmatprep.subr.mxu0 0.0
      %6256 = vmatpush1.msra.mxu0 0.0
      %6257 = vmatprep.subr.mxu0 0.0
      %6258 = vmatpush1.msra.mxu0 0.0
      %6259 = vmatprep.subr.mxu0 0.0
      %6260 = vmatpush1.msra.mxu0 0.0
      %6261 = vmatprep.subr.mxu0 0.0
      %6262 = vmatpush1.msra.mxu0 0.0
      %6263 = vmatprep.subr.mxu0 0.0
      %6264 = vmatpush1.msra.mxu0 0.0
      %6265 = vmatprep.subr.mxu0 0.0
      %6266 = vmatpush1.msra.mxu0 0.0
      %6267 = vmatprep.subr.mxu0 0.0
      %6268 = vmatpush1.msra.mxu0 0.0
      %6269 = vmatprep.subr.mxu0 0.0
      %6270 = vmatpush1.msra.mxu0 0.0
      %6271 = vmatprep.mubr.f32.mxu0 0.0
      %6272 = vmatmul.mubr.f32.gmra.mrb[0].mxu0 %v6141
      %v6273 = vpop.f32.mrb[0].mxu0
      %v6274 = vadd.f32 0.0, %v6273
      %v6275 = vpop.f32.mrb[0].mxu0
      %v6276 = vadd.f32 0.0, %v6275
      %6277 = vdwg.mxu0
      %6278 = vmatprep.subr.mxu0 %v6146
      %6279 = vmatpush1.msra.mxu0 %v6145
      %6280 = vmatprep.subr.mxu0 %v6150
      %6281 = vmatpush1.msra.mxu0 %v6149
      %6282 = vmatprep.subr.mxu0 %v6154
      %6283 = vmatpush1.msra.mxu0 %v6153
      %6284 = vmatprep.subr.mxu0 %v6158
      %6285 = vmatpush1.msra.mxu0 %v6157
      %6286 = vmatprep.subr.mxu0 %v6162
      %6287 = vmatpush1.msra.mxu0 %v6161
      %6288 = vmatprep.subr.mxu0 %v6166
      %6289 = vmatpush1.msra.mxu0 %v6165
      %6290 = vmatprep.subr.mxu0 %v6170
      %6291 = vmatpush1.msra.mxu0 %v6169
      %6292 = vmatprep.subr.mxu0 %v6174
      %6293 = vmatpush1.msra.mxu0 %v6173
      %6294 = vmatprep.subr.mxu0 %v6178
      %6295 = vmatpush1.msra.mxu0 %v6177
      %6296 = vmatprep.subr.mxu0 %v6182
      %6297 = vmatpush1.msra.mxu0 %v6181
      %6298 = vmatprep.subr.mxu0 %v6186
      %6299 = vmatpush1.msra.mxu0 %v6185
      %6300 = vmatprep.subr.mxu0 %v6190
      %6301 = vmatpush1.msra.mxu0 %v6189
      %6302 = vmatprep.subr.mxu0 %v6194
      %6303 = vmatpush1.msra.mxu0 %v6193
      %6304 = vmatprep.subr.mxu0 %v6198
      %6305 = vmatpush1.msra.mxu0 %v6197
      %6306 = vmatprep.subr.mxu0 %v6202
      %6307 = vmatpush1.msra.mxu0 %v6201
      %6308 = vmatprep.subr.mxu0 %v6206
      %6309 = vmatpush1.msra.mxu0 %v6205
      %6310 = vmatprep.subr.mxu0 0.0
      %6311 = vmatpush1.msra.mxu0 0.0
      %6312 = vmatprep.subr.mxu0 0.0
      %6313 = vmatpush1.msra.mxu0 0.0
      %6314 = vmatprep.subr.mxu0 0.0
      %6315 = vmatpush1.msra.mxu0 0.0
      %6316 = vmatprep.subr.mxu0 0.0
      %6317 = vmatpush1.msra.mxu0 0.0
      %6318 = vmatprep.subr.mxu0 0.0
      %6319 = vmatpush1.msra.mxu0 0.0
      %6320 = vmatprep.subr.mxu0 0.0
      %6321 = vmatpush1.msra.mxu0 0.0
      %6322 = vmatprep.subr.mxu0 0.0
      %6323 = vmatpush1.msra.mxu0 0.0
      %6324 = vmatprep.subr.mxu0 0.0
      %6325 = vmatpush1.msra.mxu0 0.0
      %6326 = vmatprep.subr.mxu0 0.0
      %6327 = vmatpush1.msra.mxu0 0.0
      %6328 = vmatprep.subr.mxu0 0.0
      %6329 = vmatpush1.msra.mxu0 0.0
      %6330 = vmatprep.subr.mxu0 0.0
      %6331 = vmatpush1.msra.mxu0 0.0
      %6332 = vmatprep.subr.mxu0 0.0
      %6333 = vmatpush1.msra.mxu0 0.0
      %6334 = vmatprep.subr.mxu0 0.0
      %6335 = vmatpush1.msra.mxu0 0.0
      %6336 = vmatprep.subr.mxu0 0.0
      %6337 = vmatpush1.msra.mxu0 0.0
      %6338 = vmatprep.subr.mxu0 0.0
      %6339 = vmatpush1.msra.mxu0 0.0
      %6340 = vmatprep.subr.mxu0 0.0
      %6341 = vmatpush1.msra.mxu0 0.0
      %6342 = vmatprep.mubr.f32.mxu0 0.0
      %6343 = vmatmul.mubr.f32.gmra.mrb[0].mxu0 %v6141
      %v6344 = vpop.f32.mrb[0].mxu0
      %v6345 = vadd.f32 0.0, %v6344
      %v6346 = vpop.f32.mrb[0].mxu0
      %v6347 = vadd.f32 0.0, %v6346
      %6348 = vdwg.mxu0
      %v6349 = vadd.f32 %v6066, %v6274
      %v6350 = vadd.f32 %v6068, %v6276
      %v6351 = vadd.f32 %v6137, %v6345
      %v6352 = vadd.f32 %v6139, %v6347
      %v6353 = vld [vmem:[#allocation3 + $0x3] sm:$0x1]
      %s6354 = scalar_lea.vmem %s6, 1536
      %v6355 = vld [vmem:[%s6354] sm:$0xff]
      %v6356 = vld [vmem:[%s6354 + $0x8] sm:$0xff]
      %v6357 = vld [vmem:[%s6354 + $0x10] sm:$0xff]
      %v6358 = vld [vmem:[%s6354 + $0x18] sm:$0xff]
      %v6359 = vld [vmem:[%s6354 + $0x20] sm:$0xff]
      %v6360 = vld [vmem:[%s6354 + $0x28] sm:$0xff]
      %v6361 = vld [vmem:[%s6354 + $0x30] sm:$0xff]
      %v6362 = vld [vmem:[%s6354 + $0x38] sm:$0xff]
      %v6363 = vld [vmem:[%s6354 + $0x40] sm:$0xff]
      %v6364 = vld [vmem:[%s6354 + $0x48] sm:$0xff]
      %v6365 = vld [vmem:[%s6354 + $0x50] sm:$0xff]
      %v6366 = vld [vmem:[%s6354 + $0x58] sm:$0xff]
      %v6367 = vld [vmem:[%s6354 + $0x60] sm:$0xff]
      %v6368 = vld [vmem:[%s6354 + $0x68] sm:$0xff]
      %v6369 = vld [vmem:[%s6354 + $0x70] sm:$0xff]
      %v6370 = vld [vmem:[%s6354 + $0x78] sm:$0xff]
      %v6371 = vld [vmem:[%s6354 + $0x80] sm:$0xff]
      %v6372 = vld [vmem:[%s6354 + $0x88] sm:$0xff]
      %v6373 = vld [vmem:[%s6354 + $0x90] sm:$0xff]
      %v6374 = vld [vmem:[%s6354 + $0x98] sm:$0xff]
      %v6375 = vld [vmem:[%s6354 + $0xa0] sm:$0xff]
      %v6376 = vld [vmem:[%s6354 + $0xa8] sm:$0xff]
      %v6377 = vld [vmem:[%s6354 + $0xb0] sm:$0xff]
      %v6378 = vld [vmem:[%s6354 + $0xb8] sm:$0xff]
      %v6379 = vld [vmem:[%s6354 + $0xc0] sm:$0xff]
      %v6380 = vld [vmem:[%s6354 + $0xc8] sm:$0xff]
      %v6381 = vld [vmem:[%s6354 + $0xd0] sm:$0xff]
      %v6382 = vld [vmem:[%s6354 + $0xd8] sm:$0xff]
      %v6383 = vld [vmem:[%s6354 + $0xe0] sm:$0xff]
      %v6384 = vld [vmem:[%s6354 + $0xe8] sm:$0xff]
      %v6385 = vld [vmem:[%s6354 + $0xf0] sm:$0xff]
      %v6386 = vld [vmem:[%s6354 + $0xf8] sm:$0xff]
      %v6387 = vld [vmem:[%s6354 + $0x100] sm:$0xff]
      %v6388 = vld [vmem:[%s6354 + $0x108] sm:$0xff]
      %v6389 = vld [vmem:[%s6354 + $0x110] sm:$0xff]
      %v6390 = vld [vmem:[%s6354 + $0x118] sm:$0xff]
      %v6391 = vld [vmem:[%s6354 + $0x120] sm:$0xff]
      %v6392 = vld [vmem:[%s6354 + $0x128] sm:$0xff]
      %v6393 = vld [vmem:[%s6354 + $0x130] sm:$0xff]
      %v6394 = vld [vmem:[%s6354 + $0x138] sm:$0xff]
      %v6395 = vld [vmem:[%s6354 + $0x140] sm:$0xff]
      %v6396 = vld [vmem:[%s6354 + $0x148] sm:$0xff]
      %v6397 = vld [vmem:[%s6354 + $0x150] sm:$0xff]
      %v6398 = vld [vmem:[%s6354 + $0x158] sm:$0xff]
      %v6399 = vld [vmem:[%s6354 + $0x160] sm:$0xff]
      %v6400 = vld [vmem:[%s6354 + $0x168] sm:$0xff]
      %v6401 = vld [vmem:[%s6354 + $0x170] sm:$0xff]
      %v6402 = vld [vmem:[%s6354 + $0x178] sm:$0xff]
      %v6403 = vld [vmem:[%s6354 + $0x180] sm:$0xff]
      %v6404 = vld [vmem:[%s6354 + $0x188] sm:$0xff]
      %v6405 = vld [vmem:[%s6354 + $0x190] sm:$0xff]
      %v6406 = vld [vmem:[%s6354 + $0x198] sm:$0xff]
      %v6407 = vld [vmem:[%s6354 + $0x1a0] sm:$0xff]
      %v6408 = vld [vmem:[%s6354 + $0x1a8] sm:$0xff]
      %v6409 = vld [vmem:[%s6354 + $0x1b0] sm:$0xff]
      %v6410 = vld [vmem:[%s6354 + $0x1b8] sm:$0xff]
      %v6411 = vld [vmem:[%s6354 + $0x1c0] sm:$0xff]
      %v6412 = vld [vmem:[%s6354 + $0x1c8] sm:$0xff]
      %v6413 = vld [vmem:[%s6354 + $0x1d0] sm:$0xff]
      %v6414 = vld [vmem:[%s6354 + $0x1d8] sm:$0xff]
      %v6415 = vld [vmem:[%s6354 + $0x1e0] sm:$0xff]
      %v6416 = vld [vmem:[%s6354 + $0x1e8] sm:$0xff]
      %v6417 = vld [vmem:[%s6354 + $0x1f0] sm:$0xff]
      %v6418 = vld [vmem:[%s6354 + $0x1f8] sm:$0xff]
      %6419 = vmatprep.subr.mxu0 %v6356
      %6420 = vmatpush1.msra.mxu0 %v6355
      %6421 = vmatprep.subr.mxu0 %v6360
      %6422 = vmatpush1.msra.mxu0 %v6359
      %6423 = vmatprep.subr.mxu0 %v6364
      %6424 = vmatpush1.msra.mxu0 %v6363
      %6425 = vmatprep.subr.mxu0 %v6368
      %6426 = vmatpush1.msra.mxu0 %v6367
      %6427 = vmatprep.subr.mxu0 %v6372
      %6428 = vmatpush1.msra.mxu0 %v6371
      %6429 = vmatprep.subr.mxu0 %v6376
      %6430 = vmatpush1.msra.mxu0 %v6375
      %6431 = vmatprep.subr.mxu0 %v6380
      %6432 = vmatpush1.msra.mxu0 %v6379
      %6433 = vmatprep.subr.mxu0 %v6384
      %6434 = vmatpush1.msra.mxu0 %v6383
      %6435 = vmatprep.subr.mxu0 %v6388
      %6436 = vmatpush1.msra.mxu0 %v6387
      %6437 = vmatprep.subr.mxu0 %v6392
      %6438 = vmatpush1.msra.mxu0 %v6391
      %6439 = vmatprep.subr.mxu0 %v6396
      %6440 = vmatpush1.msra.mxu0 %v6395
      %6441 = vmatprep.subr.mxu0 %v6400
      %6442 = vmatpush1.msra.mxu0 %v6399
      %6443 = vmatprep.subr.mxu0 %v6404
      %6444 = vmatpush1.msra.mxu0 %v6403
      %6445 = vmatprep.subr.mxu0 %v6408
      %6446 = vmatpush1.msra.mxu0 %v6407
      %6447 = vmatprep.subr.mxu0 %v6412
      %6448 = vmatpush1.msra.mxu0 %v6411
      %6449 = vmatprep.subr.mxu0 %v6416
      %6450 = vmatpush1.msra.mxu0 %v6415
      %6451 = vmatprep.subr.mxu0 0.0
      %6452 = vmatpush1.msra.mxu0 0.0
      %6453 = vmatprep.subr.mxu0 0.0
      %6454 = vmatpush1.msra.mxu0 0.0
      %6455 = vmatprep.subr.mxu0 0.0
      %6456 = vmatpush1.msra.mxu0 0.0
      %6457 = vmatprep.subr.mxu0 0.0
      %6458 = vmatpush1.msra.mxu0 0.0
      %6459 = vmatprep.subr.mxu0 0.0
      %6460 = vmatpush1.msra.mxu0 0.0
      %6461 = vmatprep.subr.mxu0 0.0
      %6462 = vmatpush1.msra.mxu0 0.0
      %6463 = vmatprep.subr.mxu0 0.0
      %6464 = vmatpush1.msra.mxu0 0.0
      %6465 = vmatprep.subr.mxu0 0.0
      %6466 = vmatpush1.msra.mxu0 0.0
      %6467 = vmatprep.subr.mxu0 0.0
      %6468 = vmatpush1.msra.mxu0 0.0
      %6469 = vmatprep.subr.mxu0 0.0
      %6470 = vmatpush1.msra.mxu0 0.0
      %6471 = vmatprep.subr.mxu0 0.0
      %6472 = vmatpush1.msra.mxu0 0.0
      %6473 = vmatprep.subr.mxu0 0.0
      %6474 = vmatpush1.msra.mxu0 0.0
      %6475 = vmatprep.subr.mxu0 0.0
      %6476 = vmatpush1.msra.mxu0 0.0
      %6477 = vmatprep.subr.mxu0 0.0
      %6478 = vmatpush1.msra.mxu0 0.0
      %6479 = vmatprep.subr.mxu0 0.0
      %6480 = vmatpush1.msra.mxu0 0.0
      %6481 = vmatprep.subr.mxu0 0.0
      %6482 = vmatpush1.msra.mxu0 0.0
      %6483 = vmatprep.mubr.f32.mxu0 0.0
      %6484 = vmatmul.mubr.f32.gmra.mrb[0].mxu0 %v6353
      %v6485 = vpop.f32.mrb[0].mxu0
      %v6486 = vadd.f32 0.0, %v6485
      %v6487 = vpop.f32.mrb[0].mxu0
      %v6488 = vadd.f32 0.0, %v6487
      %6489 = vdwg.mxu0
      %6490 = vmatprep.subr.mxu0 %v6358
      %6491 = vmatpush1.msra.mxu0 %v6357
      %6492 = vmatprep.subr.mxu0 %v6362
      %6493 = vmatpush1.msra.mxu0 %v6361
      %6494 = vmatprep.subr.mxu0 %v6366
      %6495 = vmatpush1.msra.mxu0 %v6365
      %6496 = vmatprep.subr.mxu0 %v6370
      %6497 = vmatpush1.msra.mxu0 %v6369
      %6498 = vmatprep.subr.mxu0 %v6374
      %6499 = vmatpush1.msra.mxu0 %v6373
      %6500 = vmatprep.subr.mxu0 %v6378
      %6501 = vmatpush1.msra.mxu0 %v6377
      %6502 = vmatprep.subr.mxu0 %v6382
      %6503 = vmatpush1.msra.mxu0 %v6381
      %6504 = vmatprep.subr.mxu0 %v6386
      %6505 = vmatpush1.msra.mxu0 %v6385
      %6506 = vmatprep.subr.mxu0 %v6390
      %6507 = vmatpush1.msra.mxu0 %v6389
      %6508 = vmatprep.subr.mxu0 %v6394
      %6509 = vmatpush1.msra.mxu0 %v6393
      %6510 = vmatprep.subr.mxu0 %v6398
      %6511 = vmatpush1.msra.mxu0 %v6397
      %6512 = vmatprep.subr.mxu0 %v6402
      %6513 = vmatpush1.msra.mxu0 %v6401
      %6514 = vmatprep.subr.mxu0 %v6406
      %6515 = vmatpush1.msra.mxu0 %v6405
      %6516 = vmatprep.subr.mxu0 %v6410
      %6517 = vmatpush1.msra.mxu0 %v6409
      %6518 = vmatprep.subr.mxu0 %v6414
      %6519 = vmatpush1.msra.mxu0 %v6413
      %6520 = vmatprep.subr.mxu0 %v6418
      %6521 = vmatpush1.msra.mxu0 %v6417
      %6522 = vmatprep.subr.mxu0 0.0
      %6523 = vmatpush1.msra.mxu0 0.0
      %6524 = vmatprep.subr.mxu0 0.0
      %6525 = vmatpush1.msra.mxu0 0.0
      %6526 = vmatprep.subr.mxu0 0.0
      %6527 = vmatpush1.msra.mxu0 0.0
      %6528 = vmatprep.subr.mxu0 0.0
      %6529 = vmatpush1.msra.mxu0 0.0
      %6530 = vmatprep.subr.mxu0 0.0
      %6531 = vmatpush1.msra.mxu0 0.0
      %6532 = vmatprep.subr.mxu0 0.0
      %6533 = vmatpush1.msra.mxu0 0.0
      %6534 = vmatprep.subr.mxu0 0.0
      %6535 = vmatpush1.msra.mxu0 0.0
      %6536 = vmatprep.subr.mxu0 0.0
      %6537 = vmatpush1.msra.mxu0 0.0
      %6538 = vmatprep.subr.mxu0 0.0
      %6539 = vmatpush1.msra.mxu0 0.0
      %6540 = vmatprep.subr.mxu0 0.0
      %6541 = vmatpush1.msra.mxu0 0.0
      %6542 = vmatprep.subr.mxu0 0.0
      %6543 = vmatpush1.msra.mxu0 0.0
      %6544 = vmatprep.subr.mxu0 0.0
      %6545 = vmatpush1.msra.mxu0 0.0
      %6546 = vmatprep.subr.mxu0 0.0
      %6547 = vmatpush1.msra.mxu0 0.0
      %6548 = vmatprep.subr.mxu0 0.0
      %6549 = vmatpush1.msra.mxu0 0.0
      %6550 = vmatprep.subr.mxu0 0.0
      %6551 = vmatpush1.msra.mxu0 0.0
      %6552 = vmatprep.subr.mxu0 0.0
      %6553 = vmatpush1.msra.mxu0 0.0
      %6554 = vmatprep.mubr.f32.mxu0 0.0
      %6555 = vmatmul.mubr.f32.gmra.mrb[0].mxu0 %v6353
      %v6556 = vpop.f32.mrb[0].mxu0
      %v6557 = vadd.f32 0.0, %v6556
      %v6558 = vpop.f32.mrb[0].mxu0
      %v6559 = vadd.f32 0.0, %v6558
      %6560 = vdwg.mxu0
      %v6561 = vadd.f32 %v6349, %v6486
      %v6562 = vadd.f32 %v6350, %v6488
      %v6563 = vadd.f32 %v6351, %v6557
      %v6564 = vadd.f32 %v6352, %v6559
      %v6565 = vld [vmem:[#allocation3 + $0x4] sm:$0x1]
      %s6566 = scalar_lea.vmem %s6, 2048
      %v6567 = vld [vmem:[%s6566] sm:$0xff]
      %v6568 = vld [vmem:[%s6566 + $0x8] sm:$0xff]
      %v6569 = vld [vmem:[%s6566 + $0x10] sm:$0xff]
      %v6570 = vld [vmem:[%s6566 + $0x18] sm:$0xff]
      %v6571 = vld [vmem:[%s6566 + $0x20] sm:$0xff]
      %v6572 = vld [vmem:[%s6566 + $0x28] sm:$0xff]
      %v6573 = vld [vmem:[%s6566 + $0x30] sm:$0xff]
      %v6574 = vld [vmem:[%s6566 + $0x38] sm:$0xff]
      %v6575 = vld [vmem:[%s6566 + $0x40] sm:$0xff]
      %v6576 = vld [vmem:[%s6566 + $0x48] sm:$0xff]
      %v6577 = vld [vmem:[%s6566 + $0x50] sm:$0xff]
      %v6578 = vld [vmem:[%s6566 + $0x58] sm:$0xff]
      %v6579 = vld [vmem:[%s6566 + $0x60] sm:$0xff]
      %v6580 = vld [vmem:[%s6566 + $0x68] sm:$0xff]
      %v6581 = vld [vmem:[%s6566 + $0x70] sm:$0xff]
      %v6582 = vld [vmem:[%s6566 + $0x78] sm:$0xff]
      %v6583 = vld [vmem:[%s6566 + $0x80] sm:$0xff]
      %v6584 = vld [vmem:[%s6566 + $0x88] sm:$0xff]
      %v6585 = vld [vmem:[%s6566 + $0x90] sm:$0xff]
      %v6586 = vld [vmem:[%s6566 + $0x98] sm:$0xff]
      %v6587 = vld [vmem:[%s6566 + $0xa0] sm:$0xff]
      %v6588 = vld [vmem:[%s6566 + $0xa8] sm:$0xff]
      %v6589 = vld [vmem:[%s6566 + $0xb0] sm:$0xff]
      %v6590 = vld [vmem:[%s6566 + $0xb8] sm:$0xff]
      %v6591 = vld [vmem:[%s6566 + $0xc0] sm:$0xff]
      %v6592 = vld [vmem:[%s6566 + $0xc8] sm:$0xff]
      %v6593 = vld [vmem:[%s6566 + $0xd0] sm:$0xff]
      %v6594 = vld [vmem:[%s6566 + $0xd8] sm:$0xff]
      %v6595 = vld [vmem:[%s6566 + $0xe0] sm:$0xff]
      %v6596 = vld [vmem:[%s6566 + $0xe8] sm:$0xff]
      %v6597 = vld [vmem:[%s6566 + $0xf0] sm:$0xff]
      %v6598 = vld [vmem:[%s6566 + $0xf8] sm:$0xff]
      %v6599 = vld [vmem:[%s6566 + $0x100] sm:$0xff]
      %v6600 = vld [vmem:[%s6566 + $0x108] sm:$0xff]
      %v6601 = vld [vmem:[%s6566 + $0x110] sm:$0xff]
      %v6602 = vld [vmem:[%s6566 + $0x118] sm:$0xff]
      %v6603 = vld [vmem:[%s6566 + $0x120] sm:$0xff]
      %v6604 = vld [vmem:[%s6566 + $0x128] sm:$0xff]
      %v6605 = vld [vmem:[%s6566 + $0x130] sm:$0xff]
      %v6606 = vld [vmem:[%s6566 + $0x138] sm:$0xff]
      %v6607 = vld [vmem:[%s6566 + $0x140] sm:$0xff]
      %v6608 = vld [vmem:[%s6566 + $0x148] sm:$0xff]
      %v6609 = vld [vmem:[%s6566 + $0x150] sm:$0xff]
      %v6610 = vld [vmem:[%s6566 + $0x158] sm:$0xff]
      %v6611 = vld [vmem:[%s6566 + $0x160] sm:$0xff]
      %v6612 = vld [vmem:[%s6566 + $0x168] sm:$0xff]
      %v6613 = vld [vmem:[%s6566 + $0x170] sm:$0xff]
      %v6614 = vld [vmem:[%s6566 + $0x178] sm:$0xff]
      %v6615 = vld [vmem:[%s6566 + $0x180] sm:$0xff]
      %v6616 = vld [vmem:[%s6566 + $0x188] sm:$0xff]
      %v6617 = vld [vmem:[%s6566 + $0x190] sm:$0xff]
      %v6618 = vld [vmem:[%s6566 + $0x198] sm:$0xff]
      %v6619 = vld [vmem:[%s6566 + $0x1a0] sm:$0xff]
      %v6620 = vld [vmem:[%s6566 + $0x1a8] sm:$0xff]
      %v6621 = vld [vmem:[%s6566 + $0x1b0] sm:$0xff]
      %v6622 = vld [vmem:[%s6566 + $0x1b8] sm:$0xff]
      %v6623 = vld [vmem:[%s6566 + $0x1c0] sm:$0xff]
      %v6624 = vld [vmem:[%s6566 + $0x1c8] sm:$0xff]
      %v6625 = vld [vmem:[%s6566 + $0x1d0] sm:$0xff]
      %v6626 = vld [vmem:[%s6566 + $0x1d8] sm:$0xff]
      %v6627 = vld [vmem:[%s6566 + $0x1e0] sm:$0xff]
      %v6628 = vld [vmem:[%s6566 + $0x1e8] sm:$0xff]
      %v6629 = vld [vmem:[%s6566 + $0x1f0] sm:$0xff]
      %v6630 = vld [vmem:[%s6566 + $0x1f8] sm:$0xff]
      %6631 = vmatprep.subr.mxu0 %v6568
      %6632 = vmatpush1.msra.mxu0 %v6567
      %6633 = vmatprep.subr.mxu0 %v6572
      %6634 = vmatpush1.msra.mxu0 %v6571
      %6635 = vmatprep.subr.mxu0 %v6576
      %6636 = vmatpush1.msra.mxu0 %v6575
      %6637 = vmatprep.subr.mxu0 %v6580
      %6638 = vmatpush1.msra.mxu0 %v6579
      %6639 = vmatprep.subr.mxu0 %v6584
      %6640 = vmatpush1.msra.mxu0 %v6583
      %6641 = vmatprep.subr.mxu0 %v6588
      %6642 = vmatpush1.msra.mxu0 %v6587
      %6643 = vmatprep.subr.mxu0 %v6592
      %6644 = vmatpush1.msra.mxu0 %v6591
      %6645 = vmatprep.subr.mxu0 %v6596
      %6646 = vmatpush1.msra.mxu0 %v6595
      %6647 = vmatprep.subr.mxu0 %v6600
      %6648 = vmatpush1.msra.mxu0 %v6599
      %6649 = vmatprep.subr.mxu0 %v6604
      %6650 = vmatpush1.msra.mxu0 %v6603
      %6651 = vmatprep.subr.mxu0 %v6608
      %6652 = vmatpush1.msra.mxu0 %v6607
      %6653 = vmatprep.subr.mxu0 %v6612
      %6654 = vmatpush1.msra.mxu0 %v6611
      %6655 = vmatprep.subr.mxu0 %v6616
      %6656 = vmatpush1.msra.mxu0 %v6615
      %6657 = vmatprep.subr.mxu0 %v6620
      %6658 = vmatpush1.msra.mxu0 %v6619
      %6659 = vmatprep.subr.mxu0 %v6624
      %6660 = vmatpush1.msra.mxu0 %v6623
      %6661 = vmatprep.subr.mxu0 %v6628
      %6662 = vmatpush1.msra.mxu0 %v6627
      %6663 = vmatprep.subr.mxu0 0.0
      %6664 = vmatpush1.msra.mxu0 0.0
      %6665 = vmatprep.subr.mxu0 0.0
      %6666 = vmatpush1.msra.mxu0 0.0
      %6667 = vmatprep.subr.mxu0 0.0
      %6668 = vmatpush1.msra.mxu0 0.0
      %6669 = vmatprep.subr.mxu0 0.0
      %6670 = vmatpush1.msra.mxu0 0.0
      %6671 = vmatprep.subr.mxu0 0.0
      %6672 = vmatpush1.msra.mxu0 0.0
      %6673 = vmatprep.subr.mxu0 0.0
      %6674 = vmatpush1.msra.mxu0 0.0
      %6675 = vmatprep.subr.mxu0 0.0
      %6676 = vmatpush1.msra.mxu0 0.0
      %6677 = vmatprep.subr.mxu0 0.0
      %6678 = vmatpush1.msra.mxu0 0.0
      %6679 = vmatprep.subr.mxu0 0.0
      %6680 = vmatpush1.msra.mxu0 0.0
      %6681 = vmatprep.subr.mxu0 0.0
      %6682 = vmatpush1.msra.mxu0 0.0
      %6683 = vmatprep.subr.mxu0 0.0
      %6684 = vmatpush1.msra.mxu0 0.0
      %6685 = vmatprep.subr.mxu0 0.0
      %6686 = vmatpush1.msra.mxu0 0.0
      %6687 = vmatprep.subr.mxu0 0.0
      %6688 = vmatpush1.msra.mxu0 0.0
      %6689 = vmatprep.subr.mxu0 0.0
      %6690 = vmatpush1.msra.mxu0 0.0
      %6691 = vmatprep.subr.mxu0 0.0
      %6692 = vmatpush1.msra.mxu0 0.0
      %6693 = vmatprep.subr.mxu0 0.0
      %6694 = vmatpush1.msra.mxu0 0.0
      %6695 = vmatprep.mubr.f32.mxu0 0.0
      %6696 = vmatmul.mubr.f32.gmra.mrb[0].mxu0 %v6565
      %v6697 = vpop.f32.mrb[0].mxu0
      %v6698 = vadd.f32 0.0, %v6697
      %v6699 = vpop.f32.mrb[0].mxu0
      %v6700 = vadd.f32 0.0, %v6699
      %6701 = vdwg.mxu0
      %6702 = vmatprep.subr.mxu0 %v6570
      %6703 = vmatpush1.msra.mxu0 %v6569
      %6704 = vmatprep.subr.mxu0 %v6574
      %6705 = vmatpush1.msra.mxu0 %v6573
      %6706 = vmatprep.subr.mxu0 %v6578
      %6707 = vmatpush1.msra.mxu0 %v6577
      %6708 = vmatprep.subr.mxu0 %v6582
      %6709 = vmatpush1.msra.mxu0 %v6581
      %6710 = vmatprep.subr.mxu0 %v6586
      %6711 = vmatpush1.msra.mxu0 %v6585
      %6712 = vmatprep.subr.mxu0 %v6590
      %6713 = vmatpush1.msra.mxu0 %v6589
      %6714 = vmatprep.subr.mxu0 %v6594
      %6715 = vmatpush1.msra.mxu0 %v6593
      %6716 = vmatprep.subr.mxu0 %v6598
      %6717 = vmatpush1.msra.mxu0 %v6597
      %6718 = vmatprep.subr.mxu0 %v6602
      %6719 = vmatpush1.msra.mxu0 %v6601
      %6720 = vmatprep.subr.mxu0 %v6606
      %6721 = vmatpush1.msra.mxu0 %v6605
      %6722 = vmatprep.subr.mxu0 %v6610
      %6723 = vmatpush1.msra.mxu0 %v6609
      %6724 = vmatprep.subr.mxu0 %v6614
      %6725 = vmatpush1.msra.mxu0 %v6613
      %6726 = vmatprep.subr.mxu0 %v6618
      %6727 = vmatpush1.msra.mxu0 %v6617
      %6728 = vmatprep.subr.mxu0 %v6622
      %6729 = vmatpush1.msra.mxu0 %v6621
      %6730 = vmatprep.subr.mxu0 %v6626
      %6731 = vmatpush1.msra.mxu0 %v6625
      %6732 = vmatprep.subr.mxu0 %v6630
      %6733 = vmatpush1.msra.mxu0 %v6629
      %6734 = vmatprep.subr.mxu0 0.0
      %6735 = vmatpush1.msra.mxu0 0.0
      %6736 = vmatprep.subr.mxu0 0.0
      %6737 = vmatpush1.msra.mxu0 0.0
      %6738 = vmatprep.subr.mxu0 0.0
      %6739 = vmatpush1.msra.mxu0 0.0
      %6740 = vmatprep.subr.mxu0 0.0
      %6741 = vmatpush1.msra.mxu0 0.0
      %6742 = vmatprep.subr.mxu0 0.0
      %6743 = vmatpush1.msra.mxu0 0.0
      %6744 = vmatprep.subr.mxu0 0.0
      %6745 = vmatpush1.msra.mxu0 0.0
      %6746 = vmatprep.subr.mxu0 0.0
      %6747 = vmatpush1.msra.mxu0 0.0
      %6748 = vmatprep.subr.mxu0 0.0
      %6749 = vmatpush1.msra.mxu0 0.0
      %6750 = vmatprep.subr.mxu0 0.0
      %6751 = vmatpush1.msra.mxu0 0.0
      %6752 = vmatprep.subr.mxu0 0.0
      %6753 = vmatpush1.msra.mxu0 0.0
      %6754 = vmatprep.subr.mxu0 0.0
      %6755 = vmatpush1.msra.mxu0 0.0
      %6756 = vmatprep.subr.mxu0 0.0
      %6757 = vmatpush1.msra.mxu0 0.0
      %6758 = vmatprep.subr.mxu0 0.0
      %6759 = vmatpush1.msra.mxu0 0.0
      %6760 = vmatprep.subr.mxu0 0.0
      %6761 = vmatpush1.msra.mxu0 0.0
      %6762 = vmatprep.subr.mxu0 0.0
      %6763 = vmatpush1.msra.mxu0 0.0
      %6764 = vmatprep.subr.mxu0 0.0
      %6765 = vmatpush1.msra.mxu0 0.0
      %6766 = vmatprep.mubr.f32.mxu0 0.0
      %6767 = vmatmul.mubr.f32.gmra.mrb[0].mxu0 %v6565
      %v6768 = vpop.f32.mrb[0].mxu0
      %v6769 = vadd.f32 0.0, %v6768
      %v6770 = vpop.f32.mrb[0].mxu0
      %v6771 = vadd.f32 0.0, %v6770
      %6772 = vdwg.mxu0
      %v6773 = vadd.f32 %v6561, %v6698
      %v6774 = vadd.f32 %v6562, %v6700
      %v6775 = vadd.f32 %v6563, %v6769
      %v6776 = vadd.f32 %v6564, %v6771
      %v6777 = vld [vmem:[#allocation3 + $0x5] sm:$0x1]
      %s6778 = scalar_lea.vmem %s6, 2560
      %v6779 = vld [vmem:[%s6778] sm:$0xff]
      %v6780 = vld [vmem:[%s6778 + $0x8] sm:$0xff]
      %v6781 = vld [vmem:[%s6778 + $0x10] sm:$0xff]
      %v6782 = vld [vmem:[%s6778 + $0x18] sm:$0xff]
      %v6783 = vld [vmem:[%s6778 + $0x20] sm:$0xff]
      %v6784 = vld [vmem:[%s6778 + $0x28] sm:$0xff]
      %v6785 = vld [vmem:[%s6778 + $0x30] sm:$0xff]
      %v6786 = vld [vmem:[%s6778 + $0x38] sm:$0xff]
      %v6787 = vld [vmem:[%s6778 + $0x40] sm:$0xff]
      %v6788 = vld [vmem:[%s6778 + $0x48] sm:$0xff]
      %v6789 = vld [vmem:[%s6778 + $0x50] sm:$0xff]
      %v6790 = vld [vmem:[%s6778 + $0x58] sm:$0xff]
      %v6791 = vld [vmem:[%s6778 + $0x60] sm:$0xff]
      %v6792 = vld [vmem:[%s6778 + $0x68] sm:$0xff]
      %v6793 = vld [vmem:[%s6778 + $0x70] sm:$0xff]
      %v6794 = vld [vmem:[%s6778 + $0x78] sm:$0xff]
      %v6795 = vld [vmem:[%s6778 + $0x80] sm:$0xff]
      %v6796 = vld [vmem:[%s6778 + $0x88] sm:$0xff]
      %v6797 = vld [vmem:[%s6778 + $0x90] sm:$0xff]
      %v6798 = vld [vmem:[%s6778 + $0x98] sm:$0xff]
      %v6799 = vld [vmem:[%s6778 + $0xa0] sm:$0xff]
      %v6800 = vld [vmem:[%s6778 + $0xa8] sm:$0xff]
      %v6801 = vld [vmem:[%s6778 + $0xb0] sm:$0xff]
      %v6802 = vld [vmem:[%s6778 + $0xb8] sm:$0xff]
      %v6803 = vld [vmem:[%s6778 + $0xc0] sm:$0xff]
      %v6804 = vld [vmem:[%s6778 + $0xc8] sm:$0xff]
      %v6805 = vld [vmem:[%s6778 + $0xd0] sm:$0xff]
      %v6806 = vld [vmem:[%s6778 + $0xd8] sm:$0xff]
      %v6807 = vld [vmem:[%s6778 + $0xe0] sm:$0xff]
      %v6808 = vld [vmem:[%s6778 + $0xe8] sm:$0xff]
      %v6809 = vld [vmem:[%s6778 + $0xf0] sm:$0xff]
      %v6810 = vld [vmem:[%s6778 + $0xf8] sm:$0xff]
      %v6811 = vld [vmem:[%s6778 + $0x100] sm:$0xff]
      %v6812 = vld [vmem:[%s6778 + $0x108] sm:$0xff]
      %v6813 = vld [vmem:[%s6778 + $0x110] sm:$0xff]
      %v6814 = vld [vmem:[%s6778 + $0x118] sm:$0xff]
      %v6815 = vld [vmem:[%s6778 + $0x120] sm:$0xff]
      %v6816 = vld [vmem:[%s6778 + $0x128] sm:$0xff]
      %v6817 = vld [vmem:[%s6778 + $0x130] sm:$0xff]
      %v6818 = vld [vmem:[%s6778 + $0x138] sm:$0xff]
      %v6819 = vld [vmem:[%s6778 + $0x140] sm:$0xff]
      %v6820 = vld [vmem:[%s6778 + $0x148] sm:$0xff]
      %v6821 = vld [vmem:[%s6778 + $0x150] sm:$0xff]
      %v6822 = vld [vmem:[%s6778 + $0x158] sm:$0xff]
      %v6823 = vld [vmem:[%s6778 + $0x160] sm:$0xff]
      %v6824 = vld [vmem:[%s6778 + $0x168] sm:$0xff]
      %v6825 = vld [vmem:[%s6778 + $0x170] sm:$0xff]
      %v6826 = vld [vmem:[%s6778 + $0x178] sm:$0xff]
      %v6827 = vld [vmem:[%s6778 + $0x180] sm:$0xff]
      %v6828 = vld [vmem:[%s6778 + $0x188] sm:$0xff]
      %v6829 = vld [vmem:[%s6778 + $0x190] sm:$0xff]
      %v6830 = vld [vmem:[%s6778 + $0x198] sm:$0xff]
      %v6831 = vld [vmem:[%s6778 + $0x1a0] sm:$0xff]
      %v6832 = vld [vmem:[%s6778 + $0x1a8] sm:$0xff]
      %v6833 = vld [vmem:[%s6778 + $0x1b0] sm:$0xff]
      %v6834 = vld [vmem:[%s6778 + $0x1b8] sm:$0xff]
      %v6835 = vld [vmem:[%s6778 + $0x1c0] sm:$0xff]
      %v6836 = vld [vmem:[%s6778 + $0x1c8] sm:$0xff]
      %v6837 = vld [vmem:[%s6778 + $0x1d0] sm:$0xff]
      %v6838 = vld [vmem:[%s6778 + $0x1d8] sm:$0xff]
      %v6839 = vld [vmem:[%s6778 + $0x1e0] sm:$0xff]
      %v6840 = vld [vmem:[%s6778 + $0x1e8] sm:$0xff]
      %v6841 = vld [vmem:[%s6778 + $0x1f0] sm:$0xff]
      %v6842 = vld [vmem:[%s6778 + $0x1f8] sm:$0xff]
      %6843 = vmatprep.subr.mxu0 %v6780
      %6844 = vmatpush1.msra.mxu0 %v6779
      %6845 = vmatprep.subr.mxu0 %v6784
      %6846 = vmatpush1.msra.mxu0 %v6783
      %6847 = vmatprep.subr.mxu0 %v6788
      %6848 = vmatpush1.msra.mxu0 %v6787
      %6849 = vmatprep.subr.mxu0 %v6792
      %6850 = vmatpush1.msra.mxu0 %v6791
      %6851 = vmatprep.subr.mxu0 %v6796
      %6852 = vmatpush1.msra.mxu0 %v6795
      %6853 = vmatprep.subr.mxu0 %v6800
      %6854 = vmatpush1.msra.mxu0 %v6799
      %6855 = vmatprep.subr.mxu0 %v6804
      %6856 = vmatpush1.msra.mxu0 %v6803
      %6857 = vmatprep.subr.mxu0 %v6808
      %6858 = vmatpush1.msra.mxu0 %v6807
      %6859 = vmatprep.subr.mxu0 %v6812
      %6860 = vmatpush1.msra.mxu0 %v6811
      %6861 = vmatprep.subr.mxu0 %v6816
      %6862 = vmatpush1.msra.mxu0 %v6815
      %6863 = vmatprep.subr.mxu0 %v6820
      %6864 = vmatpush1.msra.mxu0 %v6819
      %6865 = vmatprep.subr.mxu0 %v6824
      %6866 = vmatpush1.msra.mxu0 %v6823
      %6867 = vmatprep.subr.mxu0 %v6828
      %6868 = vmatpush1.msra.mxu0 %v6827
      %6869 = vmatprep.subr.mxu0 %v6832
      %6870 = vmatpush1.msra.mxu0 %v6831
      %6871 = vmatprep.subr.mxu0 %v6836
      %6872 = vmatpush1.msra.mxu0 %v6835
      %6873 = vmatprep.subr.mxu0 %v6840
      %6874 = vmatpush1.msra.mxu0 %v6839
      %6875 = vmatprep.subr.mxu0 0.0
      %6876 = vmatpush1.msra.mxu0 0.0
      %6877 = vmatprep.subr.mxu0 0.0
      %6878 = vmatpush1.msra.mxu0 0.0
      %6879 = vmatprep.subr.mxu0 0.0
      %6880 = vmatpush1.msra.mxu0 0.0
      %6881 = vmatprep.subr.mxu0 0.0
      %6882 = vmatpush1.msra.mxu0 0.0
      %6883 = vmatprep.subr.mxu0 0.0
      %6884 = vmatpush1.msra.mxu0 0.0
      %6885 = vmatprep.subr.mxu0 0.0
      %6886 = vmatpush1.msra.mxu0 0.0
      %6887 = vmatprep.subr.mxu0 0.0
      %6888 = vmatpush1.msra.mxu0 0.0
      %6889 = vmatprep.subr.mxu0 0.0
      %6890 = vmatpush1.msra.mxu0 0.0
      %6891 = vmatprep.subr.mxu0 0.0
      %6892 = vmatpush1.msra.mxu0 0.0
      %6893 = vmatprep.subr.mxu0 0.0
      %6894 = vmatpush1.msra.mxu0 0.0
      %6895 = vmatprep.subr.mxu0 0.0
      %6896 = vmatpush1.msra.mxu0 0.0
      %6897 = vmatprep.subr.mxu0 0.0
      %6898 = vmatpush1.msra.mxu0 0.0
      %6899 = vmatprep.subr.mxu0 0.0
      %6900 = vmatpush1.msra.mxu0 0.0
      %6901 = vmatprep.subr.mxu0 0.0
      %6902 = vmatpush1.msra.mxu0 0.0
      %6903 = vmatprep.subr.mxu0 0.0
      %6904 = vmatpush1.msra.mxu0 0.0
      %6905 = vmatprep.subr.mxu0 0.0
      %6906 = vmatpush1.msra.mxu0 0.0
      %6907 = vmatprep.mubr.f32.mxu0 0.0
      %6908 = vmatmul.mubr.f32.gmra.mrb[0].mxu0 %v6777
      %v6909 = vpop.f32.mrb[0].mxu0
      %v6910 = vadd.f32 0.0, %v6909
      %v6911 = vpop.f32.mrb[0].mxu0
      %v6912 = vadd.f32 0.0, %v6911
      %6913 = vdwg.mxu0
      %6914 = vmatprep.subr.mxu0 %v6782
      %6915 = vmatpush1.msra.mxu0 %v6781
      %6916 = vmatprep.subr.mxu0 %v6786
      %6917 = vmatpush1.msra.mxu0 %v6785
      %6918 = vmatprep.subr.mxu0 %v6790
      %6919 = vmatpush1.msra.mxu0 %v6789
      %6920 = vmatprep.subr.mxu0 %v6794
      %6921 = vmatpush1.msra.mxu0 %v6793
      %6922 = vmatprep.subr.mxu0 %v6798
      %6923 = vmatpush1.msra.mxu0 %v6797
      %6924 = vmatprep.subr.mxu0 %v6802
      %6925 = vmatpush1.msra.mxu0 %v6801
      %6926 = vmatprep.subr.mxu0 %v6806
      %6927 = vmatpush1.msra.mxu0 %v6805
      %6928 = vmatprep.subr.mxu0 %v6810
      %6929 = vmatpush1.msra.mxu0 %v6809
      %6930 = vmatprep.subr.mxu0 %v6814
      %6931 = vmatpush1.msra.mxu0 %v6813
      %6932 = vmatprep.subr.mxu0 %v6818
      %6933 = vmatpush1.msra.mxu0 %v6817
      %6934 = vmatprep.subr.mxu0 %v6822
      %6935 = vmatpush1.msra.mxu0 %v6821
      %6936 = vmatprep.subr.mxu0 %v6826
      %6937 = vmatpush1.msra.mxu0 %v6825
      %6938 = vmatprep.subr.mxu0 %v6830
      %6939 = vmatpush1.msra.mxu0 %v6829
      %6940 = vmatprep.subr.mxu0 %v6834
      %6941 = vmatpush1.msra.mxu0 %v6833
      %6942 = vmatprep.subr.mxu0 %v6838
      %6943 = vmatpush1.msra.mxu0 %v6837
      %6944 = vmatprep.subr.mxu0 %v6842
      %6945 = vmatpush1.msra.mxu0 %v6841
      %6946 = vmatprep.subr.mxu0 0.0
      %6947 = vmatpush1.msra.mxu0 0.0
      %6948 = vmatprep.subr.mxu0 0.0
      %6949 = vmatpush1.msra.mxu0 0.0
      %6950 = vmatprep.subr.mxu0 0.0
      %6951 = vmatpush1.msra.mxu0 0.0
      %6952 = vmatprep.subr.mxu0 0.0
      %6953 = vmatpush1.msra.mxu0 0.0
      %6954 = vmatprep.subr.mxu0 0.0
      %6955 = vmatpush1.msra.mxu0 0.0
      %6956 = vmatprep.subr.mxu0 0.0
      %6957 = vmatpush1.msra.mxu0 0.0
      %6958 = vmatprep.subr.mxu0 0.0
      %6959 = vmatpush1.msra.mxu0 0.0
      %6960 = vmatprep.subr.mxu0 0.0
      %6961 = vmatpush1.msra.mxu0 0.0
      %6962 = vmatprep.subr.mxu0 0.0
      %6963 = vmatpush1.msra.mxu0 0.0
      %6964 = vmatprep.subr.mxu0 0.0
      %6965 = vmatpush1.msra.mxu0 0.0
      %6966 = vmatprep.subr.mxu0 0.0
      %6967 = vmatpush1.msra.mxu0 0.0
      %6968 = vmatprep.subr.mxu0 0.0
      %6969 = vmatpush1.msra.mxu0 0.0
      %6970 = vmatprep.subr.mxu0 0.0
      %6971 = vmatpush1.msra.mxu0 0.0
      %6972 = vmatprep.subr.mxu0 0.0
      %6973 = vmatpush1.msra.mxu0 0.0
      %6974 = vmatprep.subr.mxu0 0.0
      %6975 = vmatpush1.msra.mxu0 0.0
      %6976 = vmatprep.subr.mxu0 0.0
      %6977 = vmatpush1.msra.mxu0 0.0
      %6978 = vmatprep.mubr.f32.mxu0 0.0
      %6979 = vmatmul.mubr.f32.gmra.mrb[0].mxu0 %v6777
      %v6980 = vpop.f32.mrb[0].mxu0
      %v6981 = vadd.f32 0.0, %v6980
      %v6982 = vpop.f32.mrb[0].mxu0
      %v6983 = vadd.f32 0.0, %v6982
      %6984 = vdwg.mxu0
      %v6985 = vadd.f32 %v6773, %v6910
      %v6986 = vadd.f32 %v6774, %v6912
      %v6987 = vadd.f32 %v6775, %v6981
      %v6988 = vadd.f32 %v6776, %v6983
      %v6989 = vld [vmem:[#allocation3 + $0x6] sm:$0x1]
      %s6990 = scalar_lea.vmem %s6, 3072
      %v6991 = vld [vmem:[%s6990] sm:$0xff]
      %v6992 = vld [vmem:[%s6990 + $0x8] sm:$0xff]
      %v6993 = vld [vmem:[%s6990 + $0x10] sm:$0xff]
      %v6994 = vld [vmem:[%s6990 + $0x18] sm:$0xff]
      %v6995 = vld [vmem:[%s6990 + $0x20] sm:$0xff]
      %v6996 = vld [vmem:[%s6990 + $0x28] sm:$0xff]
      %v6997 = vld [vmem:[%s6990 + $0x30] sm:$0xff]
      %v6998 = vld [vmem:[%s6990 + $0x38] sm:$0xff]
      %v6999 = vld [vmem:[%s6990 + $0x40] sm:$0xff]
      %v7000 = vld [vmem:[%s6990 + $0x48] sm:$0xff]
      %v7001 = vld [vmem:[%s6990 + $0x50] sm:$0xff]
      %v7002 = vld [vmem:[%s6990 + $0x58] sm:$0xff]
      %v7003 = vld [vmem:[%s6990 + $0x60] sm:$0xff]
      %v7004 = vld [vmem:[%s6990 + $0x68] sm:$0xff]
      %v7005 = vld [vmem:[%s6990 + $0x70] sm:$0xff]
      %v7006 = vld [vmem:[%s6990 + $0x78] sm:$0xff]
      %v7007 = vld [vmem:[%s6990 + $0x80] sm:$0xff]
      %v7008 = vld [vmem:[%s6990 + $0x88] sm:$0xff]
      %v7009 = vld [vmem:[%s6990 + $0x90] sm:$0xff]
      %v7010 = vld [vmem:[%s6990 + $0x98] sm:$0xff]
      %v7011 = vld [vmem:[%s6990 + $0xa0] sm:$0xff]
      %v7012 = vld [vmem:[%s6990 + $0xa8] sm:$0xff]
      %v7013 = vld [vmem:[%s6990 + $0xb0] sm:$0xff]
      %v7014 = vld [vmem:[%s6990 + $0xb8] sm:$0xff]
      %v7015 = vld [vmem:[%s6990 + $0xc0] sm:$0xff]
      %v7016 = vld [vmem:[%s6990 + $0xc8] sm:$0xff]
      %v7017 = vld [vmem:[%s6990 + $0xd0] sm:$0xff]
      %v7018 = vld [vmem:[%s6990 + $0xd8] sm:$0xff]
      %v7019 = vld [vmem:[%s6990 + $0xe0] sm:$0xff]
      %v7020 = vld [vmem:[%s6990 + $0xe8] sm:$0xff]
      %v7021 = vld [vmem:[%s6990 + $0xf0] sm:$0xff]
      %v7022 = vld [vmem:[%s6990 + $0xf8] sm:$0xff]
      %v7023 = vld [vmem:[%s6990 + $0x100] sm:$0xff]
      %v7024 = vld [vmem:[%s6990 + $0x108] sm:$0xff]
      %v7025 = vld [vmem:[%s6990 + $0x110] sm:$0xff]
      %v7026 = vld [vmem:[%s6990 + $0x118] sm:$0xff]
      %v7027 = vld [vmem:[%s6990 + $0x120] sm:$0xff]
      %v7028 = vld [vmem:[%s6990 + $0x128] sm:$0xff]
      %v7029 = vld [vmem:[%s6990 + $0x130] sm:$0xff]
      %v7030 = vld [vmem:[%s6990 + $0x138] sm:$0xff]
      %v7031 = vld [vmem:[%s6990 + $0x140] sm:$0xff]
      %v7032 = vld [vmem:[%s6990 + $0x148] sm:$0xff]
      %v7033 = vld [vmem:[%s6990 + $0x150] sm:$0xff]
      %v7034 = vld [vmem:[%s6990 + $0x158] sm:$0xff]
      %v7035 = vld [vmem:[%s6990 + $0x160] sm:$0xff]
      %v7036 = vld [vmem:[%s6990 + $0x168] sm:$0xff]
      %v7037 = vld [vmem:[%s6990 + $0x170] sm:$0xff]
      %v7038 = vld [vmem:[%s6990 + $0x178] sm:$0xff]
      %v7039 = vld [vmem:[%s6990 + $0x180] sm:$0xff]
      %v7040 = vld [vmem:[%s6990 + $0x188] sm:$0xff]
      %v7041 = vld [vmem:[%s6990 + $0x190] sm:$0xff]
      %v7042 = vld [vmem:[%s6990 + $0x198] sm:$0xff]
      %v7043 = vld [vmem:[%s6990 + $0x1a0] sm:$0xff]
      %v7044 = vld [vmem:[%s6990 + $0x1a8] sm:$0xff]
      %v7045 = vld [vmem:[%s6990 + $0x1b0] sm:$0xff]
      %v7046 = vld [vmem:[%s6990 + $0x1b8] sm:$0xff]
      %v7047 = vld [vmem:[%s6990 + $0x1c0] sm:$0xff]
      %v7048 = vld [vmem:[%s6990 + $0x1c8] sm:$0xff]
      %v7049 = vld [vmem:[%s6990 + $0x1d0] sm:$0xff]
      %v7050 = vld [vmem:[%s6990 + $0x1d8] sm:$0xff]
      %v7051 = vld [vmem:[%s6990 + $0x1e0] sm:$0xff]
      %v7052 = vld [vmem:[%s6990 + $0x1e8] sm:$0xff]
      %v7053 = vld [vmem:[%s6990 + $0x1f0] sm:$0xff]
      %v7054 = vld [vmem:[%s6990 + $0x1f8] sm:$0xff]
      %7055 = vmatprep.subr.mxu0 %v6992
      %7056 = vmatpush1.msra.mxu0 %v6991
      %7057 = vmatprep.subr.mxu0 %v6996
      %7058 = vmatpush1.msra.mxu0 %v6995
      %7059 = vmatprep.subr.mxu0 %v7000
      %7060 = vmatpush1.msra.mxu0 %v6999
      %7061 = vmatprep.subr.mxu0 %v7004
      %7062 = vmatpush1.msra.mxu0 %v7003
      %7063 = vmatprep.subr.mxu0 %v7008
      %7064 = vmatpush1.msra.mxu0 %v7007
      %7065 = vmatprep.subr.mxu0 %v7012
      %7066 = vmatpush1.msra.mxu0 %v7011
      %7067 = vmatprep.subr.mxu0 %v7016
      %7068 = vmatpush1.msra.mxu0 %v7015
      %7069 = vmatprep.subr.mxu0 %v7020
      %7070 = vmatpush1.msra.mxu0 %v7019
      %7071 = vmatprep.subr.mxu0 %v7024
      %7072 = vmatpush1.msra.mxu0 %v7023
      %7073 = vmatprep.subr.mxu0 %v7028
      %7074 = vmatpush1.msra.mxu0 %v7027
      %7075 = vmatprep.subr.mxu0 %v7032
      %7076 = vmatpush1.msra.mxu0 %v7031
      %7077 = vmatprep.subr.mxu0 %v7036
      %7078 = vmatpush1.msra.mxu0 %v7035
      %7079 = vmatprep.subr.mxu0 %v7040
      %7080 = vmatpush1.msra.mxu0 %v7039
      %7081 = vmatprep.subr.mxu0 %v7044
      %7082 = vmatpush1.msra.mxu0 %v7043
      %7083 = vmatprep.subr.mxu0 %v7048
      %7084 = vmatpush1.msra.mxu0 %v7047
      %7085 = vmatprep.subr.mxu0 %v7052
      %7086 = vmatpush1.msra.mxu0 %v7051
      %7087 = vmatprep.subr.mxu0 0.0
      %7088 = vmatpush1.msra.mxu0 0.0
      %7089 = vmatprep.subr.mxu0 0.0
      %7090 = vmatpush1.msra.mxu0 0.0
      %7091 = vmatprep.subr.mxu0 0.0
      %7092 = vmatpush1.msra.mxu0 0.0
      %7093 = vmatprep.subr.mxu0 0.0
      %7094 = vmatpush1.msra.mxu0 0.0
      %7095 = vmatprep.subr.mxu0 0.0
      %7096 = vmatpush1.msra.mxu0 0.0
      %7097 = vmatprep.subr.mxu0 0.0
      %7098 = vmatpush1.msra.mxu0 0.0
      %7099 = vmatprep.subr.mxu0 0.0
      %7100 = vmatpush1.msra.mxu0 0.0
      %7101 = vmatprep.subr.mxu0 0.0
      %7102 = vmatpush1.msra.mxu0 0.0
      %7103 = vmatprep.subr.mxu0 0.0
      %7104 = vmatpush1.msra.mxu0 0.0
      %7105 = vmatprep.subr.mxu0 0.0
      %7106 = vmatpush1.msra.mxu0 0.0
      %7107 = vmatprep.subr.mxu0 0.0
      %7108 = vmatpush1.msra.mxu0 0.0
      %7109 = vmatprep.subr.mxu0 0.0
      %7110 = vmatpush1.msra.mxu0 0.0
      %7111 = vmatprep.subr.mxu0 0.0
      %7112 = vmatpush1.msra.mxu0 0.0
      %7113 = vmatprep.subr.mxu0 0.0
      %7114 = vmatpush1.msra.mxu0 0.0
      %7115 = vmatprep.subr.mxu0 0.0
      %7116 = vmatpush1.msra.mxu0 0.0
      %7117 = vmatprep.subr.mxu0 0.0
      %7118 = vmatpush1.msra.mxu0 0.0
      %7119 = vmatprep.mubr.f32.mxu0 0.0
      %7120 = vmatmul.mubr.f32.gmra.mrb[0].mxu0 %v6989
      %v7121 = vpop.f32.mrb[0].mxu0
      %v7122 = vadd.f32 0.0, %v7121
      %v7123 = vpop.f32.mrb[0].mxu0
      %v7124 = vadd.f32 0.0, %v7123
      %7125 = vdwg.mxu0
      %7126 = vmatprep.subr.mxu0 %v6994
      %7127 = vmatpush1.msra.mxu0 %v6993
      %7128 = vmatprep.subr.mxu0 %v6998
      %7129 = vmatpush1.msra.mxu0 %v6997
      %7130 = vmatprep.subr.mxu0 %v7002
      %7131 = vmatpush1.msra.mxu0 %v7001
      %7132 = vmatprep.subr.mxu0 %v7006
      %7133 = vmatpush1.msra.mxu0 %v7005
      %7134 = vmatprep.subr.mxu0 %v7010
      %7135 = vmatpush1.msra.mxu0 %v7009
      %7136 = vmatprep.subr.mxu0 %v7014
      %7137 = vmatpush1.msra.mxu0 %v7013
      %7138 = vmatprep.subr.mxu0 %v7018
      %7139 = vmatpush1.msra.mxu0 %v7017
      %7140 = vmatprep.subr.mxu0 %v7022
      %7141 = vmatpush1.msra.mxu0 %v7021
      %7142 = vmatprep.subr.mxu0 %v7026
      %7143 = vmatpush1.msra.mxu0 %v7025
      %7144 = vmatprep.subr.mxu0 %v7030
      %7145 = vmatpush1.msra.mxu0 %v7029
      %7146 = vmatprep.subr.mxu0 %v7034
      %7147 = vmatpush1.msra.mxu0 %v7033
      %7148 = vmatprep.subr.mxu0 %v7038
      %7149 = vmatpush1.msra.mxu0 %v7037
      %7150 = vmatprep.subr.mxu0 %v7042
      %7151 = vmatpush1.msra.mxu0 %v7041
      %7152 = vmatprep.subr.mxu0 %v7046
      %7153 = vmatpush1.msra.mxu0 %v7045
      %7154 = vmatprep.subr.mxu0 %v7050
      %7155 = vmatpush1.msra.mxu0 %v7049
      %7156 = vmatprep.subr.mxu0 %v7054
      %7157 = vmatpush1.msra.mxu0 %v7053
      %7158 = vmatprep.subr.mxu0 0.0
      %7159 = vmatpush1.msra.mxu0 0.0
      %7160 = vmatprep.subr.mxu0 0.0
      %7161 = vmatpush1.msra.mxu0 0.0
      %7162 = vmatprep.subr.mxu0 0.0
      %7163 = vmatpush1.msra.mxu0 0.0
      %7164 = vmatprep.subr.mxu0 0.0
      %7165 = vmatpush1.msra.mxu0 0.0
      %7166 = vmatprep.subr.mxu0 0.0
      %7167 = vmatpush1.msra.mxu0 0.0
      %7168 = vmatprep.subr.mxu0 0.0
      %7169 = vmatpush1.msra.mxu0 0.0
      %7170 = vmatprep.subr.mxu0 0.0
      %7171 = vmatpush1.msra.mxu0 0.0
      %7172 = vmatprep.subr.mxu0 0.0
      %7173 = vmatpush1.msra.mxu0 0.0
      %7174 = vmatprep.subr.mxu0 0.0
      %7175 = vmatpush1.msra.mxu0 0.0
      %7176 = vmatprep.subr.mxu0 0.0
      %7177 = vmatpush1.msra.mxu0 0.0
      %7178 = vmatprep.subr.mxu0 0.0
      %7179 = vmatpush1.msra.mxu0 0.0
      %7180 = vmatprep.subr.mxu0 0.0
      %7181 = vmatpush1.msra.mxu0 0.0
      %7182 = vmatprep.subr.mxu0 0.0
      %7183 = vmatpush1.msra.mxu0 0.0
      %7184 = vmatprep.subr.mxu0 0.0
      %7185 = vmatpush1.msra.mxu0 0.0
      %7186 = vmatprep.subr.mxu0 0.0
      %7187 = vmatpush1.msra.mxu0 0.0
      %7188 = vmatprep.subr.mxu0 0.0
      %7189 = vmatpush1.msra.mxu0 0.0
      %7190 = vmatprep.mubr.f32.mxu0 0.0
      %7191 = vmatmul.mubr.f32.gmra.mrb[0].mxu0 %v6989
      %v7192 = vpop.f32.mrb[0].mxu0
      %v7193 = vadd.f32 0.0, %v7192
      %v7194 = vpop.f32.mrb[0].mxu0
      %v7195 = vadd.f32 0.0, %v7194
      %7196 = vdwg.mxu0
      %v7197 = vadd.f32 %v6985, %v7122
      %v7198 = vadd.f32 %v6986, %v7124
      %v7199 = vadd.f32 %v6987, %v7193
      %v7200 = vadd.f32 %v6988, %v7195
      %v7201 = vld [vmem:[#allocation3 + $0x7] sm:$0x1]
      %s7202 = scalar_lea.vmem %s6, 3584
      %v7203 = vld [vmem:[%s7202] sm:$0xff]
      %v7204 = vld [vmem:[%s7202 + $0x8] sm:$0xff]
      %v7205 = vld [vmem:[%s7202 + $0x10] sm:$0xff]
      %v7206 = vld [vmem:[%s7202 + $0x18] sm:$0xff]
      %v7207 = vld [vmem:[%s7202 + $0x20] sm:$0xff]
      %v7208 = vld [vmem:[%s7202 + $0x28] sm:$0xff]
      %v7209 = vld [vmem:[%s7202 + $0x30] sm:$0xff]
      %v7210 = vld [vmem:[%s7202 + $0x38] sm:$0xff]
      %v7211 = vld [vmem:[%s7202 + $0x40] sm:$0xff]
      %v7212 = vld [vmem:[%s7202 + $0x48] sm:$0xff]
      %v7213 = vld [vmem:[%s7202 + $0x50] sm:$0xff]
      %v7214 = vld [vmem:[%s7202 + $0x58] sm:$0xff]
      %v7215 = vld [vmem:[%s7202 + $0x60] sm:$0xff]
      %v7216 = vld [vmem:[%s7202 + $0x68] sm:$0xff]
      %v7217 = vld [vmem:[%s7202 + $0x70] sm:$0xff]
      %v7218 = vld [vmem:[%s7202 + $0x78] sm:$0xff]
      %v7219 = vld [vmem:[%s7202 + $0x80] sm:$0xff]
      %v7220 = vld [vmem:[%s7202 + $0x88] sm:$0xff]
      %v7221 = vld [vmem:[%s7202 + $0x90] sm:$0xff]
      %v7222 = vld [vmem:[%s7202 + $0x98] sm:$0xff]
      %v7223 = vld [vmem:[%s7202 + $0xa0] sm:$0xff]
      %v7224 = vld [vmem:[%s7202 + $0xa8] sm:$0xff]
      %v7225 = vld [vmem:[%s7202 + $0xb0] sm:$0xff]
      %v7226 = vld [vmem:[%s7202 + $0xb8] sm:$0xff]
      %v7227 = vld [vmem:[%s7202 + $0xc0] sm:$0xff]
      %v7228 = vld [vmem:[%s7202 + $0xc8] sm:$0xff]
      %v7229 = vld [vmem:[%s7202 + $0xd0] sm:$0xff]
      %v7230 = vld [vmem:[%s7202 + $0xd8] sm:$0xff]
      %v7231 = vld [vmem:[%s7202 + $0xe0] sm:$0xff]
      %v7232 = vld [vmem:[%s7202 + $0xe8] sm:$0xff]
      %v7233 = vld [vmem:[%s7202 + $0xf0] sm:$0xff]
      %v7234 = vld [vmem:[%s7202 + $0xf8] sm:$0xff]
      %v7235 = vld [vmem:[%s7202 + $0x100] sm:$0xff]
      %v7236 = vld [vmem:[%s7202 + $0x108] sm:$0xff]
      %v7237 = vld [vmem:[%s7202 + $0x110] sm:$0xff]
      %v7238 = vld [vmem:[%s7202 + $0x118] sm:$0xff]
      %v7239 = vld [vmem:[%s7202 + $0x120] sm:$0xff]
      %v7240 = vld [vmem:[%s7202 + $0x128] sm:$0xff]
      %v7241 = vld [vmem:[%s7202 + $0x130] sm:$0xff]
      %v7242 = vld [vmem:[%s7202 + $0x138] sm:$0xff]
      %v7243 = vld [vmem:[%s7202 + $0x140] sm:$0xff]
      %v7244 = vld [vmem:[%s7202 + $0x148] sm:$0xff]
      %v7245 = vld [vmem:[%s7202 + $0x150] sm:$0xff]
      %v7246 = vld [vmem:[%s7202 + $0x158] sm:$0xff]
      %v7247 = vld [vmem:[%s7202 + $0x160] sm:$0xff]
      %v7248 = vld [vmem:[%s7202 + $0x168] sm:$0xff]
      %v7249 = vld [vmem:[%s7202 + $0x170] sm:$0xff]
      %v7250 = vld [vmem:[%s7202 + $0x178] sm:$0xff]
      %v7251 = vld [vmem:[%s7202 + $0x180] sm:$0xff]
      %v7252 = vld [vmem:[%s7202 + $0x188] sm:$0xff]
      %v7253 = vld [vmem:[%s7202 + $0x190] sm:$0xff]
      %v7254 = vld [vmem:[%s7202 + $0x198] sm:$0xff]
      %v7255 = vld [vmem:[%s7202 + $0x1a0] sm:$0xff]
      %v7256 = vld [vmem:[%s7202 + $0x1a8] sm:$0xff]
      %v7257 = vld [vmem:[%s7202 + $0x1b0] sm:$0xff]
      %v7258 = vld [vmem:[%s7202 + $0x1b8] sm:$0xff]
      %v7259 = vld [vmem:[%s7202 + $0x1c0] sm:$0xff]
      %v7260 = vld [vmem:[%s7202 + $0x1c8] sm:$0xff]
      %v7261 = vld [vmem:[%s7202 + $0x1d0] sm:$0xff]
      %v7262 = vld [vmem:[%s7202 + $0x1d8] sm:$0xff]
      %v7263 = vld [vmem:[%s7202 + $0x1e0] sm:$0xff]
      %v7264 = vld [vmem:[%s7202 + $0x1e8] sm:$0xff]
      %v7265 = vld [vmem:[%s7202 + $0x1f0] sm:$0xff]
      %v7266 = vld [vmem:[%s7202 + $0x1f8] sm:$0xff]
      %7267 = vmatprep.subr.mxu0 %v7204
      %7268 = vmatpush1.msra.mxu0 %v7203
      %7269 = vmatprep.subr.mxu0 %v7208
      %7270 = vmatpush1.msra.mxu0 %v7207
      %7271 = vmatprep.subr.mxu0 %v7212
      %7272 = vmatpush1.msra.mxu0 %v7211
      %7273 = vmatprep.subr.mxu0 %v7216
      %7274 = vmatpush1.msra.mxu0 %v7215
      %7275 = vmatprep.subr.mxu0 %v7220
      %7276 = vmatpush1.msra.mxu0 %v7219
      %7277 = vmatprep.subr.mxu0 %v7224
      %7278 = vmatpush1.msra.mxu0 %v7223
      %7279 = vmatprep.subr.mxu0 %v7228
      %7280 = vmatpush1.msra.mxu0 %v7227
      %7281 = vmatprep.subr.mxu0 %v7232
      %7282 = vmatpush1.msra.mxu0 %v7231
      %7283 = vmatprep.subr.mxu0 %v7236
      %7284 = vmatpush1.msra.mxu0 %v7235
      %7285 = vmatprep.subr.mxu0 %v7240
      %7286 = vmatpush1.msra.mxu0 %v7239
      %7287 = vmatprep.subr.mxu0 %v7244
      %7288 = vmatpush1.msra.mxu0 %v7243
      %7289 = vmatprep.subr.mxu0 %v7248
      %7290 = vmatpush1.msra.mxu0 %v7247
      %7291 = vmatprep.subr.mxu0 %v7252
      %7292 = vmatpush1.msra.mxu0 %v7251
      %7293 = vmatprep.subr.mxu0 %v7256
      %7294 = vmatpush1.msra.mxu0 %v7255
      %7295 = vmatprep.subr.mxu0 %v7260
      %7296 = vmatpush1.msra.mxu0 %v7259
      %7297 = vmatprep.subr.mxu0 %v7264
      %7298 = vmatpush1.msra.mxu0 %v7263
      %7299 = vmatprep.subr.mxu0 0.0
      %7300 = vmatpush1.msra.mxu0 0.0
      %7301 = vmatprep.subr.mxu0 0.0
      %7302 = vmatpush1.msra.mxu0 0.0
      %7303 = vmatprep.subr.mxu0 0.0
      %7304 = vmatpush1.msra.mxu0 0.0
      %7305 = vmatprep.subr.mxu0 0.0
      %7306 = vmatpush1.msra.mxu0 0.0
      %7307 = vmatprep.subr.mxu0 0.0
      %7308 = vmatpush1.msra.mxu0 0.0
      %7309 = vmatprep.subr.mxu0 0.0
      %7310 = vmatpush1.msra.mxu0 0.0
      %7311 = vmatprep.subr.mxu0 0.0
      %7312 = vmatpush1.msra.mxu0 0.0
      %7313 = vmatprep.subr.mxu0 0.0
      %7314 = vmatpush1.msra.mxu0 0.0
      %7315 = vmatprep.subr.mxu0 0.0
      %7316 = vmatpush1.msra.mxu0 0.0
      %7317 = vmatprep.subr.mxu0 0.0
      %7318 = vmatpush1.msra.mxu0 0.0
      %7319 = vmatprep.subr.mxu0 0.0
      %7320 = vmatpush1.msra.mxu0 0.0
      %7321 = vmatprep.subr.mxu0 0.0
      %7322 = vmatpush1.msra.mxu0 0.0
      %7323 = vmatprep.subr.mxu0 0.0
      %7324 = vmatpush1.msra.mxu0 0.0
      %7325 = vmatprep.subr.mxu0 0.0
      %7326 = vmatpush1.msra.mxu0 0.0
      %7327 = vmatprep.subr.mxu0 0.0
      %7328 = vmatpush1.msra.mxu0 0.0
      %7329 = vmatprep.subr.mxu0 0.0
      %7330 = vmatpush1.msra.mxu0 0.0
      %7331 = vmatprep.mubr.f32.mxu0 0.0
      %7332 = vmatmul.mubr.f32.gmra.mrb[0].mxu0 %v7201
      %v7333 = vpop.f32.mrb[0].mxu0
      %v7334 = vadd.f32 0.0, %v7333
      %v7335 = vpop.f32.mrb[0].mxu0
      %v7336 = vadd.f32 0.0, %v7335
      %7337 = vdwg.mxu0
      %7338 = vmatprep.subr.mxu0 %v7206
      %7339 = vmatpush1.msra.mxu0 %v7205
      %7340 = vmatprep.subr.mxu0 %v7210
      %7341 = vmatpush1.msra.mxu0 %v7209
      %7342 = vmatprep.subr.mxu0 %v7214
      %7343 = vmatpush1.msra.mxu0 %v7213
      %7344 = vmatprep.subr.mxu0 %v7218
      %7345 = vmatpush1.msra.mxu0 %v7217
      %7346 = vmatprep.subr.mxu0 %v7222
      %7347 = vmatpush1.msra.mxu0 %v7221
      %7348 = vmatprep.subr.mxu0 %v7226
      %7349 = vmatpush1.msra.mxu0 %v7225
      %7350 = vmatprep.subr.mxu0 %v7230
      %7351 = vmatpush1.msra.mxu0 %v7229
      %7352 = vmatprep.subr.mxu0 %v7234
      %7353 = vmatpush1.msra.mxu0 %v7233
      %7354 = vmatprep.subr.mxu0 %v7238
      %7355 = vmatpush1.msra.mxu0 %v7237
      %7356 = vmatprep.subr.mxu0 %v7242
      %7357 = vmatpush1.msra.mxu0 %v7241
      %7358 = vmatprep.subr.mxu0 %v7246
      %7359 = vmatpush1.msra.mxu0 %v7245
      %7360 = vmatprep.subr.mxu0 %v7250
      %7361 = vmatpush1.msra.mxu0 %v7249
      %7362 = vmatprep.subr.mxu0 %v7254
      %7363 = vmatpush1.msra.mxu0 %v7253
      %7364 = vmatprep.subr.mxu0 %v7258
      %7365 = vmatpush1.msra.mxu0 %v7257
      %7366 = vmatprep.subr.mxu0 %v7262
      %7367 = vmatpush1.msra.mxu0 %v7261
      %7368 = vmatprep.subr.mxu0 %v7266
      %7369 = vmatpush1.msra.mxu0 %v7265
      %7370 = vmatprep.subr.mxu0 0.0
      %7371 = vmatpush1.msra.mxu0 0.0
      %7372 = vmatprep.subr.mxu0 0.0
      %7373 = vmatpush1.msra.mxu0 0.0
      %7374 = vmatprep.subr.mxu0 0.0
      %7375 = vmatpush1.msra.mxu0 0.0
      %7376 = vmatprep.subr.mxu0 0.0
      %7377 = vmatpush1.msra.mxu0 0.0
      %7378 = vmatprep.subr.mxu0 0.0
      %7379 = vmatpush1.msra.mxu0 0.0
      %7380 = vmatprep.subr.mxu0 0.0
      %7381 = vmatpush1.msra.mxu0 0.0
      %7382 = vmatprep.subr.mxu0 0.0
      %7383 = vmatpush1.msra.mxu0 0.0
      %7384 = vmatprep.subr.mxu0 0.0
      %7385 = vmatpush1.msra.mxu0 0.0
      %7386 = vmatprep.subr.mxu0 0.0
      %7387 = vmatpush1.msra.mxu0 0.0
      %7388 = vmatprep.subr.mxu0 0.0
      %7389 = vmatpush1.msra.mxu0 0.0
      %7390 = vmatprep.subr.mxu0 0.0
      %7391 = vmatpush1.msra.mxu0 0.0
      %7392 = vmatprep.subr.mxu0 0.0
      %7393 = vmatpush1.msra.mxu0 0.0
      %7394 = vmatprep.subr.mxu0 0.0
      %7395 = vmatpush1.msra.mxu0 0.0
      %7396 = vmatprep.subr.mxu0 0.0
      %7397 = vmatpush1.msra.mxu0 0.0
      %7398 = vmatprep.subr.mxu0 0.0
      %7399 = vmatpush1.msra.mxu0 0.0
      %7400 = vmatprep.subr.mxu0 0.0
      %7401 = vmatpush1.msra.mxu0 0.0
      %7402 = vmatprep.mubr.f32.mxu0 0.0
      %7403 = vmatmul.mubr.f32.gmra.mrb[0].mxu0 %v7201
      %v7404 = vpop.f32.mrb[0].mxu0
      %v7405 = vadd.f32 0.0, %v7404
      %v7406 = vpop.f32.mrb[0].mxu0
      %v7407 = vadd.f32 0.0, %v7406
      %7408 = vdwg.mxu0
      %v7409 = vadd.f32 %v7197, %v7334
      %v7410 = vadd.f32 %v7198, %v7336
      %v7411 = vadd.f32 %v7199, %v7405
      %v7412 = vadd.f32 %v7200, %v7407
      %v7413 = vld [vmem:[#allocation3 + $0x8] sm:$0x1]
      %s7414 = scalar_lea.vmem %s6, 4096
      %v7415 = vld [vmem:[%s7414] sm:$0xff]
      %v7416 = vld [vmem:[%s7414 + $0x8] sm:$0xff]
      %v7417 = vld [vmem:[%s7414 + $0x10] sm:$0xff]
      %v7418 = vld [vmem:[%s7414 + $0x18] sm:$0xff]
      %v7419 = vld [vmem:[%s7414 + $0x20] sm:$0xff]
      %v7420 = vld [vmem:[%s7414 + $0x28] sm:$0xff]
      %v7421 = vld [vmem:[%s7414 + $0x30] sm:$0xff]
      %v7422 = vld [vmem:[%s7414 + $0x38] sm:$0xff]
      %v7423 = vld [vmem:[%s7414 + $0x40] sm:$0xff]
      %v7424 = vld [vmem:[%s7414 + $0x48] sm:$0xff]
      %v7425 = vld [vmem:[%s7414 + $0x50] sm:$0xff]
      %v7426 = vld [vmem:[%s7414 + $0x58] sm:$0xff]
      %v7427 = vld [vmem:[%s7414 + $0x60] sm:$0xff]
      %v7428 = vld [vmem:[%s7414 + $0x68] sm:$0xff]
      %v7429 = vld [vmem:[%s7414 + $0x70] sm:$0xff]
      %v7430 = vld [vmem:[%s7414 + $0x78] sm:$0xff]
      %v7431 = vld [vmem:[%s7414 + $0x80] sm:$0xff]
      %v7432 = vld [vmem:[%s7414 + $0x88] sm:$0xff]
      %v7433 = vld [vmem:[%s7414 + $0x90] sm:$0xff]
      %v7434 = vld [vmem:[%s7414 + $0x98] sm:$0xff]
      %v7435 = vld [vmem:[%s7414 + $0xa0] sm:$0xff]
      %v7436 = vld [vmem:[%s7414 + $0xa8] sm:$0xff]
      %v7437 = vld [vmem:[%s7414 + $0xb0] sm:$0xff]
      %v7438 = vld [vmem:[%s7414 + $0xb8] sm:$0xff]
      %v7439 = vld [vmem:[%s7414 + $0xc0] sm:$0xff]
      %v7440 = vld [vmem:[%s7414 + $0xc8] sm:$0xff]
      %v7441 = vld [vmem:[%s7414 + $0xd0] sm:$0xff]
      %v7442 = vld [vmem:[%s7414 + $0xd8] sm:$0xff]
      %v7443 = vld [vmem:[%s7414 + $0xe0] sm:$0xff]
      %v7444 = vld [vmem:[%s7414 + $0xe8] sm:$0xff]
      %v7445 = vld [vmem:[%s7414 + $0xf0] sm:$0xff]
      %v7446 = vld [vmem:[%s7414 + $0xf8] sm:$0xff]
      %v7447 = vld [vmem:[%s7414 + $0x100] sm:$0xff]
      %v7448 = vld [vmem:[%s7414 + $0x108] sm:$0xff]
      %v7449 = vld [vmem:[%s7414 + $0x110] sm:$0xff]
      %v7450 = vld [vmem:[%s7414 + $0x118] sm:$0xff]
      %v7451 = vld [vmem:[%s7414 + $0x120] sm:$0xff]
      %v7452 = vld [vmem:[%s7414 + $0x128] sm:$0xff]
      %v7453 = vld [vmem:[%s7414 + $0x130] sm:$0xff]
      %v7454 = vld [vmem:[%s7414 + $0x138] sm:$0xff]
      %v7455 = vld [vmem:[%s7414 + $0x140] sm:$0xff]
      %v7456 = vld [vmem:[%s7414 + $0x148] sm:$0xff]
      %v7457 = vld [vmem:[%s7414 + $0x150] sm:$0xff]
      %v7458 = vld [vmem:[%s7414 + $0x158] sm:$0xff]
      %v7459 = vld [vmem:[%s7414 + $0x160] sm:$0xff]
      %v7460 = vld [vmem:[%s7414 + $0x168] sm:$0xff]
      %v7461 = vld [vmem:[%s7414 + $0x170] sm:$0xff]
      %v7462 = vld [vmem:[%s7414 + $0x178] sm:$0xff]
      %v7463 = vld [vmem:[%s7414 + $0x180] sm:$0xff]
      %v7464 = vld [vmem:[%s7414 + $0x188] sm:$0xff]
      %v7465 = vld [vmem:[%s7414 + $0x190] sm:$0xff]
      %v7466 = vld [vmem:[%s7414 + $0x198] sm:$0xff]
      %v7467 = vld [vmem:[%s7414 + $0x1a0] sm:$0xff]
      %v7468 = vld [vmem:[%s7414 + $0x1a8] sm:$0xff]
      %v7469 = vld [vmem:[%s7414 + $0x1b0] sm:$0xff]
      %v7470 = vld [vmem:[%s7414 + $0x1b8] sm:$0xff]
      %v7471 = vld [vmem:[%s7414 + $0x1c0] sm:$0xff]
      %v7472 = vld [vmem:[%s7414 + $0x1c8] sm:$0xff]
      %v7473 = vld [vmem:[%s7414 + $0x1d0] sm:$0xff]
      %v7474 = vld [vmem:[%s7414 + $0x1d8] sm:$0xff]
      %v7475 = vld [vmem:[%s7414 + $0x1e0] sm:$0xff]
      %v7476 = vld [vmem:[%s7414 + $0x1e8] sm:$0xff]
      %v7477 = vld [vmem:[%s7414 + $0x1f0] sm:$0xff]
      %v7478 = vld [vmem:[%s7414 + $0x1f8] sm:$0xff]
      %7479 = vmatprep.subr.mxu0 %v7416
      %7480 = vmatpush1.msra.mxu0 %v7415
      %7481 = vmatprep.subr.mxu0 %v7420
      %7482 = vmatpush1.msra.mxu0 %v7419
      %7483 = vmatprep.subr.mxu0 %v7424
      %7484 = vmatpush1.msra.mxu0 %v7423
      %7485 = vmatprep.subr.mxu0 %v7428
      %7486 = vmatpush1.msra.mxu0 %v7427
      %7487 = vmatprep.subr.mxu0 %v7432
      %7488 = vmatpush1.msra.mxu0 %v7431
      %7489 = vmatprep.subr.mxu0 %v7436
      %7490 = vmatpush1.msra.mxu0 %v7435
      %7491 = vmatprep.subr.mxu0 %v7440
      %7492 = vmatpush1.msra.mxu0 %v7439
      %7493 = vmatprep.subr.mxu0 %v7444
      %7494 = vmatpush1.msra.mxu0 %v7443
      %7495 = vmatprep.subr.mxu0 %v7448
      %7496 = vmatpush1.msra.mxu0 %v7447
      %7497 = vmatprep.subr.mxu0 %v7452
      %7498 = vmatpush1.msra.mxu0 %v7451
      %7499 = vmatprep.subr.mxu0 %v7456
      %7500 = vmatpush1.msra.mxu0 %v7455
      %7501 = vmatprep.subr.mxu0 %v7460
      %7502 = vmatpush1.msra.mxu0 %v7459
      %7503 = vmatprep.subr.mxu0 %v7464
      %7504 = vmatpush1.msra.mxu0 %v7463
      %7505 = vmatprep.subr.mxu0 %v7468
      %7506 = vmatpush1.msra.mxu0 %v7467
      %7507 = vmatprep.subr.mxu0 %v7472
      %7508 = vmatpush1.msra.mxu0 %v7471
      %7509 = vmatprep.subr.mxu0 %v7476
      %7510 = vmatpush1.msra.mxu0 %v7475
      %7511 = vmatprep.subr.mxu0 0.0
      %7512 = vmatpush1.msra.mxu0 0.0
      %7513 = vmatprep.subr.mxu0 0.0
      %7514 = vmatpush1.msra.mxu0 0.0
      %7515 = vmatprep.subr.mxu0 0.0
      %7516 = vmatpush1.msra.mxu0 0.0
      %7517 = vmatprep.subr.mxu0 0.0
      %7518 = vmatpush1.msra.mxu0 0.0
      %7519 = vmatprep.subr.mxu0 0.0
      %7520 = vmatpush1.msra.mxu0 0.0
      %7521 = vmatprep.subr.mxu0 0.0
      %7522 = vmatpush1.msra.mxu0 0.0
      %7523 = vmatprep.subr.mxu0 0.0
      %7524 = vmatpush1.msra.mxu0 0.0
      %7525 = vmatprep.subr.mxu0 0.0
      %7526 = vmatpush1.msra.mxu0 0.0
      %7527 = vmatprep.subr.mxu0 0.0
      %7528 = vmatpush1.msra.mxu0 0.0
      %7529 = vmatprep.subr.mxu0 0.0
      %7530 = vmatpush1.msra.mxu0 0.0
      %7531 = vmatprep.subr.mxu0 0.0
      %7532 = vmatpush1.msra.mxu0 0.0
      %7533 = vmatprep.subr.mxu0 0.0
      %7534 = vmatpush1.msra.mxu0 0.0
      %7535 = vmatprep.subr.mxu0 0.0
      %7536 = vmatpush1.msra.mxu0 0.0
      %7537 = vmatprep.subr.mxu0 0.0
      %7538 = vmatpush1.msra.mxu0 0.0
      %7539 = vmatprep.subr.mxu0 0.0
      %7540 = vmatpush1.msra.mxu0 0.0
      %7541 = vmatprep.subr.mxu0 0.0
      %7542 = vmatpush1.msra.mxu0 0.0
      %7543 = vmatprep.mubr.f32.mxu0 0.0
      %7544 = vmatmul.mubr.f32.gmra.mrb[0].mxu0 %v7413
      %v7545 = vpop.f32.mrb[0].mxu0
      %v7546 = vadd.f32 0.0, %v7545
      %v7547 = vpop.f32.mrb[0].mxu0
      %v7548 = vadd.f32 0.0, %v7547
      %7549 = vdwg.mxu0
      %7550 = vmatprep.subr.mxu0 %v7418
      %7551 = vmatpush1.msra.mxu0 %v7417
      %7552 = vmatprep.subr.mxu0 %v7422
      %7553 = vmatpush1.msra.mxu0 %v7421
      %7554 = vmatprep.subr.mxu0 %v7426
      %7555 = vmatpush1.msra.mxu0 %v7425
      %7556 = vmatprep.subr.mxu0 %v7430
      %7557 = vmatpush1.msra.mxu0 %v7429
      %7558 = vmatprep.subr.mxu0 %v7434
      %7559 = vmatpush1.msra.mxu0 %v7433
      %7560 = vmatprep.subr.mxu0 %v7438
      %7561 = vmatpush1.msra.mxu0 %v7437
      %7562 = vmatprep.subr.mxu0 %v7442
      %7563 = vmatpush1.msra.mxu0 %v7441
      %7564 = vmatprep.subr.mxu0 %v7446
      %7565 = vmatpush1.msra.mxu0 %v7445
      %7566 = vmatprep.subr.mxu0 %v7450
      %7567 = vmatpush1.msra.mxu0 %v7449
      %7568 = vmatprep.subr.mxu0 %v7454
      %7569 = vmatpush1.msra.mxu0 %v7453
      %7570 = vmatprep.subr.mxu0 %v7458
      %7571 = vmatpush1.msra.mxu0 %v7457
      %7572 = vmatprep.subr.mxu0 %v7462
      %7573 = vmatpush1.msra.mxu0 %v7461
      %7574 = vmatprep.subr.mxu0 %v7466
      %7575 = vmatpush1.msra.mxu0 %v7465
      %7576 = vmatprep.subr.mxu0 %v7470
      %7577 = vmatpush1.msra.mxu0 %v7469
      %7578 = vmatprep.subr.mxu0 %v7474
      %7579 = vmatpush1.msra.mxu0 %v7473
      %7580 = vmatprep.subr.mxu0 %v7478
      %7581 = vmatpush1.msra.mxu0 %v7477
      %7582 = vmatprep.subr.mxu0 0.0
      %7583 = vmatpush1.msra.mxu0 0.0
      %7584 = vmatprep.subr.mxu0 0.0
      %7585 = vmatpush1.msra.mxu0 0.0
      %7586 = vmatprep.subr.mxu0 0.0
      %7587 = vmatpush1.msra.mxu0 0.0
      %7588 = vmatprep.subr.mxu0 0.0
      %7589 = vmatpush1.msra.mxu0 0.0
      %7590 = vmatprep.subr.mxu0 0.0
      %7591 = vmatpush1.msra.mxu0 0.0
      %7592 = vmatprep.subr.mxu0 0.0
      %7593 = vmatpush1.msra.mxu0 0.0
      %7594 = vmatprep.subr.mxu0 0.0
      %7595 = vmatpush1.msra.mxu0 0.0
      %7596 = vmatprep.subr.mxu0 0.0
      %7597 = vmatpush1.msra.mxu0 0.0
      %7598 = vmatprep.subr.mxu0 0.0
      %7599 = vmatpush1.msra.mxu0 0.0
      %7600 = vmatprep.subr.mxu0 0.0
      %7601 = vmatpush1.msra.mxu0 0.0
      %7602 = vmatprep.subr.mxu0 0.0
      %7603 = vmatpush1.msra.mxu0 0.0
      %7604 = vmatprep.subr.mxu0 0.0
      %7605 = vmatpush1.msra.mxu0 0.0
      %7606 = vmatprep.subr.mxu0 0.0
      %7607 = vmatpush1.msra.mxu0 0.0
      %7608 = vmatprep.subr.mxu0 0.0
      %7609 = vmatpush1.msra.mxu0 0.0
      %7610 = vmatprep.subr.mxu0 0.0
      %7611 = vmatpush1.msra.mxu0 0.0
      %7612 = vmatprep.subr.mxu0 0.0
      %7613 = vmatpush1.msra.mxu0 0.0
      %7614 = vmatprep.mubr.f32.mxu0 0.0
      %7615 = vmatmul.mubr.f32.gmra.mrb[0].mxu0 %v7413
      %v7616 = vpop.f32.mrb[0].mxu0
      %v7617 = vadd.f32 0.0, %v7616
      %v7618 = vpop.f32.mrb[0].mxu0
      %v7619 = vadd.f32 0.0, %v7618
      %7620 = vdwg.mxu0
      %v7621 = vadd.f32 %v7409, %v7546
      %v7622 = vadd.f32 %v7410, %v7548
      %v7623 = vadd.f32 %v7411, %v7617
      %v7624 = vadd.f32 %v7412, %v7619
      %v7625 = vld [vmem:[#allocation3 + $0x9] sm:$0x1]
      %s7626 = scalar_lea.vmem %s6, 4608
      %v7627 = vld [vmem:[%s7626] sm:$0xff]
      %v7628 = vld [vmem:[%s7626 + $0x8] sm:$0xff]
      %v7629 = vld [vmem:[%s7626 + $0x10] sm:$0xff]
      %v7630 = vld [vmem:[%s7626 + $0x18] sm:$0xff]
      %v7631 = vld [vmem:[%s7626 + $0x20] sm:$0xff]
      %v7632 = vld [vmem:[%s7626 + $0x28] sm:$0xff]
      %v7633 = vld [vmem:[%s7626 + $0x30] sm:$0xff]
      %v7634 = vld [vmem:[%s7626 + $0x38] sm:$0xff]
      %v7635 = vld [vmem:[%s7626 + $0x40] sm:$0xff]
      %v7636 = vld [vmem:[%s7626 + $0x48] sm:$0xff]
      %v7637 = vld [vmem:[%s7626 + $0x50] sm:$0xff]
      %v7638 = vld [vmem:[%s7626 + $0x58] sm:$0xff]
      %v7639 = vld [vmem:[%s7626 + $0x60] sm:$0xff]
      %v7640 = vld [vmem:[%s7626 + $0x68] sm:$0xff]
      %v7641 = vld [vmem:[%s7626 + $0x70] sm:$0xff]
      %v7642 = vld [vmem:[%s7626 + $0x78] sm:$0xff]
      %v7643 = vld [vmem:[%s7626 + $0x80] sm:$0xff]
      %v7644 = vld [vmem:[%s7626 + $0x88] sm:$0xff]
      %v7645 = vld [vmem:[%s7626 + $0x90] sm:$0xff]
      %v7646 = vld [vmem:[%s7626 + $0x98] sm:$0xff]
      %v7647 = vld [vmem:[%s7626 + $0xa0] sm:$0xff]
      %v7648 = vld [vmem:[%s7626 + $0xa8] sm:$0xff]
      %v7649 = vld [vmem:[%s7626 + $0xb0] sm:$0xff]
      %v7650 = vld [vmem:[%s7626 + $0xb8] sm:$0xff]
      %v7651 = vld [vmem:[%s7626 + $0xc0] sm:$0xff]
      %v7652 = vld [vmem:[%s7626 + $0xc8] sm:$0xff]
      %v7653 = vld [vmem:[%s7626 + $0xd0] sm:$0xff]
      %v7654 = vld [vmem:[%s7626 + $0xd8] sm:$0xff]
      %v7655 = vld [vmem:[%s7626 + $0xe0] sm:$0xff]
      %v7656 = vld [vmem:[%s7626 + $0xe8] sm:$0xff]
      %v7657 = vld [vmem:[%s7626 + $0xf0] sm:$0xff]
      %v7658 = vld [vmem:[%s7626 + $0xf8] sm:$0xff]
      %v7659 = vld [vmem:[%s7626 + $0x100] sm:$0xff]
      %v7660 = vld [vmem:[%s7626 + $0x108] sm:$0xff]
      %v7661 = vld [vmem:[%s7626 + $0x110] sm:$0xff]
      %v7662 = vld [vmem:[%s7626 + $0x118] sm:$0xff]
      %v7663 = vld [vmem:[%s7626 + $0x120] sm:$0xff]
      %v7664 = vld [vmem:[%s7626 + $0x128] sm:$0xff]
      %v7665 = vld [vmem:[%s7626 + $0x130] sm:$0xff]
      %v7666 = vld [vmem:[%s7626 + $0x138] sm:$0xff]
      %v7667 = vld [vmem:[%s7626 + $0x140] sm:$0xff]
      %v7668 = vld [vmem:[%s7626 + $0x148] sm:$0xff]
      %v7669 = vld [vmem:[%s7626 + $0x150] sm:$0xff]
      %v7670 = vld [vmem:[%s7626 + $0x158] sm:$0xff]
      %v7671 = vld [vmem:[%s7626 + $0x160] sm:$0xff]
      %v7672 = vld [vmem:[%s7626 + $0x168] sm:$0xff]
      %v7673 = vld [vmem:[%s7626 + $0x170] sm:$0xff]
      %v7674 = vld [vmem:[%s7626 + $0x178] sm:$0xff]
      %v7675 = vld [vmem:[%s7626 + $0x180] sm:$0xff]
      %v7676 = vld [vmem:[%s7626 + $0x188] sm:$0xff]
      %v7677 = vld [vmem:[%s7626 + $0x190] sm:$0xff]
      %v7678 = vld [vmem:[%s7626 + $0x198] sm:$0xff]
      %v7679 = vld [vmem:[%s7626 + $0x1a0] sm:$0xff]
      %v7680 = vld [vmem:[%s7626 + $0x1a8] sm:$0xff]
      %v7681 = vld [vmem:[%s7626 + $0x1b0] sm:$0xff]
      %v7682 = vld [vmem:[%s7626 + $0x1b8] sm:$0xff]
      %v7683 = vld [vmem:[%s7626 + $0x1c0] sm:$0xff]
      %v7684 = vld [vmem:[%s7626 + $0x1c8] sm:$0xff]
      %v7685 = vld [vmem:[%s7626 + $0x1d0] sm:$0xff]
      %v7686 = vld [vmem:[%s7626 + $0x1d8] sm:$0xff]
      %v7687 = vld [vmem:[%s7626 + $0x1e0] sm:$0xff]
      %v7688 = vld [vmem:[%s7626 + $0x1e8] sm:$0xff]
      %v7689 = vld [vmem:[%s7626 + $0x1f0] sm:$0xff]
      %v7690 = vld [vmem:[%s7626 + $0x1f8] sm:$0xff]
      %7691 = vmatprep.subr.mxu0 %v7628
      %7692 = vmatpush1.msra.mxu0 %v7627
      %7693 = vmatprep.subr.mxu0 %v7632
      %7694 = vmatpush1.msra.mxu0 %v7631
      %7695 = vmatprep.subr.mxu0 %v7636
      %7696 = vmatpush1.msra.mxu0 %v7635
      %7697 = vmatprep.subr.mxu0 %v7640
      %7698 = vmatpush1.msra.mxu0 %v7639
      %7699 = vmatprep.subr.mxu0 %v7644
      %7700 = vmatpush1.msra.mxu0 %v7643
      %7701 = vmatprep.subr.mxu0 %v7648
      %7702 = vmatpush1.msra.mxu0 %v7647
      %7703 = vmatprep.subr.mxu0 %v7652
      %7704 = vmatpush1.msra.mxu0 %v7651
      %7705 = vmatprep.subr.mxu0 %v7656
      %7706 = vmatpush1.msra.mxu0 %v7655
      %7707 = vmatprep.subr.mxu0 %v7660
      %7708 = vmatpush1.msra.mxu0 %v7659
      %7709 = vmatprep.subr.mxu0 %v7664
      %7710 = vmatpush1.msra.mxu0 %v7663
      %7711 = vmatprep.subr.mxu0 %v7668
      %7712 = vmatpush1.msra.mxu0 %v7667
      %7713 = vmatprep.subr.mxu0 %v7672
      %7714 = vmatpush1.msra.mxu0 %v7671
      %7715 = vmatprep.subr.mxu0 %v7676
      %7716 = vmatpush1.msra.mxu0 %v7675
      %7717 = vmatprep.subr.mxu0 %v7680
      %7718 = vmatpush1.msra.mxu0 %v7679
      %7719 = vmatprep.subr.mxu0 %v7684
      %7720 = vmatpush1.msra.mxu0 %v7683
      %7721 = vmatprep.subr.mxu0 %v7688
      %7722 = vmatpush1.msra.mxu0 %v7687
      %7723 = vmatprep.subr.mxu0 0.0
      %7724 = vmatpush1.msra.mxu0 0.0
      %7725 = vmatprep.subr.mxu0 0.0
      %7726 = vmatpush1.msra.mxu0 0.0
      %7727 = vmatprep.subr.mxu0 0.0
      %7728 = vmatpush1.msra.mxu0 0.0
      %7729 = vmatprep.subr.mxu0 0.0
      %7730 = vmatpush1.msra.mxu0 0.0
      %7731 = vmatprep.subr.mxu0 0.0
      %7732 = vmatpush1.msra.mxu0 0.0
      %7733 = vmatprep.subr.mxu0 0.0
      %7734 = vmatpush1.msra.mxu0 0.0
      %7735 = vmatprep.subr.mxu0 0.0
      %7736 = vmatpush1.msra.mxu0 0.0
      %7737 = vmatprep.subr.mxu0 0.0
      %7738 = vmatpush1.msra.mxu0 0.0
      %7739 = vmatprep.subr.mxu0 0.0
      %7740 = vmatpush1.msra.mxu0 0.0
      %7741 = vmatprep.subr.mxu0 0.0
      %7742 = vmatpush1.msra.mxu0 0.0
      %7743 = vmatprep.subr.mxu0 0.0
      %7744 = vmatpush1.msra.mxu0 0.0
      %7745 = vmatprep.subr.mxu0 0.0
      %7746 = vmatpush1.msra.mxu0 0.0
      %7747 = vmatprep.subr.mxu0 0.0
      %7748 = vmatpush1.msra.mxu0 0.0
      %7749 = vmatprep.subr.mxu0 0.0
      %7750 = vmatpush1.msra.mxu0 0.0
      %7751 = vmatprep.subr.mxu0 0.0
      %7752 = vmatpush1.msra.mxu0 0.0
      %7753 = vmatprep.subr.mxu0 0.0
      %7754 = vmatpush1.msra.mxu0 0.0
      %7755 = vmatprep.mubr.f32.mxu0 0.0
      %7756 = vmatmul.mubr.f32.gmra.mrb[0].mxu0 %v7625
      %v7757 = vpop.f32.mrb[0].mxu0
      %v7758 = vadd.f32 0.0, %v7757
      %v7759 = vpop.f32.mrb[0].mxu0
      %v7760 = vadd.f32 0.0, %v7759
      %7761 = vdwg.mxu0
      %7762 = vmatprep.subr.mxu0 %v7630
      %7763 = vmatpush1.msra.mxu0 %v7629
      %7764 = vmatprep.subr.mxu0 %v7634
      %7765 = vmatpush1.msra.mxu0 %v7633
      %7766 = vmatprep.subr.mxu0 %v7638
      %7767 = vmatpush1.msra.mxu0 %v7637
      %7768 = vmatprep.subr.mxu0 %v7642
      %7769 = vmatpush1.msra.mxu0 %v7641
      %7770 = vmatprep.subr.mxu0 %v7646
      %7771 = vmatpush1.msra.mxu0 %v7645
      %7772 = vmatprep.subr.mxu0 %v7650
      %7773 = vmatpush1.msra.mxu0 %v7649
      %7774 = vmatprep.subr.mxu0 %v7654
      %7775 = vmatpush1.msra.mxu0 %v7653
      %7776 = vmatprep.subr.mxu0 %v7658
      %7777 = vmatpush1.msra.mxu0 %v7657
      %7778 = vmatprep.subr.mxu0 %v7662
      %7779 = vmatpush1.msra.mxu0 %v7661
      %7780 = vmatprep.subr.mxu0 %v7666
      %7781 = vmatpush1.msra.mxu0 %v7665
      %7782 = vmatprep.subr.mxu0 %v7670
      %7783 = vmatpush1.msra.mxu0 %v7669
      %7784 = vmatprep.subr.mxu0 %v7674
      %7785 = vmatpush1.msra.mxu0 %v7673
      %7786 = vmatprep.subr.mxu0 %v7678
      %7787 = vmatpush1.msra.mxu0 %v7677
      %7788 = vmatprep.subr.mxu0 %v7682
      %7789 = vmatpush1.msra.mxu0 %v7681
      %7790 = vmatprep.subr.mxu0 %v7686
      %7791 = vmatpush1.msra.mxu0 %v7685
      %7792 = vmatprep.subr.mxu0 %v7690
      %7793 = vmatpush1.msra.mxu0 %v7689
      %7794 = vmatprep.subr.mxu0 0.0
      %7795 = vmatpush1.msra.mxu0 0.0
      %7796 = vmatprep.subr.mxu0 0.0
      %7797 = vmatpush1.msra.mxu0 0.0
      %7798 = vmatprep.subr.mxu0 0.0
      %7799 = vmatpush1.msra.mxu0 0.0
      %7800 = vmatprep.subr.mxu0 0.0
      %7801 = vmatpush1.msra.mxu0 0.0
      %7802 = vmatprep.subr.mxu0 0.0
      %7803 = vmatpush1.msra.mxu0 0.0
      %7804 = vmatprep.subr.mxu0 0.0
      %7805 = vmatpush1.msra.mxu0 0.0
      %7806 = vmatprep.subr.mxu0 0.0
      %7807 = vmatpush1.msra.mxu0 0.0
      %7808 = vmatprep.subr.mxu0 0.0
      %7809 = vmatpush1.msra.mxu0 0.0
      %7810 = vmatprep.subr.mxu0 0.0
      %7811 = vmatpush1.msra.mxu0 0.0
      %7812 = vmatprep.subr.mxu0 0.0
      %7813 = vmatpush1.msra.mxu0 0.0
      %7814 = vmatprep.subr.mxu0 0.0
      %7815 = vmatpush1.msra.mxu0 0.0
      %7816 = vmatprep.subr.mxu0 0.0
      %7817 = vmatpush1.msra.mxu0 0.0
      %7818 = vmatprep.subr.mxu0 0.0
      %7819 = vmatpush1.msra.mxu0 0.0
      %7820 = vmatprep.subr.mxu0 0.0
      %7821 = vmatpush1.msra.mxu0 0.0
      %7822 = vmatprep.subr.mxu0 0.0
      %7823 = vmatpush1.msra.mxu0 0.0
      %7824 = vmatprep.subr.mxu0 0.0
      %7825 = vmatpush1.msra.mxu0 0.0
      %7826 = vmatprep.mubr.f32.mxu0 0.0
      %7827 = vmatmul.mubr.f32.gmra.mrb[0].mxu0 %v7625
      %v7828 = vpop.f32.mrb[0].mxu0
      %v7829 = vadd.f32 0.0, %v7828
      %v7830 = vpop.f32.mrb[0].mxu0
      %v7831 = vadd.f32 0.0, %v7830
      %7832 = vdwg.mxu0
      %v7833 = vadd.f32 %v7621, %v7758
      %v7834 = vadd.f32 %v7622, %v7760
      %v7835 = vadd.f32 %v7623, %v7829
      %v7836 = vadd.f32 %v7624, %v7831
      %v7837 = vld [vmem:[#allocation3 + $0xa] sm:$0x1]
      %s7838 = scalar_lea.vmem %s6, 5120
      %v7839 = vld [vmem:[%s7838] sm:$0xff]
      %v7840 = vld [vmem:[%s7838 + $0x8] sm:$0xff]
      %v7841 = vld [vmem:[%s7838 + $0x10] sm:$0xff]
      %v7842 = vld [vmem:[%s7838 + $0x18] sm:$0xff]
      %v7843 = vld [vmem:[%s7838 + $0x20] sm:$0xff]
      %v7844 = vld [vmem:[%s7838 + $0x28] sm:$0xff]
      %v7845 = vld [vmem:[%s7838 + $0x30] sm:$0xff]
      %v7846 = vld [vmem:[%s7838 + $0x38] sm:$0xff]
      %v7847 = vld [vmem:[%s7838 + $0x40] sm:$0xff]
      %v7848 = vld [vmem:[%s7838 + $0x48] sm:$0xff]
      %v7849 = vld [vmem:[%s7838 + $0x50] sm:$0xff]
      %v7850 = vld [vmem:[%s7838 + $0x58] sm:$0xff]
      %v7851 = vld [vmem:[%s7838 + $0x60] sm:$0xff]
      %v7852 = vld [vmem:[%s7838 + $0x68] sm:$0xff]
      %v7853 = vld [vmem:[%s7838 + $0x70] sm:$0xff]
      %v7854 = vld [vmem:[%s7838 + $0x78] sm:$0xff]
      %v7855 = vld [vmem:[%s7838 + $0x80] sm:$0xff]
      %v7856 = vld [vmem:[%s7838 + $0x88] sm:$0xff]
      %v7857 = vld [vmem:[%s7838 + $0x90] sm:$0xff]
      %v7858 = vld [vmem:[%s7838 + $0x98] sm:$0xff]
      %v7859 = vld [vmem:[%s7838 + $0xa0] sm:$0xff]
      %v7860 = vld [vmem:[%s7838 + $0xa8] sm:$0xff]
      %v7861 = vld [vmem:[%s7838 + $0xb0] sm:$0xff]
      %v7862 = vld [vmem:[%s7838 + $0xb8] sm:$0xff]
      %v7863 = vld [vmem:[%s7838 + $0xc0] sm:$0xff]
      %v7864 = vld [vmem:[%s7838 + $0xc8] sm:$0xff]
      %v7865 = vld [vmem:[%s7838 + $0xd0] sm:$0xff]
      %v7866 = vld [vmem:[%s7838 + $0xd8] sm:$0xff]
      %v7867 = vld [vmem:[%s7838 + $0xe0] sm:$0xff]
      %v7868 = vld [vmem:[%s7838 + $0xe8] sm:$0xff]
      %v7869 = vld [vmem:[%s7838 + $0xf0] sm:$0xff]
      %v7870 = vld [vmem:[%s7838 + $0xf8] sm:$0xff]
      %v7871 = vld [vmem:[%s7838 + $0x100] sm:$0xff]
      %v7872 = vld [vmem:[%s7838 + $0x108] sm:$0xff]
      %v7873 = vld [vmem:[%s7838 + $0x110] sm:$0xff]
      %v7874 = vld [vmem:[%s7838 + $0x118] sm:$0xff]
      %v7875 = vld [vmem:[%s7838 + $0x120] sm:$0xff]
      %v7876 = vld [vmem:[%s7838 + $0x128] sm:$0xff]
      %v7877 = vld [vmem:[%s7838 + $0x130] sm:$0xff]
      %v7878 = vld [vmem:[%s7838 + $0x138] sm:$0xff]
      %v7879 = vld [vmem:[%s7838 + $0x140] sm:$0xff]
      %v7880 = vld [vmem:[%s7838 + $0x148] sm:$0xff]
      %v7881 = vld [vmem:[%s7838 + $0x150] sm:$0xff]
      %v7882 = vld [vmem:[%s7838 + $0x158] sm:$0xff]
      %v7883 = vld [vmem:[%s7838 + $0x160] sm:$0xff]
      %v7884 = vld [vmem:[%s7838 + $0x168] sm:$0xff]
      %v7885 = vld [vmem:[%s7838 + $0x170] sm:$0xff]
      %v7886 = vld [vmem:[%s7838 + $0x178] sm:$0xff]
      %v7887 = vld [vmem:[%s7838 + $0x180] sm:$0xff]
      %v7888 = vld [vmem:[%s7838 + $0x188] sm:$0xff]
      %v7889 = vld [vmem:[%s7838 + $0x190] sm:$0xff]
      %v7890 = vld [vmem:[%s7838 + $0x198] sm:$0xff]
      %v7891 = vld [vmem:[%s7838 + $0x1a0] sm:$0xff]
      %v7892 = vld [vmem:[%s7838 + $0x1a8] sm:$0xff]
      %v7893 = vld [vmem:[%s7838 + $0x1b0] sm:$0xff]
      %v7894 = vld [vmem:[%s7838 + $0x1b8] sm:$0xff]
      %v7895 = vld [vmem:[%s7838 + $0x1c0] sm:$0xff]
      %v7896 = vld [vmem:[%s7838 + $0x1c8] sm:$0xff]
      %v7897 = vld [vmem:[%s7838 + $0x1d0] sm:$0xff]
      %v7898 = vld [vmem:[%s7838 + $0x1d8] sm:$0xff]
      %v7899 = vld [vmem:[%s7838 + $0x1e0] sm:$0xff]
      %v7900 = vld [vmem:[%s7838 + $0x1e8] sm:$0xff]
      %v7901 = vld [vmem:[%s7838 + $0x1f0] sm:$0xff]
      %v7902 = vld [vmem:[%s7838 + $0x1f8] sm:$0xff]
      %7903 = vmatprep.subr.mxu0 %v7840
      %7904 = vmatpush1.msra.mxu0 %v7839
      %7905 = vmatprep.subr.mxu0 %v7844
      %7906 = vmatpush1.msra.mxu0 %v7843
      %7907 = vmatprep.subr.mxu0 %v7848
      %7908 = vmatpush1.msra.mxu0 %v7847
      %7909 = vmatprep.subr.mxu0 %v7852
      %7910 = vmatpush1.msra.mxu0 %v7851
      %7911 = vmatprep.subr.mxu0 %v7856
      %7912 = vmatpush1.msra.mxu0 %v7855
      %7913 = vmatprep.subr.mxu0 %v7860
      %7914 = vmatpush1.msra.mxu0 %v7859
      %7915 = vmatprep.subr.mxu0 %v7864
      %7916 = vmatpush1.msra.mxu0 %v7863
      %7917 = vmatprep.subr.mxu0 %v7868
      %7918 = vmatpush1.msra.mxu0 %v7867
      %7919 = vmatprep.subr.mxu0 %v7872
      %7920 = vmatpush1.msra.mxu0 %v7871
      %7921 = vmatprep.subr.mxu0 %v7876
      %7922 = vmatpush1.msra.mxu0 %v7875
      %7923 = vmatprep.subr.mxu0 %v7880
      %7924 = vmatpush1.msra.mxu0 %v7879
      %7925 = vmatprep.subr.mxu0 %v7884
      %7926 = vmatpush1.msra.mxu0 %v7883
      %7927 = vmatprep.subr.mxu0 %v7888
      %7928 = vmatpush1.msra.mxu0 %v7887
      %7929 = vmatprep.subr.mxu0 %v7892
      %7930 = vmatpush1.msra.mxu0 %v7891
      %7931 = vmatprep.subr.mxu0 %v7896
      %7932 = vmatpush1.msra.mxu0 %v7895
      %7933 = vmatprep.subr.mxu0 %v7900
      %7934 = vmatpush1.msra.mxu0 %v7899
      %7935 = vmatprep.subr.mxu0 0.0
      %7936 = vmatpush1.msra.mxu0 0.0
      %7937 = vmatprep.subr.mxu0 0.0
      %7938 = vmatpush1.msra.mxu0 0.0
      %7939 = vmatprep.subr.mxu0 0.0
      %7940 = vmatpush1.msra.mxu0 0.0
      %7941 = vmatprep.subr.mxu0 0.0
      %7942 = vmatpush1.msra.mxu0 0.0
      %7943 = vmatprep.subr.mxu0 0.0
      %7944 = vmatpush1.msra.mxu0 0.0
      %7945 = vmatprep.subr.mxu0 0.0
      %7946 = vmatpush1.msra.mxu0 0.0
      %7947 = vmatprep.subr.mxu0 0.0
      %7948 = vmatpush1.msra.mxu0 0.0
      %7949 = vmatprep.subr.mxu0 0.0
      %7950 = vmatpush1.msra.mxu0 0.0
      %7951 = vmatprep.subr.mxu0 0.0
      %7952 = vmatpush1.msra.mxu0 0.0
      %7953 = vmatprep.subr.mxu0 0.0
      %7954 = vmatpush1.msra.mxu0 0.0
      %7955 = vmatprep.subr.mxu0 0.0
      %7956 = vmatpush1.msra.mxu0 0.0
      %7957 = vmatprep.subr.mxu0 0.0
      %7958 = vmatpush1.msra.mxu0 0.0
      %7959 = vmatprep.subr.mxu0 0.0
      %7960 = vmatpush1.msra.mxu0 0.0
      %7961 = vmatprep.subr.mxu0 0.0
      %7962 = vmatpush1.msra.mxu0 0.0
      %7963 = vmatprep.subr.mxu0 0.0
      %7964 = vmatpush1.msra.mxu0 0.0
      %7965 = vmatprep.subr.mxu0 0.0
      %7966 = vmatpush1.msra.mxu0 0.0
      %7967 = vmatprep.mubr.f32.mxu0 0.0
      %7968 = vmatmul.mubr.f32.gmra.mrb[0].mxu0 %v7837
      %v7969 = vpop.f32.mrb[0].mxu0
      %v7970 = vadd.f32 0.0, %v7969
      %v7971 = vpop.f32.mrb[0].mxu0
      %v7972 = vadd.f32 0.0, %v7971
      %7973 = vdwg.mxu0
      %7974 = vmatprep.subr.mxu0 %v7842
      %7975 = vmatpush1.msra.mxu0 %v7841
      %7976 = vmatprep.subr.mxu0 %v7846
      %7977 = vmatpush1.msra.mxu0 %v7845
      %7978 = vmatprep.subr.mxu0 %v7850
      %7979 = vmatpush1.msra.mxu0 %v7849
      %7980 = vmatprep.subr.mxu0 %v7854
      %7981 = vmatpush1.msra.mxu0 %v7853
      %7982 = vmatprep.subr.mxu0 %v7858
      %7983 = vmatpush1.msra.mxu0 %v7857
      %7984 = vmatprep.subr.mxu0 %v7862
      %7985 = vmatpush1.msra.mxu0 %v7861
      %7986 = vmatprep.subr.mxu0 %v7866
      %7987 = vmatpush1.msra.mxu0 %v7865
      %7988 = vmatprep.subr.mxu0 %v7870
      %7989 = vmatpush1.msra.mxu0 %v7869
      %7990 = vmatprep.subr.mxu0 %v7874
      %7991 = vmatpush1.msra.mxu0 %v7873
      %7992 = vmatprep.subr.mxu0 %v7878
      %7993 = vmatpush1.msra.mxu0 %v7877
      %7994 = vmatprep.subr.mxu0 %v7882
      %7995 = vmatpush1.msra.mxu0 %v7881
      %7996 = vmatprep.subr.mxu0 %v7886
      %7997 = vmatpush1.msra.mxu0 %v7885
      %7998 = vmatprep.subr.mxu0 %v7890
      %7999 = vmatpush1.msra.mxu0 %v7889
      %8000 = vmatprep.subr.mxu0 %v7894
      %8001 = vmatpush1.msra.mxu0 %v7893
      %8002 = vmatprep.subr.mxu0 %v7898
      %8003 = vmatpush1.msra.mxu0 %v7897
      %8004 = vmatprep.subr.mxu0 %v7902
      %8005 = vmatpush1.msra.mxu0 %v7901
      %8006 = vmatprep.subr.mxu0 0.0
      %8007 = vmatpush1.msra.mxu0 0.0
      %8008 = vmatprep.subr.mxu0 0.0
      %8009 = vmatpush1.msra.mxu0 0.0
      %8010 = vmatprep.subr.mxu0 0.0
      %8011 = vmatpush1.msra.mxu0 0.0
      %8012 = vmatprep.subr.mxu0 0.0
      %8013 = vmatpush1.msra.mxu0 0.0
      %8014 = vmatprep.subr.mxu0 0.0
      %8015 = vmatpush1.msra.mxu0 0.0
      %8016 = vmatprep.subr.mxu0 0.0
      %8017 = vmatpush1.msra.mxu0 0.0
      %8018 = vmatprep.subr.mxu0 0.0
      %8019 = vmatpush1.msra.mxu0 0.0
      %8020 = vmatprep.subr.mxu0 0.0
      %8021 = vmatpush1.msra.mxu0 0.0
      %8022 = vmatprep.subr.mxu0 0.0
      %8023 = vmatpush1.msra.mxu0 0.0
      %8024 = vmatprep.subr.mxu0 0.0
      %8025 = vmatpush1.msra.mxu0 0.0
      %8026 = vmatprep.subr.mxu0 0.0
      %8027 = vmatpush1.msra.mxu0 0.0
      %8028 = vmatprep.subr.mxu0 0.0
      %8029 = vmatpush1.msra.mxu0 0.0
      %8030 = vmatprep.subr.mxu0 0.0
      %8031 = vmatpush1.msra.mxu0 0.0
      %8032 = vmatprep.subr.mxu0 0.0
      %8033 = vmatpush1.msra.mxu0 0.0
      %8034 = vmatprep.subr.mxu0 0.0
      %8035 = vmatpush1.msra.mxu0 0.0
      %8036 = vmatprep.subr.mxu0 0.0
      %8037 = vmatpush1.msra.mxu0 0.0
      %8038 = vmatprep.mubr.f32.mxu0 0.0
      %8039 = vmatmul.mubr.f32.gmra.mrb[0].mxu0 %v7837
      %v8040 = vpop.f32.mrb[0].mxu0
      %v8041 = vadd.f32 0.0, %v8040
      %v8042 = vpop.f32.mrb[0].mxu0
      %v8043 = vadd.f32 0.0, %v8042
      %8044 = vdwg.mxu0
      %v8045 = vadd.f32 %v7833, %v7970
      %v8046 = vadd.f32 %v7834, %v7972
      %v8047 = vadd.f32 %v7835, %v8041
      %v8048 = vadd.f32 %v7836, %v8043
      %v8049 = vld [vmem:[#allocation3 + $0xb] sm:$0x1]
      %s8050 = scalar_lea.vmem %s6, 5632
      %v8051 = vld [vmem:[%s8050] sm:$0xff]
      %v8052 = vld [vmem:[%s8050 + $0x8] sm:$0xff]
      %v8053 = vld [vmem:[%s8050 + $0x10] sm:$0xff]
      %v8054 = vld [vmem:[%s8050 + $0x18] sm:$0xff]
      %v8055 = vld [vmem:[%s8050 + $0x20] sm:$0xff]
      %v8056 = vld [vmem:[%s8050 + $0x28] sm:$0xff]
      %v8057 = vld [vmem:[%s8050 + $0x30] sm:$0xff]
      %v8058 = vld [vmem:[%s8050 + $0x38] sm:$0xff]
      %v8059 = vld [vmem:[%s8050 + $0x40] sm:$0xff]
      %v8060 = vld [vmem:[%s8050 + $0x48] sm:$0xff]
      %v8061 = vld [vmem:[%s8050 + $0x50] sm:$0xff]
      %v8062 = vld [vmem:[%s8050 + $0x58] sm:$0xff]
      %v8063 = vld [vmem:[%s8050 + $0x60] sm:$0xff]
      %v8064 = vld [vmem:[%s8050 + $0x68] sm:$0xff]
      %v8065 = vld [vmem:[%s8050 + $0x70] sm:$0xff]
      %v8066 = vld [vmem:[%s8050 + $0x78] sm:$0xff]
      %v8067 = vld [vmem:[%s8050 + $0x80] sm:$0xff]
      %v8068 = vld [vmem:[%s8050 + $0x88] sm:$0xff]
      %v8069 = vld [vmem:[%s8050 + $0x90] sm:$0xff]
      %v8070 = vld [vmem:[%s8050 + $0x98] sm:$0xff]
      %v8071 = vld [vmem:[%s8050 + $0xa0] sm:$0xff]
      %v8072 = vld [vmem:[%s8050 + $0xa8] sm:$0xff]
      %v8073 = vld [vmem:[%s8050 + $0xb0] sm:$0xff]
      %v8074 = vld [vmem:[%s8050 + $0xb8] sm:$0xff]
      %v8075 = vld [vmem:[%s8050 + $0xc0] sm:$0xff]
      %v8076 = vld [vmem:[%s8050 + $0xc8] sm:$0xff]
      %v8077 = vld [vmem:[%s8050 + $0xd0] sm:$0xff]
      %v8078 = vld [vmem:[%s8050 + $0xd8] sm:$0xff]
      %v8079 = vld [vmem:[%s8050 + $0xe0] sm:$0xff]
      %v8080 = vld [vmem:[%s8050 + $0xe8] sm:$0xff]
      %v8081 = vld [vmem:[%s8050 + $0xf0] sm:$0xff]
      %v8082 = vld [vmem:[%s8050 + $0xf8] sm:$0xff]
      %v8083 = vld [vmem:[%s8050 + $0x100] sm:$0xff]
      %v8084 = vld [vmem:[%s8050 + $0x108] sm:$0xff]
      %v8085 = vld [vmem:[%s8050 + $0x110] sm:$0xff]
      %v8086 = vld [vmem:[%s8050 + $0x118] sm:$0xff]
      %v8087 = vld [vmem:[%s8050 + $0x120] sm:$0xff]
      %v8088 = vld [vmem:[%s8050 + $0x128] sm:$0xff]
      %v8089 = vld [vmem:[%s8050 + $0x130] sm:$0xff]
      %v8090 = vld [vmem:[%s8050 + $0x138] sm:$0xff]
      %v8091 = vld [vmem:[%s8050 + $0x140] sm:$0xff]
      %v8092 = vld [vmem:[%s8050 + $0x148] sm:$0xff]
      %v8093 = vld [vmem:[%s8050 + $0x150] sm:$0xff]
      %v8094 = vld [vmem:[%s8050 + $0x158] sm:$0xff]
      %v8095 = vld [vmem:[%s8050 + $0x160] sm:$0xff]
      %v8096 = vld [vmem:[%s8050 + $0x168] sm:$0xff]
      %v8097 = vld [vmem:[%s8050 + $0x170] sm:$0xff]
      %v8098 = vld [vmem:[%s8050 + $0x178] sm:$0xff]
      %v8099 = vld [vmem:[%s8050 + $0x180] sm:$0xff]
      %v8100 = vld [vmem:[%s8050 + $0x188] sm:$0xff]
      %v8101 = vld [vmem:[%s8050 + $0x190] sm:$0xff]
      %v8102 = vld [vmem:[%s8050 + $0x198] sm:$0xff]
      %v8103 = vld [vmem:[%s8050 + $0x1a0] sm:$0xff]
      %v8104 = vld [vmem:[%s8050 + $0x1a8] sm:$0xff]
      %v8105 = vld [vmem:[%s8050 + $0x1b0] sm:$0xff]
      %v8106 = vld [vmem:[%s8050 + $0x1b8] sm:$0xff]
      %v8107 = vld [vmem:[%s8050 + $0x1c0] sm:$0xff]
      %v8108 = vld [vmem:[%s8050 + $0x1c8] sm:$0xff]
      %v8109 = vld [vmem:[%s8050 + $0x1d0] sm:$0xff]
      %v8110 = vld [vmem:[%s8050 + $0x1d8] sm:$0xff]
      %v8111 = vld [vmem:[%s8050 + $0x1e0] sm:$0xff]
      %v8112 = vld [vmem:[%s8050 + $0x1e8] sm:$0xff]
      %v8113 = vld [vmem:[%s8050 + $0x1f0] sm:$0xff]
      %v8114 = vld [vmem:[%s8050 + $0x1f8] sm:$0xff]
      %8115 = vmatprep.subr.mxu0 %v8052
      %8116 = vmatpush1.msra.mxu0 %v8051
      %8117 = vmatprep.subr.mxu0 %v8056
      %8118 = vmatpush1.msra.mxu0 %v8055
      %8119 = vmatprep.subr.mxu0 %v8060
      %8120 = vmatpush1.msra.mxu0 %v8059
      %8121 = vmatprep.subr.mxu0 %v8064
      %8122 = vmatpush1.msra.mxu0 %v8063
      %8123 = vmatprep.subr.mxu0 %v8068
      %8124 = vmatpush1.msra.mxu0 %v8067
      %8125 = vmatprep.subr.mxu0 %v8072
      %8126 = vmatpush1.msra.mxu0 %v8071
      %8127 = vmatprep.subr.mxu0 %v8076
      %8128 = vmatpush1.msra.mxu0 %v8075
      %8129 = vmatprep.subr.mxu0 %v8080
      %8130 = vmatpush1.msra.mxu0 %v8079
      %8131 = vmatprep.subr.mxu0 %v8084
      %8132 = vmatpush1.msra.mxu0 %v8083
      %8133 = vmatprep.subr.mxu0 %v8088
      %8134 = vmatpush1.msra.mxu0 %v8087
      %8135 = vmatprep.subr.mxu0 %v8092
      %8136 = vmatpush1.msra.mxu0 %v8091
      %8137 = vmatprep.subr.mxu0 %v8096
      %8138 = vmatpush1.msra.mxu0 %v8095
      %8139 = vmatprep.subr.mxu0 %v8100
      %8140 = vmatpush1.msra.mxu0 %v8099
      %8141 = vmatprep.subr.mxu0 %v8104
      %8142 = vmatpush1.msra.mxu0 %v8103
      %8143 = vmatprep.subr.mxu0 %v8108
      %8144 = vmatpush1.msra.mxu0 %v8107
      %8145 = vmatprep.subr.mxu0 %v8112
      %8146 = vmatpush1.msra.mxu0 %v8111
      %8147 = vmatprep.subr.mxu0 0.0
      %8148 = vmatpush1.msra.mxu0 0.0
      %8149 = vmatprep.subr.mxu0 0.0
      %8150 = vmatpush1.msra.mxu0 0.0
      %8151 = vmatprep.subr.mxu0 0.0
      %8152 = vmatpush1.msra.mxu0 0.0
      %8153 = vmatprep.subr.mxu0 0.0
      %8154 = vmatpush1.msra.mxu0 0.0
      %8155 = vmatprep.subr.mxu0 0.0
      %8156 = vmatpush1.msra.mxu0 0.0
      %8157 = vmatprep.subr.mxu0 0.0
      %8158 = vmatpush1.msra.mxu0 0.0
      %8159 = vmatprep.subr.mxu0 0.0
      %8160 = vmatpush1.msra.mxu0 0.0
      %8161 = vmatprep.subr.mxu0 0.0
      %8162 = vmatpush1.msra.mxu0 0.0
      %8163 = vmatprep.subr.mxu0 0.0
      %8164 = vmatpush1.msra.mxu0 0.0
      %8165 = vmatprep.subr.mxu0 0.0
      %8166 = vmatpush1.msra.mxu0 0.0
      %8167 = vmatprep.subr.mxu0 0.0
      %8168 = vmatpush1.msra.mxu0 0.0
      %8169 = vmatprep.subr.mxu0 0.0
      %8170 = vmatpush1.msra.mxu0 0.0
      %8171 = vmatprep.subr.mxu0 0.0
      %8172 = vmatpush1.msra.mxu0 0.0
      %8173 = vmatprep.subr.mxu0 0.0
      %8174 = vmatpush1.msra.mxu0 0.0
      %8175 = vmatprep.subr.mxu0 0.0
      %8176 = vmatpush1.msra.mxu0 0.0
      %8177 = vmatprep.subr.mxu0 0.0
      %8178 = vmatpush1.msra.mxu0 0.0
      %8179 = vmatprep.mubr.f32.mxu0 0.0
      %8180 = vmatmul.mubr.f32.gmra.mrb[0].mxu0 %v8049
      %v8181 = vpop.f32.mrb[0].mxu0
      %v8182 = vadd.f32 0.0, %v8181
      %v8183 = vpop.f32.mrb[0].mxu0
      %v8184 = vadd.f32 0.0, %v8183
      %8185 = vdwg.mxu0
      %8186 = vmatprep.subr.mxu0 %v8054
      %8187 = vmatpush1.msra.mxu0 %v8053
      %8188 = vmatprep.subr.mxu0 %v8058
      %8189 = vmatpush1.msra.mxu0 %v8057
      %8190 = vmatprep.subr.mxu0 %v8062
      %8191 = vmatpush1.msra.mxu0 %v8061
      %8192 = vmatprep.subr.mxu0 %v8066
      %8193 = vmatpush1.msra.mxu0 %v8065
      %8194 = vmatprep.subr.mxu0 %v8070
      %8195 = vmatpush1.msra.mxu0 %v8069
      %8196 = vmatprep.subr.mxu0 %v8074
      %8197 = vmatpush1.msra.mxu0 %v8073
      %8198 = vmatprep.subr.mxu0 %v8078
      %8199 = vmatpush1.msra.mxu0 %v8077
      %8200 = vmatprep.subr.mxu0 %v8082
      %8201 = vmatpush1.msra.mxu0 %v8081
      %8202 = vmatprep.subr.mxu0 %v8086
      %8203 = vmatpush1.msra.mxu0 %v8085
      %8204 = vmatprep.subr.mxu0 %v8090
      %8205 = vmatpush1.msra.mxu0 %v8089
      %8206 = vmatprep.subr.mxu0 %v8094
      %8207 = vmatpush1.msra.mxu0 %v8093
      %8208 = vmatprep.subr.mxu0 %v8098
      %8209 = vmatpush1.msra.mxu0 %v8097
      %8210 = vmatprep.subr.mxu0 %v8102
      %8211 = vmatpush1.msra.mxu0 %v8101
      %8212 = vmatprep.subr.mxu0 %v8106
      %8213 = vmatpush1.msra.mxu0 %v8105
      %8214 = vmatprep.subr.mxu0 %v8110
      %8215 = vmatpush1.msra.mxu0 %v8109
      %8216 = vmatprep.subr.mxu0 %v8114
      %8217 = vmatpush1.msra.mxu0 %v8113
      %8218 = vmatprep.subr.mxu0 0.0
      %8219 = vmatpush1.msra.mxu0 0.0
      %8220 = vmatprep.subr.mxu0 0.0
      %8221 = vmatpush1.msra.mxu0 0.0
      %8222 = vmatprep.subr.mxu0 0.0
      %8223 = vmatpush1.msra.mxu0 0.0
      %8224 = vmatprep.subr.mxu0 0.0
      %8225 = vmatpush1.msra.mxu0 0.0
      %8226 = vmatprep.subr.mxu0 0.0
      %8227 = vmatpush1.msra.mxu0 0.0
      %8228 = vmatprep.subr.mxu0 0.0
      %8229 = vmatpush1.msra.mxu0 0.0
      %8230 = vmatprep.subr.mxu0 0.0
      %8231 = vmatpush1.msra.mxu0 0.0
      %8232 = vmatprep.subr.mxu0 0.0
      %8233 = vmatpush1.msra.mxu0 0.0
      %8234 = vmatprep.subr.mxu0 0.0
      %8235 = vmatpush1.msra.mxu0 0.0
      %8236 = vmatprep.subr.mxu0 0.0
      %8237 = vmatpush1.msra.mxu0 0.0
      %8238 = vmatprep.subr.mxu0 0.0
      %8239 = vmatpush1.msra.mxu0 0.0
      %8240 = vmatprep.subr.mxu0 0.0
      %8241 = vmatpush1.msra.mxu0 0.0
      %8242 = vmatprep.subr.mxu0 0.0
      %8243 = vmatpush1.msra.mxu0 0.0
      %8244 = vmatprep.subr.mxu0 0.0
      %8245 = vmatpush1.msra.mxu0 0.0
      %8246 = vmatprep.subr.mxu0 0.0
      %8247 = vmatpush1.msra.mxu0 0.0
      %8248 = vmatprep.subr.mxu0 0.0
      %8249 = vmatpush1.msra.mxu0 0.0
      %8250 = vmatprep.mubr.f32.mxu0 0.0
      %8251 = vmatmul.mubr.f32.gmra.mrb[0].mxu0 %v8049
      %v8252 = vpop.f32.mrb[0].mxu0
      %v8253 = vadd.f32 0.0, %v8252
      %v8254 = vpop.f32.mrb[0].mxu0
      %v8255 = vadd.f32 0.0, %v8254
      %8256 = vdwg.mxu0
      %v8257 = vadd.f32 %v8045, %v8182
      %v8258 = vadd.f32 %v8046, %v8184
      %v8259 = vadd.f32 %v8047, %v8253
      %v8260 = vadd.f32 %v8048, %v8255
      %v8261 = vld [vmem:[#allocation3 + $0xc] sm:$0x1]
      %s8262 = scalar_lea.vmem %s6, 6144
      %v8263 = vld [vmem:[%s8262] sm:$0xff]
      %v8264 = vld [vmem:[%s8262 + $0x8] sm:$0xff]
      %v8265 = vld [vmem:[%s8262 + $0x10] sm:$0xff]
      %v8266 = vld [vmem:[%s8262 + $0x18] sm:$0xff]
      %v8267 = vld [vmem:[%s8262 + $0x20] sm:$0xff]
      %v8268 = vld [vmem:[%s8262 + $0x28] sm:$0xff]
      %v8269 = vld [vmem:[%s8262 + $0x30] sm:$0xff]
      %v8270 = vld [vmem:[%s8262 + $0x38] sm:$0xff]
      %v8271 = vld [vmem:[%s8262 + $0x40] sm:$0xff]
      %v8272 = vld [vmem:[%s8262 + $0x48] sm:$0xff]
      %v8273 = vld [vmem:[%s8262 + $0x50] sm:$0xff]
      %v8274 = vld [vmem:[%s8262 + $0x58] sm:$0xff]
      %v8275 = vld [vmem:[%s8262 + $0x60] sm:$0xff]
      %v8276 = vld [vmem:[%s8262 + $0x68] sm:$0xff]
      %v8277 = vld [vmem:[%s8262 + $0x70] sm:$0xff]
      %v8278 = vld [vmem:[%s8262 + $0x78] sm:$0xff]
      %v8279 = vld [vmem:[%s8262 + $0x80] sm:$0xff]
      %v8280 = vld [vmem:[%s8262 + $0x88] sm:$0xff]
      %v8281 = vld [vmem:[%s8262 + $0x90] sm:$0xff]
      %v8282 = vld [vmem:[%s8262 + $0x98] sm:$0xff]
      %v8283 = vld [vmem:[%s8262 + $0xa0] sm:$0xff]
      %v8284 = vld [vmem:[%s8262 + $0xa8] sm:$0xff]
      %v8285 = vld [vmem:[%s8262 + $0xb0] sm:$0xff]
      %v8286 = vld [vmem:[%s8262 + $0xb8] sm:$0xff]
      %v8287 = vld [vmem:[%s8262 + $0xc0] sm:$0xff]
      %v8288 = vld [vmem:[%s8262 + $0xc8] sm:$0xff]
      %v8289 = vld [vmem:[%s8262 + $0xd0] sm:$0xff]
      %v8290 = vld [vmem:[%s8262 + $0xd8] sm:$0xff]
      %v8291 = vld [vmem:[%s8262 + $0xe0] sm:$0xff]
      %v8292 = vld [vmem:[%s8262 + $0xe8] sm:$0xff]
      %v8293 = vld [vmem:[%s8262 + $0xf0] sm:$0xff]
      %v8294 = vld [vmem:[%s8262 + $0xf8] sm:$0xff]
      %v8295 = vld [vmem:[%s8262 + $0x100] sm:$0xff]
      %v8296 = vld [vmem:[%s8262 + $0x108] sm:$0xff]
      %v8297 = vld [vmem:[%s8262 + $0x110] sm:$0xff]
      %v8298 = vld [vmem:[%s8262 + $0x118] sm:$0xff]
      %v8299 = vld [vmem:[%s8262 + $0x120] sm:$0xff]
      %v8300 = vld [vmem:[%s8262 + $0x128] sm:$0xff]
      %v8301 = vld [vmem:[%s8262 + $0x130] sm:$0xff]
      %v8302 = vld [vmem:[%s8262 + $0x138] sm:$0xff]
      %v8303 = vld [vmem:[%s8262 + $0x140] sm:$0xff]
      %v8304 = vld [vmem:[%s8262 + $0x148] sm:$0xff]
      %v8305 = vld [vmem:[%s8262 + $0x150] sm:$0xff]
      %v8306 = vld [vmem:[%s8262 + $0x158] sm:$0xff]
      %v8307 = vld [vmem:[%s8262 + $0x160] sm:$0xff]
      %v8308 = vld [vmem:[%s8262 + $0x168] sm:$0xff]
      %v8309 = vld [vmem:[%s8262 + $0x170] sm:$0xff]
      %v8310 = vld [vmem:[%s8262 + $0x178] sm:$0xff]
      %v8311 = vld [vmem:[%s8262 + $0x180] sm:$0xff]
      %v8312 = vld [vmem:[%s8262 + $0x188] sm:$0xff]
      %v8313 = vld [vmem:[%s8262 + $0x190] sm:$0xff]
      %v8314 = vld [vmem:[%s8262 + $0x198] sm:$0xff]
      %v8315 = vld [vmem:[%s8262 + $0x1a0] sm:$0xff]
      %v8316 = vld [vmem:[%s8262 + $0x1a8] sm:$0xff]
      %v8317 = vld [vmem:[%s8262 + $0x1b0] sm:$0xff]
      %v8318 = vld [vmem:[%s8262 + $0x1b8] sm:$0xff]
      %v8319 = vld [vmem:[%s8262 + $0x1c0] sm:$0xff]
      %v8320 = vld [vmem:[%s8262 + $0x1c8] sm:$0xff]
      %v8321 = vld [vmem:[%s8262 + $0x1d0] sm:$0xff]
      %v8322 = vld [vmem:[%s8262 + $0x1d8] sm:$0xff]
      %v8323 = vld [vmem:[%s8262 + $0x1e0] sm:$0xff]
      %v8324 = vld [vmem:[%s8262 + $0x1e8] sm:$0xff]
      %v8325 = vld [vmem:[%s8262 + $0x1f0] sm:$0xff]
      %v8326 = vld [vmem:[%s8262 + $0x1f8] sm:$0xff]
      %8327 = vmatprep.subr.mxu0 %v8264
      %8328 = vmatpush1.msra.mxu0 %v8263
      %8329 = vmatprep.subr.mxu0 %v8268
      %8330 = vmatpush1.msra.mxu0 %v8267
      %8331 = vmatprep.subr.mxu0 %v8272
      %8332 = vmatpush1.msra.mxu0 %v8271
      %8333 = vmatprep.subr.mxu0 %v8276
      %8334 = vmatpush1.msra.mxu0 %v8275
      %8335 = vmatprep.subr.mxu0 %v8280
      %8336 = vmatpush1.msra.mxu0 %v8279
      %8337 = vmatprep.subr.mxu0 %v8284
      %8338 = vmatpush1.msra.mxu0 %v8283
      %8339 = vmatprep.subr.mxu0 %v8288
      %8340 = vmatpush1.msra.mxu0 %v8287
      %8341 = vmatprep.subr.mxu0 %v8292
      %8342 = vmatpush1.msra.mxu0 %v8291
      %8343 = vmatprep.subr.mxu0 %v8296
      %8344 = vmatpush1.msra.mxu0 %v8295
      %8345 = vmatprep.subr.mxu0 %v8300
      %8346 = vmatpush1.msra.mxu0 %v8299
      %8347 = vmatprep.subr.mxu0 %v8304
      %8348 = vmatpush1.msra.mxu0 %v8303
      %8349 = vmatprep.subr.mxu0 %v8308
      %8350 = vmatpush1.msra.mxu0 %v8307
      %8351 = vmatprep.subr.mxu0 %v8312
      %8352 = vmatpush1.msra.mxu0 %v8311
      %8353 = vmatprep.subr.mxu0 %v8316
      %8354 = vmatpush1.msra.mxu0 %v8315
      %8355 = vmatprep.subr.mxu0 %v8320
      %8356 = vmatpush1.msra.mxu0 %v8319
      %8357 = vmatprep.subr.mxu0 %v8324
      %8358 = vmatpush1.msra.mxu0 %v8323
      %8359 = vmatprep.subr.mxu0 0.0
      %8360 = vmatpush1.msra.mxu0 0.0
      %8361 = vmatprep.subr.mxu0 0.0
      %8362 = vmatpush1.msra.mxu0 0.0
      %8363 = vmatprep.subr.mxu0 0.0
      %8364 = vmatpush1.msra.mxu0 0.0
      %8365 = vmatprep.subr.mxu0 0.0
      %8366 = vmatpush1.msra.mxu0 0.0
      %8367 = vmatprep.subr.mxu0 0.0
      %8368 = vmatpush1.msra.mxu0 0.0
      %8369 = vmatprep.subr.mxu0 0.0
      %8370 = vmatpush1.msra.mxu0 0.0
      %8371 = vmatprep.subr.mxu0 0.0
      %8372 = vmatpush1.msra.mxu0 0.0
      %8373 = vmatprep.subr.mxu0 0.0
      %8374 = vmatpush1.msra.mxu0 0.0
      %8375 = vmatprep.subr.mxu0 0.0
      %8376 = vmatpush1.msra.mxu0 0.0
      %8377 = vmatprep.subr.mxu0 0.0
      %8378 = vmatpush1.msra.mxu0 0.0
      %8379 = vmatprep.subr.mxu0 0.0
      %8380 = vmatpush1.msra.mxu0 0.0
      %8381 = vmatprep.subr.mxu0 0.0
      %8382 = vmatpush1.msra.mxu0 0.0
      %8383 = vmatprep.subr.mxu0 0.0
      %8384 = vmatpush1.msra.mxu0 0.0
      %8385 = vmatprep.subr.mxu0 0.0
      %8386 = vmatpush1.msra.mxu0 0.0
      %8387 = vmatprep.subr.mxu0 0.0
      %8388 = vmatpush1.msra.mxu0 0.0
      %8389 = vmatprep.subr.mxu0 0.0
      %8390 = vmatpush1.msra.mxu0 0.0
      %8391 = vmatprep.mubr.f32.mxu0 0.0
      %8392 = vmatmul.mubr.f32.gmra.mrb[0].mxu0 %v8261
      %v8393 = vpop.f32.mrb[0].mxu0
      %v8394 = vadd.f32 0.0, %v8393
      %v8395 = vpop.f32.mrb[0].mxu0
      %v8396 = vadd.f32 0.0, %v8395
      %8397 = vdwg.mxu0
      %8398 = vmatprep.subr.mxu0 %v8266
      %8399 = vmatpush1.msra.mxu0 %v8265
      %8400 = vmatprep.subr.mxu0 %v8270
      %8401 = vmatpush1.msra.mxu0 %v8269
      %8402 = vmatprep.subr.mxu0 %v8274
      %8403 = vmatpush1.msra.mxu0 %v8273
      %8404 = vmatprep.subr.mxu0 %v8278
      %8405 = vmatpush1.msra.mxu0 %v8277
      %8406 = vmatprep.subr.mxu0 %v8282
      %8407 = vmatpush1.msra.mxu0 %v8281
      %8408 = vmatprep.subr.mxu0 %v8286
      %8409 = vmatpush1.msra.mxu0 %v8285
      %8410 = vmatprep.subr.mxu0 %v8290
      %8411 = vmatpush1.msra.mxu0 %v8289
      %8412 = vmatprep.subr.mxu0 %v8294
      %8413 = vmatpush1.msra.mxu0 %v8293
      %8414 = vmatprep.subr.mxu0 %v8298
      %8415 = vmatpush1.msra.mxu0 %v8297
      %8416 = vmatprep.subr.mxu0 %v8302
      %8417 = vmatpush1.msra.mxu0 %v8301
      %8418 = vmatprep.subr.mxu0 %v8306
      %8419 = vmatpush1.msra.mxu0 %v8305
      %8420 = vmatprep.subr.mxu0 %v8310
      %8421 = vmatpush1.msra.mxu0 %v8309
      %8422 = vmatprep.subr.mxu0 %v8314
      %8423 = vmatpush1.msra.mxu0 %v8313
      %8424 = vmatprep.subr.mxu0 %v8318
      %8425 = vmatpush1.msra.mxu0 %v8317
      %8426 = vmatprep.subr.mxu0 %v8322
      %8427 = vmatpush1.msra.mxu0 %v8321
      %8428 = vmatprep.subr.mxu0 %v8326
      %8429 = vmatpush1.msra.mxu0 %v8325
      %8430 = vmatprep.subr.mxu0 0.0
      %8431 = vmatpush1.msra.mxu0 0.0
      %8432 = vmatprep.subr.mxu0 0.0
      %8433 = vmatpush1.msra.mxu0 0.0
      %8434 = vmatprep.subr.mxu0 0.0
      %8435 = vmatpush1.msra.mxu0 0.0
      %8436 = vmatprep.subr.mxu0 0.0
      %8437 = vmatpush1.msra.mxu0 0.0
      %8438 = vmatprep.subr.mxu0 0.0
      %8439 = vmatpush1.msra.mxu0 0.0
      %8440 = vmatprep.subr.mxu0 0.0
      %8441 = vmatpush1.msra.mxu0 0.0
      %8442 = vmatprep.subr.mxu0 0.0
      %8443 = vmatpush1.msra.mxu0 0.0
      %8444 = vmatprep.subr.mxu0 0.0
      %8445 = vmatpush1.msra.mxu0 0.0
      %8446 = vmatprep.subr.mxu0 0.0
      %8447 = vmatpush1.msra.mxu0 0.0
      %8448 = vmatprep.subr.mxu0 0.0
      %8449 = vmatpush1.msra.mxu0 0.0
      %8450 = vmatprep.subr.mxu0 0.0
      %8451 = vmatpush1.msra.mxu0 0.0
      %8452 = vmatprep.subr.mxu0 0.0
      %8453 = vmatpush1.msra.mxu0 0.0
      %8454 = vmatprep.subr.mxu0 0.0
      %8455 = vmatpush1.msra.mxu0 0.0
      %8456 = vmatprep.subr.mxu0 0.0
      %8457 = vmatpush1.msra.mxu0 0.0
      %8458 = vmatprep.subr.mxu0 0.0
      %8459 = vmatpush1.msra.mxu0 0.0
      %8460 = vmatprep.subr.mxu0 0.0
      %8461 = vmatpush1.msra.mxu0 0.0
      %8462 = vmatprep.mubr.f32.mxu0 0.0
      %8463 = vmatmul.mubr.f32.gmra.mrb[0].mxu0 %v8261
      %v8464 = vpop.f32.mrb[0].mxu0
      %v8465 = vadd.f32 0.0, %v8464
      %v8466 = vpop.f32.mrb[0].mxu0
      %v8467 = vadd.f32 0.0, %v8466
      %8468 = vdwg.mxu0
      %v8469 = vadd.f32 %v8257, %v8394
      %v8470 = vadd.f32 %v8258, %v8396
      %v8471 = vadd.f32 %v8259, %v8465
      %v8472 = vadd.f32 %v8260, %v8467
      %v8473 = vld [vmem:[#allocation3 + $0xd] sm:$0x1]
      %s8474 = scalar_lea.vmem %s6, 6656
      %v8475 = vld [vmem:[%s8474] sm:$0xff]
      %v8476 = vld [vmem:[%s8474 + $0x8] sm:$0xff]
      %v8477 = vld [vmem:[%s8474 + $0x10] sm:$0xff]
      %v8478 = vld [vmem:[%s8474 + $0x18] sm:$0xff]
      %v8479 = vld [vmem:[%s8474 + $0x20] sm:$0xff]
      %v8480 = vld [vmem:[%s8474 + $0x28] sm:$0xff]
      %v8481 = vld [vmem:[%s8474 + $0x30] sm:$0xff]
      %v8482 = vld [vmem:[%s8474 + $0x38] sm:$0xff]
      %v8483 = vld [vmem:[%s8474 + $0x40] sm:$0xff]
      %v8484 = vld [vmem:[%s8474 + $0x48] sm:$0xff]
      %v8485 = vld [vmem:[%s8474 + $0x50] sm:$0xff]
      %v8486 = vld [vmem:[%s8474 + $0x58] sm:$0xff]
      %v8487 = vld [vmem:[%s8474 + $0x60] sm:$0xff]
      %v8488 = vld [vmem:[%s8474 + $0x68] sm:$0xff]
      %v8489 = vld [vmem:[%s8474 + $0x70] sm:$0xff]
      %v8490 = vld [vmem:[%s8474 + $0x78] sm:$0xff]
      %v8491 = vld [vmem:[%s8474 + $0x80] sm:$0xff]
      %v8492 = vld [vmem:[%s8474 + $0x88] sm:$0xff]
      %v8493 = vld [vmem:[%s8474 + $0x90] sm:$0xff]
      %v8494 = vld [vmem:[%s8474 + $0x98] sm:$0xff]
      %v8495 = vld [vmem:[%s8474 + $0xa0] sm:$0xff]
      %v8496 = vld [vmem:[%s8474 + $0xa8] sm:$0xff]
      %v8497 = vld [vmem:[%s8474 + $0xb0] sm:$0xff]
      %v8498 = vld [vmem:[%s8474 + $0xb8] sm:$0xff]
      %v8499 = vld [vmem:[%s8474 + $0xc0] sm:$0xff]
      %v8500 = vld [vmem:[%s8474 + $0xc8] sm:$0xff]
      %v8501 = vld [vmem:[%s8474 + $0xd0] sm:$0xff]
      %v8502 = vld [vmem:[%s8474 + $0xd8] sm:$0xff]
      %v8503 = vld [vmem:[%s8474 + $0xe0] sm:$0xff]
      %v8504 = vld [vmem:[%s8474 + $0xe8] sm:$0xff]
      %v8505 = vld [vmem:[%s8474 + $0xf0] sm:$0xff]
      %v8506 = vld [vmem:[%s8474 + $0xf8] sm:$0xff]
      %v8507 = vld [vmem:[%s8474 + $0x100] sm:$0xff]
      %v8508 = vld [vmem:[%s8474 + $0x108] sm:$0xff]
      %v8509 = vld [vmem:[%s8474 + $0x110] sm:$0xff]
      %v8510 = vld [vmem:[%s8474 + $0x118] sm:$0xff]
      %v8511 = vld [vmem:[%s8474 + $0x120] sm:$0xff]
      %v8512 = vld [vmem:[%s8474 + $0x128] sm:$0xff]
      %v8513 = vld [vmem:[%s8474 + $0x130] sm:$0xff]
      %v8514 = vld [vmem:[%s8474 + $0x138] sm:$0xff]
      %v8515 = vld [vmem:[%s8474 + $0x140] sm:$0xff]
      %v8516 = vld [vmem:[%s8474 + $0x148] sm:$0xff]
      %v8517 = vld [vmem:[%s8474 + $0x150] sm:$0xff]
      %v8518 = vld [vmem:[%s8474 + $0x158] sm:$0xff]
      %v8519 = vld [vmem:[%s8474 + $0x160] sm:$0xff]
      %v8520 = vld [vmem:[%s8474 + $0x168] sm:$0xff]
      %v8521 = vld [vmem:[%s8474 + $0x170] sm:$0xff]
      %v8522 = vld [vmem:[%s8474 + $0x178] sm:$0xff]
      %v8523 = vld [vmem:[%s8474 + $0x180] sm:$0xff]
      %v8524 = vld [vmem:[%s8474 + $0x188] sm:$0xff]
      %v8525 = vld [vmem:[%s8474 + $0x190] sm:$0xff]
      %v8526 = vld [vmem:[%s8474 + $0x198] sm:$0xff]
      %v8527 = vld [vmem:[%s8474 + $0x1a0] sm:$0xff]
      %v8528 = vld [vmem:[%s8474 + $0x1a8] sm:$0xff]
      %v8529 = vld [vmem:[%s8474 + $0x1b0] sm:$0xff]
      %v8530 = vld [vmem:[%s8474 + $0x1b8] sm:$0xff]
      %v8531 = vld [vmem:[%s8474 + $0x1c0] sm:$0xff]
      %v8532 = vld [vmem:[%s8474 + $0x1c8] sm:$0xff]
      %v8533 = vld [vmem:[%s8474 + $0x1d0] sm:$0xff]
      %v8534 = vld [vmem:[%s8474 + $0x1d8] sm:$0xff]
      %v8535 = vld [vmem:[%s8474 + $0x1e0] sm:$0xff]
      %v8536 = vld [vmem:[%s8474 + $0x1e8] sm:$0xff]
      %v8537 = vld [vmem:[%s8474 + $0x1f0] sm:$0xff]
      %v8538 = vld [vmem:[%s8474 + $0x1f8] sm:$0xff]
      %8539 = vmatprep.subr.mxu0 %v8476
      %8540 = vmatpush1.msra.mxu0 %v8475
      %8541 = vmatprep.subr.mxu0 %v8480
      %8542 = vmatpush1.msra.mxu0 %v8479
      %8543 = vmatprep.subr.mxu0 %v8484
      %8544 = vmatpush1.msra.mxu0 %v8483
      %8545 = vmatprep.subr.mxu0 %v8488
      %8546 = vmatpush1.msra.mxu0 %v8487
      %8547 = vmatprep.subr.mxu0 %v8492
      %8548 = vmatpush1.msra.mxu0 %v8491
      %8549 = vmatprep.subr.mxu0 %v8496
      %8550 = vmatpush1.msra.mxu0 %v8495
      %8551 = vmatprep.subr.mxu0 %v8500
      %8552 = vmatpush1.msra.mxu0 %v8499
      %8553 = vmatprep.subr.mxu0 %v8504
      %8554 = vmatpush1.msra.mxu0 %v8503
      %8555 = vmatprep.subr.mxu0 %v8508
      %8556 = vmatpush1.msra.mxu0 %v8507
      %8557 = vmatprep.subr.mxu0 %v8512
      %8558 = vmatpush1.msra.mxu0 %v8511
      %8559 = vmatprep.subr.mxu0 %v8516
      %8560 = vmatpush1.msra.mxu0 %v8515
      %8561 = vmatprep.subr.mxu0 %v8520
      %8562 = vmatpush1.msra.mxu0 %v8519
      %8563 = vmatprep.subr.mxu0 %v8524
      %8564 = vmatpush1.msra.mxu0 %v8523
      %8565 = vmatprep.subr.mxu0 %v8528
      %8566 = vmatpush1.msra.mxu0 %v8527
      %8567 = vmatprep.subr.mxu0 %v8532
      %8568 = vmatpush1.msra.mxu0 %v8531
      %8569 = vmatprep.subr.mxu0 %v8536
      %8570 = vmatpush1.msra.mxu0 %v8535
      %8571 = vmatprep.subr.mxu0 0.0
      %8572 = vmatpush1.msra.mxu0 0.0
      %8573 = vmatprep.subr.mxu0 0.0
      %8574 = vmatpush1.msra.mxu0 0.0
      %8575 = vmatprep.subr.mxu0 0.0
      %8576 = vmatpush1.msra.mxu0 0.0
      %8577 = vmatprep.subr.mxu0 0.0
      %8578 = vmatpush1.msra.mxu0 0.0
      %8579 = vmatprep.subr.mxu0 0.0
      %8580 = vmatpush1.msra.mxu0 0.0
      %8581 = vmatprep.subr.mxu0 0.0
      %8582 = vmatpush1.msra.mxu0 0.0
      %8583 = vmatprep.subr.mxu0 0.0
      %8584 = vmatpush1.msra.mxu0 0.0
      %8585 = vmatprep.subr.mxu0 0.0
      %8586 = vmatpush1.msra.mxu0 0.0
      %8587 = vmatprep.subr.mxu0 0.0
      %8588 = vmatpush1.msra.mxu0 0.0
      %8589 = vmatprep.subr.mxu0 0.0
      %8590 = vmatpush1.msra.mxu0 0.0
      %8591 = vmatprep.subr.mxu0 0.0
      %8592 = vmatpush1.msra.mxu0 0.0
      %8593 = vmatprep.subr.mxu0 0.0
      %8594 = vmatpush1.msra.mxu0 0.0
      %8595 = vmatprep.subr.mxu0 0.0
      %8596 = vmatpush1.msra.mxu0 0.0
      %8597 = vmatprep.subr.mxu0 0.0
      %8598 = vmatpush1.msra.mxu0 0.0
      %8599 = vmatprep.subr.mxu0 0.0
      %8600 = vmatpush1.msra.mxu0 0.0
      %8601 = vmatprep.subr.mxu0 0.0
      %8602 = vmatpush1.msra.mxu0 0.0
      %8603 = vmatprep.mubr.f32.mxu0 0.0
      %8604 = vmatmul.mubr.f32.gmra.mrb[0].mxu0 %v8473
      %v8605 = vpop.f32.mrb[0].mxu0
      %v8606 = vadd.f32 0.0, %v8605
      %v8607 = vpop.f32.mrb[0].mxu0
      %v8608 = vadd.f32 0.0, %v8607
      %8609 = vdwg.mxu0
      %8610 = vmatprep.subr.mxu0 %v8478
      %8611 = vmatpush1.msra.mxu0 %v8477
      %8612 = vmatprep.subr.mxu0 %v8482
      %8613 = vmatpush1.msra.mxu0 %v8481
      %8614 = vmatprep.subr.mxu0 %v8486
      %8615 = vmatpush1.msra.mxu0 %v8485
      %8616 = vmatprep.subr.mxu0 %v8490
      %8617 = vmatpush1.msra.mxu0 %v8489
      %8618 = vmatprep.subr.mxu0 %v8494
      %8619 = vmatpush1.msra.mxu0 %v8493
      %8620 = vmatprep.subr.mxu0 %v8498
      %8621 = vmatpush1.msra.mxu0 %v8497
      %8622 = vmatprep.subr.mxu0 %v8502
      %8623 = vmatpush1.msra.mxu0 %v8501
      %8624 = vmatprep.subr.mxu0 %v8506
      %8625 = vmatpush1.msra.mxu0 %v8505
      %8626 = vmatprep.subr.mxu0 %v8510
      %8627 = vmatpush1.msra.mxu0 %v8509
      %8628 = vmatprep.subr.mxu0 %v8514
      %8629 = vmatpush1.msra.mxu0 %v8513
      %8630 = vmatprep.subr.mxu0 %v8518
      %8631 = vmatpush1.msra.mxu0 %v8517
      %8632 = vmatprep.subr.mxu0 %v8522
      %8633 = vmatpush1.msra.mxu0 %v8521
      %8634 = vmatprep.subr.mxu0 %v8526
      %8635 = vmatpush1.msra.mxu0 %v8525
      %8636 = vmatprep.subr.mxu0 %v8530
      %8637 = vmatpush1.msra.mxu0 %v8529
      %8638 = vmatprep.subr.mxu0 %v8534
      %8639 = vmatpush1.msra.mxu0 %v8533
      %8640 = vmatprep.subr.mxu0 %v8538
      %8641 = vmatpush1.msra.mxu0 %v8537
      %8642 = vmatprep.subr.mxu0 0.0
      %8643 = vmatpush1.msra.mxu0 0.0
      %8644 = vmatprep.subr.mxu0 0.0
      %8645 = vmatpush1.msra.mxu0 0.0
      %8646 = vmatprep.subr.mxu0 0.0
      %8647 = vmatpush1.msra.mxu0 0.0
      %8648 = vmatprep.subr.mxu0 0.0
      %8649 = vmatpush1.msra.mxu0 0.0
      %8650 = vmatprep.subr.mxu0 0.0
      %8651 = vmatpush1.msra.mxu0 0.0
      %8652 = vmatprep.subr.mxu0 0.0
      %8653 = vmatpush1.msra.mxu0 0.0
      %8654 = vmatprep.subr.mxu0 0.0
      %8655 = vmatpush1.msra.mxu0 0.0
      %8656 = vmatprep.subr.mxu0 0.0
      %8657 = vmatpush1.msra.mxu0 0.0
      %8658 = vmatprep.subr.mxu0 0.0
      %8659 = vmatpush1.msra.mxu0 0.0
      %8660 = vmatprep.subr.mxu0 0.0
      %8661 = vmatpush1.msra.mxu0 0.0
      %8662 = vmatprep.subr.mxu0 0.0
      %8663 = vmatpush1.msra.mxu0 0.0
      %8664 = vmatprep.subr.mxu0 0.0
      %8665 = vmatpush1.msra.mxu0 0.0
      %8666 = vmatprep.subr.mxu0 0.0
      %8667 = vmatpush1.msra.mxu0 0.0
      %8668 = vmatprep.subr.mxu0 0.0
      %8669 = vmatpush1.msra.mxu0 0.0
      %8670 = vmatprep.subr.mxu0 0.0
      %8671 = vmatpush1.msra.mxu0 0.0
      %8672 = vmatprep.subr.mxu0 0.0
      %8673 = vmatpush1.msra.mxu0 0.0
      %8674 = vmatprep.mubr.f32.mxu0 0.0
      %8675 = vmatmul.mubr.f32.gmra.mrb[0].mxu0 %v8473
      %v8676 = vpop.f32.mrb[0].mxu0
      %v8677 = vadd.f32 0.0, %v8676
      %v8678 = vpop.f32.mrb[0].mxu0
      %v8679 = vadd.f32 0.0, %v8678
      %8680 = vdwg.mxu0
      %v8681 = vadd.f32 %v8469, %v8606
      %v8682 = vadd.f32 %v8470, %v8608
      %v8683 = vadd.f32 %v8471, %v8677
      %v8684 = vadd.f32 %v8472, %v8679
      %v8685 = vld [vmem:[#allocation3 + $0xe] sm:$0x1]
      %s8686 = scalar_lea.vmem %s6, 7168
      %v8687 = vld [vmem:[%s8686] sm:$0xff]
      %v8688 = vld [vmem:[%s8686 + $0x8] sm:$0xff]
      %v8689 = vld [vmem:[%s8686 + $0x10] sm:$0xff]
      %v8690 = vld [vmem:[%s8686 + $0x18] sm:$0xff]
      %v8691 = vld [vmem:[%s8686 + $0x20] sm:$0xff]
      %v8692 = vld [vmem:[%s8686 + $0x28] sm:$0xff]
      %v8693 = vld [vmem:[%s8686 + $0x30] sm:$0xff]
      %v8694 = vld [vmem:[%s8686 + $0x38] sm:$0xff]
      %v8695 = vld [vmem:[%s8686 + $0x40] sm:$0xff]
      %v8696 = vld [vmem:[%s8686 + $0x48] sm:$0xff]
      %v8697 = vld [vmem:[%s8686 + $0x50] sm:$0xff]
      %v8698 = vld [vmem:[%s8686 + $0x58] sm:$0xff]
      %v8699 = vld [vmem:[%s8686 + $0x60] sm:$0xff]
      %v8700 = vld [vmem:[%s8686 + $0x68] sm:$0xff]
      %v8701 = vld [vmem:[%s8686 + $0x70] sm:$0xff]
      %v8702 = vld [vmem:[%s8686 + $0x78] sm:$0xff]
      %v8703 = vld [vmem:[%s8686 + $0x80] sm:$0xff]
      %v8704 = vld [vmem:[%s8686 + $0x88] sm:$0xff]
      %v8705 = vld [vmem:[%s8686 + $0x90] sm:$0xff]
      %v8706 = vld [vmem:[%s8686 + $0x98] sm:$0xff]
      %v8707 = vld [vmem:[%s8686 + $0xa0] sm:$0xff]
      %v8708 = vld [vmem:[%s8686 + $0xa8] sm:$0xff]
      %v8709 = vld [vmem:[%s8686 + $0xb0] sm:$0xff]
      %v8710 = vld [vmem:[%s8686 + $0xb8] sm:$0xff]
      %v8711 = vld [vmem:[%s8686 + $0xc0] sm:$0xff]
      %v8712 = vld [vmem:[%s8686 + $0xc8] sm:$0xff]
      %v8713 = vld [vmem:[%s8686 + $0xd0] sm:$0xff]
      %v8714 = vld [vmem:[%s8686 + $0xd8] sm:$0xff]
      %v8715 = vld [vmem:[%s8686 + $0xe0] sm:$0xff]
      %v8716 = vld [vmem:[%s8686 + $0xe8] sm:$0xff]
      %v8717 = vld [vmem:[%s8686 + $0xf0] sm:$0xff]
      %v8718 = vld [vmem:[%s8686 + $0xf8] sm:$0xff]
      %v8719 = vld [vmem:[%s8686 + $0x100] sm:$0xff]
      %v8720 = vld [vmem:[%s8686 + $0x108] sm:$0xff]
      %v8721 = vld [vmem:[%s8686 + $0x110] sm:$0xff]
      %v8722 = vld [vmem:[%s8686 + $0x118] sm:$0xff]
      %v8723 = vld [vmem:[%s8686 + $0x120] sm:$0xff]
      %v8724 = vld [vmem:[%s8686 + $0x128] sm:$0xff]
      %v8725 = vld [vmem:[%s8686 + $0x130] sm:$0xff]
      %v8726 = vld [vmem:[%s8686 + $0x138] sm:$0xff]
      %v8727 = vld [vmem:[%s8686 + $0x140] sm:$0xff]
      %v8728 = vld [vmem:[%s8686 + $0x148] sm:$0xff]
      %v8729 = vld [vmem:[%s8686 + $0x150] sm:$0xff]
      %v8730 = vld [vmem:[%s8686 + $0x158] sm:$0xff]
      %v8731 = vld [vmem:[%s8686 + $0x160] sm:$0xff]
      %v8732 = vld [vmem:[%s8686 + $0x168] sm:$0xff]
      %v8733 = vld [vmem:[%s8686 + $0x170] sm:$0xff]
      %v8734 = vld [vmem:[%s8686 + $0x178] sm:$0xff]
      %v8735 = vld [vmem:[%s8686 + $0x180] sm:$0xff]
      %v8736 = vld [vmem:[%s8686 + $0x188] sm:$0xff]
      %v8737 = vld [vmem:[%s8686 + $0x190] sm:$0xff]
      %v8738 = vld [vmem:[%s8686 + $0x198] sm:$0xff]
      %v8739 = vld [vmem:[%s8686 + $0x1a0] sm:$0xff]
      %v8740 = vld [vmem:[%s8686 + $0x1a8] sm:$0xff]
      %v8741 = vld [vmem:[%s8686 + $0x1b0] sm:$0xff]
      %v8742 = vld [vmem:[%s8686 + $0x1b8] sm:$0xff]
      %v8743 = vld [vmem:[%s8686 + $0x1c0] sm:$0xff]
      %v8744 = vld [vmem:[%s8686 + $0x1c8] sm:$0xff]
      %v8745 = vld [vmem:[%s8686 + $0x1d0] sm:$0xff]
      %v8746 = vld [vmem:[%s8686 + $0x1d8] sm:$0xff]
      %v8747 = vld [vmem:[%s8686 + $0x1e0] sm:$0xff]
      %v8748 = vld [vmem:[%s8686 + $0x1e8] sm:$0xff]
      %v8749 = vld [vmem:[%s8686 + $0x1f0] sm:$0xff]
      %v8750 = vld [vmem:[%s8686 + $0x1f8] sm:$0xff]
      %8751 = vmatprep.subr.mxu0 %v8688
      %8752 = vmatpush1.msra.mxu0 %v8687
      %8753 = vmatprep.subr.mxu0 %v8692
      %8754 = vmatpush1.msra.mxu0 %v8691
      %8755 = vmatprep.subr.mxu0 %v8696
      %8756 = vmatpush1.msra.mxu0 %v8695
      %8757 = vmatprep.subr.mxu0 %v8700
      %8758 = vmatpush1.msra.mxu0 %v8699
      %8759 = vmatprep.subr.mxu0 %v8704
      %8760 = vmatpush1.msra.mxu0 %v8703
      %8761 = vmatprep.subr.mxu0 %v8708
      %8762 = vmatpush1.msra.mxu0 %v8707
      %8763 = vmatprep.subr.mxu0 %v8712
      %8764 = vmatpush1.msra.mxu0 %v8711
      %8765 = vmatprep.subr.mxu0 %v8716
      %8766 = vmatpush1.msra.mxu0 %v8715
      %8767 = vmatprep.subr.mxu0 %v8720
      %8768 = vmatpush1.msra.mxu0 %v8719
      %8769 = vmatprep.subr.mxu0 %v8724
      %8770 = vmatpush1.msra.mxu0 %v8723
      %8771 = vmatprep.subr.mxu0 %v8728
      %8772 = vmatpush1.msra.mxu0 %v8727
      %8773 = vmatprep.subr.mxu0 %v8732
      %8774 = vmatpush1.msra.mxu0 %v8731
      %8775 = vmatprep.subr.mxu0 %v8736
      %8776 = vmatpush1.msra.mxu0 %v8735
      %8777 = vmatprep.subr.mxu0 %v8740
      %8778 = vmatpush1.msra.mxu0 %v8739
      %8779 = vmatprep.subr.mxu0 %v8744
      %8780 = vmatpush1.msra.mxu0 %v8743
      %8781 = vmatprep.subr.mxu0 %v8748
      %8782 = vmatpush1.msra.mxu0 %v8747
      %8783 = vmatprep.subr.mxu0 0.0
      %8784 = vmatpush1.msra.mxu0 0.0
      %8785 = vmatprep.subr.mxu0 0.0
      %8786 = vmatpush1.msra.mxu0 0.0
      %8787 = vmatprep.subr.mxu0 0.0
      %8788 = vmatpush1.msra.mxu0 0.0
      %8789 = vmatprep.subr.mxu0 0.0
      %8790 = vmatpush1.msra.mxu0 0.0
      %8791 = vmatprep.subr.mxu0 0.0
      %8792 = vmatpush1.msra.mxu0 0.0
      %8793 = vmatprep.subr.mxu0 0.0
      %8794 = vmatpush1.msra.mxu0 0.0
      %8795 = vmatprep.subr.mxu0 0.0
      %8796 = vmatpush1.msra.mxu0 0.0
      %8797 = vmatprep.subr.mxu0 0.0
      %8798 = vmatpush1.msra.mxu0 0.0
      %8799 = vmatprep.subr.mxu0 0.0
      %8800 = vmatpush1.msra.mxu0 0.0
      %8801 = vmatprep.subr.mxu0 0.0
      %8802 = vmatpush1.msra.mxu0 0.0
      %8803 = vmatprep.subr.mxu0 0.0
      %8804 = vmatpush1.msra.mxu0 0.0
      %8805 = vmatprep.subr.mxu0 0.0
      %8806 = vmatpush1.msra.mxu0 0.0
      %8807 = vmatprep.subr.mxu0 0.0
      %8808 = vmatpush1.msra.mxu0 0.0
      %8809 = vmatprep.subr.mxu0 0.0
      %8810 = vmatpush1.msra.mxu0 0.0
      %8811 = vmatprep.subr.mxu0 0.0
      %8812 = vmatpush1.msra.mxu0 0.0
      %8813 = vmatprep.subr.mxu0 0.0
      %8814 = vmatpush1.msra.mxu0 0.0
      %8815 = vmatprep.mubr.f32.mxu0 0.0
      %8816 = vmatmul.mubr.f32.gmra.mrb[0].mxu0 %v8685
      %v8817 = vpop.f32.mrb[0].mxu0
      %v8818 = vadd.f32 0.0, %v8817
      %v8819 = vpop.f32.mrb[0].mxu0
      %v8820 = vadd.f32 0.0, %v8819
      %8821 = vdwg.mxu0
      %8822 = vmatprep.subr.mxu0 %v8690
      %8823 = vmatpush1.msra.mxu0 %v8689
      %8824 = vmatprep.subr.mxu0 %v8694
      %8825 = vmatpush1.msra.mxu0 %v8693
      %8826 = vmatprep.subr.mxu0 %v8698
      %8827 = vmatpush1.msra.mxu0 %v8697
      %8828 = vmatprep.subr.mxu0 %v8702
      %8829 = vmatpush1.msra.mxu0 %v8701
      %8830 = vmatprep.subr.mxu0 %v8706
      %8831 = vmatpush1.msra.mxu0 %v8705
      %8832 = vmatprep.subr.mxu0 %v8710
      %8833 = vmatpush1.msra.mxu0 %v8709
      %8834 = vmatprep.subr.mxu0 %v8714
      %8835 = vmatpush1.msra.mxu0 %v8713
      %8836 = vmatprep.subr.mxu0 %v8718
      %8837 = vmatpush1.msra.mxu0 %v8717
      %8838 = vmatprep.subr.mxu0 %v8722
      %8839 = vmatpush1.msra.mxu0 %v8721
      %8840 = vmatprep.subr.mxu0 %v8726
      %8841 = vmatpush1.msra.mxu0 %v8725
      %8842 = vmatprep.subr.mxu0 %v8730
      %8843 = vmatpush1.msra.mxu0 %v8729
      %8844 = vmatprep.subr.mxu0 %v8734
      %8845 = vmatpush1.msra.mxu0 %v8733
      %8846 = vmatprep.subr.mxu0 %v8738
      %8847 = vmatpush1.msra.mxu0 %v8737
      %8848 = vmatprep.subr.mxu0 %v8742
      %8849 = vmatpush1.msra.mxu0 %v8741
      %8850 = vmatprep.subr.mxu0 %v8746
      %8851 = vmatpush1.msra.mxu0 %v8745
      %8852 = vmatprep.subr.mxu0 %v8750
      %8853 = vmatpush1.msra.mxu0 %v8749
      %8854 = vmatprep.subr.mxu0 0.0
      %8855 = vmatpush1.msra.mxu0 0.0
      %8856 = vmatprep.subr.mxu0 0.0
      %8857 = vmatpush1.msra.mxu0 0.0
      %8858 = vmatprep.subr.mxu0 0.0
      %8859 = vmatpush1.msra.mxu0 0.0
      %8860 = vmatprep.subr.mxu0 0.0
      %8861 = vmatpush1.msra.mxu0 0.0
      %8862 = vmatprep.subr.mxu0 0.0
      %8863 = vmatpush1.msra.mxu0 0.0
      %8864 = vmatprep.subr.mxu0 0.0
      %8865 = vmatpush1.msra.mxu0 0.0
      %8866 = vmatprep.subr.mxu0 0.0
      %8867 = vmatpush1.msra.mxu0 0.0
      %8868 = vmatprep.subr.mxu0 0.0
      %8869 = vmatpush1.msra.mxu0 0.0
      %8870 = vmatprep.subr.mxu0 0.0
      %8871 = vmatpush1.msra.mxu0 0.0
      %8872 = vmatprep.subr.mxu0 0.0
      %8873 = vmatpush1.msra.mxu0 0.0
      %8874 = vmatprep.subr.mxu0 0.0
      %8875 = vmatpush1.msra.mxu0 0.0
      %8876 = vmatprep.subr.mxu0 0.0
      %8877 = vmatpush1.msra.mxu0 0.0
      %8878 = vmatprep.subr.mxu0 0.0
      %8879 = vmatpush1.msra.mxu0 0.0
      %8880 = vmatprep.subr.mxu0 0.0
      %8881 = vmatpush1.msra.mxu0 0.0
      %8882 = vmatprep.subr.mxu0 0.0
      %8883 = vmatpush1.msra.mxu0 0.0
      %8884 = vmatprep.subr.mxu0 0.0
      %8885 = vmatpush1.msra.mxu0 0.0
      %8886 = vmatprep.mubr.f32.mxu0 0.0
      %8887 = vmatmul.mubr.f32.gmra.mrb[0].mxu0 %v8685
      %v8888 = vpop.f32.mrb[0].mxu0
      %v8889 = vadd.f32 0.0, %v8888
      %v8890 = vpop.f32.mrb[0].mxu0
      %v8891 = vadd.f32 0.0, %v8890
      %8892 = vdwg.mxu0
      %v8893 = vadd.f32 %v8681, %v8818
      %v8894 = vadd.f32 %v8682, %v8820
      %v8895 = vadd.f32 %v8683, %v8889
      %v8896 = vadd.f32 %v8684, %v8891
      %v8897 = vld [vmem:[#allocation3 + $0xf] sm:$0x1]
      %s8898 = scalar_lea.vmem %s6, 7680
      %v8899 = vld [vmem:[%s8898] sm:$0xff]
      %v8900 = vld [vmem:[%s8898 + $0x8] sm:$0xff]
      %v8901 = vld [vmem:[%s8898 + $0x10] sm:$0xff]
      %v8902 = vld [vmem:[%s8898 + $0x18] sm:$0xff]
      %v8903 = vld [vmem:[%s8898 + $0x20] sm:$0xff]
      %v8904 = vld [vmem:[%s8898 + $0x28] sm:$0xff]
      %v8905 = vld [vmem:[%s8898 + $0x30] sm:$0xff]
      %v8906 = vld [vmem:[%s8898 + $0x38] sm:$0xff]
      %v8907 = vld [vmem:[%s8898 + $0x40] sm:$0xff]
      %v8908 = vld [vmem:[%s8898 + $0x48] sm:$0xff]
      %v8909 = vld [vmem:[%s8898 + $0x50] sm:$0xff]
      %v8910 = vld [vmem:[%s8898 + $0x58] sm:$0xff]
      %v8911 = vld [vmem:[%s8898 + $0x60] sm:$0xff]
      %v8912 = vld [vmem:[%s8898 + $0x68] sm:$0xff]
      %v8913 = vld [vmem:[%s8898 + $0x70] sm:$0xff]
      %v8914 = vld [vmem:[%s8898 + $0x78] sm:$0xff]
      %v8915 = vld [vmem:[%s8898 + $0x80] sm:$0xff]
      %v8916 = vld [vmem:[%s8898 + $0x88] sm:$0xff]
      %v8917 = vld [vmem:[%s8898 + $0x90] sm:$0xff]
      %v8918 = vld [vmem:[%s8898 + $0x98] sm:$0xff]
      %v8919 = vld [vmem:[%s8898 + $0xa0] sm:$0xff]
      %v8920 = vld [vmem:[%s8898 + $0xa8] sm:$0xff]
      %v8921 = vld [vmem:[%s8898 + $0xb0] sm:$0xff]
      %v8922 = vld [vmem:[%s8898 + $0xb8] sm:$0xff]
      %v8923 = vld [vmem:[%s8898 + $0xc0] sm:$0xff]
      %v8924 = vld [vmem:[%s8898 + $0xc8] sm:$0xff]
      %v8925 = vld [vmem:[%s8898 + $0xd0] sm:$0xff]
      %v8926 = vld [vmem:[%s8898 + $0xd8] sm:$0xff]
      %v8927 = vld [vmem:[%s8898 + $0xe0] sm:$0xff]
      %v8928 = vld [vmem:[%s8898 + $0xe8] sm:$0xff]
      %v8929 = vld [vmem:[%s8898 + $0xf0] sm:$0xff]
      %v8930 = vld [vmem:[%s8898 + $0xf8] sm:$0xff]
      %v8931 = vld [vmem:[%s8898 + $0x100] sm:$0xff]
      %v8932 = vld [vmem:[%s8898 + $0x108] sm:$0xff]
      %v8933 = vld [vmem:[%s8898 + $0x110] sm:$0xff]
      %v8934 = vld [vmem:[%s8898 + $0x118] sm:$0xff]
      %v8935 = vld [vmem:[%s8898 + $0x120] sm:$0xff]
      %v8936 = vld [vmem:[%s8898 + $0x128] sm:$0xff]
      %v8937 = vld [vmem:[%s8898 + $0x130] sm:$0xff]
      %v8938 = vld [vmem:[%s8898 + $0x138] sm:$0xff]
      %v8939 = vld [vmem:[%s8898 + $0x140] sm:$0xff]
      %v8940 = vld [vmem:[%s8898 + $0x148] sm:$0xff]
      %v8941 = vld [vmem:[%s8898 + $0x150] sm:$0xff]
      %v8942 = vld [vmem:[%s8898 + $0x158] sm:$0xff]
      %v8943 = vld [vmem:[%s8898 + $0x160] sm:$0xff]
      %v8944 = vld [vmem:[%s8898 + $0x168] sm:$0xff]
      %v8945 = vld [vmem:[%s8898 + $0x170] sm:$0xff]
      %v8946 = vld [vmem:[%s8898 + $0x178] sm:$0xff]
      %v8947 = vld [vmem:[%s8898 + $0x180] sm:$0xff]
      %v8948 = vld [vmem:[%s8898 + $0x188] sm:$0xff]
      %v8949 = vld [vmem:[%s8898 + $0x190] sm:$0xff]
      %v8950 = vld [vmem:[%s8898 + $0x198] sm:$0xff]
      %v8951 = vld [vmem:[%s8898 + $0x1a0] sm:$0xff]
      %v8952 = vld [vmem:[%s8898 + $0x1a8] sm:$0xff]
      %v8953 = vld [vmem:[%s8898 + $0x1b0] sm:$0xff]
      %v8954 = vld [vmem:[%s8898 + $0x1b8] sm:$0xff]
      %v8955 = vld [vmem:[%s8898 + $0x1c0] sm:$0xff]
      %v8956 = vld [vmem:[%s8898 + $0x1c8] sm:$0xff]
      %v8957 = vld [vmem:[%s8898 + $0x1d0] sm:$0xff]
      %v8958 = vld [vmem:[%s8898 + $0x1d8] sm:$0xff]
      %v8959 = vld [vmem:[%s8898 + $0x1e0] sm:$0xff]
      %v8960 = vld [vmem:[%s8898 + $0x1e8] sm:$0xff]
      %v8961 = vld [vmem:[%s8898 + $0x1f0] sm:$0xff]
      %v8962 = vld [vmem:[%s8898 + $0x1f8] sm:$0xff]
      %8963 = vmatprep.subr.mxu0 %v8900
      %8964 = vmatpush1.msra.mxu0 %v8899
      %8965 = vmatprep.subr.mxu0 %v8904
      %8966 = vmatpush1.msra.mxu0 %v8903
      %8967 = vmatprep.subr.mxu0 %v8908
      %8968 = vmatpush1.msra.mxu0 %v8907
      %8969 = vmatprep.subr.mxu0 %v8912
      %8970 = vmatpush1.msra.mxu0 %v8911
      %8971 = vmatprep.subr.mxu0 %v8916
      %8972 = vmatpush1.msra.mxu0 %v8915
      %8973 = vmatprep.subr.mxu0 %v8920
      %8974 = vmatpush1.msra.mxu0 %v8919
      %8975 = vmatprep.subr.mxu0 %v8924
      %8976 = vmatpush1.msra.mxu0 %v8923
      %8977 = vmatprep.subr.mxu0 %v8928
      %8978 = vmatpush1.msra.mxu0 %v8927
      %8979 = vmatprep.subr.mxu0 %v8932
      %8980 = vmatpush1.msra.mxu0 %v8931
      %8981 = vmatprep.subr.mxu0 %v8936
      %8982 = vmatpush1.msra.mxu0 %v8935
      %8983 = vmatprep.subr.mxu0 %v8940
      %8984 = vmatpush1.msra.mxu0 %v8939
      %8985 = vmatprep.subr.mxu0 %v8944
      %8986 = vmatpush1.msra.mxu0 %v8943
      %8987 = vmatprep.subr.mxu0 %v8948
      %8988 = vmatpush1.msra.mxu0 %v8947
      %8989 = vmatprep.subr.mxu0 %v8952
      %8990 = vmatpush1.msra.mxu0 %v8951
      %8991 = vmatprep.subr.mxu0 %v8956
      %8992 = vmatpush1.msra.mxu0 %v8955
      %8993 = vmatprep.subr.mxu0 %v8960
      %8994 = vmatpush1.msra.mxu0 %v8959
      %8995 = vmatprep.subr.mxu0 0.0
      %8996 = vmatpush1.msra.mxu0 0.0
      %8997 = vmatprep.subr.mxu0 0.0
      %8998 = vmatpush1.msra.mxu0 0.0
      %8999 = vmatprep.subr.mxu0 0.0
      %9000 = vmatpush1.msra.mxu0 0.0
      %9001 = vmatprep.subr.mxu0 0.0
      %9002 = vmatpush1.msra.mxu0 0.0
      %9003 = vmatprep.subr.mxu0 0.0
      %9004 = vmatpush1.msra.mxu0 0.0
      %9005 = vmatprep.subr.mxu0 0.0
      %9006 = vmatpush1.msra.mxu0 0.0
      %9007 = vmatprep.subr.mxu0 0.0
      %9008 = vmatpush1.msra.mxu0 0.0
      %9009 = vmatprep.subr.mxu0 0.0
      %9010 = vmatpush1.msra.mxu0 0.0
      %9011 = vmatprep.subr.mxu0 0.0
      %9012 = vmatpush1.msra.mxu0 0.0
      %9013 = vmatprep.subr.mxu0 0.0
      %9014 = vmatpush1.msra.mxu0 0.0
      %9015 = vmatprep.subr.mxu0 0.0
      %9016 = vmatpush1.msra.mxu0 0.0
      %9017 = vmatprep.subr.mxu0 0.0
      %9018 = vmatpush1.msra.mxu0 0.0
      %9019 = vmatprep.subr.mxu0 0.0
      %9020 = vmatpush1.msra.mxu0 0.0
      %9021 = vmatprep.subr.mxu0 0.0
      %9022 = vmatpush1.msra.mxu0 0.0
      %9023 = vmatprep.subr.mxu0 0.0
      %9024 = vmatpush1.msra.mxu0 0.0
      %9025 = vmatprep.subr.mxu0 0.0
      %9026 = vmatpush1.msra.mxu0 0.0
      %9027 = vmatprep.mubr.f32.mxu0 0.0
      %9028 = vmatmul.mubr.f32.gmra.mrb[0].mxu0 %v8897
      %v9029 = vpop.f32.mrb[0].mxu0
      %v9030 = vadd.f32 0.0, %v9029
      %v9031 = vpop.f32.mrb[0].mxu0
      %v9032 = vadd.f32 0.0, %v9031
      %9033 = vdwg.mxu0
      %9034 = vmatprep.subr.mxu0 %v8902
      %9035 = vmatpush1.msra.mxu0 %v8901
      %9036 = vmatprep.subr.mxu0 %v8906
      %9037 = vmatpush1.msra.mxu0 %v8905
      %9038 = vmatprep.subr.mxu0 %v8910
      %9039 = vmatpush1.msra.mxu0 %v8909
      %9040 = vmatprep.subr.mxu0 %v8914
      %9041 = vmatpush1.msra.mxu0 %v8913
      %9042 = vmatprep.subr.mxu0 %v8918
      %9043 = vmatpush1.msra.mxu0 %v8917
      %9044 = vmatprep.subr.mxu0 %v8922
      %9045 = vmatpush1.msra.mxu0 %v8921
      %9046 = vmatprep.subr.mxu0 %v8926
      %9047 = vmatpush1.msra.mxu0 %v8925
      %9048 = vmatprep.subr.mxu0 %v8930
      %9049 = vmatpush1.msra.mxu0 %v8929
      %9050 = vmatprep.subr.mxu0 %v8934
      %9051 = vmatpush1.msra.mxu0 %v8933
      %9052 = vmatprep.subr.mxu0 %v8938
      %9053 = vmatpush1.msra.mxu0 %v8937
      %9054 = vmatprep.subr.mxu0 %v8942
      %9055 = vmatpush1.msra.mxu0 %v8941
      %9056 = vmatprep.subr.mxu0 %v8946
      %9057 = vmatpush1.msra.mxu0 %v8945
      %9058 = vmatprep.subr.mxu0 %v8950
      %9059 = vmatpush1.msra.mxu0 %v8949
      %9060 = vmatprep.subr.mxu0 %v8954
      %9061 = vmatpush1.msra.mxu0 %v8953
      %9062 = vmatprep.subr.mxu0 %v8958
      %9063 = vmatpush1.msra.mxu0 %v8957
      %9064 = vmatprep.subr.mxu0 %v8962
      %9065 = vmatpush1.msra.mxu0 %v8961
      %9066 = vmatprep.subr.mxu0 0.0
      %9067 = vmatpush1.msra.mxu0 0.0
      %9068 = vmatprep.subr.mxu0 0.0
      %9069 = vmatpush1.msra.mxu0 0.0
      %9070 = vmatprep.subr.mxu0 0.0
      %9071 = vmatpush1.msra.mxu0 0.0
      %9072 = vmatprep.subr.mxu0 0.0
      %9073 = vmatpush1.msra.mxu0 0.0
      %9074 = vmatprep.subr.mxu0 0.0
      %9075 = vmatpush1.msra.mxu0 0.0
      %9076 = vmatprep.subr.mxu0 0.0
      %9077 = vmatpush1.msra.mxu0 0.0
      %9078 = vmatprep.subr.mxu0 0.0
      %9079 = vmatpush1.msra.mxu0 0.0
      %9080 = vmatprep.subr.mxu0 0.0
      %9081 = vmatpush1.msra.mxu0 0.0
      %9082 = vmatprep.subr.mxu0 0.0
      %9083 = vmatpush1.msra.mxu0 0.0
      %9084 = vmatprep.subr.mxu0 0.0
      %9085 = vmatpush1.msra.mxu0 0.0
      %9086 = vmatprep.subr.mxu0 0.0
      %9087 = vmatpush1.msra.mxu0 0.0
      %9088 = vmatprep.subr.mxu0 0.0
      %9089 = vmatpush1.msra.mxu0 0.0
      %9090 = vmatprep.subr.mxu0 0.0
      %9091 = vmatpush1.msra.mxu0 0.0
      %9092 = vmatprep.subr.mxu0 0.0
      %9093 = vmatpush1.msra.mxu0 0.0
      %9094 = vmatprep.subr.mxu0 0.0
      %9095 = vmatpush1.msra.mxu0 0.0
      %9096 = vmatprep.subr.mxu0 0.0
      %9097 = vmatpush1.msra.mxu0 0.0
      %9098 = vmatprep.mubr.f32.mxu0 0.0
      %9099 = vmatmul.mubr.f32.gmra.mrb[0].mxu0 %v8897
      %v9100 = vpop.f32.mrb[0].mxu0
      %v9101 = vadd.f32 0.0, %v9100
      %v9102 = vpop.f32.mrb[0].mxu0
      %v9103 = vadd.f32 0.0, %v9102
      %9104 = vdwg.mxu0
      %v9105 = vadd.f32 %v8893, %v9030
      %v9106 = vadd.f32 %v8894, %v9032
      %v9107 = vadd.f32 %v8895, %v9101
      %v9108 = vadd.f32 %v8896, %v9103
      %v9109 = vld [vmem:[%s7] sm:$0xf]
      %v9111 = vlaneseq
      %v9112 = vshrl.u32 %v9111, 7
      %v9113 = vsub.s32 0, %v9112
      %v9114 = vrot.slane %v9109, %v9113
      %v9115 = vlaneseq
      %v9116 = vshrl.u32 %v9115, 7
      %v9117 = vsub.s32 1, %v9116
      %v9118 = vrot.slane %v9109, %v9117
      %v9119 = vlaneseq
      %v9120 = vshrl.u32 %v9119, 7
      %v9121 = vsub.s32 2, %v9120
      %v9122 = vrot.slane %v9109, %v9121
      %v9123 = vlaneseq
      %v9124 = vshrl.u32 %v9123, 7
      %v9125 = vsub.s32 3, %v9124
      %v9126 = vrot.slane %v9109, %v9125
      %v9131 = vadd.f32 %v9105, %v9114
      %v9132 = vadd.f32 %v9106, %v9118
      %v9133 = vadd.f32 %v9107, %v9122
      %v9134 = vadd.f32 %v9108, %v9126
      %v9135 = vmax.f32 %v9131, 0.0
      %v9136 = vmax.f32 %v9132, 0.0
      %v9137 = vmax.f32 %v9133, 0.0
      %v9138 = vmax.f32 %v9134, 0.0
      %v9139 = vld [vmem:[%s8] sm:$0xff]
      %v9140 = vld [vmem:[%s8 + $0x8] sm:$0xff]
      %v9141 = vld [vmem:[%s8 + $0x10] sm:$0xff]
      %v9142 = vld [vmem:[%s8 + $0x18] sm:$0xff]
      %v9143 = vld [vmem:[%s8 + $0x20] sm:$0xff]
      %v9144 = vld [vmem:[%s8 + $0x28] sm:$0xff]
      %v9145 = vld [vmem:[%s8 + $0x30] sm:$0xff]
      %v9146 = vld [vmem:[%s8 + $0x38] sm:$0xff]
      %v9147 = vld [vmem:[%s8 + $0x40] sm:$0xff]
      %v9148 = vld [vmem:[%s8 + $0x48] sm:$0xff]
      %v9149 = vld [vmem:[%s8 + $0x50] sm:$0xff]
      %v9150 = vld [vmem:[%s8 + $0x58] sm:$0xff]
      %v9151 = vld [vmem:[%s8 + $0x60] sm:$0xff]
      %v9152 = vld [vmem:[%s8 + $0x68] sm:$0xff]
      %v9153 = vld [vmem:[%s8 + $0x70] sm:$0xff]
      %v9154 = vld [vmem:[%s8 + $0x78] sm:$0xff]
      %v9155 = vld [vmem:[%s8 + $0x80] sm:$0xff]
      %v9156 = vld [vmem:[%s8 + $0x88] sm:$0xff]
      %v9157 = vld [vmem:[%s8 + $0x90] sm:$0xff]
      %v9158 = vld [vmem:[%s8 + $0x98] sm:$0xff]
      %v9159 = vld [vmem:[%s8 + $0xa0] sm:$0xff]
      %v9160 = vld [vmem:[%s8 + $0xa8] sm:$0xff]
      %v9161 = vld [vmem:[%s8 + $0xb0] sm:$0xff]
      %v9162 = vld [vmem:[%s8 + $0xb8] sm:$0xff]
      %v9163 = vld [vmem:[%s8 + $0xc0] sm:$0xff]
      %v9164 = vld [vmem:[%s8 + $0xc8] sm:$0xff]
      %v9165 = vld [vmem:[%s8 + $0xd0] sm:$0xff]
      %v9166 = vld [vmem:[%s8 + $0xd8] sm:$0xff]
      %v9167 = vld [vmem:[%s8 + $0xe0] sm:$0xff]
      %v9168 = vld [vmem:[%s8 + $0xe8] sm:$0xff]
      %v9169 = vld [vmem:[%s8 + $0xf0] sm:$0xff]
      %v9170 = vld [vmem:[%s8 + $0xf8] sm:$0xff]
      %v9171 = vld [vmem:[%s8 + $0x100] sm:$0xff]
      %v9172 = vld [vmem:[%s8 + $0x108] sm:$0xff]
      %v9173 = vld [vmem:[%s8 + $0x110] sm:$0xff]
      %v9174 = vld [vmem:[%s8 + $0x118] sm:$0xff]
      %v9175 = vld [vmem:[%s8 + $0x120] sm:$0xff]
      %v9176 = vld [vmem:[%s8 + $0x128] sm:$0xff]
      %v9177 = vld [vmem:[%s8 + $0x130] sm:$0xff]
      %v9178 = vld [vmem:[%s8 + $0x138] sm:$0xff]
      %v9179 = vld [vmem:[%s8 + $0x140] sm:$0xff]
      %v9180 = vld [vmem:[%s8 + $0x148] sm:$0xff]
      %v9181 = vld [vmem:[%s8 + $0x150] sm:$0xff]
      %v9182 = vld [vmem:[%s8 + $0x158] sm:$0xff]
      %v9183 = vld [vmem:[%s8 + $0x160] sm:$0xff]
      %v9184 = vld [vmem:[%s8 + $0x168] sm:$0xff]
      %v9185 = vld [vmem:[%s8 + $0x170] sm:$0xff]
      %v9186 = vld [vmem:[%s8 + $0x178] sm:$0xff]
      %v9187 = vld [vmem:[%s8 + $0x180] sm:$0xff]
      %v9188 = vld [vmem:[%s8 + $0x188] sm:$0xff]
      %v9189 = vld [vmem:[%s8 + $0x190] sm:$0xff]
      %v9190 = vld [vmem:[%s8 + $0x198] sm:$0xff]
      %v9191 = vld [vmem:[%s8 + $0x1a0] sm:$0xff]
      %v9192 = vld [vmem:[%s8 + $0x1a8] sm:$0xff]
      %v9193 = vld [vmem:[%s8 + $0x1b0] sm:$0xff]
      %v9194 = vld [vmem:[%s8 + $0x1b8] sm:$0xff]
      %v9195 = vld [vmem:[%s8 + $0x1c0] sm:$0xff]
      %v9196 = vld [vmem:[%s8 + $0x1c8] sm:$0xff]
      %v9197 = vld [vmem:[%s8 + $0x1d0] sm:$0xff]
      %v9198 = vld [vmem:[%s8 + $0x1d8] sm:$0xff]
      %v9199 = vld [vmem:[%s8 + $0x1e0] sm:$0xff]
      %v9200 = vld [vmem:[%s8 + $0x1e8] sm:$0xff]
      %v9201 = vld [vmem:[%s8 + $0x1f0] sm:$0xff]
      %v9202 = vld [vmem:[%s8 + $0x1f8] sm:$0xff]
      %v9203 = vld [vmem:[%s9] sm:$0x1]
      %9204 = vmatprep.subr.mxu0 0.0
      %9205 = vmatpush1.msra.mxu0 %v9139
      %9206 = vmatprep.subr.mxu0 0.0
      %9207 = vmatpush1.msra.mxu0 %v9140
      %9208 = vmatprep.subr.mxu0 0.0
      %9209 = vmatpush1.msra.mxu0 %v9141
      %9210 = vmatprep.subr.mxu0 0.0
      %9211 = vmatpush1.msra.mxu0 %v9142
      %9212 = vmatprep.subr.mxu0 0.0
      %9213 = vmatpush1.msra.mxu0 %v9143
      %9214 = vmatprep.subr.mxu0 0.0
      %9215 = vmatpush1.msra.mxu0 %v9144
      %9216 = vmatprep.subr.mxu0 0.0
      %9217 = vmatpush1.msra.mxu0 %v9145
      %9218 = vmatprep.subr.mxu0 0.0
      %9219 = vmatpush1.msra.mxu0 %v9146
      %9220 = vmatprep.subr.mxu0 0.0
      %9221 = vmatpush1.msra.mxu0 %v9147
      %9222 = vmatprep.subr.mxu0 0.0
      %9223 = vmatpush1.msra.mxu0 %v9148
      %9224 = vmatprep.subr.mxu0 0.0
      %9225 = vmatpush1.msra.mxu0 %v9149
      %9226 = vmatprep.subr.mxu0 0.0
      %9227 = vmatpush1.msra.mxu0 %v9150
      %9228 = vmatprep.subr.mxu0 0.0
      %9229 = vmatpush1.msra.mxu0 %v9151
      %9230 = vmatprep.subr.mxu0 0.0
      %9231 = vmatpush1.msra.mxu0 %v9152
      %9232 = vmatprep.subr.mxu0 0.0
      %9233 = vmatpush1.msra.mxu0 %v9153
      %9234 = vmatprep.subr.mxu0 0.0
      %9235 = vmatpush1.msra.mxu0 %v9154
      %9236 = vmatprep.subr.mxu0 0.0
      %9237 = vmatpush1.msra.mxu0 %v9155
      %9238 = vmatprep.subr.mxu0 0.0
      %9239 = vmatpush1.msra.mxu0 %v9156
      %9240 = vmatprep.subr.mxu0 0.0
      %9241 = vmatpush1.msra.mxu0 %v9157
      %9242 = vmatprep.subr.mxu0 0.0
      %9243 = vmatpush1.msra.mxu0 %v9158
      %9244 = vmatprep.subr.mxu0 0.0
      %9245 = vmatpush1.msra.mxu0 %v9159
      %9246 = vmatprep.subr.mxu0 0.0
      %9247 = vmatpush1.msra.mxu0 %v9160
      %9248 = vmatprep.subr.mxu0 0.0
      %9249 = vmatpush1.msra.mxu0 %v9161
      %9250 = vmatprep.subr.mxu0 0.0
      %9251 = vmatpush1.msra.mxu0 %v9162
      %9252 = vmatprep.subr.mxu0 0.0
      %9253 = vmatpush1.msra.mxu0 %v9163
      %9254 = vmatprep.subr.mxu0 0.0
      %9255 = vmatpush1.msra.mxu0 %v9164
      %9256 = vmatprep.subr.mxu0 0.0
      %9257 = vmatpush1.msra.mxu0 %v9165
      %9258 = vmatprep.subr.mxu0 0.0
      %9259 = vmatpush1.msra.mxu0 %v9166
      %9260 = vmatprep.subr.mxu0 0.0
      %9261 = vmatpush1.msra.mxu0 %v9167
      %9262 = vmatprep.subr.mxu0 0.0
      %9263 = vmatpush1.msra.mxu0 %v9168
      %9264 = vmatprep.subr.mxu0 0.0
      %9265 = vmatpush1.msra.mxu0 %v9169
      %9266 = vmatprep.subr.mxu0 0.0
      %9267 = vmatpush1.msra.mxu0 %v9170
      %9268 = vmatprep.mubr.f32.mxu0 %v9136
      %9269 = vmatmul.mubr.f32.gmra.mrb[0].mxu0 %v9135
      %v9270 = vpop.f32.mrb[0].mxu0
      %v9271 = vadd.f32 %v9203, %v9270
      %v9272 = vpop.f32.mrb[0].mxu0
      %9273 = vdwg.mxu0
      %9274 = vmatprep.subr.mxu0 0.0
      %9275 = vmatpush1.msra.mxu0 %v9171
      %9276 = vmatprep.subr.mxu0 0.0
      %9277 = vmatpush1.msra.mxu0 %v9172
      %9278 = vmatprep.subr.mxu0 0.0
      %9279 = vmatpush1.msra.mxu0 %v9173
      %9280 = vmatprep.subr.mxu0 0.0
      %9281 = vmatpush1.msra.mxu0 %v9174
      %9282 = vmatprep.subr.mxu0 0.0
      %9283 = vmatpush1.msra.mxu0 %v9175
      %9284 = vmatprep.subr.mxu0 0.0
      %9285 = vmatpush1.msra.mxu0 %v9176
      %9286 = vmatprep.subr.mxu0 0.0
      %9287 = vmatpush1.msra.mxu0 %v9177
      %9288 = vmatprep.subr.mxu0 0.0
      %9289 = vmatpush1.msra.mxu0 %v9178
      %9290 = vmatprep.subr.mxu0 0.0
      %9291 = vmatpush1.msra.mxu0 %v9179
      %9292 = vmatprep.subr.mxu0 0.0
      %9293 = vmatpush1.msra.mxu0 %v9180
      %9294 = vmatprep.subr.mxu0 0.0
      %9295 = vmatpush1.msra.mxu0 %v9181
      %9296 = vmatprep.subr.mxu0 0.0
      %9297 = vmatpush1.msra.mxu0 %v9182
      %9298 = vmatprep.subr.mxu0 0.0
      %9299 = vmatpush1.msra.mxu0 %v9183
      %9300 = vmatprep.subr.mxu0 0.0
      %9301 = vmatpush1.msra.mxu0 %v9184
      %9302 = vmatprep.subr.mxu0 0.0
      %9303 = vmatpush1.msra.mxu0 %v9185
      %9304 = vmatprep.subr.mxu0 0.0
      %9305 = vmatpush1.msra.mxu0 %v9186
      %9306 = vmatprep.subr.mxu0 0.0
      %9307 = vmatpush1.msra.mxu0 %v9187
      %9308 = vmatprep.subr.mxu0 0.0
      %9309 = vmatpush1.msra.mxu0 %v9188
      %9310 = vmatprep.subr.mxu0 0.0
      %9311 = vmatpush1.msra.mxu0 %v9189
      %9312 = vmatprep.subr.mxu0 0.0
      %9313 = vmatpush1.msra.mxu0 %v9190
      %9314 = vmatprep.subr.mxu0 0.0
      %9315 = vmatpush1.msra.mxu0 %v9191
      %9316 = vmatprep.subr.mxu0 0.0
      %9317 = vmatpush1.msra.mxu0 %v9192
      %9318 = vmatprep.subr.mxu0 0.0
      %9319 = vmatpush1.msra.mxu0 %v9193
      %9320 = vmatprep.subr.mxu0 0.0
      %9321 = vmatpush1.msra.mxu0 %v9194
      %9322 = vmatprep.subr.mxu0 0.0
      %9323 = vmatpush1.msra.mxu0 %v9195
      %9324 = vmatprep.subr.mxu0 0.0
      %9325 = vmatpush1.msra.mxu0 %v9196
      %9326 = vmatprep.subr.mxu0 0.0
      %9327 = vmatpush1.msra.mxu0 %v9197
      %9328 = vmatprep.subr.mxu0 0.0
      %9329 = vmatpush1.msra.mxu0 %v9198
      %9330 = vmatprep.subr.mxu0 0.0
      %9331 = vmatpush1.msra.mxu0 %v9199
      %9332 = vmatprep.subr.mxu0 0.0
      %9333 = vmatpush1.msra.mxu0 %v9200
      %9334 = vmatprep.subr.mxu0 0.0
      %9335 = vmatpush1.msra.mxu0 %v9201
      %9336 = vmatprep.subr.mxu0 0.0
      %9337 = vmatpush1.msra.mxu0 %v9202
      %9338 = vmatprep.mubr.f32.mxu0 %v9138
      %9339 = vmatmul.mubr.f32.gmra.mrb[0].mxu0 %v9137
      %v9340 = vpop.f32.mrb[0].mxu0
      %v9341 = vadd.f32 %v9271, %v9340
      %v9342 = vpop.f32.mrb[0].mxu0
      %9343 = vdwg.mxu0
      %v9344 = vlaneseq
      %v9345 = vand.u32 %v9344, 127
      %vm9346 = vcmp.lt.s32.totalorder %v9345, 10
      %v9347 = vsel %vm9346, %v9341, -1e+30
      %vm9348 = vcmask 1040384
      %v9349 = vsel %vm9348, %v9347, -inf
      %9350 = vmax.xlane.f32.xlu0 %v9349
      %v9351 = vpop.xlane.xlu0 %9350
      %v9352 = vsub.f32 %v9347, %v9351
      %v9353 = vmul.f32 %v9352, 1.442695
      %v9354 = vpow.pop %v9353
      %v9355 = vsel %vm9346, %v9354, 0.0
      %v9356 = vsel %vm9348, %v9355, 0.0
      %9357 = vadd.xlane.f32.xlu0 %v9356
      %v9358 = vpop.xlane.xlu0 %9357
      %v9359 = vlog2.pop %v9358
      %v9360 = vmul.f32 %v9359, 0.6931472
      %v9361 = vsub.f32 %v9352, %v9360
      %v9362 = vsel %vm9346, %v9361, 0.0
      %v9363 = vlaneseq
      %v9364 = vshrl.u32 %v9363, 7
      %v9365 = vsub.s32 0, %v9364
      %v9366 = vrot.slane %v9362, %v9365
      %9367 = vst [vmem:[%s357] sm:$0xff] %v9366
      %p9368 = scmp.lt.s32.totalorder %s21, 1
      %s9369 = scalar_select %p9368, %s21, 1
      %s9370 = smul.addr %s9369, 8
      %s9371 = scalar_lea.vmem %s10, %s9370
      // Predicated region
      $region61: #{sudoku_net_forward.1} parent=59 // pred_check
        %p9372 = pneg %p254
      $region62: #{sudoku_net_forward.1} parent=59 // pred_check_branch
        %9374 = sbr.rel (%p9372) target = $region64
      $region63: #{sudoku_net_forward.1} parent=59 // pred_region
        _
      $region64: #{sudoku_net_forward.1} parent=59 // pred_fallthru
        _
    $region60: #{sudoku_net_forward.1} parent=5 // pred_fallthru
      _
    %p9375 = scmp.le.s32.totalorder 2, %s16
    // Predicated region
    $region65: #{sudoku_net_forward.1} parent=5 // pred_check
      %p9376 = pneg %p9375
    $region66: #{sudoku_net_forward.1} parent=5 // pred_check_branch
      %9378 = sbr.rel (%p9376) target = $region68
    $region67: #{sudoku_net_forward.1} parent=5 // pred_region
      %s9379 = ssub.s32 %s16, 2
      // Predicated region
      $region69: #{sudoku_net_forward.1} parent=67 // pred_check
        %p9380 = pneg %p260
      $region70: #{sudoku_net_forward.1} parent=67 // pred_check_branch
        %9382 = sbr.rel (%p9380) target = $region72
      $region71: #{sudoku_net_forward.1} parent=67 // pred_region
        %p9383 = scmp.lt.s32.totalorder %s22, 1
        %s9384 = scalar_select %p9383, %s22, 1
        %s9385 = smul.addr %s9384, 8
        %s9386 = scalar_lea.vmem %s10, %s9385
      $region72: #{sudoku_net_forward.1} parent=67 // pred_fallthru
        _
    $region68: #{sudoku_net_forward.1} parent=5 // pred_fallthru
      _
  $region6: #{sudoku_net_forward.1} parent=0 // loop_footer
    %s20 = sadd.s32 1, %s16
  $region7: #{sudoku_net_forward.1} parent=0 // loop_footer_branch
    %15 = sbr.rel target = $region3
  $region8: #{sudoku_net_forward.1} parent=0 // loop_exit
    _

</llo_original>
